<compile_context>
chip_gen: v7x
topology: tpu7x:2x2x1
jax: 0.10.0
libtpu: 0.0.40
codegen_flags: <defaults>
</compile_context>

<pallas_src>
import jax
import jax.numpy as jnp
from jax.experimental import pallas as pl
from jax.experimental.pallas import tpu as pltpu

_BN_EPS = 1e-5


# --------------------------------------------------------------------------- #
# Kernel
# --------------------------------------------------------------------------- #
def _complex_projection_kernel(
    # activation tiles (TB, D)
    x_img_ref, x_txt_ref, conj_ref,
    # VMEM-resident bf16 weights
    iw1_ref, iw2_ref, tw1_ref, tw2_ref,
    # packed f32 biases: rows = [ib1', ib2, tb1', tb2], shape (4, D_img)
    bias_ref,
    # outputs
    concat_ref, x1_ref, x2_ref,
):
    f32 = jnp.float32
    bf16 = jnp.bfloat16

    ib1 = bias_ref[0:1, :]
    ib2 = bias_ref[1:2, :]
    tb1 = bias_ref[2:3, :]
    tb2 = bias_ref[3:4, :]

    # image branch: (BN folded into iw1/ib1) Linear -> Dropout(id) -> ReLU -> Linear
    h = jnp.dot(x_img_ref[...].astype(bf16), iw1_ref[...],
                preferred_element_type=f32) + ib1
    h = jnp.maximum(h, 0.0)
    x1 = jnp.dot(h.astype(bf16), iw2_ref[...],
                 preferred_element_type=f32) + ib2

    # text branch: (BN folded into tw1/tb1) Linear -> ReLU -> Linear
    g = jnp.dot(x_txt_ref[...].astype(bf16), tw1_ref[...],
                preferred_element_type=f32) + tb1
    g = jnp.maximum(g, 0.0)
    x2 = jnp.dot(g.astype(bf16), tw2_ref[...],
                 preferred_element_type=f32) + tb2

    # complex projection: delta = x2
    re_s = x1 * jnp.cos(x2)
    im_s = x1 * (conj_ref[...] * jnp.sin(x2))

    x1_ref[...] = x1
    x2_ref[...] = x2
    d = x1_ref.shape[1]                 # static, multiple of 128 -> unmasked vst
    concat_ref[:, 0:d] = re_s           # torch.cat([re_score, im_score], dim=1)
    concat_ref[:, d:2 * d] = im_s


# --------------------------------------------------------------------------- #
# Parameter preparation (BN folding + bf16 weights + bias packing)
# --------------------------------------------------------------------------- #
def _fold_bn_into_linear(gamma, beta, mean, var, w, b, eps=_BN_EPS):
    a = gamma * jax.lax.rsqrt(var + eps)          # (1, Din)
    w_f = a.reshape(-1, 1) * w                    # (Din, Dout)
    b_f = b + (beta - mean * a) @ w               # (1, Dout)
    return w_f, b_f


def _prepare_params(params):
    (ig, ibeta, imu, ivar, iw1, ib1, iw2, ib2,
     tg, tbeta, tmu, tvar, tw1, tb1, tw2, tb2) = params
    iw1f, ib1f = _fold_bn_into_linear(ig, ibeta, imu, ivar, iw1, ib1)
    tw1f, tb1f = _fold_bn_into_linear(tg, tbeta, tmu, tvar, tw1, tb1)
    biases = jnp.concatenate([ib1f, ib2, tb1f, tb2], axis=0).astype(jnp.float32)
    return (iw1f.astype(jnp.bfloat16), iw2.astype(jnp.bfloat16),
            tw1f.astype(jnp.bfloat16), tw2.astype(jnp.bfloat16), biases)


def _pick_tile(batch, max_tb=256):
    for tb in (256, 128, 64, 32, 16, 8):
        if tb <= max_tb and batch % tb == 0:
            return tb
    return min(batch, max_tb)   # ragged batch -> partial last tile (Pallas pads)


# --------------------------------------------------------------------------- #
# Wrapper
# --------------------------------------------------------------------------- #
def complex_projection_forward(x_img, x_txt, conjugate, params, *, tile_b=256):
    """x = (x_img [B, D_img], x_txt [B, D_txt], CONJUGATE [>=B, D_img])."""
    B, D_img = x_img.shape
    _, D_txt = x_txt.shape

    iw1, iw2, tw1, tw2, biases = _prepare_params(params)

    TB = _pick_tile(B, tile_b)
    grid = (pl.cdiv(B, TB),)

    def act_spec(d):
        return pl.BlockSpec((TB, d), lambda i: (i, 0))

    def resident_spec(shape):
        return pl.BlockSpec(shape, lambda i: (0, 0))

    in_specs = [
        act_spec(D_img),                 # x_img tile
        act_spec(D_txt),                 # x_txt tile
        act_spec(D_img),                 # conjugate tile (implicit [:B] via grid)
        resident_spec(iw1.shape),
        resident_spec(iw2.shape),
        resident_spec(tw1.shape),
        resident_spec(tw2.shape),
        resident_spec(biases.shape),
    ]
    out_specs = (
        pl.BlockSpec((TB, 2 * D_img), lambda i: (i, 0)),   # concat_x
        act_spec(D_img),                                   # x1
        act_spec(D_img),                                   # x2
    )
    out_shape = (
        jax.ShapeDtypeStruct((B, 2 * D_img), jnp.float32),
        jax.ShapeDtypeStruct((B, D_img), jnp.float32),
        jax.ShapeDtypeStruct((B, D_img), jnp.float32),
    )

    # VMEM budget: resident weights/biases + double-buffered activation tiles.
    w_bytes = (iw1.size + iw2.size + tw1.size + tw2.size) * 2 + biases.size * 4
    in_bytes = 2 * TB * (2 * D_img + D_txt) * 4            # x_img + conj + x_txt
    out_bytes = 2 * TB * (4 * D_img) * 4                   # concat + x1 + x2
    vmem_limit = int(min(max(4 * (w_bytes + in_bytes + out_bytes), 16 << 20),
                         48 << 20))

    concat_x, x1, x2 = pl.pallas_call(
        _complex_projection_kernel,
        grid=grid,
        in_specs=in_specs,
        out_specs=out_specs,
        out_shape=out_shape,
        compiler_params=pltpu.CompilerParams(
            dimension_semantics=("parallel",),      # megacore-shardable batch axis
            vmem_limit_bytes=vmem_limit,
        ),
    )(x_img, x_txt, conjugate, iw1, iw2, tw1, tw2, biases)

    re_score = concat_x[:, :D_img]
    im_score = concat_x[:, D_img:]
    # unsqueeze(1) + x0 copy are pure glue, done outside the kernel.
    return (concat_x,
            x1[:, None, :],
            x2[:, None, :],
            x_img[:, None, :],
            re_score[:, None, :],
            im_score[:, None, :])


# --------------------------------------------------------------------------- #
# References + synthetic params
# --------------------------------------------------------------------------- #
def init_params(key, image_embed_dim, text_embed_dim):
    """Deterministic synthetic parameters (shapes match the torch module)."""
    ks = jax.random.split(key, 12)

    def lin(k, din, dout):
        kw, kb = jax.random.split(k)
        w = jax.random.normal(kw, (din, dout), jnp.float32) * 0.02   # (in, out)
        b = jax.random.normal(kb, (1, dout), jnp.float32) * 0.01
        return w, b

    i_gamma = 1.0 + 0.1 * jax.random.normal(ks[0], (1, image_embed_dim), jnp.float32)
    i_beta = 0.1 * jax.random.normal(ks[1], (1, image_embed_dim), jnp.float32)
    i_mean = 0.1 * jax.random.normal(ks[2], (1, image_embed_dim), jnp.float32)
    i_var = 1.0 + 0.1 * jnp.abs(jax.random.normal(ks[3], (1, image_embed_dim), jnp.float32))
    i_w1, i_b1 = lin(ks[4], image_embed_dim, image_embed_dim)
    i_w2, i_b2 = lin(ks[5], image_embed_dim, image_embed_dim)

    t_gamma = 1.0 + 0.1 * jax.random.normal(ks[6], (1, text_embed_dim), jnp.float32)
    t_beta = 0.1 * jax.random.normal(ks[7], (1, text_embed_dim), jnp.float32)
    t_mean = 0.1 * jax.random.normal(ks[8], (1, text_embed_dim), jnp.float32)
    t_var = 1.0 + 0.1 * jnp.abs(jax.random.normal(ks[9], (1, text_embed_dim), jnp.float32))
    t_w1, t_b1 = lin(ks[10], text_embed_dim, image_embed_dim)
    t_w2, t_b2 = lin(ks[11], image_embed_dim, image_embed_dim)

    return (i_gamma, i_beta, i_mean, i_var, i_w1, i_b1, i_w2, i_b2,
            t_gamma, t_beta, t_mean, t_var, t_w1, t_b1, t_w2, t_b2)


def reference_forward_bf16(x_img, x_txt, conjugate, params):
    """Pure-JAX reference using the same folded-BN / bf16-weight math."""
    iw1, iw2, tw1, tw2, biases = _prepare_params(params)
    ib1, ib2, tb1, tb2 = biases[0:1], biases[1:2], biases[2:3], biases[3:4]
    B = x_img.shape[0]
    conj = conjugate[:B]

    def dot(a, w):
        return jnp.dot(a.astype(jnp.bfloat16), w, preferred_element_type=jnp.float32)

    x1 = dot(jnp.maximum(dot(x_img, iw1) + ib1, 0.0), iw2) + ib2
    x2 = dot(jnp.maximum(dot(x_txt, tw1) + tb1, 0.0), tw2) + tb2
    re_s = x1 * jnp.cos(x2)
    im_s = x1 * (conj * jnp.sin(x2))
    concat = jnp.concatenate([re_s, im_s], axis=1)
    return (concat, x1[:, None, :], x2[:, None, :], x_img[:, None, :],
            re_s[:, None, :], im_s[:, None, :])


def reference_forward_exact(x_img, x_txt, conjugate, params):
    """Pure-JAX eval-mode reference: unfolded BN, full f32 weights."""
    (ig, ibeta, imu, ivar, iw1, ib1, iw2, ib2,
     tg, tbeta, tmu, tvar, tw1, tb1, tw2, tb2) = params
    B = x_img.shape[0]
    conj = conjugate[:B]
    xn = (x_img - imu) * jax.lax.rsqrt(ivar + _BN_EPS) * ig + ibeta
    x1 = jnp.maximum(xn @ iw1 + ib1, 0.0) @ iw2 + ib2
    tn = (x_txt - tmu) * jax.lax.rsqrt(tvar + _BN_EPS) * tg + tbeta
    x2 = jnp.maximum(tn @ tw1 + tb1, 0.0) @ tw2 + tb2
    re_s = x1 * jnp.cos(x2)
    im_s = x1 * (conj * jnp.sin(x2))
    concat = jnp.concatenate([re_s, im_s], axis=1)
    return (concat, x1[:, None, :], x2[:, None, :], x_img[:, None, :],
            re_s[:, None, :], im_s[:, None, :])


# --------------------------------------------------------------------------- #
# Demo / self-check
# --------------------------------------------------------------------------- #
if __name__ == "__main__":
    # Small, TPU-tile-friendly stand-ins for (D_img=512, D_txt=768).
    # B=512 with TB=256 exercises a multi-step, pipelined, megacore-parallel grid.
    B, D_IMG, D_TXT = 512, 128, 256

    key = jax.random.PRNGKey(0)
    k_img, k_txt, k_conj, k_par = jax.random.split(key, 4)

    x_img = jax.random.normal(k_img, (B, D_IMG), jnp.float32)
    x_txt = jax.random.normal(k_txt, (B, D_TXT), jnp.float32)
    # CONJUGATE: +/-1 tensor allocated longer than the batch; the [:B] slice is
    # realized by the kernel's grid extent rather than an HBM copy.
    conjugate = jnp.where(
        jax.random.uniform(k_conj, (B + 4, D_IMG)) < 0.5, -1.0, 1.0
    ).astype(jnp.float32)
    params = init_params(k_par, D_IMG, D_TXT)

    fwd = jax.jit(complex_projection_forward)
    outs = jax.block_until_ready(fwd(x_img, x_txt, conjugate, params))

    # Tight check against a reference doing the same folded-BN / bf16-dot math.
    refs_bf16 = reference_forward_bf16(x_img, x_txt, conjugate, params)
    for o, r in zip(outs, refs_bf16):
        assert o.shape == r.shape, (o.shape, r.shape)
        assert jnp.allclose(o, r, atol=1e-3, rtol=1e-3), float(jnp.max(jnp.abs(o - r)))

    # Looser check against the exact f32 / unfolded-BN reference
    # (difference is only bf16 weight quantization).
    refs_f32 = reference_forward_exact(x_img, x_txt, conjugate, params)
    for o, r in zip(outs, refs_f32):
        assert o.shape == r.shape, (o.shape, r.shape)
        assert jnp.allclose(o, r, atol=5e-2, rtol=5e-2), float(jnp.max(jnp.abs(o - r)))

    print("KERNEL_OK")
</pallas_src>

<mosaic_0001>
module attributes {stable_mosaic.version = 11 : i64} {
  func.func @_complex_projection_kernel(%arg0: i32, %arg1: memref<256x128xf32, #tpu.memory_space<vmem>>, %arg2: memref<256x256xf32, #tpu.memory_space<vmem>>, %arg3: memref<256x128xf32, #tpu.memory_space<vmem>>, %arg4: memref<128x128xbf16, #tpu.memory_space<vmem>>, %arg5: memref<128x128xbf16, #tpu.memory_space<vmem>>, %arg6: memref<256x128xbf16, #tpu.memory_space<vmem>>, %arg7: memref<128x128xbf16, #tpu.memory_space<vmem>>, %arg8: memref<4x128xf32, #tpu.memory_space<vmem>>, %arg9: memref<256x256xf32, #tpu.memory_space<vmem>>, %arg10: memref<256x128xf32, #tpu.memory_space<vmem>>, %arg11: memref<256x128xf32, #tpu.memory_space<vmem>>) attributes {dimension_semantics = [#tpu.dimension_semantics<parallel>], iteration_bounds = array<i64: 2>, scalar_prefetch = 0 : i64, scratch_operands = 0 : i64, tpu.core_type = #tpu.core_type<tc>, window_params = [{transform_indices = @transform_0, window_bounds = array<i64: 256, 128>}, {transform_indices = @transform_1, window_bounds = array<i64: 256, 256>}, {transform_indices = @transform_2, window_bounds = array<i64: 256, 128>}, {pipeline_mode = #tpu.pipeline_mode<synchronous>, transform_indices = @transform_3, window_bounds = array<i64: 128, 128>}, {pipeline_mode = #tpu.pipeline_mode<synchronous>, transform_indices = @transform_4, window_bounds = array<i64: 128, 128>}, {pipeline_mode = #tpu.pipeline_mode<synchronous>, transform_indices = @transform_5, window_bounds = array<i64: 256, 128>}, {pipeline_mode = #tpu.pipeline_mode<synchronous>, transform_indices = @transform_6, window_bounds = array<i64: 128, 128>}, {pipeline_mode = #tpu.pipeline_mode<synchronous>, transform_indices = @transform_7, window_bounds = array<i64: 4, 128>}, {transform_indices = @transform_8, window_bounds = array<i64: 256, 256>}, {transform_indices = @transform_9, window_bounds = array<i64: 256, 128>}, {transform_indices = @transform_10, window_bounds = array<i64: 256, 128>}]} {
    %c0 = arith.constant 0 : index
    %c0_0 = arith.constant 0 : index
    %0 = vector.load %arg8[%c0, %c0_0] : memref<4x128xf32, #tpu.memory_space<vmem>>, vector<1x128xf32>
    %c1 = arith.constant 1 : index
    %c0_1 = arith.constant 0 : index
    %1 = vector.load %arg8[%c1, %c0_1] : memref<4x128xf32, #tpu.memory_space<vmem>>, vector<1x128xf32>
    %c2 = arith.constant 2 : index
    %c0_2 = arith.constant 0 : index
    %2 = vector.load %arg8[%c2, %c0_2] : memref<4x128xf32, #tpu.memory_space<vmem>>, vector<1x128xf32>
    %c3 = arith.constant 3 : index
    %c0_3 = arith.constant 0 : index
    %3 = vector.load %arg8[%c3, %c0_3] : memref<4x128xf32, #tpu.memory_space<vmem>>, vector<1x128xf32>
    %c0_4 = arith.constant 0 : index
    %c0_5 = arith.constant 0 : index
    %4 = vector.load %arg1[%c0_4, %c0_5] : memref<256x128xf32, #tpu.memory_space<vmem>>, vector<256x128xf32>
    %5 = arith.truncf %4 : vector<256x128xf32> to vector<256x128xbf16>
    %c0_6 = arith.constant 0 : index
    %c0_7 = arith.constant 0 : index
    %6 = vector.load %arg4[%c0_6, %c0_7] : memref<128x128xbf16, #tpu.memory_space<vmem>>, vector<128x128xbf16>
    %cst = arith.constant dense<0.000000e+00> : vector<256x128xf32>
    %7 = tpu.matmul %5, %6, %cst {dimension_numbers = #tpu.dot_dimension_numbers<[1], [0], [0], [1], [0, 0, 1, 1], [], []>} : vector<256x128xbf16>, vector<128x128xbf16>, vector<256x128xf32> -> vector<256x128xf32>
    %8 = vector.broadcast %0 : vector<1x128xf32> to vector<256x128xf32>
    %9 = arith.addf %7, %8 : vector<256x128xf32>
    %cst_8 = arith.constant 0.000000e+00 : f32
    %10 = vector.broadcast %cst_8 : f32 to vector<256x128xf32>
    %11 = arith.maximumf %9, %10 : vector<256x128xf32>
    %12 = arith.truncf %11 : vector<256x128xf32> to vector<256x128xbf16>
    %c0_9 = arith.constant 0 : index
    %c0_10 = arith.constant 0 : index
    %13 = vector.load %arg5[%c0_9, %c0_10] : memref<128x128xbf16, #tpu.memory_space<vmem>>, vector<128x128xbf16>
    %cst_11 = arith.constant dense<0.000000e+00> : vector<256x128xf32>
    %14 = tpu.matmul %12, %13, %cst_11 {dimension_numbers = #tpu.dot_dimension_numbers<[1], [0], [0], [1], [0, 0, 1, 1], [], []>} : vector<256x128xbf16>, vector<128x128xbf16>, vector<256x128xf32> -> vector<256x128xf32>
    %15 = vector.broadcast %1 : vector<1x128xf32> to vector<256x128xf32>
    %16 = arith.addf %14, %15 : vector<256x128xf32>
    %c0_12 = arith.constant 0 : index
    %c0_13 = arith.constant 0 : index
    %17 = vector.load %arg2[%c0_12, %c0_13] : memref<256x256xf32, #tpu.memory_space<vmem>>, vector<256x256xf32>
    %18 = arith.truncf %17 : vector<256x256xf32> to vector<256x256xbf16>
    %c0_14 = arith.constant 0 : index
    %c0_15 = arith.constant 0 : index
    %19 = vector.load %arg6[%c0_14, %c0_15] : memref<256x128xbf16, #tpu.memory_space<vmem>>, vector<256x128xbf16>
    %cst_16 = arith.constant dense<0.000000e+00> : vector<256x128xf32>
    %20 = tpu.matmul %18, %19, %cst_16 {dimension_numbers = #tpu.dot_dimension_numbers<[1], [0], [0], [1], [0, 0, 1, 1], [], []>} : vector<256x256xbf16>, vector<256x128xbf16>, vector<256x128xf32> -> vector<256x128xf32>
    %21 = vector.broadcast %2 : vector<1x128xf32> to vector<256x128xf32>
    %22 = arith.addf %20, %21 : vector<256x128xf32>
    %cst_17 = arith.constant 0.000000e+00 : f32
    %23 = vector.broadcast %cst_17 : f32 to vector<256x128xf32>
    %24 = arith.maximumf %22, %23 : vector<256x128xf32>
    %25 = arith.truncf %24 : vector<256x128xf32> to vector<256x128xbf16>
    %c0_18 = arith.constant 0 : index
    %c0_19 = arith.constant 0 : index
    %26 = vector.load %arg7[%c0_18, %c0_19] : memref<128x128xbf16, #tpu.memory_space<vmem>>, vector<128x128xbf16>
    %cst_20 = arith.constant dense<0.000000e+00> : vector<256x128xf32>
    %27 = tpu.matmul %25, %26, %cst_20 {dimension_numbers = #tpu.dot_dimension_numbers<[1], [0], [0], [1], [0, 0, 1, 1], [], []>} : vector<256x128xbf16>, vector<128x128xbf16>, vector<256x128xf32> -> vector<256x128xf32>
    %28 = vector.broadcast %3 : vector<1x128xf32> to vector<256x128xf32>
    %29 = arith.addf %27, %28 : vector<256x128xf32>
    %30 = math.cos %29 : vector<256x128xf32>
    %31 = arith.mulf %16, %30 : vector<256x128xf32>
    %c0_21 = arith.constant 0 : index
    %c0_22 = arith.constant 0 : index
    %32 = vector.load %arg3[%c0_21, %c0_22] : memref<256x128xf32, #tpu.memory_space<vmem>>, vector<256x128xf32>
    %33 = math.sin %29 : vector<256x128xf32>
    %34 = arith.mulf %32, %33 : vector<256x128xf32>
    %35 = arith.mulf %16, %34 : vector<256x128xf32>
    %c0_23 = arith.constant 0 : index
    %c0_24 = arith.constant 0 : index
    %36 = vector.load %arg10[%c0_23, %c0_24] : memref<256x128xf32, #tpu.memory_space<vmem>>, vector<256x128xf32>
    tpu.vector_store %arg10[%c0_23, %c0_24], %16 {strides = array<i32>} : memref<256x128xf32, #tpu.memory_space<vmem>>, vector<256x128xf32>,
    %c0_25 = arith.constant 0 : index
    %c0_26 = arith.constant 0 : index
    %37 = vector.load %arg11[%c0_25, %c0_26] : memref<256x128xf32, #tpu.memory_space<vmem>>, vector<256x128xf32>
    tpu.vector_store %arg11[%c0_25, %c0_26], %29 {strides = array<i32>} : memref<256x128xf32, #tpu.memory_space<vmem>>, vector<256x128xf32>,
    %c0_27 = arith.constant 0 : index
    %c0_28 = arith.constant 0 : index
    %38 = vector.load %arg9[%c0_27, %c0_28] : memref<256x256xf32, #tpu.memory_space<vmem>>, vector<256x128xf32>
    tpu.vector_store %arg9[%c0_27, %c0_28], %31 {strides = array<i32>} : memref<256x256xf32, #tpu.memory_space<vmem>>, vector<256x128xf32>,
    %c0_29 = arith.constant 0 : index
    %c128 = arith.constant 128 : index
    %39 = vector.load %arg9[%c0_29, %c128] : memref<256x256xf32, #tpu.memory_space<vmem>>, vector<256x128xf32>
    tpu.vector_store %arg9[%c0_29, %c128], %35 {strides = array<i32>} : memref<256x256xf32, #tpu.memory_space<vmem>>, vector<256x128xf32>,
    return
  }
  func.func @transform_0(%arg0: i32) -> (i32, i32) {
    %c0_i32 = arith.constant 0 : i32
    %c0_i32_0 = arith.constant 0 : i32
    return %arg0, %c0_i32 : i32, i32
  }
  func.func @transform_1(%arg0: i32) -> (i32, i32) {
    %c0_i32 = arith.constant 0 : i32
    %c0_i32_0 = arith.constant 0 : i32
    return %arg0, %c0_i32 : i32, i32
  }
  func.func @transform_2(%arg0: i32) -> (i32, i32) {
    %c0_i32 = arith.constant 0 : i32
    %c0_i32_0 = arith.constant 0 : i32
    return %arg0, %c0_i32 : i32, i32
  }
  func.func @transform_3(%arg0: i32) -> (i32, i32) {
    %c0_i32 = arith.constant 0 : i32
    %c0_i32_0 = arith.constant 0 : i32
    %c0_i32_1 = arith.constant 0 : i32
    return %c0_i32, %c0_i32_0 : i32, i32
  }
  func.func @transform_4(%arg0: i32) -> (i32, i32) {
    %c0_i32 = arith.constant 0 : i32
    %c0_i32_0 = arith.constant 0 : i32
    %c0_i32_1 = arith.constant 0 : i32
    return %c0_i32, %c0_i32_0 : i32, i32
  }
  func.func @transform_5(%arg0: i32) -> (i32, i32) {
    %c0_i32 = arith.constant 0 : i32
    %c0_i32_0 = arith.constant 0 : i32
    %c0_i32_1 = arith.constant 0 : i32
    return %c0_i32, %c0_i32_0 : i32, i32
  }
  func.func @transform_6(%arg0: i32) -> (i32, i32) {
    %c0_i32 = arith.constant 0 : i32
    %c0_i32_0 = arith.constant 0 : i32
    %c0_i32_1 = arith.constant 0 : i32
    return %c0_i32, %c0_i32_0 : i32, i32
  }
  func.func @transform_7(%arg0: i32) -> (i32, i32) {
    %c0_i32 = arith.constant 0 : i32
    %c0_i32_0 = arith.constant 0 : i32
    %c0_i32_1 = arith.constant 0 : i32
    return %c0_i32, %c0_i32_0 : i32, i32
  }
  func.func @transform_8(%arg0: i32) -> (i32, i32) {
    %c0_i32 = arith.constant 0 : i32
    %c0_i32_0 = arith.constant 0 : i32
    return %arg0, %c0_i32 : i32, i32
  }
  func.func @transform_9(%arg0: i32) -> (i32, i32) {
    %c0_i32 = arith.constant 0 : i32
    %c0_i32_0 = arith.constant 0 : i32
    return %arg0, %c0_i32 : i32, i32
  }
  func.func @transform_10(%arg0: i32) -> (i32, i32) {
    %c0_i32 = arith.constant 0 : i32
    %c0_i32_0 = arith.constant 0 : i32
    return %arg0, %c0_i32 : i32, i32
  }
}

</mosaic_0001>

<llo_original>
// kernel: complex_projection_forward.1
$region0: #{complex_projection_forward.1}
  #allocation0 [shape = 'u32[]', space=smem, size = 0x4, offset = 0x4, fixed_abs, tag = 'smem constant byte address 0x4 - core index']
  #allocation1 [shape = 'u32[144,128]{1,0:T(1,128)}', space=vmem, size = 0x12000, scoped, tag = 'internal scratch']
  %s0 = inlined_call_operand.vmem [shape: f32[512,128], index: 0, kind: input, shape index: {}]
  %s1 = inlined_call_operand.hbm [shape: f32[512,256], index: 1, kind: input, shape index: {}]
  %s2 = inlined_call_operand.vmem [shape: f32[516,128], index: 2, kind: input, shape index: {}]
  %s3 = inlined_call_operand.vmem [shape: bf16[128,128], index: 3, kind: input, shape index: {}]
  %s4 = inlined_call_operand.vmem [shape: bf16[128,128], index: 4, kind: input, shape index: {}]
  %s5 = inlined_call_operand.vmem [shape: bf16[256,128], index: 5, kind: input, shape index: {}]
  %s6 = inlined_call_operand.vmem [shape: bf16[128,128], index: 6, kind: input, shape index: {}]
  %s7 = inlined_call_operand.vmem [shape: f32[4,128], index: 7, kind: input, shape index: {}]
  %s8 = inlined_call_operand.vmem [shape: f32[512,256], index: 8, kind: output, shape index: {0}]
  %s9 = inlined_call_operand.hbm [shape: f32[512,128], index: 9, kind: output, shape index: {1}]
  %s10 = inlined_call_operand.hbm [shape: f32[512,128], index: 10, kind: output, shape index: {2}]
  %11 = xla_tuple %s8, %s9, %s10
  %s12 = sld [smem:[#allocation0]]
  $region85: #{complex_projection_forward.1} parent=0
    _
  %s14 = ssub.s32 1, %s12
  %s15 = scalar_select 0, %s14, %s12
  $region1: #{complex_projection_forward.1} parent=0
    #allocation2 [shape = 'u8[524288]{0}', space=vmem, size = 0x80000, scoped, tag = 'input window, operand 1']
    #allocation3 [shape = 's32[2]{0}', space=sflag, size = 0x8, scoped, tag = 'scoped memory for complex_projection_forward.1']
    #allocation4 [shape = 's32[2]{0}', space=sflag, size = 0x8, scoped, tag = 'scoped memory for complex_projection_forward.1']
    #allocation5 [shape = 'u8[262144]{0}', space=vmem, size = 0x40000, scoped, tag = 'output window, operand 1']
    #allocation6 [shape = 'u8[262144]{0}', space=vmem, size = 0x40000, scoped, tag = 'output window, operand 2']
    #allocation7 [shape = 's32[2]{0}', space=sflag, size = 0x8, scoped, tag = 'scoped memory for complex_projection_forward.1']
    %16 = vsyncpa [#allocation3], 0
    %s17 = scalar_lea.sflag [#allocation3], 1
    %18 = vsyncpa %s17, 0
    %19 = vsyncpa [#allocation4], 0
    %s20 = scalar_lea.sflag [#allocation4], 1
    %21 = vsyncpa %s20, 0
    %22 = vsyncpa [#allocation7], 0
    %s23 = scalar_lea.sflag [#allocation7], 1
    %24 = vsyncpa %s23, 0
    loop: start=0, step=1, limit=4
    $region2: #{complex_projection_forward.1} parent=1 // loop_pre_header
      _
    $region3: #{complex_projection_forward.1} parent=1 // loop_header
      %s26 = sphi 0, %s30
      %p27 = scmp.ge.s32.totalorder %s26, 4
      %s36 = sphi 0, %s38
      %s39 = sphi 0, %s36
      %s40 = sphi 0, %s39
      %s56 = sphi 0, %s40
      %s62 = sphi 0, %s64
      %s65 = sphi 0, %s62
      %s66 = sphi 0, %s65
      %s82 = sphi 0, %s66
      %s88 = sphi 0, %s90
      %s91 = sphi 0, %s88
      %s92 = sphi 0, %s91
      %s108 = sphi 0, %s92
      %s112 = sphi 0, %s112
      %s114 = sphi 0, %s112
      %s115 = sphi 0, %s114
      %s129 = sphi 0, %s115
      %s133 = sphi 0, %s133
      %s135 = sphi 0, %s133
      %s136 = sphi 0, %s135
      %s150 = sphi 0, %s136
      %s154 = sphi 0, %s154
      %s156 = sphi 0, %s154
      %s157 = sphi 0, %s156
      %s171 = sphi 0, %s157
      %s175 = sphi 0, %s175
      %s177 = sphi 0, %s175
      %s178 = sphi 0, %s177
      %s192 = sphi 0, %s178
      %s196 = sphi 0, %s196
      %s198 = sphi 0, %s196
      %s199 = sphi 0, %s198
      %s213 = sphi 0, %s199
      %s219 = sphi 0, %s221
      %s222 = sphi 0, %s219
      %s223 = sphi 0, %s222
      %s239 = sphi 0, %s223
      %s245 = sphi 0, %s247
      %s248 = sphi 0, %s245
      %s249 = sphi 0, %s248
      %s265 = sphi 0, %s249
      %s271 = sphi 0, %s273
      %s274 = sphi 0, %s271
      %s275 = sphi 0, %s274
      %s291 = sphi 0, %s275
    $region4: #{complex_projection_forward.1} parent=1 // loop_header_branch
      %29 = sbr.rel (%p27) target = $region8
    $region5: #{complex_projection_forward.1} parent=1 // loop_body
      %s31 = ssub.s32 %s26, 1
      %s32 = ssub.s32 %s26, 2
      %s33 = sadd.s32 %s26, 1
      %s34 = ssub.s32 %s26, %s33
      %p35 = scmp.eq.s32.totalorder %s34, 0
      %s37 = sadd.s32 %s36, 1
      %s38 = scalar_select %p35, %s36, %s37
      %p41 = pneg %p35
      %p42 = scmp.eq.s32.totalorder %s26, 1
      %p43 = por %p41, %p42
      %p44 = scmp.ne.s32.totalorder %s36, %s39
      %p45 = scmp.eq.s32.totalorder %s26, 0
      %p46 = por %p44, %p45
      %p47 = scmp.ne.s32.totalorder %s36, %s39
      %p48 = scmp.eq.s32.totalorder %s31, 1
      %p49 = por %p47, %p48
      %p50 = scmp.ne.s32.totalorder %s39, %s40
      %p51 = scmp.eq.s32.totalorder %s31, 0
      %p52 = por %p50, %p51
      %p53 = scmp.ne.s32.totalorder %s39, %s40
      %p54 = scmp.eq.s32.totalorder %s32, 1
      %p55 = por %p53, %p54
      %p57 = scmp.ne.s32.totalorder %s40, %s56
      %p58 = scmp.eq.s32.totalorder %s32, 0
      %p59 = por %p57, %p58
      %s60 = ssub.s32 %s26, %s33
      %p61 = scmp.eq.s32.totalorder %s60, 0
      %s63 = sadd.s32 %s62, 1
      %s64 = scalar_select %p61, %s62, %s63
      %p67 = pneg %p61
      %p68 = scmp.eq.s32.totalorder %s26, 1
      %p69 = por %p67, %p68
      %p70 = scmp.ne.s32.totalorder %s62, %s65
      %p71 = scmp.eq.s32.totalorder %s26, 0
      %p72 = por %p70, %p71
      %p73 = scmp.ne.s32.totalorder %s62, %s65
      %p74 = scmp.eq.s32.totalorder %s31, 1
      %p75 = por %p73, %p74
      %p76 = scmp.ne.s32.totalorder %s65, %s66
      %p77 = scmp.eq.s32.totalorder %s31, 0
      %p78 = por %p76, %p77
      %p79 = scmp.ne.s32.totalorder %s65, %s66
      %p80 = scmp.eq.s32.totalorder %s32, 1
      %p81 = por %p79, %p80
      %p83 = scmp.ne.s32.totalorder %s66, %s82
      %p84 = scmp.eq.s32.totalorder %s32, 0
      %p85 = por %p83, %p84
      %s86 = ssub.s32 %s26, %s33
      %p87 = scmp.eq.s32.totalorder %s86, 0
      %s89 = sadd.s32 %s88, 1
      %s90 = scalar_select %p87, %s88, %s89
      %p93 = pneg %p87
      %p94 = scmp.eq.s32.totalorder %s26, 1
      %p95 = por %p93, %p94
      %p96 = scmp.ne.s32.totalorder %s88, %s91
      %p97 = scmp.eq.s32.totalorder %s26, 0
      %p98 = por %p96, %p97
      %p99 = scmp.ne.s32.totalorder %s88, %s91
      %p100 = scmp.eq.s32.totalorder %s31, 1
      %p101 = por %p99, %p100
      %p102 = scmp.ne.s32.totalorder %s91, %s92
      %p103 = scmp.eq.s32.totalorder %s31, 0
      %p104 = por %p102, %p103
      %p105 = scmp.ne.s32.totalorder %s91, %s92
      %p106 = scmp.eq.s32.totalorder %s32, 1
      %p107 = por %p105, %p106
      %p109 = scmp.ne.s32.totalorder %s92, %s108
      %p110 = scmp.eq.s32.totalorder %s32, 0
      %p111 = por %p109, %p110
      %s113 = sadd.s32 %s112, 1
      %p116 = scmp.eq.s32.totalorder %s26, 1
      %p117 = scmp.ne.s32.totalorder %s112, %s114
      %p118 = scmp.eq.s32.totalorder %s26, 0
      %p119 = por %p117, %p118
      %p120 = scmp.ne.s32.totalorder %s112, %s114
      %p121 = scmp.eq.s32.totalorder %s31, 1
      %p122 = por %p120, %p121
      %p123 = scmp.ne.s32.totalorder %s114, %s115
      %p124 = scmp.eq.s32.totalorder %s31, 0
      %p125 = por %p123, %p124
      %p126 = scmp.ne.s32.totalorder %s114, %s115
      %p127 = scmp.eq.s32.totalorder %s32, 1
      %p128 = por %p126, %p127
      %p130 = scmp.ne.s32.totalorder %s115, %s129
      %p131 = scmp.eq.s32.totalorder %s32, 0
      %p132 = por %p130, %p131
      %s134 = sadd.s32 %s133, 1
      %p137 = scmp.eq.s32.totalorder %s26, 1
      %p138 = scmp.ne.s32.totalorder %s133, %s135
      %p139 = scmp.eq.s32.totalorder %s26, 0
      %p140 = por %p138, %p139
      %p141 = scmp.ne.s32.totalorder %s133, %s135
      %p142 = scmp.eq.s32.totalorder %s31, 1
      %p143 = por %p141, %p142
      %p144 = scmp.ne.s32.totalorder %s135, %s136
      %p145 = scmp.eq.s32.totalorder %s31, 0
      %p146 = por %p144, %p145
      %p147 = scmp.ne.s32.totalorder %s135, %s136
      %p148 = scmp.eq.s32.totalorder %s32, 1
      %p149 = por %p147, %p148
      %p151 = scmp.ne.s32.totalorder %s136, %s150
      %p152 = scmp.eq.s32.totalorder %s32, 0
      %p153 = por %p151, %p152
      %s155 = sadd.s32 %s154, 1
      %p158 = scmp.eq.s32.totalorder %s26, 1
      %p159 = scmp.ne.s32.totalorder %s154, %s156
      %p160 = scmp.eq.s32.totalorder %s26, 0
      %p161 = por %p159, %p160
      %p162 = scmp.ne.s32.totalorder %s154, %s156
      %p163 = scmp.eq.s32.totalorder %s31, 1
      %p164 = por %p162, %p163
      %p165 = scmp.ne.s32.totalorder %s156, %s157
      %p166 = scmp.eq.s32.totalorder %s31, 0
      %p167 = por %p165, %p166
      %p168 = scmp.ne.s32.totalorder %s156, %s157
      %p169 = scmp.eq.s32.totalorder %s32, 1
      %p170 = por %p168, %p169
      %p172 = scmp.ne.s32.totalorder %s157, %s171
      %p173 = scmp.eq.s32.totalorder %s32, 0
      %p174 = por %p172, %p173
      %s176 = sadd.s32 %s175, 1
      %p179 = scmp.eq.s32.totalorder %s26, 1
      %p180 = scmp.ne.s32.totalorder %s175, %s177
      %p181 = scmp.eq.s32.totalorder %s26, 0
      %p182 = por %p180, %p181
      %p183 = scmp.ne.s32.totalorder %s175, %s177
      %p184 = scmp.eq.s32.totalorder %s31, 1
      %p185 = por %p183, %p184
      %p186 = scmp.ne.s32.totalorder %s177, %s178
      %p187 = scmp.eq.s32.totalorder %s31, 0
      %p188 = por %p186, %p187
      %p189 = scmp.ne.s32.totalorder %s177, %s178
      %p190 = scmp.eq.s32.totalorder %s32, 1
      %p191 = por %p189, %p190
      %p193 = scmp.ne.s32.totalorder %s178, %s192
      %p194 = scmp.eq.s32.totalorder %s32, 0
      %p195 = por %p193, %p194
      %s197 = sadd.s32 %s196, 1
      %p200 = scmp.eq.s32.totalorder %s26, 1
      %p201 = scmp.ne.s32.totalorder %s196, %s198
      %p202 = scmp.eq.s32.totalorder %s26, 0
      %p203 = por %p201, %p202
      %p204 = scmp.ne.s32.totalorder %s196, %s198
      %p205 = scmp.eq.s32.totalorder %s31, 1
      %p206 = por %p204, %p205
      %p207 = scmp.ne.s32.totalorder %s198, %s199
      %p208 = scmp.eq.s32.totalorder %s31, 0
      %p209 = por %p207, %p208
      %p210 = scmp.ne.s32.totalorder %s198, %s199
      %p211 = scmp.eq.s32.totalorder %s32, 1
      %p212 = por %p210, %p211
      %p214 = scmp.ne.s32.totalorder %s199, %s213
      %p215 = scmp.eq.s32.totalorder %s32, 0
      %p216 = por %p214, %p215
      %s217 = ssub.s32 %s26, %s33
      %p218 = scmp.eq.s32.totalorder %s217, 0
      %s220 = sadd.s32 %s219, 1
      %s221 = scalar_select %p218, %s219, %s220
      %p224 = pneg %p218
      %p225 = scmp.eq.s32.totalorder %s26, 1
      %p226 = por %p224, %p225
      %p227 = scmp.ne.s32.totalorder %s219, %s222
      %p228 = scmp.eq.s32.totalorder %s26, 0
      %p229 = por %p227, %p228
      %p230 = scmp.ne.s32.totalorder %s219, %s222
      %p231 = scmp.eq.s32.totalorder %s31, 1
      %p232 = por %p230, %p231
      %p233 = scmp.ne.s32.totalorder %s222, %s223
      %p234 = scmp.eq.s32.totalorder %s31, 0
      %p235 = por %p233, %p234
      %p236 = scmp.ne.s32.totalorder %s222, %s223
      %p237 = scmp.eq.s32.totalorder %s32, 1
      %p238 = por %p236, %p237
      %p240 = scmp.ne.s32.totalorder %s223, %s239
      %p241 = scmp.eq.s32.totalorder %s32, 0
      %p242 = por %p240, %p241
      %s243 = ssub.s32 %s26, %s33
      %p244 = scmp.eq.s32.totalorder %s243, 0
      %s246 = sadd.s32 %s245, 1
      %s247 = scalar_select %p244, %s245, %s246
      %p250 = pneg %p244
      %p251 = scmp.eq.s32.totalorder %s26, 1
      %p252 = por %p250, %p251
      %p253 = scmp.ne.s32.totalorder %s245, %s248
      %p254 = scmp.eq.s32.totalorder %s26, 0
      %p255 = por %p253, %p254
      %p256 = scmp.ne.s32.totalorder %s245, %s248
      %p257 = scmp.eq.s32.totalorder %s31, 1
      %p258 = por %p256, %p257
      %p259 = scmp.ne.s32.totalorder %s248, %s249
      %p260 = scmp.eq.s32.totalorder %s31, 0
      %p261 = por %p259, %p260
      %p262 = scmp.ne.s32.totalorder %s248, %s249
      %p263 = scmp.eq.s32.totalorder %s32, 1
      %p264 = por %p262, %p263
      %p266 = scmp.ne.s32.totalorder %s249, %s265
      %p267 = scmp.eq.s32.totalorder %s32, 0
      %p268 = por %p266, %p267
      %s269 = ssub.s32 %s26, %s33
      %p270 = scmp.eq.s32.totalorder %s269, 0
      %s272 = sadd.s32 %s271, 1
      %s273 = scalar_select %p270, %s271, %s272
      %p276 = pneg %p270
      %p277 = scmp.eq.s32.totalorder %s26, 1
      %p278 = por %p276, %p277
      %p279 = scmp.ne.s32.totalorder %s271, %s274
      %p280 = scmp.eq.s32.totalorder %s26, 0
      %p281 = por %p279, %p280
      %p282 = scmp.ne.s32.totalorder %s271, %s274
      %p283 = scmp.eq.s32.totalorder %s31, 1
      %p284 = por %p282, %p283
      %p285 = scmp.ne.s32.totalorder %s274, %s275
      %p286 = scmp.eq.s32.totalorder %s31, 0
      %p287 = por %p285, %p286
      %p288 = scmp.ne.s32.totalorder %s274, %s275
      %p289 = scmp.eq.s32.totalorder %s32, 1
      %p290 = por %p288, %p289
      %p292 = scmp.ne.s32.totalorder %s275, %s291
      %p293 = scmp.eq.s32.totalorder %s32, 0
      %p294 = por %p292, %p293
      %p295 = scmp.le.s32.totalorder 1, %s26
      %p296 = scmp.lt.s32.totalorder %s26, 3
      %p297 = pnand %p295, %p296
      %p298 = pneg %p297
      // Predicated region
      $region9: #{complex_projection_forward.1} parent=5 // pred_check
        _
      $region10: #{complex_projection_forward.1} parent=5 // pred_check_branch
        %300 = sbr.rel (%p297) target = $region12
      $region11: #{complex_projection_forward.1} parent=5 // pred_region
        %s301 = ssub.s32 %s26, 1
        // Predicated region
        $region13: #{complex_projection_forward.1} parent=11 // pred_check
          %p302 = pneg %p125
        $region14: #{complex_projection_forward.1} parent=11 // pred_check_branch
          %304 = sbr.rel (%p302) target = $region16
        $region15: #{complex_projection_forward.1} parent=11 // pred_region
          _
        $region16: #{complex_projection_forward.1} parent=11 // pred_fallthru
          _
        // Predicated region
        $region17: #{complex_projection_forward.1} parent=11 // pred_check
          %p305 = pneg %p146
        $region18: #{complex_projection_forward.1} parent=11 // pred_check_branch
          %307 = sbr.rel (%p305) target = $region20
        $region19: #{complex_projection_forward.1} parent=11 // pred_region
          _
        $region20: #{complex_projection_forward.1} parent=11 // pred_fallthru
          _
        // Predicated region
        $region21: #{complex_projection_forward.1} parent=11 // pred_check
          %p308 = pneg %p167
        $region22: #{complex_projection_forward.1} parent=11 // pred_check_branch
          %310 = sbr.rel (%p308) target = $region24
        $region23: #{complex_projection_forward.1} parent=11 // pred_region
          _
        $region24: #{complex_projection_forward.1} parent=11 // pred_fallthru
          _
        // Predicated region
        $region25: #{complex_projection_forward.1} parent=11 // pred_check
          %p311 = pneg %p188
        $region26: #{complex_projection_forward.1} parent=11 // pred_check_branch
          %313 = sbr.rel (%p311) target = $region28
        $region27: #{complex_projection_forward.1} parent=11 // pred_region
          _
        $region28: #{complex_projection_forward.1} parent=11 // pred_fallthru
          _
        // Predicated region
        $region29: #{complex_projection_forward.1} parent=11 // pred_check
          %p314 = pneg %p209
        $region30: #{complex_projection_forward.1} parent=11 // pred_check_branch
          %316 = sbr.rel (%p314) target = $region32
        $region31: #{complex_projection_forward.1} parent=11 // pred_region
          _
        $region32: #{complex_projection_forward.1} parent=11 // pred_fallthru
          _
      $region12: #{complex_projection_forward.1} parent=5 // pred_fallthru
        _
      %p317 = scmp.lt.s32.totalorder %s26, 2
      // Predicated region
      $region33: #{complex_projection_forward.1} parent=5 // pred_check
        %p318 = pneg %p317
      $region34: #{complex_projection_forward.1} parent=5 // pred_check_branch
        %320 = sbr.rel (%p318) target = $region36
      $region35: #{complex_projection_forward.1} parent=5 // pred_region
        // Predicated region
        $region37: #{complex_projection_forward.1} parent=35 // pred_check
          %p321 = pneg %p46
        $region38: #{complex_projection_forward.1} parent=35 // pred_check_branch
          %323 = sbr.rel (%p321) target = $region40
        $region39: #{complex_projection_forward.1} parent=35 // pred_region
          %s324 = smul.u32 32, %s26
          %p325 = scmp.lt.s32.totalorder %s324, 63
          %s326 = scalar_select %p325, %s324, 63
          %s327 = smul.addr %s326, 8
          %s328 = scalar_lea.vmem %s0, %s327
          %s329 = smul.u32 32, %s26
        $region40: #{complex_projection_forward.1} parent=35 // pred_fallthru
          _
        // Predicated region
        $region41: #{complex_projection_forward.1} parent=35 // pred_check
          %p330 = pneg %p72
        $region42: #{complex_projection_forward.1} parent=35 // pred_check_branch
          %332 = sbr.rel (%p330) target = $region44
        $region43: #{complex_projection_forward.1} parent=35 // pred_region
          %s333 = sand.u32 %s62, 1
          %s334 = scalar_lea.sflag [#allocation3], %s333
          %s335 = sand.u32 %s62, 1
          %s336 = smul.addr %s335, 512
          %s337 = scalar_lea.vmem [#allocation2], %s336
          %s338 = smul.u32 32, %s26
          %s340 = ssub.s32 8192, 8192
          %341 = vsyncadd %s334, %s340
          %s342 = smul.addr %s338, 2
          %s343 = smul.addr %s342, 128
          %s344 = scalar_lea.hbm %s1, %s343
          %s345 = sshll.u32 %s337, 4
          %s346 = int_to_ptr.vmem [resolvable:$true] %s345
          %351 = dma.hbm_to_vmem [thread:$0]  %s344, 8192, %s346, %s334, 256, 256, 16
        $region44: #{complex_projection_forward.1} parent=35 // pred_fallthru
          _
        // Predicated region
        $region45: #{complex_projection_forward.1} parent=35 // pred_check
          %p352 = pneg %p98
        $region46: #{complex_projection_forward.1} parent=35 // pred_check_branch
          %354 = sbr.rel (%p352) target = $region48
        $region47: #{complex_projection_forward.1} parent=35 // pred_region
          %s355 = smul.u32 32, %s26
          %s356 = ssub.s32 65, %s355
          %p357 = scmp.lt.s32.totalorder %s356, 32
          %s358 = scalar_select %p357, %s356, 32
          %s359 = smul.u32 128, %s358
          %p360 = scmp.lt.s32.totalorder %s355, 64
          %s361 = scalar_select %p360, %s355, 64
          %s362 = smul.addr %s361, 8
          %s363 = scalar_lea.vmem %s2, %s362
          %s364 = smul.u32 32, %s26
          %s365 = ssub.s32 65, %s364
          %p366 = scmp.lt.s32.totalorder %s365, 32
          %s367 = scalar_select %p366, %s365, 32
          %s368 = smul.u32 128, %s367
        $region48: #{complex_projection_forward.1} parent=35 // pred_fallthru
          _
      $region36: #{complex_projection_forward.1} parent=5 // pred_fallthru
        _
      %p369 = scmp.le.s32.totalorder 1, %s26
      %p370 = scmp.lt.s32.totalorder %s26, 3
      %p371 = pnand %p369, %p370
      %p372 = pneg %p371
      // Predicated region
      $region49: #{complex_projection_forward.1} parent=5 // pred_check
        _
      $region50: #{complex_projection_forward.1} parent=5 // pred_check_branch
        %374 = sbr.rel (%p371) target = $region52
      $region51: #{complex_projection_forward.1} parent=5 // pred_region
        %s375 = ssub.s32 %s26, 1
        %s376 = sand.u32 %s65, 1
        %s377 = scalar_lea.sflag [#allocation3], %s376
        %s378 = sand.u32 %s65, 1
        %s379 = smul.addr %s378, 512
        %s380 = scalar_lea.vmem [#allocation2], %s379
        // Predicated region
        $region53: #{complex_projection_forward.1} parent=51 // pred_check
          %p381 = pneg %p78
        $region54: #{complex_projection_forward.1} parent=51 // pred_check_branch
          %383 = sbr.rel (%p381) target = $region56
        $region55: #{complex_projection_forward.1} parent=51 // pred_region
          %384 = dma.done %s377, 8192
        $region56: #{complex_projection_forward.1} parent=51 // pred_fallthru
          _
        %s385 = smul.u32 32, %s31
        %p386 = scmp.lt.s32.totalorder %s385, 63
        %s387 = scalar_select %p386, %s385, 63
        %s388 = smul.addr %s387, 8
        %s389 = scalar_lea.vmem %s0, %s388
        %p390 = pneg %p52
        %p391 = pneg %p49
        %s392 = sand.u32 %s65, 1
        %s393 = scalar_lea.sflag [#allocation3], %s392
        %s394 = sand.u32 %s65, 1
        %s395 = smul.addr %s394, 512
        %s396 = scalar_lea.vmem [#allocation2], %s395
        %p397 = pneg %p78
        %p398 = pneg %p75
        %s399 = smul.u32 32, %s31
        %s400 = ssub.s32 65, %s399
        %p401 = scmp.lt.s32.totalorder %s400, 32
        %s402 = scalar_select %p401, %s400, 32
        %s403 = smul.u32 128, %s402
        %p404 = scmp.lt.s32.totalorder %s399, 64
        %s405 = scalar_select %p404, %s399, 64
        %s406 = smul.addr %s405, 8
        %s407 = scalar_lea.vmem %s2, %s406
        %p408 = pneg %p104
        %p409 = pneg %p101
        %p410 = pneg %p125
        %p411 = pneg %p122
        %p412 = pneg %p146
        %p413 = pneg %p143
        %p414 = pneg %p167
        %p415 = pneg %p164
        %p416 = pneg %p188
        %p417 = pneg %p185
        %p418 = pneg %p209
        %p419 = pneg %p206
        %p420 = pneg %p235
        %p421 = pneg %p232
        %s422 = smul.u32 32, %s31
        %p423 = scmp.lt.s32.totalorder %s422, 63
        %s424 = scalar_select %p423, %s422, 63
        %s425 = smul.addr %s424, 2
        %s426 = smul.addr %s425, 8
        %s427 = scalar_lea.vmem %s8, %s426
        %p428 = pneg %p261
        %p429 = pneg %p258
        %s430 = sand.u32 %s248, 1
        %s431 = scalar_lea.sflag [#allocation4], %s430
        %s432 = sand.u32 %s248, 1
        %s433 = smul.addr %s432, 256
        %s434 = scalar_lea.vmem [#allocation5], %s433
        %p435 = pneg %p287
        %p436 = pneg %p284
        %s437 = sand.u32 %s274, 1
        %s438 = scalar_lea.sflag [#allocation7], %s437
        %s439 = sand.u32 %s274, 1
        %s440 = smul.addr %s439, 256
        %s441 = scalar_lea.vmem [#allocation6], %s440
        %s442 = smul.u32 32, %s31
        %p443 = scmp.lt.s32.totalorder %s442, 63
        %s444 = scalar_select %p443, %s442, 63
        %s445 = smul.addr %s444, 8
        %s446 = scalar_lea.vmem %s0, %s445
        %s447 = smul.u32 32, %s31
        %s448 = smul.u32 32, %s31
        %s449 = smul.u32 32, %s31
        %s450 = ssub.s32 65, %s449
        %p451 = scmp.lt.s32.totalorder %s450, 32
        %s452 = scalar_select %p451, %s450, 32
        %s453 = smul.u32 128, %s452
        %p454 = scmp.lt.s32.totalorder %s449, 64
        %s455 = scalar_select %p454, %s449, 64
        %s456 = smul.addr %s455, 8
        %s457 = scalar_lea.vmem %s2, %s456
        %s458 = smul.u32 32, %s31
        %s459 = ssub.s32 65, %s458
        %p460 = scmp.lt.s32.totalorder %s459, 32
        %s461 = scalar_select %p460, %s459, 32
        %s462 = smul.u32 128, %s461
        %s463 = smul.u32 32, %s31
        %p464 = scmp.lt.s32.totalorder %s463, 63
        %s465 = scalar_select %p464, %s463, 63
        %s466 = smul.addr %s465, 2
        %s467 = smul.addr %s466, 8
        %s468 = scalar_lea.vmem %s8, %s467
        %s469 = smul.u32 32, %s31
        %s470 = smul.u32 32, %s31
        %s471 = smul.u32 32, %s31
        %v473 = vld [vmem:[%s7] sm:$0x1]
        %v474 = vld [vmem:[%s7 + $0x1] sm:$0x1]
        %v475 = vld [vmem:[%s7 + $0x2] sm:$0x1]
        %v476 = vld [vmem:[%s7 + $0x3] sm:$0x1]
        %v477 = vld [vmem:[%s446] sm:$0xff]
        %v478 = vld [vmem:[%s446 + $0x8] sm:$0xff]
        %v479 = vld [vmem:[%s446 + $0x10] sm:$0xff]
        %v480 = vld [vmem:[%s446 + $0x18] sm:$0xff]
        %v481 = vld [vmem:[%s446 + $0x20] sm:$0xff]
        %v482 = vld [vmem:[%s446 + $0x28] sm:$0xff]
        %v483 = vld [vmem:[%s446 + $0x30] sm:$0xff]
        %v484 = vld [vmem:[%s446 + $0x38] sm:$0xff]
        %v485 = vld [vmem:[%s446 + $0x40] sm:$0xff]
        %v486 = vld [vmem:[%s446 + $0x48] sm:$0xff]
        %v487 = vld [vmem:[%s446 + $0x50] sm:$0xff]
        %v488 = vld [vmem:[%s446 + $0x58] sm:$0xff]
        %v489 = vld [vmem:[%s446 + $0x60] sm:$0xff]
        %v490 = vld [vmem:[%s446 + $0x68] sm:$0xff]
        %v491 = vld [vmem:[%s446 + $0x70] sm:$0xff]
        %v492 = vld [vmem:[%s446 + $0x78] sm:$0xff]
        %v493 = vld [vmem:[%s446 + $0x80] sm:$0xff]
        %v494 = vld [vmem:[%s446 + $0x88] sm:$0xff]
        %v495 = vld [vmem:[%s446 + $0x90] sm:$0xff]
        %v496 = vld [vmem:[%s446 + $0x98] sm:$0xff]
        %v497 = vld [vmem:[%s446 + $0xa0] sm:$0xff]
        %v498 = vld [vmem:[%s446 + $0xa8] sm:$0xff]
        %v499 = vld [vmem:[%s446 + $0xb0] sm:$0xff]
        %v500 = vld [vmem:[%s446 + $0xb8] sm:$0xff]
        %v501 = vld [vmem:[%s446 + $0xc0] sm:$0xff]
        %v502 = vld [vmem:[%s446 + $0xc8] sm:$0xff]
        %v503 = vld [vmem:[%s446 + $0xd0] sm:$0xff]
        %v504 = vld [vmem:[%s446 + $0xd8] sm:$0xff]
        %v505 = vld [vmem:[%s446 + $0xe0] sm:$0xff]
        %v506 = vld [vmem:[%s446 + $0xe8] sm:$0xff]
        %v507 = vld [vmem:[%s446 + $0xf0] sm:$0xff]
        %v508 = vld [vmem:[%s446 + $0xf8] sm:$0xff]
        %v509 = vpack.c.bf16 %v478, %v477
        %v510 = vpack.c.bf16 %v480, %v479
        %v511 = vpack.c.bf16 %v482, %v481
        %v512 = vpack.c.bf16 %v484, %v483
        %v513 = vpack.c.bf16 %v486, %v485
        %v514 = vpack.c.bf16 %v488, %v487
        %v515 = vpack.c.bf16 %v490, %v489
        %v516 = vpack.c.bf16 %v492, %v491
        %v517 = vpack.c.bf16 %v494, %v493
        %v518 = vpack.c.bf16 %v496, %v495
        %v519 = vpack.c.bf16 %v498, %v497
        %v520 = vpack.c.bf16 %v500, %v499
        %v521 = vpack.c.bf16 %v502, %v501
        %v522 = vpack.c.bf16 %v504, %v503
        %v523 = vpack.c.bf16 %v506, %v505
        %v524 = vpack.c.bf16 %v508, %v507
        %v525 = vld [vmem:[%s3] sm:$0xf]
        %v526 = vld [vmem:[%s3 + $0x4] sm:$0xf]
        %v527 = vld [vmem:[%s3 + $0x8] sm:$0xf]
        %v528 = vld [vmem:[%s3 + $0xc] sm:$0xf]
        %v529 = vld [vmem:[%s3 + $0x10] sm:$0xf]
        %v530 = vld [vmem:[%s3 + $0x14] sm:$0xf]
        %v531 = vld [vmem:[%s3 + $0x18] sm:$0xf]
        %v532 = vld [vmem:[%s3 + $0x1c] sm:$0xf]
        %v533 = vld [vmem:[%s3 + $0x20] sm:$0xf]
        %v534 = vld [vmem:[%s3 + $0x24] sm:$0xf]
        %v535 = vld [vmem:[%s3 + $0x28] sm:$0xf]
        %v536 = vld [vmem:[%s3 + $0x2c] sm:$0xf]
        %v537 = vld [vmem:[%s3 + $0x30] sm:$0xf]
        %v538 = vld [vmem:[%s3 + $0x34] sm:$0xf]
        %v539 = vld [vmem:[%s3 + $0x38] sm:$0xf]
        %v540 = vld [vmem:[%s3 + $0x3c] sm:$0xf]
        %v541 = vlaneseq
        %v542 = vshrl.u32 %v541, 7
        %v543 = vsub.s32 0, %v542
        %v544 = vrot.slane %v473, %v543
        %v561 = vunpack.c.l.b16 %v525
        %v562 = vunpack.c.l.b16 %v526
        %v563 = vunpack.c.l.b16 %v527
        %v564 = vunpack.c.l.b16 %v528
        %v565 = vunpack.c.l.b16 %v529
        %v566 = vunpack.c.l.b16 %v530
        %v567 = vunpack.c.l.b16 %v531
        %v568 = vunpack.c.l.b16 %v532
        %v569 = vunpack.c.l.b16 %v533
        %v570 = vunpack.c.l.b16 %v534
        %v571 = vunpack.c.l.b16 %v535
        %v572 = vunpack.c.l.b16 %v536
        %v573 = vunpack.c.l.b16 %v537
        %v574 = vunpack.c.l.b16 %v538
        %v575 = vunpack.c.l.b16 %v539
        %v576 = vunpack.c.l.b16 %v540
        %v577 = vpack.c.b16 %v562, %v561
        %v578 = vpack.c.b16 %v564, %v563
        %v579 = vpack.c.b16 %v566, %v565
        %v580 = vpack.c.b16 %v568, %v567
        %v581 = vpack.c.b16 %v570, %v569
        %v582 = vpack.c.b16 %v572, %v571
        %v583 = vpack.c.b16 %v574, %v573
        %v584 = vpack.c.b16 %v576, %v575
        %593 = vmatprep.subr.bf16.mxu0 0
        %594 = vmatpush1.bf16.msra.mxu0 %v577
        %595 = vmatprep.subr.bf16.mxu0 0
        %596 = vmatpush1.bf16.msra.mxu0 %v578
        %597 = vmatprep.subr.bf16.mxu0 0
        %598 = vmatpush1.bf16.msra.mxu0 %v579
        %599 = vmatprep.subr.bf16.mxu0 0
        %600 = vmatpush1.bf16.msra.mxu0 %v580
        %601 = vmatprep.subr.bf16.mxu0 0
        %602 = vmatpush1.bf16.msra.mxu0 %v581
        %603 = vmatprep.subr.bf16.mxu0 0
        %604 = vmatpush1.bf16.msra.mxu0 %v582
        %605 = vmatprep.subr.bf16.mxu0 0
        %606 = vmatpush1.bf16.msra.mxu0 %v583
        %607 = vmatprep.subr.bf16.mxu0 0
        %608 = vmatpush1.bf16.msra.mxu0 %v584
        %609 = vmatprep.subr.bf16.mxu0 0
        %610 = vmatpush1.bf16.msra.mxu0 0
        %611 = vmatprep.subr.bf16.mxu0 0
        %612 = vmatpush1.bf16.msra.mxu0 0
        %613 = vmatprep.subr.bf16.mxu0 0
        %614 = vmatpush1.bf16.msra.mxu0 0
        %615 = vmatprep.subr.bf16.mxu0 0
        %616 = vmatpush1.bf16.msra.mxu0 0
        %617 = vmatprep.subr.bf16.mxu0 0
        %618 = vmatpush1.bf16.msra.mxu0 0
        %619 = vmatprep.subr.bf16.mxu0 0
        %620 = vmatpush1.bf16.msra.mxu0 0
        %621 = vmatprep.subr.bf16.mxu0 0
        %622 = vmatpush1.bf16.msra.mxu0 0
        %623 = vmatprep.subr.bf16.mxu0 0
        %624 = vmatpush1.bf16.msra.mxu0 0
        %625 = vmatprep.mubr.bf16.mxu0 0
        %626 = vmatmul.mubr.bf16.gmra.mrb[0].mxu0 %v509
        %v627 = vpop.f32.mrb[0].mxu0
        %v628 = vadd.f32 %v544, %v627
        %v629 = vpop.f32.mrb[0].mxu0
        %v630 = vpop.f32.mrb[0].mxu0
        %v631 = vadd.f32 %v544, %v630
        %v632 = vpop.f32.mrb[0].mxu0
        %633 = vmatprep.mubr.bf16.mxu0 0
        %634 = vmatmul.mubr.bf16.gmra.mrb[0].mxu0 %v510
        %v635 = vpop.f32.mrb[0].mxu0
        %v636 = vadd.f32 %v544, %v635
        %v637 = vpop.f32.mrb[0].mxu0
        %v638 = vpop.f32.mrb[0].mxu0
        %v639 = vadd.f32 %v544, %v638
        %v640 = vpop.f32.mrb[0].mxu0
        %641 = vmatprep.mubr.bf16.mxu0 0
        %642 = vmatmul.mubr.bf16.gmra.mrb[0].mxu0 %v511
        %v643 = vpop.f32.mrb[0].mxu0
        %v644 = vadd.f32 %v544, %v643
        %v645 = vpop.f32.mrb[0].mxu0
        %v646 = vpop.f32.mrb[0].mxu0
        %v647 = vadd.f32 %v544, %v646
        %v648 = vpop.f32.mrb[0].mxu0
        %649 = vmatprep.mubr.bf16.mxu0 0
        %650 = vmatmul.mubr.bf16.gmra.mrb[0].mxu0 %v512
        %v651 = vpop.f32.mrb[0].mxu0
        %v652 = vadd.f32 %v544, %v651
        %v653 = vpop.f32.mrb[0].mxu0
        %v654 = vpop.f32.mrb[0].mxu0
        %v655 = vadd.f32 %v544, %v654
        %v656 = vpop.f32.mrb[0].mxu0
        %657 = vmatprep.mubr.bf16.mxu0 0
        %658 = vmatmul.mubr.bf16.gmra.mrb[0].mxu0 %v513
        %v659 = vpop.f32.mrb[0].mxu0
        %v660 = vadd.f32 %v544, %v659
        %v661 = vpop.f32.mrb[0].mxu0
        %v662 = vpop.f32.mrb[0].mxu0
        %v663 = vadd.f32 %v544, %v662
        %v664 = vpop.f32.mrb[0].mxu0
        %665 = vmatprep.mubr.bf16.mxu0 0
        %666 = vmatmul.mubr.bf16.gmra.mrb[0].mxu0 %v514
        %v667 = vpop.f32.mrb[0].mxu0
        %v668 = vadd.f32 %v544, %v667
        %v669 = vpop.f32.mrb[0].mxu0
        %v670 = vpop.f32.mrb[0].mxu0
        %v671 = vadd.f32 %v544, %v670
        %v672 = vpop.f32.mrb[0].mxu0
        %673 = vmatprep.mubr.bf16.mxu0 0
        %674 = vmatmul.mubr.bf16.gmra.mrb[0].mxu0 %v515
        %v675 = vpop.f32.mrb[0].mxu0
        %v676 = vadd.f32 %v544, %v675
        %v677 = vpop.f32.mrb[0].mxu0
        %v678 = vpop.f32.mrb[0].mxu0
        %v679 = vadd.f32 %v544, %v678
        %v680 = vpop.f32.mrb[0].mxu0
        %681 = vmatprep.mubr.bf16.mxu0 0
        %682 = vmatmul.mubr.bf16.gmra.mrb[0].mxu0 %v516
        %v683 = vpop.f32.mrb[0].mxu0
        %v684 = vadd.f32 %v544, %v683
        %v685 = vpop.f32.mrb[0].mxu0
        %v686 = vpop.f32.mrb[0].mxu0
        %v687 = vadd.f32 %v544, %v686
        %v688 = vpop.f32.mrb[0].mxu0
        %689 = vmatprep.mubr.bf16.mxu0 0
        %690 = vmatmul.mubr.bf16.gmra.mrb[0].mxu0 %v517
        %v691 = vpop.f32.mrb[0].mxu0
        %v692 = vadd.f32 %v544, %v691
        %v693 = vpop.f32.mrb[0].mxu0
        %v694 = vpop.f32.mrb[0].mxu0
        %v695 = vadd.f32 %v544, %v694
        %v696 = vpop.f32.mrb[0].mxu0
        %697 = vmatprep.mubr.bf16.mxu0 0
        %698 = vmatmul.mubr.bf16.gmra.mrb[0].mxu0 %v518
        %v699 = vpop.f32.mrb[0].mxu0
        %v700 = vadd.f32 %v544, %v699
        %v701 = vpop.f32.mrb[0].mxu0
        %v702 = vpop.f32.mrb[0].mxu0
        %v703 = vadd.f32 %v544, %v702
        %v704 = vpop.f32.mrb[0].mxu0
        %705 = vmatprep.mubr.bf16.mxu0 0
        %706 = vmatmul.mubr.bf16.gmra.mrb[0].mxu0 %v519
        %v707 = vpop.f32.mrb[0].mxu0
        %v708 = vadd.f32 %v544, %v707
        %v709 = vpop.f32.mrb[0].mxu0
        %v710 = vpop.f32.mrb[0].mxu0
        %v711 = vadd.f32 %v544, %v710
        %v712 = vpop.f32.mrb[0].mxu0
        %713 = vmatprep.mubr.bf16.mxu0 0
        %714 = vmatmul.mubr.bf16.gmra.mrb[0].mxu0 %v520
        %v715 = vpop.f32.mrb[0].mxu0
        %v716 = vadd.f32 %v544, %v715
        %v717 = vpop.f32.mrb[0].mxu0
        %v718 = vpop.f32.mrb[0].mxu0
        %v719 = vadd.f32 %v544, %v718
        %v720 = vpop.f32.mrb[0].mxu0
        %721 = vmatprep.mubr.bf16.mxu0 0
        %722 = vmatmul.mubr.bf16.gmra.mrb[0].mxu0 %v521
        %v723 = vpop.f32.mrb[0].mxu0
        %v724 = vadd.f32 %v544, %v723
        %v725 = vpop.f32.mrb[0].mxu0
        %v726 = vpop.f32.mrb[0].mxu0
        %v727 = vadd.f32 %v544, %v726
        %v728 = vpop.f32.mrb[0].mxu0
        %729 = vmatprep.mubr.bf16.mxu0 0
        %730 = vmatmul.mubr.bf16.gmra.mrb[0].mxu0 %v522
        %v731 = vpop.f32.mrb[0].mxu0
        %v732 = vadd.f32 %v544, %v731
        %v733 = vpop.f32.mrb[0].mxu0
        %v734 = vpop.f32.mrb[0].mxu0
        %v735 = vadd.f32 %v544, %v734
        %v736 = vpop.f32.mrb[0].mxu0
        %737 = vmatprep.mubr.bf16.mxu0 0
        %738 = vmatmul.mubr.bf16.gmra.mrb[0].mxu0 %v523
        %v739 = vpop.f32.mrb[0].mxu0
        %v740 = vadd.f32 %v544, %v739
        %v741 = vpop.f32.mrb[0].mxu0
        %v742 = vpop.f32.mrb[0].mxu0
        %v743 = vadd.f32 %v544, %v742
        %v744 = vpop.f32.mrb[0].mxu0
        %745 = vmatprep.mubr.bf16.mxu0 0
        %746 = vmatmul.mubr.bf16.gmra.mrb[0].mxu0 %v524
        %v747 = vpop.f32.mrb[0].mxu0
        %v748 = vadd.f32 %v544, %v747
        %v749 = vpop.f32.mrb[0].mxu0
        %v750 = vpop.f32.mrb[0].mxu0
        %v751 = vadd.f32 %v544, %v750
        %v752 = vpop.f32.mrb[0].mxu0
        %753 = vdwg.mxu0
        %v754 = vmax.f32 %v628, 0.0
        %v755 = vmax.f32 %v631, 0.0
        %v756 = vmax.f32 %v636, 0.0
        %v757 = vmax.f32 %v639, 0.0
        %v758 = vmax.f32 %v644, 0.0
        %v759 = vmax.f32 %v647, 0.0
        %v760 = vmax.f32 %v652, 0.0
        %v761 = vmax.f32 %v655, 0.0
        %v762 = vmax.f32 %v660, 0.0
        %v763 = vmax.f32 %v663, 0.0
        %v764 = vmax.f32 %v668, 0.0
        %v765 = vmax.f32 %v671, 0.0
        %v766 = vmax.f32 %v676, 0.0
        %v767 = vmax.f32 %v679, 0.0
        %v768 = vmax.f32 %v684, 0.0
        %v769 = vmax.f32 %v687, 0.0
        %v770 = vmax.f32 %v692, 0.0
        %v771 = vmax.f32 %v695, 0.0
        %v772 = vmax.f32 %v700, 0.0
        %v773 = vmax.f32 %v703, 0.0
        %v774 = vmax.f32 %v708, 0.0
        %v775 = vmax.f32 %v711, 0.0
        %v776 = vmax.f32 %v716, 0.0
        %v777 = vmax.f32 %v719, 0.0
        %v778 = vmax.f32 %v724, 0.0
        %v779 = vmax.f32 %v727, 0.0
        %v780 = vmax.f32 %v732, 0.0
        %v781 = vmax.f32 %v735, 0.0
        %v782 = vmax.f32 %v740, 0.0
        %v783 = vmax.f32 %v743, 0.0
        %v784 = vmax.f32 %v748, 0.0
        %v785 = vmax.f32 %v751, 0.0
        %v786 = vpack.c.bf16 %v755, %v754
        %v787 = vpack.c.bf16 %v757, %v756
        %v788 = vpack.c.bf16 %v759, %v758
        %v789 = vpack.c.bf16 %v761, %v760
        %v790 = vpack.c.bf16 %v763, %v762
        %v791 = vpack.c.bf16 %v765, %v764
        %v792 = vpack.c.bf16 %v767, %v766
        %v793 = vpack.c.bf16 %v769, %v768
        %v794 = vpack.c.bf16 %v771, %v770
        %v795 = vpack.c.bf16 %v773, %v772
        %v796 = vpack.c.bf16 %v775, %v774
        %v797 = vpack.c.bf16 %v777, %v776
        %v798 = vpack.c.bf16 %v779, %v778
        %v799 = vpack.c.bf16 %v781, %v780
        %v800 = vpack.c.bf16 %v783, %v782
        %v801 = vpack.c.bf16 %v785, %v784
        %v802 = vld [vmem:[%s4] sm:$0xf]
        %v803 = vld [vmem:[%s4 + $0x4] sm:$0xf]
        %v804 = vld [vmem:[%s4 + $0x8] sm:$0xf]
        %v805 = vld [vmem:[%s4 + $0xc] sm:$0xf]
        %v806 = vld [vmem:[%s4 + $0x10] sm:$0xf]
        %v807 = vld [vmem:[%s4 + $0x14] sm:$0xf]
        %v808 = vld [vmem:[%s4 + $0x18] sm:$0xf]
        %v809 = vld [vmem:[%s4 + $0x1c] sm:$0xf]
        %v810 = vld [vmem:[%s4 + $0x20] sm:$0xf]
        %v811 = vld [vmem:[%s4 + $0x24] sm:$0xf]
        %v812 = vld [vmem:[%s4 + $0x28] sm:$0xf]
        %v813 = vld [vmem:[%s4 + $0x2c] sm:$0xf]
        %v814 = vld [vmem:[%s4 + $0x30] sm:$0xf]
        %v815 = vld [vmem:[%s4 + $0x34] sm:$0xf]
        %v816 = vld [vmem:[%s4 + $0x38] sm:$0xf]
        %v817 = vld [vmem:[%s4 + $0x3c] sm:$0xf]
        %v818 = vlaneseq
        %v819 = vshrl.u32 %v818, 7
        %v820 = vsub.s32 0, %v819
        %v821 = vrot.slane %v474, %v820
        %v838 = vunpack.c.l.b16 %v802
        %v839 = vunpack.c.l.b16 %v803
        %v840 = vunpack.c.l.b16 %v804
        %v841 = vunpack.c.l.b16 %v805
        %v842 = vunpack.c.l.b16 %v806
        %v843 = vunpack.c.l.b16 %v807
        %v844 = vunpack.c.l.b16 %v808
        %v845 = vunpack.c.l.b16 %v809
        %v846 = vunpack.c.l.b16 %v810
        %v847 = vunpack.c.l.b16 %v811
        %v848 = vunpack.c.l.b16 %v812
        %v849 = vunpack.c.l.b16 %v813
        %v850 = vunpack.c.l.b16 %v814
        %v851 = vunpack.c.l.b16 %v815
        %v852 = vunpack.c.l.b16 %v816
        %v853 = vunpack.c.l.b16 %v817
        %v854 = vpack.c.b16 %v839, %v838
        %v855 = vpack.c.b16 %v841, %v840
        %v856 = vpack.c.b16 %v843, %v842
        %v857 = vpack.c.b16 %v845, %v844
        %v858 = vpack.c.b16 %v847, %v846
        %v859 = vpack.c.b16 %v849, %v848
        %v860 = vpack.c.b16 %v851, %v850
        %v861 = vpack.c.b16 %v853, %v852
        %870 = vmatprep.subr.bf16.mxu0 0
        %871 = vmatpush1.bf16.msra.mxu0 %v854
        %872 = vmatprep.subr.bf16.mxu0 0
        %873 = vmatpush1.bf16.msra.mxu0 %v855
        %874 = vmatprep.subr.bf16.mxu0 0
        %875 = vmatpush1.bf16.msra.mxu0 %v856
        %876 = vmatprep.subr.bf16.mxu0 0
        %877 = vmatpush1.bf16.msra.mxu0 %v857
        %878 = vmatprep.subr.bf16.mxu0 0
        %879 = vmatpush1.bf16.msra.mxu0 %v858
        %880 = vmatprep.subr.bf16.mxu0 0
        %881 = vmatpush1.bf16.msra.mxu0 %v859
        %882 = vmatprep.subr.bf16.mxu0 0
        %883 = vmatpush1.bf16.msra.mxu0 %v860
        %884 = vmatprep.subr.bf16.mxu0 0
        %885 = vmatpush1.bf16.msra.mxu0 %v861
        %886 = vmatprep.subr.bf16.mxu0 0
        %887 = vmatpush1.bf16.msra.mxu0 0
        %888 = vmatprep.subr.bf16.mxu0 0
        %889 = vmatpush1.bf16.msra.mxu0 0
        %890 = vmatprep.subr.bf16.mxu0 0
        %891 = vmatpush1.bf16.msra.mxu0 0
        %892 = vmatprep.subr.bf16.mxu0 0
        %893 = vmatpush1.bf16.msra.mxu0 0
        %894 = vmatprep.subr.bf16.mxu0 0
        %895 = vmatpush1.bf16.msra.mxu0 0
        %896 = vmatprep.subr.bf16.mxu0 0
        %897 = vmatpush1.bf16.msra.mxu0 0
        %898 = vmatprep.subr.bf16.mxu0 0
        %899 = vmatpush1.bf16.msra.mxu0 0
        %900 = vmatprep.subr.bf16.mxu0 0
        %901 = vmatpush1.bf16.msra.mxu0 0
        %902 = vmatprep.mubr.bf16.mxu0 0
        %903 = vmatmul.mubr.bf16.gmra.mrb[0].mxu0 %v786
        %v904 = vpop.f32.mrb[0].mxu0
        %v905 = vadd.f32 %v821, %v904
        %v906 = vpop.f32.mrb[0].mxu0
        %v907 = vpop.f32.mrb[0].mxu0
        %v908 = vadd.f32 %v821, %v907
        %v909 = vpop.f32.mrb[0].mxu0
        %910 = vmatprep.mubr.bf16.mxu0 0
        %911 = vmatmul.mubr.bf16.gmra.mrb[0].mxu0 %v787
        %v912 = vpop.f32.mrb[0].mxu0
        %v913 = vadd.f32 %v821, %v912
        %v914 = vpop.f32.mrb[0].mxu0
        %v915 = vpop.f32.mrb[0].mxu0
        %v916 = vadd.f32 %v821, %v915
        %v917 = vpop.f32.mrb[0].mxu0
        %918 = vmatprep.mubr.bf16.mxu0 0
        %919 = vmatmul.mubr.bf16.gmra.mrb[0].mxu0 %v788
        %v920 = vpop.f32.mrb[0].mxu0
        %v921 = vadd.f32 %v821, %v920
        %v922 = vpop.f32.mrb[0].mxu0
        %v923 = vpop.f32.mrb[0].mxu0
        %v924 = vadd.f32 %v821, %v923
        %v925 = vpop.f32.mrb[0].mxu0
        %926 = vmatprep.mubr.bf16.mxu0 0
        %927 = vmatmul.mubr.bf16.gmra.mrb[0].mxu0 %v789
        %v928 = vpop.f32.mrb[0].mxu0
        %v929 = vadd.f32 %v821, %v928
        %v930 = vpop.f32.mrb[0].mxu0
        %v931 = vpop.f32.mrb[0].mxu0
        %v932 = vadd.f32 %v821, %v931
        %v933 = vpop.f32.mrb[0].mxu0
        %934 = vmatprep.mubr.bf16.mxu0 0
        %935 = vmatmul.mubr.bf16.gmra.mrb[0].mxu0 %v790
        %v936 = vpop.f32.mrb[0].mxu0
        %v937 = vadd.f32 %v821, %v936
        %v938 = vpop.f32.mrb[0].mxu0
        %v939 = vpop.f32.mrb[0].mxu0
        %v940 = vadd.f32 %v821, %v939
        %v941 = vpop.f32.mrb[0].mxu0
        %942 = vmatprep.mubr.bf16.mxu0 0
        %943 = vmatmul.mubr.bf16.gmra.mrb[0].mxu0 %v791
        %v944 = vpop.f32.mrb[0].mxu0
        %v945 = vadd.f32 %v821, %v944
        %v946 = vpop.f32.mrb[0].mxu0
        %v947 = vpop.f32.mrb[0].mxu0
        %v948 = vadd.f32 %v821, %v947
        %v949 = vpop.f32.mrb[0].mxu0
        %950 = vmatprep.mubr.bf16.mxu0 0
        %951 = vmatmul.mubr.bf16.gmra.mrb[0].mxu0 %v792
        %v952 = vpop.f32.mrb[0].mxu0
        %v953 = vadd.f32 %v821, %v952
        %v954 = vpop.f32.mrb[0].mxu0
        %v955 = vpop.f32.mrb[0].mxu0
        %v956 = vadd.f32 %v821, %v955
        %v957 = vpop.f32.mrb[0].mxu0
        %958 = vmatprep.mubr.bf16.mxu0 0
        %959 = vmatmul.mubr.bf16.gmra.mrb[0].mxu0 %v793
        %v960 = vpop.f32.mrb[0].mxu0
        %v961 = vadd.f32 %v821, %v960
        %v962 = vpop.f32.mrb[0].mxu0
        %v963 = vpop.f32.mrb[0].mxu0
        %v964 = vadd.f32 %v821, %v963
        %v965 = vpop.f32.mrb[0].mxu0
        %966 = vmatprep.mubr.bf16.mxu0 0
        %967 = vmatmul.mubr.bf16.gmra.mrb[0].mxu0 %v794
        %v968 = vpop.f32.mrb[0].mxu0
        %v969 = vadd.f32 %v821, %v968
        %v970 = vpop.f32.mrb[0].mxu0
        %v971 = vpop.f32.mrb[0].mxu0
        %v972 = vadd.f32 %v821, %v971
        %v973 = vpop.f32.mrb[0].mxu0
        %974 = vmatprep.mubr.bf16.mxu0 0
        %975 = vmatmul.mubr.bf16.gmra.mrb[0].mxu0 %v795
        %v976 = vpop.f32.mrb[0].mxu0
        %v977 = vadd.f32 %v821, %v976
        %v978 = vpop.f32.mrb[0].mxu0
        %v979 = vpop.f32.mrb[0].mxu0
        %v980 = vadd.f32 %v821, %v979
        %v981 = vpop.f32.mrb[0].mxu0
        %982 = vmatprep.mubr.bf16.mxu0 0
        %983 = vmatmul.mubr.bf16.gmra.mrb[0].mxu0 %v796
        %v984 = vpop.f32.mrb[0].mxu0
        %v985 = vadd.f32 %v821, %v984
        %v986 = vpop.f32.mrb[0].mxu0
        %v987 = vpop.f32.mrb[0].mxu0
        %v988 = vadd.f32 %v821, %v987
        %v989 = vpop.f32.mrb[0].mxu0
        %990 = vmatprep.mubr.bf16.mxu0 0
        %991 = vmatmul.mubr.bf16.gmra.mrb[0].mxu0 %v797
        %v992 = vpop.f32.mrb[0].mxu0
        %v993 = vadd.f32 %v821, %v992
        %v994 = vpop.f32.mrb[0].mxu0
        %v995 = vpop.f32.mrb[0].mxu0
        %v996 = vadd.f32 %v821, %v995
        %v997 = vpop.f32.mrb[0].mxu0
        %998 = vmatprep.mubr.bf16.mxu0 0
        %999 = vmatmul.mubr.bf16.gmra.mrb[0].mxu0 %v798
        %v1000 = vpop.f32.mrb[0].mxu0
        %v1001 = vadd.f32 %v821, %v1000
        %v1002 = vpop.f32.mrb[0].mxu0
        %v1003 = vpop.f32.mrb[0].mxu0
        %v1004 = vadd.f32 %v821, %v1003
        %v1005 = vpop.f32.mrb[0].mxu0
        %1006 = vmatprep.mubr.bf16.mxu0 0
        %1007 = vmatmul.mubr.bf16.gmra.mrb[0].mxu0 %v799
        %v1008 = vpop.f32.mrb[0].mxu0
        %v1009 = vadd.f32 %v821, %v1008
        %v1010 = vpop.f32.mrb[0].mxu0
        %v1011 = vpop.f32.mrb[0].mxu0
        %v1012 = vadd.f32 %v821, %v1011
        %v1013 = vpop.f32.mrb[0].mxu0
        %1014 = vmatprep.mubr.bf16.mxu0 0
        %1015 = vmatmul.mubr.bf16.gmra.mrb[0].mxu0 %v800
        %v1016 = vpop.f32.mrb[0].mxu0
        %v1017 = vadd.f32 %v821, %v1016
        %v1018 = vpop.f32.mrb[0].mxu0
        %v1019 = vpop.f32.mrb[0].mxu0
        %v1020 = vadd.f32 %v821, %v1019
        %v1021 = vpop.f32.mrb[0].mxu0
        %1022 = vmatprep.mubr.bf16.mxu0 0
        %1023 = vmatmul.mubr.bf16.gmra.mrb[0].mxu0 %v801
        %v1024 = vpop.f32.mrb[0].mxu0
        %v1025 = vadd.f32 %v821, %v1024
        %v1026 = vpop.f32.mrb[0].mxu0
        %v1027 = vpop.f32.mrb[0].mxu0
        %v1028 = vadd.f32 %v821, %v1027
        %v1029 = vpop.f32.mrb[0].mxu0
        %1030 = vdwg.mxu0
        %v1031 = vld [vmem:[%s380] sm:$0xff]
        %v1032 = vld [vmem:[%s380 + $0x8] sm:$0xff]
        %v1033 = vld [vmem:[%s380 + $0x10] sm:$0xff]
        %v1034 = vld [vmem:[%s380 + $0x18] sm:$0xff]
        %v1035 = vld [vmem:[%s380 + $0x20] sm:$0xff]
        %v1036 = vld [vmem:[%s380 + $0x28] sm:$0xff]
        %v1037 = vld [vmem:[%s380 + $0x30] sm:$0xff]
        %v1038 = vld [vmem:[%s380 + $0x38] sm:$0xff]
        %v1039 = vld [vmem:[%s380 + $0x40] sm:$0xff]
        %v1040 = vld [vmem:[%s380 + $0x48] sm:$0xff]
        %v1041 = vld [vmem:[%s380 + $0x50] sm:$0xff]
        %v1042 = vld [vmem:[%s380 + $0x58] sm:$0xff]
        %v1043 = vld [vmem:[%s380 + $0x60] sm:$0xff]
        %v1044 = vld [vmem:[%s380 + $0x68] sm:$0xff]
        %v1045 = vld [vmem:[%s380 + $0x70] sm:$0xff]
        %v1046 = vld [vmem:[%s380 + $0x78] sm:$0xff]
        %v1047 = vld [vmem:[%s380 + $0x80] sm:$0xff]
        %v1048 = vld [vmem:[%s380 + $0x88] sm:$0xff]
        %v1049 = vld [vmem:[%s380 + $0x90] sm:$0xff]
        %v1050 = vld [vmem:[%s380 + $0x98] sm:$0xff]
        %v1051 = vld [vmem:[%s380 + $0xa0] sm:$0xff]
        %v1052 = vld [vmem:[%s380 + $0xa8] sm:$0xff]
        %v1053 = vld [vmem:[%s380 + $0xb0] sm:$0xff]
        %v1054 = vld [vmem:[%s380 + $0xb8] sm:$0xff]
        %v1055 = vld [vmem:[%s380 + $0xc0] sm:$0xff]
        %v1056 = vld [vmem:[%s380 + $0xc8] sm:$0xff]
        %v1057 = vld [vmem:[%s380 + $0xd0] sm:$0xff]
        %v1058 = vld [vmem:[%s380 + $0xd8] sm:$0xff]
        %v1059 = vld [vmem:[%s380 + $0xe0] sm:$0xff]
        %v1060 = vld [vmem:[%s380 + $0xe8] sm:$0xff]
        %v1061 = vld [vmem:[%s380 + $0xf0] sm:$0xff]
        %v1062 = vld [vmem:[%s380 + $0xf8] sm:$0xff]
        %v1063 = vld [vmem:[%s380 + $0x100] sm:$0xff]
        %v1064 = vld [vmem:[%s380 + $0x108] sm:$0xff]
        %v1065 = vld [vmem:[%s380 + $0x110] sm:$0xff]
        %v1066 = vld [vmem:[%s380 + $0x118] sm:$0xff]
        %v1067 = vld [vmem:[%s380 + $0x120] sm:$0xff]
        %v1068 = vld [vmem:[%s380 + $0x128] sm:$0xff]
        %v1069 = vld [vmem:[%s380 + $0x130] sm:$0xff]
        %v1070 = vld [vmem:[%s380 + $0x138] sm:$0xff]
        %v1071 = vld [vmem:[%s380 + $0x140] sm:$0xff]
        %v1072 = vld [vmem:[%s380 + $0x148] sm:$0xff]
        %v1073 = vld [vmem:[%s380 + $0x150] sm:$0xff]
        %v1074 = vld [vmem:[%s380 + $0x158] sm:$0xff]
        %v1075 = vld [vmem:[%s380 + $0x160] sm:$0xff]
        %v1076 = vld [vmem:[%s380 + $0x168] sm:$0xff]
        %v1077 = vld [vmem:[%s380 + $0x170] sm:$0xff]
        %v1078 = vld [vmem:[%s380 + $0x178] sm:$0xff]
        %v1079 = vld [vmem:[%s380 + $0x180] sm:$0xff]
        %v1080 = vld [vmem:[%s380 + $0x188] sm:$0xff]
        %v1081 = vld [vmem:[%s380 + $0x190] sm:$0xff]
        %v1082 = vld [vmem:[%s380 + $0x198] sm:$0xff]
        %v1083 = vld [vmem:[%s380 + $0x1a0] sm:$0xff]
        %v1084 = vld [vmem:[%s380 + $0x1a8] sm:$0xff]
        %v1085 = vld [vmem:[%s380 + $0x1b0] sm:$0xff]
        %v1086 = vld [vmem:[%s380 + $0x1b8] sm:$0xff]
        %v1087 = vld [vmem:[%s380 + $0x1c0] sm:$0xff]
        %v1088 = vld [vmem:[%s380 + $0x1c8] sm:$0xff]
        %v1089 = vld [vmem:[%s380 + $0x1d0] sm:$0xff]
        %v1090 = vld [vmem:[%s380 + $0x1d8] sm:$0xff]
        %v1091 = vld [vmem:[%s380 + $0x1e0] sm:$0xff]
        %v1092 = vld [vmem:[%s380 + $0x1e8] sm:$0xff]
        %v1093 = vld [vmem:[%s380 + $0x1f0] sm:$0xff]
        %v1094 = vld [vmem:[%s380 + $0x1f8] sm:$0xff]
        %v1095 = vpack.c.bf16 %v1033, %v1031
        %v1096 = vpack.c.bf16 %v1034, %v1032
        %v1097 = vpack.c.bf16 %v1037, %v1035
        %v1098 = vpack.c.bf16 %v1038, %v1036
        %v1099 = vpack.c.bf16 %v1041, %v1039
        %v1100 = vpack.c.bf16 %v1042, %v1040
        %v1101 = vpack.c.bf16 %v1045, %v1043
        %v1102 = vpack.c.bf16 %v1046, %v1044
        %v1103 = vpack.c.bf16 %v1049, %v1047
        %v1104 = vpack.c.bf16 %v1050, %v1048
        %v1105 = vpack.c.bf16 %v1053, %v1051
        %v1106 = vpack.c.bf16 %v1054, %v1052
        %v1107 = vpack.c.bf16 %v1057, %v1055
        %v1108 = vpack.c.bf16 %v1058, %v1056
        %v1109 = vpack.c.bf16 %v1061, %v1059
        %v1110 = vpack.c.bf16 %v1062, %v1060
        %v1111 = vpack.c.bf16 %v1065, %v1063
        %v1112 = vpack.c.bf16 %v1066, %v1064
        %v1113 = vpack.c.bf16 %v1069, %v1067
        %v1114 = vpack.c.bf16 %v1070, %v1068
        %v1115 = vpack.c.bf16 %v1073, %v1071
        %v1116 = vpack.c.bf16 %v1074, %v1072
        %v1117 = vpack.c.bf16 %v1077, %v1075
        %v1118 = vpack.c.bf16 %v1078, %v1076
        %v1119 = vpack.c.bf16 %v1081, %v1079
        %v1120 = vpack.c.bf16 %v1082, %v1080
        %v1121 = vpack.c.bf16 %v1085, %v1083
        %v1122 = vpack.c.bf16 %v1086, %v1084
        %v1123 = vpack.c.bf16 %v1089, %v1087
        %v1124 = vpack.c.bf16 %v1090, %v1088
        %v1125 = vpack.c.bf16 %v1093, %v1091
        %v1126 = vpack.c.bf16 %v1094, %v1092
        %v1127 = vld [vmem:[%s5] sm:$0xf]
        %v1128 = vld [vmem:[%s5 + $0x4] sm:$0xf]
        %v1129 = vld [vmem:[%s5 + $0x8] sm:$0xf]
        %v1130 = vld [vmem:[%s5 + $0xc] sm:$0xf]
        %v1131 = vld [vmem:[%s5 + $0x10] sm:$0xf]
        %v1132 = vld [vmem:[%s5 + $0x14] sm:$0xf]
        %v1133 = vld [vmem:[%s5 + $0x18] sm:$0xf]
        %v1134 = vld [vmem:[%s5 + $0x1c] sm:$0xf]
        %v1135 = vld [vmem:[%s5 + $0x20] sm:$0xf]
        %v1136 = vld [vmem:[%s5 + $0x24] sm:$0xf]
        %v1137 = vld [vmem:[%s5 + $0x28] sm:$0xf]
        %v1138 = vld [vmem:[%s5 + $0x2c] sm:$0xf]
        %v1139 = vld [vmem:[%s5 + $0x30] sm:$0xf]
        %v1140 = vld [vmem:[%s5 + $0x34] sm:$0xf]
        %v1141 = vld [vmem:[%s5 + $0x38] sm:$0xf]
        %v1142 = vld [vmem:[%s5 + $0x3c] sm:$0xf]
        %v1143 = vld [vmem:[%s5 + $0x40] sm:$0xf]
        %v1144 = vld [vmem:[%s5 + $0x44] sm:$0xf]
        %v1145 = vld [vmem:[%s5 + $0x48] sm:$0xf]
        %v1146 = vld [vmem:[%s5 + $0x4c] sm:$0xf]
        %v1147 = vld [vmem:[%s5 + $0x50] sm:$0xf]
        %v1148 = vld [vmem:[%s5 + $0x54] sm:$0xf]
        %v1149 = vld [vmem:[%s5 + $0x58] sm:$0xf]
        %v1150 = vld [vmem:[%s5 + $0x5c] sm:$0xf]
        %v1151 = vld [vmem:[%s5 + $0x60] sm:$0xf]
        %v1152 = vld [vmem:[%s5 + $0x64] sm:$0xf]
        %v1153 = vld [vmem:[%s5 + $0x68] sm:$0xf]
        %v1154 = vld [vmem:[%s5 + $0x6c] sm:$0xf]
        %v1155 = vld [vmem:[%s5 + $0x70] sm:$0xf]
        %v1156 = vld [vmem:[%s5 + $0x74] sm:$0xf]
        %v1157 = vld [vmem:[%s5 + $0x78] sm:$0xf]
        %v1158 = vld [vmem:[%s5 + $0x7c] sm:$0xf]
        %v1159 = vlaneseq
        %v1160 = vshrl.u32 %v1159, 7
        %v1161 = vsub.s32 0, %v1160
        %v1162 = vrot.slane %v475, %v1161
        %v1195 = vunpack.c.l.b16 %v1127
        %v1196 = vunpack.c.l.b16 %v1128
        %v1197 = vunpack.c.l.b16 %v1129
        %v1198 = vunpack.c.l.b16 %v1130
        %v1199 = vunpack.c.l.b16 %v1131
        %v1200 = vunpack.c.l.b16 %v1132
        %v1201 = vunpack.c.l.b16 %v1133
        %v1202 = vunpack.c.l.b16 %v1134
        %v1203 = vunpack.c.l.b16 %v1135
        %v1204 = vunpack.c.l.b16 %v1136
        %v1205 = vunpack.c.l.b16 %v1137
        %v1206 = vunpack.c.l.b16 %v1138
        %v1207 = vunpack.c.l.b16 %v1139
        %v1208 = vunpack.c.l.b16 %v1140
        %v1209 = vunpack.c.l.b16 %v1141
        %v1210 = vunpack.c.l.b16 %v1142
        %v1211 = vunpack.c.l.b16 %v1143
        %v1212 = vunpack.c.l.b16 %v1144
        %v1213 = vunpack.c.l.b16 %v1145
        %v1214 = vunpack.c.l.b16 %v1146
        %v1215 = vunpack.c.l.b16 %v1147
        %v1216 = vunpack.c.l.b16 %v1148
        %v1217 = vunpack.c.l.b16 %v1149
        %v1218 = vunpack.c.l.b16 %v1150
        %v1219 = vunpack.c.l.b16 %v1151
        %v1220 = vunpack.c.l.b16 %v1152
        %v1221 = vunpack.c.l.b16 %v1153
        %v1222 = vunpack.c.l.b16 %v1154
        %v1223 = vunpack.c.l.b16 %v1155
        %v1224 = vunpack.c.l.b16 %v1156
        %v1225 = vunpack.c.l.b16 %v1157
        %v1226 = vunpack.c.l.b16 %v1158
        %v1227 = vpack.c.b16 %v1196, %v1195
        %v1228 = vpack.c.b16 %v1198, %v1197
        %v1229 = vpack.c.b16 %v1200, %v1199
        %v1230 = vpack.c.b16 %v1202, %v1201
        %v1231 = vpack.c.b16 %v1204, %v1203
        %v1232 = vpack.c.b16 %v1206, %v1205
        %v1233 = vpack.c.b16 %v1208, %v1207
        %v1234 = vpack.c.b16 %v1210, %v1209
        %v1235 = vpack.c.b16 %v1212, %v1211
        %v1236 = vpack.c.b16 %v1214, %v1213
        %v1237 = vpack.c.b16 %v1216, %v1215
        %v1238 = vpack.c.b16 %v1218, %v1217
        %v1239 = vpack.c.b16 %v1220, %v1219
        %v1240 = vpack.c.b16 %v1222, %v1221
        %v1241 = vpack.c.b16 %v1224, %v1223
        %v1242 = vpack.c.b16 %v1226, %v1225
        %1259 = vmatprep.subr.bf16.mxu0 0
        %1260 = vmatpush1.bf16.msra.mxu0 %v1227
        %1261 = vmatprep.subr.bf16.mxu0 0
        %1262 = vmatpush1.bf16.msra.mxu0 %v1228
        %1263 = vmatprep.subr.bf16.mxu0 0
        %1264 = vmatpush1.bf16.msra.mxu0 %v1229
        %1265 = vmatprep.subr.bf16.mxu0 0
        %1266 = vmatpush1.bf16.msra.mxu0 %v1230
        %1267 = vmatprep.subr.bf16.mxu0 0
        %1268 = vmatpush1.bf16.msra.mxu0 %v1231
        %1269 = vmatprep.subr.bf16.mxu0 0
        %1270 = vmatpush1.bf16.msra.mxu0 %v1232
        %1271 = vmatprep.subr.bf16.mxu0 0
        %1272 = vmatpush1.bf16.msra.mxu0 %v1233
        %1273 = vmatprep.subr.bf16.mxu0 0
        %1274 = vmatpush1.bf16.msra.mxu0 %v1234
        %1275 = vmatprep.subr.bf16.mxu0 0
        %1276 = vmatpush1.bf16.msra.mxu0 %v1235
        %1277 = vmatprep.subr.bf16.mxu0 0
        %1278 = vmatpush1.bf16.msra.mxu0 %v1236
        %1279 = vmatprep.subr.bf16.mxu0 0
        %1280 = vmatpush1.bf16.msra.mxu0 %v1237
        %1281 = vmatprep.subr.bf16.mxu0 0
        %1282 = vmatpush1.bf16.msra.mxu0 %v1238
        %1283 = vmatprep.subr.bf16.mxu0 0
        %1284 = vmatpush1.bf16.msra.mxu0 %v1239
        %1285 = vmatprep.subr.bf16.mxu0 0
        %1286 = vmatpush1.bf16.msra.mxu0 %v1240
        %1287 = vmatprep.subr.bf16.mxu0 0
        %1288 = vmatpush1.bf16.msra.mxu0 %v1241
        %1289 = vmatprep.subr.bf16.mxu0 0
        %1290 = vmatpush1.bf16.msra.mxu0 %v1242
        %1291 = vmatprep.mubr.bf16.mxu0 %v1096
        %1292 = vmatmul.mubr.bf16.gmra.mrb[0].mxu0 %v1095
        %v1293 = vpop.f32.mrb[0].mxu0
        %v1294 = vadd.f32 %v1162, %v1293
        %v1295 = vpop.f32.mrb[0].mxu0
        %v1296 = vpop.f32.mrb[0].mxu0
        %v1297 = vadd.f32 %v1162, %v1296
        %v1298 = vpop.f32.mrb[0].mxu0
        %1299 = vmatprep.mubr.bf16.mxu0 %v1098
        %1300 = vmatmul.mubr.bf16.gmra.mrb[0].mxu0 %v1097
        %v1301 = vpop.f32.mrb[0].mxu0
        %v1302 = vadd.f32 %v1162, %v1301
        %v1303 = vpop.f32.mrb[0].mxu0
        %v1304 = vpop.f32.mrb[0].mxu0
        %v1305 = vadd.f32 %v1162, %v1304
        %v1306 = vpop.f32.mrb[0].mxu0
        %1307 = vmatprep.mubr.bf16.mxu0 %v1100
        %1308 = vmatmul.mubr.bf16.gmra.mrb[0].mxu0 %v1099
        %v1309 = vpop.f32.mrb[0].mxu0
        %v1310 = vadd.f32 %v1162, %v1309
        %v1311 = vpop.f32.mrb[0].mxu0
        %v1312 = vpop.f32.mrb[0].mxu0
        %v1313 = vadd.f32 %v1162, %v1312
        %v1314 = vpop.f32.mrb[0].mxu0
        %1315 = vmatprep.mubr.bf16.mxu0 %v1102
        %1316 = vmatmul.mubr.bf16.gmra.mrb[0].mxu0 %v1101
        %v1317 = vpop.f32.mrb[0].mxu0
        %v1318 = vadd.f32 %v1162, %v1317
        %v1319 = vpop.f32.mrb[0].mxu0
        %v1320 = vpop.f32.mrb[0].mxu0
        %v1321 = vadd.f32 %v1162, %v1320
        %v1322 = vpop.f32.mrb[0].mxu0
        %1323 = vmatprep.mubr.bf16.mxu0 %v1104
        %1324 = vmatmul.mubr.bf16.gmra.mrb[0].mxu0 %v1103
        %v1325 = vpop.f32.mrb[0].mxu0
        %v1326 = vadd.f32 %v1162, %v1325
        %v1327 = vpop.f32.mrb[0].mxu0
        %v1328 = vpop.f32.mrb[0].mxu0
        %v1329 = vadd.f32 %v1162, %v1328
        %v1330 = vpop.f32.mrb[0].mxu0
        %1331 = vmatprep.mubr.bf16.mxu0 %v1106
        %1332 = vmatmul.mubr.bf16.gmra.mrb[0].mxu0 %v1105
        %v1333 = vpop.f32.mrb[0].mxu0
        %v1334 = vadd.f32 %v1162, %v1333
        %v1335 = vpop.f32.mrb[0].mxu0
        %v1336 = vpop.f32.mrb[0].mxu0
        %v1337 = vadd.f32 %v1162, %v1336
        %v1338 = vpop.f32.mrb[0].mxu0
        %1339 = vmatprep.mubr.bf16.mxu0 %v1108
        %1340 = vmatmul.mubr.bf16.gmra.mrb[0].mxu0 %v1107
        %v1341 = vpop.f32.mrb[0].mxu0
        %v1342 = vadd.f32 %v1162, %v1341
        %v1343 = vpop.f32.mrb[0].mxu0
        %v1344 = vpop.f32.mrb[0].mxu0
        %v1345 = vadd.f32 %v1162, %v1344
        %v1346 = vpop.f32.mrb[0].mxu0
        %1347 = vmatprep.mubr.bf16.mxu0 %v1110
        %1348 = vmatmul.mubr.bf16.gmra.mrb[0].mxu0 %v1109
        %v1349 = vpop.f32.mrb[0].mxu0
        %v1350 = vadd.f32 %v1162, %v1349
        %v1351 = vpop.f32.mrb[0].mxu0
        %v1352 = vpop.f32.mrb[0].mxu0
        %v1353 = vadd.f32 %v1162, %v1352
        %v1354 = vpop.f32.mrb[0].mxu0
        %1355 = vmatprep.mubr.bf16.mxu0 %v1112
        %1356 = vmatmul.mubr.bf16.gmra.mrb[0].mxu0 %v1111
        %v1357 = vpop.f32.mrb[0].mxu0
        %v1358 = vadd.f32 %v1162, %v1357
        %v1359 = vpop.f32.mrb[0].mxu0
        %v1360 = vpop.f32.mrb[0].mxu0
        %v1361 = vadd.f32 %v1162, %v1360
        %v1362 = vpop.f32.mrb[0].mxu0
        %1363 = vmatprep.mubr.bf16.mxu0 %v1114
        %1364 = vmatmul.mubr.bf16.gmra.mrb[0].mxu0 %v1113
        %v1365 = vpop.f32.mrb[0].mxu0
        %v1366 = vadd.f32 %v1162, %v1365
        %v1367 = vpop.f32.mrb[0].mxu0
        %v1368 = vpop.f32.mrb[0].mxu0
        %v1369 = vadd.f32 %v1162, %v1368
        %v1370 = vpop.f32.mrb[0].mxu0
        %1371 = vmatprep.mubr.bf16.mxu0 %v1116
        %1372 = vmatmul.mubr.bf16.gmra.mrb[0].mxu0 %v1115
        %v1373 = vpop.f32.mrb[0].mxu0
        %v1374 = vadd.f32 %v1162, %v1373
        %v1375 = vpop.f32.mrb[0].mxu0
        %v1376 = vpop.f32.mrb[0].mxu0
        %v1377 = vadd.f32 %v1162, %v1376
        %v1378 = vpop.f32.mrb[0].mxu0
        %1379 = vmatprep.mubr.bf16.mxu0 %v1118
        %1380 = vmatmul.mubr.bf16.gmra.mrb[0].mxu0 %v1117
        %v1381 = vpop.f32.mrb[0].mxu0
        %v1382 = vadd.f32 %v1162, %v1381
        %v1383 = vpop.f32.mrb[0].mxu0
        %v1384 = vpop.f32.mrb[0].mxu0
        %v1385 = vadd.f32 %v1162, %v1384
        %v1386 = vpop.f32.mrb[0].mxu0
        %1387 = vmatprep.mubr.bf16.mxu0 %v1120
        %1388 = vmatmul.mubr.bf16.gmra.mrb[0].mxu0 %v1119
        %v1389 = vpop.f32.mrb[0].mxu0
        %v1390 = vadd.f32 %v1162, %v1389
        %v1391 = vpop.f32.mrb[0].mxu0
        %v1392 = vpop.f32.mrb[0].mxu0
        %v1393 = vadd.f32 %v1162, %v1392
        %v1394 = vpop.f32.mrb[0].mxu0
        %1395 = vmatprep.mubr.bf16.mxu0 %v1122
        %1396 = vmatmul.mubr.bf16.gmra.mrb[0].mxu0 %v1121
        %v1397 = vpop.f32.mrb[0].mxu0
        %v1398 = vadd.f32 %v1162, %v1397
        %v1399 = vpop.f32.mrb[0].mxu0
        %v1400 = vpop.f32.mrb[0].mxu0
        %v1401 = vadd.f32 %v1162, %v1400
        %v1402 = vpop.f32.mrb[0].mxu0
        %1403 = vmatprep.mubr.bf16.mxu0 %v1124
        %1404 = vmatmul.mubr.bf16.gmra.mrb[0].mxu0 %v1123
        %v1405 = vpop.f32.mrb[0].mxu0
        %v1406 = vadd.f32 %v1162, %v1405
        %v1407 = vpop.f32.mrb[0].mxu0
        %v1408 = vpop.f32.mrb[0].mxu0
        %v1409 = vadd.f32 %v1162, %v1408
        %v1410 = vpop.f32.mrb[0].mxu0
        %1411 = vmatprep.mubr.bf16.mxu0 %v1126
        %1412 = vmatmul.mubr.bf16.gmra.mrb[0].mxu0 %v1125
        %v1413 = vpop.f32.mrb[0].mxu0
        %v1414 = vadd.f32 %v1162, %v1413
        %v1415 = vpop.f32.mrb[0].mxu0
        %v1416 = vpop.f32.mrb[0].mxu0
        %v1417 = vadd.f32 %v1162, %v1416
        %v1418 = vpop.f32.mrb[0].mxu0
        %1419 = vdwg.mxu0
        %v1420 = vmax.f32 %v1294, 0.0
        %v1421 = vmax.f32 %v1297, 0.0
        %v1422 = vmax.f32 %v1302, 0.0
        %v1423 = vmax.f32 %v1305, 0.0
        %v1424 = vmax.f32 %v1310, 0.0
        %v1425 = vmax.f32 %v1313, 0.0
        %v1426 = vmax.f32 %v1318, 0.0
        %v1427 = vmax.f32 %v1321, 0.0
        %v1428 = vmax.f32 %v1326, 0.0
        %v1429 = vmax.f32 %v1329, 0.0
        %v1430 = vmax.f32 %v1334, 0.0
        %v1431 = vmax.f32 %v1337, 0.0
        %v1432 = vmax.f32 %v1342, 0.0
        %v1433 = vmax.f32 %v1345, 0.0
        %v1434 = vmax.f32 %v1350, 0.0
        %v1435 = vmax.f32 %v1353, 0.0
        %v1436 = vmax.f32 %v1358, 0.0
        %v1437 = vmax.f32 %v1361, 0.0
        %v1438 = vmax.f32 %v1366, 0.0
        %v1439 = vmax.f32 %v1369, 0.0
        %v1440 = vmax.f32 %v1374, 0.0
        %v1441 = vmax.f32 %v1377, 0.0
        %v1442 = vmax.f32 %v1382, 0.0
        %v1443 = vmax.f32 %v1385, 0.0
        %v1444 = vmax.f32 %v1390, 0.0
        %v1445 = vmax.f32 %v1393, 0.0
        %v1446 = vmax.f32 %v1398, 0.0
        %v1447 = vmax.f32 %v1401, 0.0
        %v1448 = vmax.f32 %v1406, 0.0
        %v1449 = vmax.f32 %v1409, 0.0
        %v1450 = vmax.f32 %v1414, 0.0
        %v1451 = vmax.f32 %v1417, 0.0
        %v1452 = vpack.c.bf16 %v1421, %v1420
        %v1453 = vpack.c.bf16 %v1423, %v1422
        %v1454 = vpack.c.bf16 %v1425, %v1424
        %v1455 = vpack.c.bf16 %v1427, %v1426
        %v1456 = vpack.c.bf16 %v1429, %v1428
        %v1457 = vpack.c.bf16 %v1431, %v1430
        %v1458 = vpack.c.bf16 %v1433, %v1432
        %v1459 = vpack.c.bf16 %v1435, %v1434
        %v1460 = vpack.c.bf16 %v1437, %v1436
        %v1461 = vpack.c.bf16 %v1439, %v1438
        %v1462 = vpack.c.bf16 %v1441, %v1440
        %v1463 = vpack.c.bf16 %v1443, %v1442
        %v1464 = vpack.c.bf16 %v1445, %v1444
        %v1465 = vpack.c.bf16 %v1447, %v1446
        %v1466 = vpack.c.bf16 %v1449, %v1448
        %v1467 = vpack.c.bf16 %v1451, %v1450
        %v1468 = vld [vmem:[%s6] sm:$0xf]
        %v1469 = vld [vmem:[%s6 + $0x4] sm:$0xf]
        %v1470 = vld [vmem:[%s6 + $0x8] sm:$0xf]
        %v1471 = vld [vmem:[%s6 + $0xc] sm:$0xf]
        %v1472 = vld [vmem:[%s6 + $0x10] sm:$0xf]
        %v1473 = vld [vmem:[%s6 + $0x14] sm:$0xf]
        %v1474 = vld [vmem:[%s6 + $0x18] sm:$0xf]
        %v1475 = vld [vmem:[%s6 + $0x1c] sm:$0xf]
        %v1476 = vld [vmem:[%s6 + $0x20] sm:$0xf]
        %v1477 = vld [vmem:[%s6 + $0x24] sm:$0xf]
        %v1478 = vld [vmem:[%s6 + $0x28] sm:$0xf]
        %v1479 = vld [vmem:[%s6 + $0x2c] sm:$0xf]
        %v1480 = vld [vmem:[%s6 + $0x30] sm:$0xf]
        %v1481 = vld [vmem:[%s6 + $0x34] sm:$0xf]
        %v1482 = vld [vmem:[%s6 + $0x38] sm:$0xf]
        %v1483 = vld [vmem:[%s6 + $0x3c] sm:$0xf]
        %v1484 = vlaneseq
        %v1485 = vshrl.u32 %v1484, 7
        %v1486 = vsub.s32 0, %v1485
        %v1487 = vrot.slane %v476, %v1486
        %v1504 = vunpack.c.l.b16 %v1468
        %v1505 = vunpack.c.l.b16 %v1469
        %v1506 = vunpack.c.l.b16 %v1470
        %v1507 = vunpack.c.l.b16 %v1471
        %v1508 = vunpack.c.l.b16 %v1472
        %v1509 = vunpack.c.l.b16 %v1473
        %v1510 = vunpack.c.l.b16 %v1474
        %v1511 = vunpack.c.l.b16 %v1475
        %v1512 = vunpack.c.l.b16 %v1476
        %v1513 = vunpack.c.l.b16 %v1477
        %v1514 = vunpack.c.l.b16 %v1478
        %v1515 = vunpack.c.l.b16 %v1479
        %v1516 = vunpack.c.l.b16 %v1480
        %v1517 = vunpack.c.l.b16 %v1481
        %v1518 = vunpack.c.l.b16 %v1482
        %v1519 = vunpack.c.l.b16 %v1483
        %v1520 = vpack.c.b16 %v1505, %v1504
        %v1521 = vpack.c.b16 %v1507, %v1506
        %v1522 = vpack.c.b16 %v1509, %v1508
        %v1523 = vpack.c.b16 %v1511, %v1510
        %v1524 = vpack.c.b16 %v1513, %v1512
        %v1525 = vpack.c.b16 %v1515, %v1514
        %v1526 = vpack.c.b16 %v1517, %v1516
        %v1527 = vpack.c.b16 %v1519, %v1518
        %1536 = vmatprep.subr.bf16.mxu0 0
        %1537 = vmatpush1.bf16.msra.mxu0 %v1520
        %1538 = vmatprep.subr.bf16.mxu0 0
        %1539 = vmatpush1.bf16.msra.mxu0 %v1521
        %1540 = vmatprep.subr.bf16.mxu0 0
        %1541 = vmatpush1.bf16.msra.mxu0 %v1522
        %1542 = vmatprep.subr.bf16.mxu0 0
        %1543 = vmatpush1.bf16.msra.mxu0 %v1523
        %1544 = vmatprep.subr.bf16.mxu0 0
        %1545 = vmatpush1.bf16.msra.mxu0 %v1524
        %1546 = vmatprep.subr.bf16.mxu0 0
        %1547 = vmatpush1.bf16.msra.mxu0 %v1525
        %1548 = vmatprep.subr.bf16.mxu0 0
        %1549 = vmatpush1.bf16.msra.mxu0 %v1526
        %1550 = vmatprep.subr.bf16.mxu0 0
        %1551 = vmatpush1.bf16.msra.mxu0 %v1527
        %1552 = vmatprep.subr.bf16.mxu0 0
        %1553 = vmatpush1.bf16.msra.mxu0 0
        %1554 = vmatprep.subr.bf16.mxu0 0
        %1555 = vmatpush1.bf16.msra.mxu0 0
        %1556 = vmatprep.subr.bf16.mxu0 0
        %1557 = vmatpush1.bf16.msra.mxu0 0
        %1558 = vmatprep.subr.bf16.mxu0 0
        %1559 = vmatpush1.bf16.msra.mxu0 0
        %1560 = vmatprep.subr.bf16.mxu0 0
        %1561 = vmatpush1.bf16.msra.mxu0 0
        %1562 = vmatprep.subr.bf16.mxu0 0
        %1563 = vmatpush1.bf16.msra.mxu0 0
        %1564 = vmatprep.subr.bf16.mxu0 0
        %1565 = vmatpush1.bf16.msra.mxu0 0
        %1566 = vmatprep.subr.bf16.mxu0 0
        %1567 = vmatpush1.bf16.msra.mxu0 0
        %1568 = vmatprep.mubr.bf16.mxu0 0
        %1569 = vmatmul.mubr.bf16.gmra.mrb[0].mxu0 %v1452
        %v1570 = vpop.f32.mrb[0].mxu0
        %v1571 = vadd.f32 %v1487, %v1570
        %v1572 = vpop.f32.mrb[0].mxu0
        %v1573 = vpop.f32.mrb[0].mxu0
        %v1574 = vadd.f32 %v1487, %v1573
        %v1575 = vpop.f32.mrb[0].mxu0
        %1576 = vmatprep.mubr.bf16.mxu0 0
        %1577 = vmatmul.mubr.bf16.gmra.mrb[0].mxu0 %v1453
        %v1578 = vpop.f32.mrb[0].mxu0
        %v1579 = vadd.f32 %v1487, %v1578
        %v1580 = vpop.f32.mrb[0].mxu0
        %v1581 = vpop.f32.mrb[0].mxu0
        %v1582 = vadd.f32 %v1487, %v1581
        %v1583 = vpop.f32.mrb[0].mxu0
        %1584 = vmatprep.mubr.bf16.mxu0 0
        %1585 = vmatmul.mubr.bf16.gmra.mrb[0].mxu0 %v1454
        %v1586 = vpop.f32.mrb[0].mxu0
        %v1587 = vadd.f32 %v1487, %v1586
        %v1588 = vpop.f32.mrb[0].mxu0
        %v1589 = vpop.f32.mrb[0].mxu0
        %v1590 = vadd.f32 %v1487, %v1589
        %v1591 = vpop.f32.mrb[0].mxu0
        %1592 = vmatprep.mubr.bf16.mxu0 0
        %1593 = vmatmul.mubr.bf16.gmra.mrb[0].mxu0 %v1455
        %v1594 = vpop.f32.mrb[0].mxu0
        %v1595 = vadd.f32 %v1487, %v1594
        %v1596 = vpop.f32.mrb[0].mxu0
        %v1597 = vpop.f32.mrb[0].mxu0
        %v1598 = vadd.f32 %v1487, %v1597
        %v1599 = vpop.f32.mrb[0].mxu0
        %1600 = vmatprep.mubr.bf16.mxu0 0
        %1601 = vmatmul.mubr.bf16.gmra.mrb[0].mxu0 %v1456
        %v1602 = vpop.f32.mrb[0].mxu0
        %v1603 = vadd.f32 %v1487, %v1602
        %v1604 = vpop.f32.mrb[0].mxu0
        %v1605 = vpop.f32.mrb[0].mxu0
        %v1606 = vadd.f32 %v1487, %v1605
        %v1607 = vpop.f32.mrb[0].mxu0
        %1608 = vmatprep.mubr.bf16.mxu0 0
        %1609 = vmatmul.mubr.bf16.gmra.mrb[0].mxu0 %v1457
        %v1610 = vpop.f32.mrb[0].mxu0
        %v1611 = vadd.f32 %v1487, %v1610
        %v1612 = vpop.f32.mrb[0].mxu0
        %v1613 = vpop.f32.mrb[0].mxu0
        %v1614 = vadd.f32 %v1487, %v1613
        %v1615 = vpop.f32.mrb[0].mxu0
        %1616 = vmatprep.mubr.bf16.mxu0 0
        %1617 = vmatmul.mubr.bf16.gmra.mrb[0].mxu0 %v1458
        %v1618 = vpop.f32.mrb[0].mxu0
        %v1619 = vadd.f32 %v1487, %v1618
        %v1620 = vpop.f32.mrb[0].mxu0
        %v1621 = vpop.f32.mrb[0].mxu0
        %v1622 = vadd.f32 %v1487, %v1621
        %v1623 = vpop.f32.mrb[0].mxu0
        %1624 = vmatprep.mubr.bf16.mxu0 0
        %1625 = vmatmul.mubr.bf16.gmra.mrb[0].mxu0 %v1459
        %v1626 = vpop.f32.mrb[0].mxu0
        %v1627 = vadd.f32 %v1487, %v1626
        %v1628 = vpop.f32.mrb[0].mxu0
        %v1629 = vpop.f32.mrb[0].mxu0
        %v1630 = vadd.f32 %v1487, %v1629
        %v1631 = vpop.f32.mrb[0].mxu0
        %1632 = vmatprep.mubr.bf16.mxu0 0
        %1633 = vmatmul.mubr.bf16.gmra.mrb[0].mxu0 %v1460
        %v1634 = vpop.f32.mrb[0].mxu0
        %v1635 = vadd.f32 %v1487, %v1634
        %v1636 = vpop.f32.mrb[0].mxu0
        %v1637 = vpop.f32.mrb[0].mxu0
        %v1638 = vadd.f32 %v1487, %v1637
        %v1639 = vpop.f32.mrb[0].mxu0
        %1640 = vmatprep.mubr.bf16.mxu0 0
        %1641 = vmatmul.mubr.bf16.gmra.mrb[0].mxu0 %v1461
        %v1642 = vpop.f32.mrb[0].mxu0
        %v1643 = vadd.f32 %v1487, %v1642
        %v1644 = vpop.f32.mrb[0].mxu0
        %v1645 = vpop.f32.mrb[0].mxu0
        %v1646 = vadd.f32 %v1487, %v1645
        %v1647 = vpop.f32.mrb[0].mxu0
        %1648 = vmatprep.mubr.bf16.mxu0 0
        %1649 = vmatmul.mubr.bf16.gmra.mrb[0].mxu0 %v1462
        %v1650 = vpop.f32.mrb[0].mxu0
        %v1651 = vadd.f32 %v1487, %v1650
        %v1652 = vpop.f32.mrb[0].mxu0
        %v1653 = vpop.f32.mrb[0].mxu0
        %v1654 = vadd.f32 %v1487, %v1653
        %v1655 = vpop.f32.mrb[0].mxu0
        %1656 = vmatprep.mubr.bf16.mxu0 0
        %1657 = vmatmul.mubr.bf16.gmra.mrb[0].mxu0 %v1463
        %v1658 = vpop.f32.mrb[0].mxu0
        %v1659 = vadd.f32 %v1487, %v1658
        %v1660 = vpop.f32.mrb[0].mxu0
        %v1661 = vpop.f32.mrb[0].mxu0
        %v1662 = vadd.f32 %v1487, %v1661
        %v1663 = vpop.f32.mrb[0].mxu0
        %1664 = vmatprep.mubr.bf16.mxu0 0
        %1665 = vmatmul.mubr.bf16.gmra.mrb[0].mxu0 %v1464
        %v1666 = vpop.f32.mrb[0].mxu0
        %v1667 = vadd.f32 %v1487, %v1666
        %v1668 = vpop.f32.mrb[0].mxu0
        %v1669 = vpop.f32.mrb[0].mxu0
        %v1670 = vadd.f32 %v1487, %v1669
        %v1671 = vpop.f32.mrb[0].mxu0
        %1672 = vmatprep.mubr.bf16.mxu0 0
        %1673 = vmatmul.mubr.bf16.gmra.mrb[0].mxu0 %v1465
        %v1674 = vpop.f32.mrb[0].mxu0
        %v1675 = vadd.f32 %v1487, %v1674
        %v1676 = vpop.f32.mrb[0].mxu0
        %v1677 = vpop.f32.mrb[0].mxu0
        %v1678 = vadd.f32 %v1487, %v1677
        %v1679 = vpop.f32.mrb[0].mxu0
        %1680 = vmatprep.mubr.bf16.mxu0 0
        %1681 = vmatmul.mubr.bf16.gmra.mrb[0].mxu0 %v1466
        %v1682 = vpop.f32.mrb[0].mxu0
        %v1683 = vadd.f32 %v1487, %v1682
        %v1684 = vpop.f32.mrb[0].mxu0
        %v1685 = vpop.f32.mrb[0].mxu0
        %v1686 = vadd.f32 %v1487, %v1685
        %v1687 = vpop.f32.mrb[0].mxu0
        %1688 = vmatprep.mubr.bf16.mxu0 0
        %1689 = vmatmul.mubr.bf16.gmra.mrb[0].mxu0 %v1467
        %v1690 = vpop.f32.mrb[0].mxu0
        %v1691 = vadd.f32 %v1487, %v1690
        %v1692 = vpop.f32.mrb[0].mxu0
        %v1693 = vpop.f32.mrb[0].mxu0
        %v1694 = vadd.f32 %v1487, %v1693
        %v1695 = vpop.f32.mrb[0].mxu0
        %1696 = vdwg.mxu0
        %v1697 = vand.u32 2147483647, %v1571
        %vm1698 = vcmp.le.f32.partialorder %v1697, 0.7853982
        %vm1699 = vcmp.lt.s32.totalorder %v1571, 0
        %v1700 = vand.u32 %v1571, 2139095040
        %v1701 = vshrl.u32 %v1700, 23
        %v1702 = vsub.s32 %v1701, 127
        %v1703 = vand.u32 2147483647, %v1571
        %v1704 = vand.u32 %v1703, 8388607
        %v1705 = vor.u32 %v1704, 8388608
        %v1706 = vsub.s32 0, %v1705
        %v1707 = vadd.s32 %v1702, 1
        %vm1708 = vcmp.gt.s32.totalorder %v1707, 0
        %v1709 = vsel %vm1708, %v1707, 0
        %v1710 = vshrl.u32 %v1709, 5
        %v1711 = vand.u32 %v1709, 31
        %v1712 = vsub.s32 32, %v1711
        %v1713 = vshrl.u32 683565275, %v1712
        %v1714 = vshll.u32 683565275, %v1711
        %v1715 = vshrl.u32 2475754826, %v1712
        %v1716 = vor.u32 %v1714, %v1715
        %v1717 = vshll.u32 2475754826, %v1711
        %v1718 = vshrl.u32 2131351028, %v1712
        %v1719 = vor.u32 %v1717, %v1718
        %v1720 = vshll.u32 2131351028, %v1711
        %v1721 = vshrl.u32 2102212464, %v1712
        %v1722 = vor.u32 %v1720, %v1721
        %v1723 = vshll.u32 2102212464, %v1711
        %v1724 = vshrl.u32 920167782, %v1712
        %v1725 = vor.u32 %v1723, %v1724
        %v1726 = vshll.u32 920167782, %v1711
        %v1727 = vshrl.u32 1326507024, %v1712
        %v1728 = vor.u32 %v1726, %v1727
        %vm1729 = vcmp.lt.s32.totalorder %v1710, 1
        %vm1730 = vcmp.lt.s32.totalorder %v1710, 2
        %vm1731 = vcmp.lt.s32.totalorder %v1710, 3
        %vm1732 = vcmp.lt.s32.totalorder %v1710, 4
        %v1733 = vsel %vm1729, %v1713, %v1716
        %v1734 = vsel %vm1732, %v1722, 2102212464
        %v1735 = vsel %vm1731, %v1719, %v1734
        %v1736 = vsel %vm1730, %v1733, %v1735
        %v1737 = vsel %vm1729, %v1716, %v1719
        %v1738 = vsel %vm1732, %v1725, 920167782
        %v1739 = vsel %vm1731, %v1722, %v1738
        %v1740 = vsel %vm1730, %v1737, %v1739
        %v1741 = vsel %vm1729, %v1719, %v1722
        %v1742 = vsel %vm1732, %v1728, 1326507024
        %v1743 = vsel %vm1731, %v1725, %v1742
        %v1744 = vsel %vm1730, %v1741, %v1743
        %v1745 = vshll.u32 %v1705, 8
        %v1746 = vmul.u32.u64.compose %v1745, %v1744
        %v1747 = vextract.low.u32 %v1746
        %v1748 = vextract.high.u32 %v1746
        %v1749 = vmul.u32.u64.compose %v1745, %v1740
        %v1750 = vextract.low.u32 %v1749
        %v1751 = vextract.high.u32 %v1749
        %v1752 = vmul.u32 %v1745, %v1736
        %v1753 = vadd.s32 %v1748, %v1750
        %vm1754 = vc.u32 %v1748, %v1750
        %v1755 = vadd.s32 %v1751, 1
        %v1756 = vsel %vm1754, %v1755, %v1751
        %v1757 = vadd.s32 %v1752, %v1756
        %v1758 = vadd.s32 %v1757, 536870912
        %v1759 = vshrl.u32 %v1758, 30
        %v1760 = vshll.u32 %v1759, 30
        %v1761 = vsub.s32 %v1757, %v1760
        %vm1762 = vcmp.lt.s32.totalorder %v1761, 0
        %v1763 = vsub.s32 0, %v1761
        %v1764 = vsel %vm1762, %v1763, %v1761
        %v1765 = vclz %v1764
        %v1766 = vsub.s32 %v1765, 2
        %vm1767 = vcmp.gt.s32.totalorder 0, %v1766
        %v1768 = vsel %vm1767, 0, %v1766
        %v1769 = vsub.s32 32, %v1768
        %v1770 = vshll.u32 %v1761, %v1768
        %v1771 = vshrl.u32 %v1753, %v1769
        %v1772 = vor.u32 %v1770, %v1771
        %v1773 = vsub.s32 4294967266, %v1768
        %v1774 = vadd.s32 %v1773, 127
        %v1775 = vshll.u32 %v1774, 23
        %v1776 = vor.u32 4788187, %v1775
        %v1777 = vand.u32 2147483647, %v1776
        %v1779 = vcvt.s32.f32 %v1772
        %v1780 = vmul.f32 %v1779, %v1777
        %v1781 = vxor.u32 %v1780, 2147483648
        %v1782 = vsel %vm1699, %v1781, %v1780
        %v1783 = vsub.s32 4, %v1759
        %v1784 = vsel %vm1699, %v1783, %v1759
        %v1785 = vsel %vm1698, %v1571, %v1782
        %v1786 = vsel %vm1698, 0, %v1784
        %v1787 = vcosq.f32.pop %v1785
        %v1788 = vsinq.f32.pop %v1785
        %vm1789 = vweird.f32 %v1571
        %v1790 = vand.u32 %v1786, 3
        %vm1791 = vcmp.lt.s32.totalorder %v1790, 2
        %vm1792 = vcmp.eq.s32.totalorder %v1790, 0
        %v1793 = vxor.u32 %v1788, 2147483648
        %v1794 = vsel %vm1792, %v1787, %v1793
        %vm1795 = vcmp.eq.s32.totalorder %v1790, 2
        %v1796 = vxor.u32 %v1787, 2147483648
        %v1797 = vsel %vm1795, %v1796, %v1788
        %v1798 = vsel %vm1791, %v1794, %v1797
        %v1799 = vsel %vm1789, nan, %v1798
        %v1800 = vand.u32 2147483647, %v1574
        %vm1801 = vcmp.le.f32.partialorder %v1800, 0.7853982
        %vm1802 = vcmp.lt.s32.totalorder %v1574, 0
        %v1803 = vand.u32 %v1574, 2139095040
        %v1804 = vshrl.u32 %v1803, 23
        %v1805 = vsub.s32 %v1804, 127
        %v1806 = vand.u32 2147483647, %v1574
        %v1807 = vand.u32 %v1806, 8388607
        %v1808 = vor.u32 %v1807, 8388608
        %v1809 = vsub.s32 0, %v1808
        %v1810 = vadd.s32 %v1805, 1
        %vm1811 = vcmp.gt.s32.totalorder %v1810, 0
        %v1812 = vsel %vm1811, %v1810, 0
        %v1813 = vshrl.u32 %v1812, 5
        %v1814 = vand.u32 %v1812, 31
        %v1815 = vsub.s32 32, %v1814
        %v1816 = vshrl.u32 683565275, %v1815
        %v1817 = vshll.u32 683565275, %v1814
        %v1818 = vshrl.u32 2475754826, %v1815
        %v1819 = vor.u32 %v1817, %v1818
        %v1820 = vshll.u32 2475754826, %v1814
        %v1821 = vshrl.u32 2131351028, %v1815
        %v1822 = vor.u32 %v1820, %v1821
        %v1823 = vshll.u32 2131351028, %v1814
        %v1824 = vshrl.u32 2102212464, %v1815
        %v1825 = vor.u32 %v1823, %v1824
        %v1826 = vshll.u32 2102212464, %v1814
        %v1827 = vshrl.u32 920167782, %v1815
        %v1828 = vor.u32 %v1826, %v1827
        %v1829 = vshll.u32 920167782, %v1814
        %v1830 = vshrl.u32 1326507024, %v1815
        %v1831 = vor.u32 %v1829, %v1830
        %vm1832 = vcmp.lt.s32.totalorder %v1813, 1
        %vm1833 = vcmp.lt.s32.totalorder %v1813, 2
        %vm1834 = vcmp.lt.s32.totalorder %v1813, 3
        %vm1835 = vcmp.lt.s32.totalorder %v1813, 4
        %v1836 = vsel %vm1832, %v1816, %v1819
        %v1837 = vsel %vm1835, %v1825, 2102212464
        %v1838 = vsel %vm1834, %v1822, %v1837
        %v1839 = vsel %vm1833, %v1836, %v1838
        %v1840 = vsel %vm1832, %v1819, %v1822
        %v1841 = vsel %vm1835, %v1828, 920167782
        %v1842 = vsel %vm1834, %v1825, %v1841
        %v1843 = vsel %vm1833, %v1840, %v1842
        %v1844 = vsel %vm1832, %v1822, %v1825
        %v1845 = vsel %vm1835, %v1831, 1326507024
        %v1846 = vsel %vm1834, %v1828, %v1845
        %v1847 = vsel %vm1833, %v1844, %v1846
        %v1848 = vshll.u32 %v1808, 8
        %v1849 = vmul.u32.u64.compose %v1848, %v1847
        %v1850 = vextract.low.u32 %v1849
        %v1851 = vextract.high.u32 %v1849
        %v1852 = vmul.u32.u64.compose %v1848, %v1843
        %v1853 = vextract.low.u32 %v1852
        %v1854 = vextract.high.u32 %v1852
        %v1855 = vmul.u32 %v1848, %v1839
        %v1856 = vadd.s32 %v1851, %v1853
        %vm1857 = vc.u32 %v1851, %v1853
        %v1858 = vadd.s32 %v1854, 1
        %v1859 = vsel %vm1857, %v1858, %v1854
        %v1860 = vadd.s32 %v1855, %v1859
        %v1861 = vadd.s32 %v1860, 536870912
        %v1862 = vshrl.u32 %v1861, 30
        %v1863 = vshll.u32 %v1862, 30
        %v1864 = vsub.s32 %v1860, %v1863
        %vm1865 = vcmp.lt.s32.totalorder %v1864, 0
        %v1866 = vsub.s32 0, %v1864
        %v1867 = vsel %vm1865, %v1866, %v1864
        %v1868 = vclz %v1867
        %v1869 = vsub.s32 %v1868, 2
        %vm1870 = vcmp.gt.s32.totalorder 0, %v1869
        %v1871 = vsel %vm1870, 0, %v1869
        %v1872 = vsub.s32 32, %v1871
        %v1873 = vshll.u32 %v1864, %v1871
        %v1874 = vshrl.u32 %v1856, %v1872
        %v1875 = vor.u32 %v1873, %v1874
        %v1876 = vsub.s32 4294967266, %v1871
        %v1877 = vadd.s32 %v1876, 127
        %v1878 = vshll.u32 %v1877, 23
        %v1879 = vor.u32 4788187, %v1878
        %v1880 = vand.u32 2147483647, %v1879
        %v1882 = vcvt.s32.f32 %v1875
        %v1883 = vmul.f32 %v1882, %v1880
        %v1884 = vxor.u32 %v1883, 2147483648
        %v1885 = vsel %vm1802, %v1884, %v1883
        %v1886 = vsub.s32 4, %v1862
        %v1887 = vsel %vm1802, %v1886, %v1862
        %v1888 = vsel %vm1801, %v1574, %v1885
        %v1889 = vsel %vm1801, 0, %v1887
        %v1890 = vcosq.f32.pop %v1888
        %v1891 = vsinq.f32.pop %v1888
        %vm1892 = vweird.f32 %v1574
        %v1893 = vand.u32 %v1889, 3
        %vm1894 = vcmp.lt.s32.totalorder %v1893, 2
        %vm1895 = vcmp.eq.s32.totalorder %v1893, 0
        %v1896 = vxor.u32 %v1891, 2147483648
        %v1897 = vsel %vm1895, %v1890, %v1896
        %vm1898 = vcmp.eq.s32.totalorder %v1893, 2
        %v1899 = vxor.u32 %v1890, 2147483648
        %v1900 = vsel %vm1898, %v1899, %v1891
        %v1901 = vsel %vm1894, %v1897, %v1900
        %v1902 = vsel %vm1892, nan, %v1901
        %v1903 = vand.u32 2147483647, %v1579
        %vm1904 = vcmp.le.f32.partialorder %v1903, 0.7853982
        %vm1905 = vcmp.lt.s32.totalorder %v1579, 0
        %v1906 = vand.u32 %v1579, 2139095040
        %v1907 = vshrl.u32 %v1906, 23
        %v1908 = vsub.s32 %v1907, 127
        %v1909 = vand.u32 2147483647, %v1579
        %v1910 = vand.u32 %v1909, 8388607
        %v1911 = vor.u32 %v1910, 8388608
        %v1912 = vsub.s32 0, %v1911
        %v1913 = vadd.s32 %v1908, 1
        %vm1914 = vcmp.gt.s32.totalorder %v1913, 0
        %v1915 = vsel %vm1914, %v1913, 0
        %v1916 = vshrl.u32 %v1915, 5
        %v1917 = vand.u32 %v1915, 31
        %v1918 = vsub.s32 32, %v1917
        %v1919 = vshrl.u32 683565275, %v1918
        %v1920 = vshll.u32 683565275, %v1917
        %v1921 = vshrl.u32 2475754826, %v1918
        %v1922 = vor.u32 %v1920, %v1921
        %v1923 = vshll.u32 2475754826, %v1917
        %v1924 = vshrl.u32 2131351028, %v1918
        %v1925 = vor.u32 %v1923, %v1924
        %v1926 = vshll.u32 2131351028, %v1917
        %v1927 = vshrl.u32 2102212464, %v1918
        %v1928 = vor.u32 %v1926, %v1927
        %v1929 = vshll.u32 2102212464, %v1917
        %v1930 = vshrl.u32 920167782, %v1918
        %v1931 = vor.u32 %v1929, %v1930
        %v1932 = vshll.u32 920167782, %v1917
        %v1933 = vshrl.u32 1326507024, %v1918
        %v1934 = vor.u32 %v1932, %v1933
        %vm1935 = vcmp.lt.s32.totalorder %v1916, 1
        %vm1936 = vcmp.lt.s32.totalorder %v1916, 2
        %vm1937 = vcmp.lt.s32.totalorder %v1916, 3
        %vm1938 = vcmp.lt.s32.totalorder %v1916, 4
        %v1939 = vsel %vm1935, %v1919, %v1922
        %v1940 = vsel %vm1938, %v1928, 2102212464
        %v1941 = vsel %vm1937, %v1925, %v1940
        %v1942 = vsel %vm1936, %v1939, %v1941
        %v1943 = vsel %vm1935, %v1922, %v1925
        %v1944 = vsel %vm1938, %v1931, 920167782
        %v1945 = vsel %vm1937, %v1928, %v1944
        %v1946 = vsel %vm1936, %v1943, %v1945
        %v1947 = vsel %vm1935, %v1925, %v1928
        %v1948 = vsel %vm1938, %v1934, 1326507024
        %v1949 = vsel %vm1937, %v1931, %v1948
        %v1950 = vsel %vm1936, %v1947, %v1949
        %v1951 = vshll.u32 %v1911, 8
        %v1952 = vmul.u32.u64.compose %v1951, %v1950
        %v1953 = vextract.low.u32 %v1952
        %v1954 = vextract.high.u32 %v1952
        %v1955 = vmul.u32.u64.compose %v1951, %v1946
        %v1956 = vextract.low.u32 %v1955
        %v1957 = vextract.high.u32 %v1955
        %v1958 = vmul.u32 %v1951, %v1942
        %v1959 = vadd.s32 %v1954, %v1956
        %vm1960 = vc.u32 %v1954, %v1956
        %v1961 = vadd.s32 %v1957, 1
        %v1962 = vsel %vm1960, %v1961, %v1957
        %v1963 = vadd.s32 %v1958, %v1962
        %v1964 = vadd.s32 %v1963, 536870912
        %v1965 = vshrl.u32 %v1964, 30
        %v1966 = vshll.u32 %v1965, 30
        %v1967 = vsub.s32 %v1963, %v1966
        %vm1968 = vcmp.lt.s32.totalorder %v1967, 0
        %v1969 = vsub.s32 0, %v1967
        %v1970 = vsel %vm1968, %v1969, %v1967
        %v1971 = vclz %v1970
        %v1972 = vsub.s32 %v1971, 2
        %vm1973 = vcmp.gt.s32.totalorder 0, %v1972
        %v1974 = vsel %vm1973, 0, %v1972
        %v1975 = vsub.s32 32, %v1974
        %v1976 = vshll.u32 %v1967, %v1974
        %v1977 = vshrl.u32 %v1959, %v1975
        %v1978 = vor.u32 %v1976, %v1977
        %v1979 = vsub.s32 4294967266, %v1974
        %v1980 = vadd.s32 %v1979, 127
        %v1981 = vshll.u32 %v1980, 23
        %v1982 = vor.u32 4788187, %v1981
        %v1983 = vand.u32 2147483647, %v1982
        %v1985 = vcvt.s32.f32 %v1978
        %v1986 = vmul.f32 %v1985, %v1983
        %v1987 = vxor.u32 %v1986, 2147483648
        %v1988 = vsel %vm1905, %v1987, %v1986
        %v1989 = vsub.s32 4, %v1965
        %v1990 = vsel %vm1905, %v1989, %v1965
        %v1991 = vsel %vm1904, %v1579, %v1988
        %v1992 = vsel %vm1904, 0, %v1990
        %v1993 = vcosq.f32.pop %v1991
        %v1994 = vsinq.f32.pop %v1991
        %vm1995 = vweird.f32 %v1579
        %v1996 = vand.u32 %v1992, 3
        %vm1997 = vcmp.lt.s32.totalorder %v1996, 2
        %vm1998 = vcmp.eq.s32.totalorder %v1996, 0
        %v1999 = vxor.u32 %v1994, 2147483648
        %v2000 = vsel %vm1998, %v1993, %v1999
        %vm2001 = vcmp.eq.s32.totalorder %v1996, 2
        %v2002 = vxor.u32 %v1993, 2147483648
        %v2003 = vsel %vm2001, %v2002, %v1994
        %v2004 = vsel %vm1997, %v2000, %v2003
        %v2005 = vsel %vm1995, nan, %v2004
        %v2006 = vand.u32 2147483647, %v1582
        %vm2007 = vcmp.le.f32.partialorder %v2006, 0.7853982
        %vm2008 = vcmp.lt.s32.totalorder %v1582, 0
        %v2009 = vand.u32 %v1582, 2139095040
        %v2010 = vshrl.u32 %v2009, 23
        %v2011 = vsub.s32 %v2010, 127
        %v2012 = vand.u32 2147483647, %v1582
        %v2013 = vand.u32 %v2012, 8388607
        %v2014 = vor.u32 %v2013, 8388608
        %v2015 = vsub.s32 0, %v2014
        %v2016 = vadd.s32 %v2011, 1
        %vm2017 = vcmp.gt.s32.totalorder %v2016, 0
        %v2018 = vsel %vm2017, %v2016, 0
        %v2019 = vshrl.u32 %v2018, 5
        %v2020 = vand.u32 %v2018, 31
        %v2021 = vsub.s32 32, %v2020
        %v2022 = vshrl.u32 683565275, %v2021
        %v2023 = vshll.u32 683565275, %v2020
        %v2024 = vshrl.u32 2475754826, %v2021
        %v2025 = vor.u32 %v2023, %v2024
        %v2026 = vshll.u32 2475754826, %v2020
        %v2027 = vshrl.u32 2131351028, %v2021
        %v2028 = vor.u32 %v2026, %v2027
        %v2029 = vshll.u32 2131351028, %v2020
        %v2030 = vshrl.u32 2102212464, %v2021
        %v2031 = vor.u32 %v2029, %v2030
        %v2032 = vshll.u32 2102212464, %v2020
        %v2033 = vshrl.u32 920167782, %v2021
        %v2034 = vor.u32 %v2032, %v2033
        %v2035 = vshll.u32 920167782, %v2020
        %v2036 = vshrl.u32 1326507024, %v2021
        %v2037 = vor.u32 %v2035, %v2036
        %vm2038 = vcmp.lt.s32.totalorder %v2019, 1
        %vm2039 = vcmp.lt.s32.totalorder %v2019, 2
        %vm2040 = vcmp.lt.s32.totalorder %v2019, 3
        %vm2041 = vcmp.lt.s32.totalorder %v2019, 4
        %v2042 = vsel %vm2038, %v2022, %v2025
        %v2043 = vsel %vm2041, %v2031, 2102212464
        %v2044 = vsel %vm2040, %v2028, %v2043
        %v2045 = vsel %vm2039, %v2042, %v2044
        %v2046 = vsel %vm2038, %v2025, %v2028
        %v2047 = vsel %vm2041, %v2034, 920167782
        %v2048 = vsel %vm2040, %v2031, %v2047
        %v2049 = vsel %vm2039, %v2046, %v2048
        %v2050 = vsel %vm2038, %v2028, %v2031
        %v2051 = vsel %vm2041, %v2037, 1326507024
        %v2052 = vsel %vm2040, %v2034, %v2051
        %v2053 = vsel %vm2039, %v2050, %v2052
        %v2054 = vshll.u32 %v2014, 8
        %v2055 = vmul.u32.u64.compose %v2054, %v2053
        %v2056 = vextract.low.u32 %v2055
        %v2057 = vextract.high.u32 %v2055
        %v2058 = vmul.u32.u64.compose %v2054, %v2049
        %v2059 = vextract.low.u32 %v2058
        %v2060 = vextract.high.u32 %v2058
        %v2061 = vmul.u32 %v2054, %v2045
        %v2062 = vadd.s32 %v2057, %v2059
        %vm2063 = vc.u32 %v2057, %v2059
        %v2064 = vadd.s32 %v2060, 1
        %v2065 = vsel %vm2063, %v2064, %v2060
        %v2066 = vadd.s32 %v2061, %v2065
        %v2067 = vadd.s32 %v2066, 536870912
        %v2068 = vshrl.u32 %v2067, 30
        %v2069 = vshll.u32 %v2068, 30
        %v2070 = vsub.s32 %v2066, %v2069
        %vm2071 = vcmp.lt.s32.totalorder %v2070, 0
        %v2072 = vsub.s32 0, %v2070
        %v2073 = vsel %vm2071, %v2072, %v2070
        %v2074 = vclz %v2073
        %v2075 = vsub.s32 %v2074, 2
        %vm2076 = vcmp.gt.s32.totalorder 0, %v2075
        %v2077 = vsel %vm2076, 0, %v2075
        %v2078 = vsub.s32 32, %v2077
        %v2079 = vshll.u32 %v2070, %v2077
        %v2080 = vshrl.u32 %v2062, %v2078
        %v2081 = vor.u32 %v2079, %v2080
        %v2082 = vsub.s32 4294967266, %v2077
        %v2083 = vadd.s32 %v2082, 127
        %v2084 = vshll.u32 %v2083, 23
        %v2085 = vor.u32 4788187, %v2084
        %v2086 = vand.u32 2147483647, %v2085
        %v2088 = vcvt.s32.f32 %v2081
        %v2089 = vmul.f32 %v2088, %v2086
        %v2090 = vxor.u32 %v2089, 2147483648
        %v2091 = vsel %vm2008, %v2090, %v2089
        %v2092 = vsub.s32 4, %v2068
        %v2093 = vsel %vm2008, %v2092, %v2068
        %v2094 = vsel %vm2007, %v1582, %v2091
        %v2095 = vsel %vm2007, 0, %v2093
        %v2096 = vcosq.f32.pop %v2094
        %v2097 = vsinq.f32.pop %v2094
        %vm2098 = vweird.f32 %v1582
        %v2099 = vand.u32 %v2095, 3
        %vm2100 = vcmp.lt.s32.totalorder %v2099, 2
        %vm2101 = vcmp.eq.s32.totalorder %v2099, 0
        %v2102 = vxor.u32 %v2097, 2147483648
        %v2103 = vsel %vm2101, %v2096, %v2102
        %vm2104 = vcmp.eq.s32.totalorder %v2099, 2
        %v2105 = vxor.u32 %v2096, 2147483648
        %v2106 = vsel %vm2104, %v2105, %v2097
        %v2107 = vsel %vm2100, %v2103, %v2106
        %v2108 = vsel %vm2098, nan, %v2107
        %v2109 = vand.u32 2147483647, %v1587
        %vm2110 = vcmp.le.f32.partialorder %v2109, 0.7853982
        %vm2111 = vcmp.lt.s32.totalorder %v1587, 0
        %v2112 = vand.u32 %v1587, 2139095040
        %v2113 = vshrl.u32 %v2112, 23
        %v2114 = vsub.s32 %v2113, 127
        %v2115 = vand.u32 2147483647, %v1587
        %v2116 = vand.u32 %v2115, 8388607
        %v2117 = vor.u32 %v2116, 8388608
        %v2118 = vsub.s32 0, %v2117
        %v2119 = vadd.s32 %v2114, 1
        %vm2120 = vcmp.gt.s32.totalorder %v2119, 0
        %v2121 = vsel %vm2120, %v2119, 0
        %v2122 = vshrl.u32 %v2121, 5
        %v2123 = vand.u32 %v2121, 31
        %v2124 = vsub.s32 32, %v2123
        %v2125 = vshrl.u32 683565275, %v2124
        %v2126 = vshll.u32 683565275, %v2123
        %v2127 = vshrl.u32 2475754826, %v2124
        %v2128 = vor.u32 %v2126, %v2127
        %v2129 = vshll.u32 2475754826, %v2123
        %v2130 = vshrl.u32 2131351028, %v2124
        %v2131 = vor.u32 %v2129, %v2130
        %v2132 = vshll.u32 2131351028, %v2123
        %v2133 = vshrl.u32 2102212464, %v2124
        %v2134 = vor.u32 %v2132, %v2133
        %v2135 = vshll.u32 2102212464, %v2123
        %v2136 = vshrl.u32 920167782, %v2124
        %v2137 = vor.u32 %v2135, %v2136
        %v2138 = vshll.u32 920167782, %v2123
        %v2139 = vshrl.u32 1326507024, %v2124
        %v2140 = vor.u32 %v2138, %v2139
        %vm2141 = vcmp.lt.s32.totalorder %v2122, 1
        %vm2142 = vcmp.lt.s32.totalorder %v2122, 2
        %vm2143 = vcmp.lt.s32.totalorder %v2122, 3
        %vm2144 = vcmp.lt.s32.totalorder %v2122, 4
        %v2145 = vsel %vm2141, %v2125, %v2128
        %v2146 = vsel %vm2144, %v2134, 2102212464
        %v2147 = vsel %vm2143, %v2131, %v2146
        %v2148 = vsel %vm2142, %v2145, %v2147
        %v2149 = vsel %vm2141, %v2128, %v2131
        %v2150 = vsel %vm2144, %v2137, 920167782
        %v2151 = vsel %vm2143, %v2134, %v2150
        %v2152 = vsel %vm2142, %v2149, %v2151
        %v2153 = vsel %vm2141, %v2131, %v2134
        %v2154 = vsel %vm2144, %v2140, 1326507024
        %v2155 = vsel %vm2143, %v2137, %v2154
        %v2156 = vsel %vm2142, %v2153, %v2155
        %v2157 = vshll.u32 %v2117, 8
        %v2158 = vmul.u32.u64.compose %v2157, %v2156
        %v2159 = vextract.low.u32 %v2158
        %v2160 = vextract.high.u32 %v2158
        %v2161 = vmul.u32.u64.compose %v2157, %v2152
        %v2162 = vextract.low.u32 %v2161
        %v2163 = vextract.high.u32 %v2161
        %v2164 = vmul.u32 %v2157, %v2148
        %v2165 = vadd.s32 %v2160, %v2162
        %vm2166 = vc.u32 %v2160, %v2162
        %v2167 = vadd.s32 %v2163, 1
        %v2168 = vsel %vm2166, %v2167, %v2163
        %v2169 = vadd.s32 %v2164, %v2168
        %v2170 = vadd.s32 %v2169, 536870912
        %v2171 = vshrl.u32 %v2170, 30
        %v2172 = vshll.u32 %v2171, 30
        %v2173 = vsub.s32 %v2169, %v2172
        %vm2174 = vcmp.lt.s32.totalorder %v2173, 0
        %v2175 = vsub.s32 0, %v2173
        %v2176 = vsel %vm2174, %v2175, %v2173
        %v2177 = vclz %v2176
        %v2178 = vsub.s32 %v2177, 2
        %vm2179 = vcmp.gt.s32.totalorder 0, %v2178
        %v2180 = vsel %vm2179, 0, %v2178
        %v2181 = vsub.s32 32, %v2180
        %v2182 = vshll.u32 %v2173, %v2180
        %v2183 = vshrl.u32 %v2165, %v2181
        %v2184 = vor.u32 %v2182, %v2183
        %v2185 = vsub.s32 4294967266, %v2180
        %v2186 = vadd.s32 %v2185, 127
        %v2187 = vshll.u32 %v2186, 23
        %v2188 = vor.u32 4788187, %v2187
        %v2189 = vand.u32 2147483647, %v2188
        %v2191 = vcvt.s32.f32 %v2184
        %v2192 = vmul.f32 %v2191, %v2189
        %v2193 = vxor.u32 %v2192, 2147483648
        %v2194 = vsel %vm2111, %v2193, %v2192
        %v2195 = vsub.s32 4, %v2171
        %v2196 = vsel %vm2111, %v2195, %v2171
        %v2197 = vsel %vm2110, %v1587, %v2194
        %v2198 = vsel %vm2110, 0, %v2196
        %v2199 = vcosq.f32.pop %v2197
        %v2200 = vsinq.f32.pop %v2197
        %vm2201 = vweird.f32 %v1587
        %v2202 = vand.u32 %v2198, 3
        %vm2203 = vcmp.lt.s32.totalorder %v2202, 2
        %vm2204 = vcmp.eq.s32.totalorder %v2202, 0
        %v2205 = vxor.u32 %v2200, 2147483648
        %v2206 = vsel %vm2204, %v2199, %v2205
        %vm2207 = vcmp.eq.s32.totalorder %v2202, 2
        %v2208 = vxor.u32 %v2199, 2147483648
        %v2209 = vsel %vm2207, %v2208, %v2200
        %v2210 = vsel %vm2203, %v2206, %v2209
        %v2211 = vsel %vm2201, nan, %v2210
        %v2212 = vand.u32 2147483647, %v1590
        %vm2213 = vcmp.le.f32.partialorder %v2212, 0.7853982
        %vm2214 = vcmp.lt.s32.totalorder %v1590, 0
        %v2215 = vand.u32 %v1590, 2139095040
        %v2216 = vshrl.u32 %v2215, 23
        %v2217 = vsub.s32 %v2216, 127
        %v2218 = vand.u32 2147483647, %v1590
        %v2219 = vand.u32 %v2218, 8388607
        %v2220 = vor.u32 %v2219, 8388608
        %v2221 = vsub.s32 0, %v2220
        %v2222 = vadd.s32 %v2217, 1
        %vm2223 = vcmp.gt.s32.totalorder %v2222, 0
        %v2224 = vsel %vm2223, %v2222, 0
        %v2225 = vshrl.u32 %v2224, 5
        %v2226 = vand.u32 %v2224, 31
        %v2227 = vsub.s32 32, %v2226
        %v2228 = vshrl.u32 683565275, %v2227
        %v2229 = vshll.u32 683565275, %v2226
        %v2230 = vshrl.u32 2475754826, %v2227
        %v2231 = vor.u32 %v2229, %v2230
        %v2232 = vshll.u32 2475754826, %v2226
        %v2233 = vshrl.u32 2131351028, %v2227
        %v2234 = vor.u32 %v2232, %v2233
        %v2235 = vshll.u32 2131351028, %v2226
        %v2236 = vshrl.u32 2102212464, %v2227
        %v2237 = vor.u32 %v2235, %v2236
        %v2238 = vshll.u32 2102212464, %v2226
        %v2239 = vshrl.u32 920167782, %v2227
        %v2240 = vor.u32 %v2238, %v2239
        %v2241 = vshll.u32 920167782, %v2226
        %v2242 = vshrl.u32 1326507024, %v2227
        %v2243 = vor.u32 %v2241, %v2242
        %vm2244 = vcmp.lt.s32.totalorder %v2225, 1
        %vm2245 = vcmp.lt.s32.totalorder %v2225, 2
        %vm2246 = vcmp.lt.s32.totalorder %v2225, 3
        %vm2247 = vcmp.lt.s32.totalorder %v2225, 4
        %v2248 = vsel %vm2244, %v2228, %v2231
        %v2249 = vsel %vm2247, %v2237, 2102212464
        %v2250 = vsel %vm2246, %v2234, %v2249
        %v2251 = vsel %vm2245, %v2248, %v2250
        %v2252 = vsel %vm2244, %v2231, %v2234
        %v2253 = vsel %vm2247, %v2240, 920167782
        %v2254 = vsel %vm2246, %v2237, %v2253
        %v2255 = vsel %vm2245, %v2252, %v2254
        %v2256 = vsel %vm2244, %v2234, %v2237
        %v2257 = vsel %vm2247, %v2243, 1326507024
        %v2258 = vsel %vm2246, %v2240, %v2257
        %v2259 = vsel %vm2245, %v2256, %v2258
        %v2260 = vshll.u32 %v2220, 8
        %v2261 = vmul.u32.u64.compose %v2260, %v2259
        %v2262 = vextract.low.u32 %v2261
        %v2263 = vextract.high.u32 %v2261
        %v2264 = vmul.u32.u64.compose %v2260, %v2255
        %v2265 = vextract.low.u32 %v2264
        %v2266 = vextract.high.u32 %v2264
        %v2267 = vmul.u32 %v2260, %v2251
        %v2268 = vadd.s32 %v2263, %v2265
        %vm2269 = vc.u32 %v2263, %v2265
        %v2270 = vadd.s32 %v2266, 1
        %v2271 = vsel %vm2269, %v2270, %v2266
        %v2272 = vadd.s32 %v2267, %v2271
        %v2273 = vadd.s32 %v2272, 536870912
        %v2274 = vshrl.u32 %v2273, 30
        %v2275 = vshll.u32 %v2274, 30
        %v2276 = vsub.s32 %v2272, %v2275
        %vm2277 = vcmp.lt.s32.totalorder %v2276, 0
        %v2278 = vsub.s32 0, %v2276
        %v2279 = vsel %vm2277, %v2278, %v2276
        %v2280 = vclz %v2279
        %v2281 = vsub.s32 %v2280, 2
        %vm2282 = vcmp.gt.s32.totalorder 0, %v2281
        %v2283 = vsel %vm2282, 0, %v2281
        %v2284 = vsub.s32 32, %v2283
        %v2285 = vshll.u32 %v2276, %v2283
        %v2286 = vshrl.u32 %v2268, %v2284
        %v2287 = vor.u32 %v2285, %v2286
        %v2288 = vsub.s32 4294967266, %v2283
        %v2289 = vadd.s32 %v2288, 127
        %v2290 = vshll.u32 %v2289, 23
        %v2291 = vor.u32 4788187, %v2290
        %v2292 = vand.u32 2147483647, %v2291
        %v2294 = vcvt.s32.f32 %v2287
        %v2295 = vmul.f32 %v2294, %v2292
        %v2296 = vxor.u32 %v2295, 2147483648
        %v2297 = vsel %vm2214, %v2296, %v2295
        %v2298 = vsub.s32 4, %v2274
        %v2299 = vsel %vm2214, %v2298, %v2274
        %v2300 = vsel %vm2213, %v1590, %v2297
        %v2301 = vsel %vm2213, 0, %v2299
        %v2302 = vcosq.f32.pop %v2300
        %v2303 = vsinq.f32.pop %v2300
        %vm2304 = vweird.f32 %v1590
        %v2305 = vand.u32 %v2301, 3
        %vm2306 = vcmp.lt.s32.totalorder %v2305, 2
        %vm2307 = vcmp.eq.s32.totalorder %v2305, 0
        %v2308 = vxor.u32 %v2303, 2147483648
        %v2309 = vsel %vm2307, %v2302, %v2308
        %vm2310 = vcmp.eq.s32.totalorder %v2305, 2
        %v2311 = vxor.u32 %v2302, 2147483648
        %v2312 = vsel %vm2310, %v2311, %v2303
        %v2313 = vsel %vm2306, %v2309, %v2312
        %v2314 = vsel %vm2304, nan, %v2313
        %v2315 = vand.u32 2147483647, %v1595
        %vm2316 = vcmp.le.f32.partialorder %v2315, 0.7853982
        %vm2317 = vcmp.lt.s32.totalorder %v1595, 0
        %v2318 = vand.u32 %v1595, 2139095040
        %v2319 = vshrl.u32 %v2318, 23
        %v2320 = vsub.s32 %v2319, 127
        %v2321 = vand.u32 2147483647, %v1595
        %v2322 = vand.u32 %v2321, 8388607
        %v2323 = vor.u32 %v2322, 8388608
        %v2324 = vsub.s32 0, %v2323
        %v2325 = vadd.s32 %v2320, 1
        %vm2326 = vcmp.gt.s32.totalorder %v2325, 0
        %v2327 = vsel %vm2326, %v2325, 0
        %v2328 = vshrl.u32 %v2327, 5
        %v2329 = vand.u32 %v2327, 31
        %v2330 = vsub.s32 32, %v2329
        %v2331 = vshrl.u32 683565275, %v2330
        %v2332 = vshll.u32 683565275, %v2329
        %v2333 = vshrl.u32 2475754826, %v2330
        %v2334 = vor.u32 %v2332, %v2333
        %v2335 = vshll.u32 2475754826, %v2329
        %v2336 = vshrl.u32 2131351028, %v2330
        %v2337 = vor.u32 %v2335, %v2336
        %v2338 = vshll.u32 2131351028, %v2329
        %v2339 = vshrl.u32 2102212464, %v2330
        %v2340 = vor.u32 %v2338, %v2339
        %v2341 = vshll.u32 2102212464, %v2329
        %v2342 = vshrl.u32 920167782, %v2330
        %v2343 = vor.u32 %v2341, %v2342
        %v2344 = vshll.u32 920167782, %v2329
        %v2345 = vshrl.u32 1326507024, %v2330
        %v2346 = vor.u32 %v2344, %v2345
        %vm2347 = vcmp.lt.s32.totalorder %v2328, 1
        %vm2348 = vcmp.lt.s32.totalorder %v2328, 2
        %vm2349 = vcmp.lt.s32.totalorder %v2328, 3
        %vm2350 = vcmp.lt.s32.totalorder %v2328, 4
        %v2351 = vsel %vm2347, %v2331, %v2334
        %v2352 = vsel %vm2350, %v2340, 2102212464
        %v2353 = vsel %vm2349, %v2337, %v2352
        %v2354 = vsel %vm2348, %v2351, %v2353
        %v2355 = vsel %vm2347, %v2334, %v2337
        %v2356 = vsel %vm2350, %v2343, 920167782
        %v2357 = vsel %vm2349, %v2340, %v2356
        %v2358 = vsel %vm2348, %v2355, %v2357
        %v2359 = vsel %vm2347, %v2337, %v2340
        %v2360 = vsel %vm2350, %v2346, 1326507024
        %v2361 = vsel %vm2349, %v2343, %v2360
        %v2362 = vsel %vm2348, %v2359, %v2361
        %v2363 = vshll.u32 %v2323, 8
        %v2364 = vmul.u32.u64.compose %v2363, %v2362
        %v2365 = vextract.low.u32 %v2364
        %v2366 = vextract.high.u32 %v2364
        %v2367 = vmul.u32.u64.compose %v2363, %v2358
        %v2368 = vextract.low.u32 %v2367
        %v2369 = vextract.high.u32 %v2367
        %v2370 = vmul.u32 %v2363, %v2354
        %v2371 = vadd.s32 %v2366, %v2368
        %vm2372 = vc.u32 %v2366, %v2368
        %v2373 = vadd.s32 %v2369, 1
        %v2374 = vsel %vm2372, %v2373, %v2369
        %v2375 = vadd.s32 %v2370, %v2374
        %v2376 = vadd.s32 %v2375, 536870912
        %v2377 = vshrl.u32 %v2376, 30
        %v2378 = vshll.u32 %v2377, 30
        %v2379 = vsub.s32 %v2375, %v2378
        %vm2380 = vcmp.lt.s32.totalorder %v2379, 0
        %v2381 = vsub.s32 0, %v2379
        %v2382 = vsel %vm2380, %v2381, %v2379
        %v2383 = vclz %v2382
        %v2384 = vsub.s32 %v2383, 2
        %vm2385 = vcmp.gt.s32.totalorder 0, %v2384
        %v2386 = vsel %vm2385, 0, %v2384
        %v2387 = vsub.s32 32, %v2386
        %v2388 = vshll.u32 %v2379, %v2386
        %v2389 = vshrl.u32 %v2371, %v2387
        %v2390 = vor.u32 %v2388, %v2389
        %v2391 = vsub.s32 4294967266, %v2386
        %v2392 = vadd.s32 %v2391, 127
        %v2393 = vshll.u32 %v2392, 23
        %v2394 = vor.u32 4788187, %v2393
        %v2395 = vand.u32 2147483647, %v2394
        %v2397 = vcvt.s32.f32 %v2390
        %v2398 = vmul.f32 %v2397, %v2395
        %v2399 = vxor.u32 %v2398, 2147483648
        %v2400 = vsel %vm2317, %v2399, %v2398
        %v2401 = vsub.s32 4, %v2377
        %v2402 = vsel %vm2317, %v2401, %v2377
        %v2403 = vsel %vm2316, %v1595, %v2400
        %v2404 = vsel %vm2316, 0, %v2402
        %v2405 = vcosq.f32.pop %v2403
        %v2406 = vsinq.f32.pop %v2403
        %vm2407 = vweird.f32 %v1595
        %v2408 = vand.u32 %v2404, 3
        %vm2409 = vcmp.lt.s32.totalorder %v2408, 2
        %vm2410 = vcmp.eq.s32.totalorder %v2408, 0
        %v2411 = vxor.u32 %v2406, 2147483648
        %v2412 = vsel %vm2410, %v2405, %v2411
        %vm2413 = vcmp.eq.s32.totalorder %v2408, 2
        %v2414 = vxor.u32 %v2405, 2147483648
        %v2415 = vsel %vm2413, %v2414, %v2406
        %v2416 = vsel %vm2409, %v2412, %v2415
        %v2417 = vsel %vm2407, nan, %v2416
        %v2418 = vand.u32 2147483647, %v1598
        %vm2419 = vcmp.le.f32.partialorder %v2418, 0.7853982
        %vm2420 = vcmp.lt.s32.totalorder %v1598, 0
        %v2421 = vand.u32 %v1598, 2139095040
        %v2422 = vshrl.u32 %v2421, 23
        %v2423 = vsub.s32 %v2422, 127
        %v2424 = vand.u32 2147483647, %v1598
        %v2425 = vand.u32 %v2424, 8388607
        %v2426 = vor.u32 %v2425, 8388608
        %v2427 = vsub.s32 0, %v2426
        %v2428 = vadd.s32 %v2423, 1
        %vm2429 = vcmp.gt.s32.totalorder %v2428, 0
        %v2430 = vsel %vm2429, %v2428, 0
        %v2431 = vshrl.u32 %v2430, 5
        %v2432 = vand.u32 %v2430, 31
        %v2433 = vsub.s32 32, %v2432
        %v2434 = vshrl.u32 683565275, %v2433
        %v2435 = vshll.u32 683565275, %v2432
        %v2436 = vshrl.u32 2475754826, %v2433
        %v2437 = vor.u32 %v2435, %v2436
        %v2438 = vshll.u32 2475754826, %v2432
        %v2439 = vshrl.u32 2131351028, %v2433
        %v2440 = vor.u32 %v2438, %v2439
        %v2441 = vshll.u32 2131351028, %v2432
        %v2442 = vshrl.u32 2102212464, %v2433
        %v2443 = vor.u32 %v2441, %v2442
        %v2444 = vshll.u32 2102212464, %v2432
        %v2445 = vshrl.u32 920167782, %v2433
        %v2446 = vor.u32 %v2444, %v2445
        %v2447 = vshll.u32 920167782, %v2432
        %v2448 = vshrl.u32 1326507024, %v2433
        %v2449 = vor.u32 %v2447, %v2448
        %vm2450 = vcmp.lt.s32.totalorder %v2431, 1
        %vm2451 = vcmp.lt.s32.totalorder %v2431, 2
        %vm2452 = vcmp.lt.s32.totalorder %v2431, 3
        %vm2453 = vcmp.lt.s32.totalorder %v2431, 4
        %v2454 = vsel %vm2450, %v2434, %v2437
        %v2455 = vsel %vm2453, %v2443, 2102212464
        %v2456 = vsel %vm2452, %v2440, %v2455
        %v2457 = vsel %vm2451, %v2454, %v2456
        %v2458 = vsel %vm2450, %v2437, %v2440
        %v2459 = vsel %vm2453, %v2446, 920167782
        %v2460 = vsel %vm2452, %v2443, %v2459
        %v2461 = vsel %vm2451, %v2458, %v2460
        %v2462 = vsel %vm2450, %v2440, %v2443
        %v2463 = vsel %vm2453, %v2449, 1326507024
        %v2464 = vsel %vm2452, %v2446, %v2463
        %v2465 = vsel %vm2451, %v2462, %v2464
        %v2466 = vshll.u32 %v2426, 8
        %v2467 = vmul.u32.u64.compose %v2466, %v2465
        %v2468 = vextract.low.u32 %v2467
        %v2469 = vextract.high.u32 %v2467
        %v2470 = vmul.u32.u64.compose %v2466, %v2461
        %v2471 = vextract.low.u32 %v2470
        %v2472 = vextract.high.u32 %v2470
        %v2473 = vmul.u32 %v2466, %v2457
        %v2474 = vadd.s32 %v2469, %v2471
        %vm2475 = vc.u32 %v2469, %v2471
        %v2476 = vadd.s32 %v2472, 1
        %v2477 = vsel %vm2475, %v2476, %v2472
        %v2478 = vadd.s32 %v2473, %v2477
        %v2479 = vadd.s32 %v2478, 536870912
        %v2480 = vshrl.u32 %v2479, 30
        %v2481 = vshll.u32 %v2480, 30
        %v2482 = vsub.s32 %v2478, %v2481
        %vm2483 = vcmp.lt.s32.totalorder %v2482, 0
        %v2484 = vsub.s32 0, %v2482
        %v2485 = vsel %vm2483, %v2484, %v2482
        %v2486 = vclz %v2485
        %v2487 = vsub.s32 %v2486, 2
        %vm2488 = vcmp.gt.s32.totalorder 0, %v2487
        %v2489 = vsel %vm2488, 0, %v2487
        %v2490 = vsub.s32 32, %v2489
        %v2491 = vshll.u32 %v2482, %v2489
        %v2492 = vshrl.u32 %v2474, %v2490
        %v2493 = vor.u32 %v2491, %v2492
        %v2494 = vsub.s32 4294967266, %v2489
        %v2495 = vadd.s32 %v2494, 127
        %v2496 = vshll.u32 %v2495, 23
        %v2497 = vor.u32 4788187, %v2496
        %v2498 = vand.u32 2147483647, %v2497
        %v2500 = vcvt.s32.f32 %v2493
        %v2501 = vmul.f32 %v2500, %v2498
        %v2502 = vxor.u32 %v2501, 2147483648
        %v2503 = vsel %vm2420, %v2502, %v2501
        %v2504 = vsub.s32 4, %v2480
        %v2505 = vsel %vm2420, %v2504, %v2480
        %v2506 = vsel %vm2419, %v1598, %v2503
        %v2507 = vsel %vm2419, 0, %v2505
        %v2508 = vcosq.f32.pop %v2506
        %v2509 = vsinq.f32.pop %v2506
        %vm2510 = vweird.f32 %v1598
        %v2511 = vand.u32 %v2507, 3
        %vm2512 = vcmp.lt.s32.totalorder %v2511, 2
        %vm2513 = vcmp.eq.s32.totalorder %v2511, 0
        %v2514 = vxor.u32 %v2509, 2147483648
        %v2515 = vsel %vm2513, %v2508, %v2514
        %vm2516 = vcmp.eq.s32.totalorder %v2511, 2
        %v2517 = vxor.u32 %v2508, 2147483648
        %v2518 = vsel %vm2516, %v2517, %v2509
        %v2519 = vsel %vm2512, %v2515, %v2518
        %v2520 = vsel %vm2510, nan, %v2519
        %v2521 = vand.u32 2147483647, %v1603
        %vm2522 = vcmp.le.f32.partialorder %v2521, 0.7853982
        %vm2523 = vcmp.lt.s32.totalorder %v1603, 0
        %v2524 = vand.u32 %v1603, 2139095040
        %v2525 = vshrl.u32 %v2524, 23
        %v2526 = vsub.s32 %v2525, 127
        %v2527 = vand.u32 2147483647, %v1603
        %v2528 = vand.u32 %v2527, 8388607
        %v2529 = vor.u32 %v2528, 8388608
        %v2530 = vsub.s32 0, %v2529
        %v2531 = vadd.s32 %v2526, 1
        %vm2532 = vcmp.gt.s32.totalorder %v2531, 0
        %v2533 = vsel %vm2532, %v2531, 0
        %v2534 = vshrl.u32 %v2533, 5
        %v2535 = vand.u32 %v2533, 31
        %v2536 = vsub.s32 32, %v2535
        %v2537 = vshrl.u32 683565275, %v2536
        %v2538 = vshll.u32 683565275, %v2535
        %v2539 = vshrl.u32 2475754826, %v2536
        %v2540 = vor.u32 %v2538, %v2539
        %v2541 = vshll.u32 2475754826, %v2535
        %v2542 = vshrl.u32 2131351028, %v2536
        %v2543 = vor.u32 %v2541, %v2542
        %v2544 = vshll.u32 2131351028, %v2535
        %v2545 = vshrl.u32 2102212464, %v2536
        %v2546 = vor.u32 %v2544, %v2545
        %v2547 = vshll.u32 2102212464, %v2535
        %v2548 = vshrl.u32 920167782, %v2536
        %v2549 = vor.u32 %v2547, %v2548
        %v2550 = vshll.u32 920167782, %v2535
        %v2551 = vshrl.u32 1326507024, %v2536
        %v2552 = vor.u32 %v2550, %v2551
        %vm2553 = vcmp.lt.s32.totalorder %v2534, 1
        %vm2554 = vcmp.lt.s32.totalorder %v2534, 2
        %vm2555 = vcmp.lt.s32.totalorder %v2534, 3
        %vm2556 = vcmp.lt.s32.totalorder %v2534, 4
        %v2557 = vsel %vm2553, %v2537, %v2540
        %v2558 = vsel %vm2556, %v2546, 2102212464
        %v2559 = vsel %vm2555, %v2543, %v2558
        %v2560 = vsel %vm2554, %v2557, %v2559
        %v2561 = vsel %vm2553, %v2540, %v2543
        %v2562 = vsel %vm2556, %v2549, 920167782
        %v2563 = vsel %vm2555, %v2546, %v2562
        %v2564 = vsel %vm2554, %v2561, %v2563
        %v2565 = vsel %vm2553, %v2543, %v2546
        %v2566 = vsel %vm2556, %v2552, 1326507024
        %v2567 = vsel %vm2555, %v2549, %v2566
        %v2568 = vsel %vm2554, %v2565, %v2567
        %v2569 = vshll.u32 %v2529, 8
        %v2570 = vmul.u32.u64.compose %v2569, %v2568
        %v2571 = vextract.low.u32 %v2570
        %v2572 = vextract.high.u32 %v2570
        %v2573 = vmul.u32.u64.compose %v2569, %v2564
        %v2574 = vextract.low.u32 %v2573
        %v2575 = vextract.high.u32 %v2573
        %v2576 = vmul.u32 %v2569, %v2560
        %v2577 = vadd.s32 %v2572, %v2574
        %vm2578 = vc.u32 %v2572, %v2574
        %v2579 = vadd.s32 %v2575, 1
        %v2580 = vsel %vm2578, %v2579, %v2575
        %v2581 = vadd.s32 %v2576, %v2580
        %v2582 = vadd.s32 %v2581, 536870912
        %v2583 = vshrl.u32 %v2582, 30
        %v2584 = vshll.u32 %v2583, 30
        %v2585 = vsub.s32 %v2581, %v2584
        %vm2586 = vcmp.lt.s32.totalorder %v2585, 0
        %v2587 = vsub.s32 0, %v2585
        %v2588 = vsel %vm2586, %v2587, %v2585
        %v2589 = vclz %v2588
        %v2590 = vsub.s32 %v2589, 2
        %vm2591 = vcmp.gt.s32.totalorder 0, %v2590
        %v2592 = vsel %vm2591, 0, %v2590
        %v2593 = vsub.s32 32, %v2592
        %v2594 = vshll.u32 %v2585, %v2592
        %v2595 = vshrl.u32 %v2577, %v2593
        %v2596 = vor.u32 %v2594, %v2595
        %v2597 = vsub.s32 4294967266, %v2592
        %v2598 = vadd.s32 %v2597, 127
        %v2599 = vshll.u32 %v2598, 23
        %v2600 = vor.u32 4788187, %v2599
        %v2601 = vand.u32 2147483647, %v2600
        %v2603 = vcvt.s32.f32 %v2596
        %v2604 = vmul.f32 %v2603, %v2601
        %v2605 = vxor.u32 %v2604, 2147483648
        %v2606 = vsel %vm2523, %v2605, %v2604
        %v2607 = vsub.s32 4, %v2583
        %v2608 = vsel %vm2523, %v2607, %v2583
        %v2609 = vsel %vm2522, %v1603, %v2606
        %v2610 = vsel %vm2522, 0, %v2608
        %v2611 = vcosq.f32.pop %v2609
        %v2612 = vsinq.f32.pop %v2609
        %vm2613 = vweird.f32 %v1603
        %v2614 = vand.u32 %v2610, 3
        %vm2615 = vcmp.lt.s32.totalorder %v2614, 2
        %vm2616 = vcmp.eq.s32.totalorder %v2614, 0
        %v2617 = vxor.u32 %v2612, 2147483648
        %v2618 = vsel %vm2616, %v2611, %v2617
        %vm2619 = vcmp.eq.s32.totalorder %v2614, 2
        %v2620 = vxor.u32 %v2611, 2147483648
        %v2621 = vsel %vm2619, %v2620, %v2612
        %v2622 = vsel %vm2615, %v2618, %v2621
        %v2623 = vsel %vm2613, nan, %v2622
        %v2624 = vand.u32 2147483647, %v1606
        %vm2625 = vcmp.le.f32.partialorder %v2624, 0.7853982
        %vm2626 = vcmp.lt.s32.totalorder %v1606, 0
        %v2627 = vand.u32 %v1606, 2139095040
        %v2628 = vshrl.u32 %v2627, 23
        %v2629 = vsub.s32 %v2628, 127
        %v2630 = vand.u32 2147483647, %v1606
        %v2631 = vand.u32 %v2630, 8388607
        %v2632 = vor.u32 %v2631, 8388608
        %v2633 = vsub.s32 0, %v2632
        %v2634 = vadd.s32 %v2629, 1
        %vm2635 = vcmp.gt.s32.totalorder %v2634, 0
        %v2636 = vsel %vm2635, %v2634, 0
        %v2637 = vshrl.u32 %v2636, 5
        %v2638 = vand.u32 %v2636, 31
        %v2639 = vsub.s32 32, %v2638
        %v2640 = vshrl.u32 683565275, %v2639
        %v2641 = vshll.u32 683565275, %v2638
        %v2642 = vshrl.u32 2475754826, %v2639
        %v2643 = vor.u32 %v2641, %v2642
        %v2644 = vshll.u32 2475754826, %v2638
        %v2645 = vshrl.u32 2131351028, %v2639
        %v2646 = vor.u32 %v2644, %v2645
        %v2647 = vshll.u32 2131351028, %v2638
        %v2648 = vshrl.u32 2102212464, %v2639
        %v2649 = vor.u32 %v2647, %v2648
        %v2650 = vshll.u32 2102212464, %v2638
        %v2651 = vshrl.u32 920167782, %v2639
        %v2652 = vor.u32 %v2650, %v2651
        %v2653 = vshll.u32 920167782, %v2638
        %v2654 = vshrl.u32 1326507024, %v2639
        %v2655 = vor.u32 %v2653, %v2654
        %vm2656 = vcmp.lt.s32.totalorder %v2637, 1
        %vm2657 = vcmp.lt.s32.totalorder %v2637, 2
        %vm2658 = vcmp.lt.s32.totalorder %v2637, 3
        %vm2659 = vcmp.lt.s32.totalorder %v2637, 4
        %v2660 = vsel %vm2656, %v2640, %v2643
        %v2661 = vsel %vm2659, %v2649, 2102212464
        %v2662 = vsel %vm2658, %v2646, %v2661
        %v2663 = vsel %vm2657, %v2660, %v2662
        %v2664 = vsel %vm2656, %v2643, %v2646
        %v2665 = vsel %vm2659, %v2652, 920167782
        %v2666 = vsel %vm2658, %v2649, %v2665
        %v2667 = vsel %vm2657, %v2664, %v2666
        %v2668 = vsel %vm2656, %v2646, %v2649
        %v2669 = vsel %vm2659, %v2655, 1326507024
        %v2670 = vsel %vm2658, %v2652, %v2669
        %v2671 = vsel %vm2657, %v2668, %v2670
        %v2672 = vshll.u32 %v2632, 8
        %v2673 = vmul.u32.u64.compose %v2672, %v2671
        %v2674 = vextract.low.u32 %v2673
        %v2675 = vextract.high.u32 %v2673
        %v2676 = vmul.u32.u64.compose %v2672, %v2667
        %v2677 = vextract.low.u32 %v2676
        %v2678 = vextract.high.u32 %v2676
        %v2679 = vmul.u32 %v2672, %v2663
        %v2680 = vadd.s32 %v2675, %v2677
        %vm2681 = vc.u32 %v2675, %v2677
        %v2682 = vadd.s32 %v2678, 1
        %v2683 = vsel %vm2681, %v2682, %v2678
        %v2684 = vadd.s32 %v2679, %v2683
        %v2685 = vadd.s32 %v2684, 536870912
        %v2686 = vshrl.u32 %v2685, 30
        %v2687 = vshll.u32 %v2686, 30
        %v2688 = vsub.s32 %v2684, %v2687
        %vm2689 = vcmp.lt.s32.totalorder %v2688, 0
        %v2690 = vsub.s32 0, %v2688
        %v2691 = vsel %vm2689, %v2690, %v2688
        %v2692 = vclz %v2691
        %v2693 = vsub.s32 %v2692, 2
        %vm2694 = vcmp.gt.s32.totalorder 0, %v2693
        %v2695 = vsel %vm2694, 0, %v2693
        %v2696 = vsub.s32 32, %v2695
        %v2697 = vshll.u32 %v2688, %v2695
        %v2698 = vshrl.u32 %v2680, %v2696
        %v2699 = vor.u32 %v2697, %v2698
        %v2700 = vsub.s32 4294967266, %v2695
        %v2701 = vadd.s32 %v2700, 127
        %v2702 = vshll.u32 %v2701, 23
        %v2703 = vor.u32 4788187, %v2702
        %v2704 = vand.u32 2147483647, %v2703
        %v2706 = vcvt.s32.f32 %v2699
        %v2707 = vmul.f32 %v2706, %v2704
        %v2708 = vxor.u32 %v2707, 2147483648
        %v2709 = vsel %vm2626, %v2708, %v2707
        %v2710 = vsub.s32 4, %v2686
        %v2711 = vsel %vm2626, %v2710, %v2686
        %v2712 = vsel %vm2625, %v1606, %v2709
        %v2713 = vsel %vm2625, 0, %v2711
        %v2714 = vcosq.f32.pop %v2712
        %v2715 = vsinq.f32.pop %v2712
        %vm2716 = vweird.f32 %v1606
        %v2717 = vand.u32 %v2713, 3
        %vm2718 = vcmp.lt.s32.totalorder %v2717, 2
        %vm2719 = vcmp.eq.s32.totalorder %v2717, 0
        %v2720 = vxor.u32 %v2715, 2147483648
        %v2721 = vsel %vm2719, %v2714, %v2720
        %vm2722 = vcmp.eq.s32.totalorder %v2717, 2
        %v2723 = vxor.u32 %v2714, 2147483648
        %v2724 = vsel %vm2722, %v2723, %v2715
        %v2725 = vsel %vm2718, %v2721, %v2724
        %v2726 = vsel %vm2716, nan, %v2725
        %v2727 = vand.u32 2147483647, %v1611
        %vm2728 = vcmp.le.f32.partialorder %v2727, 0.7853982
        %vm2729 = vcmp.lt.s32.totalorder %v1611, 0
        %v2730 = vand.u32 %v1611, 2139095040
        %v2731 = vshrl.u32 %v2730, 23
        %v2732 = vsub.s32 %v2731, 127
        %v2733 = vand.u32 2147483647, %v1611
        %v2734 = vand.u32 %v2733, 8388607
        %v2735 = vor.u32 %v2734, 8388608
        %v2736 = vsub.s32 0, %v2735
        %v2737 = vadd.s32 %v2732, 1
        %vm2738 = vcmp.gt.s32.totalorder %v2737, 0
        %v2739 = vsel %vm2738, %v2737, 0
        %v2740 = vshrl.u32 %v2739, 5
        %v2741 = vand.u32 %v2739, 31
        %v2742 = vsub.s32 32, %v2741
        %v2743 = vshrl.u32 683565275, %v2742
        %v2744 = vshll.u32 683565275, %v2741
        %v2745 = vshrl.u32 2475754826, %v2742
        %v2746 = vor.u32 %v2744, %v2745
        %v2747 = vshll.u32 2475754826, %v2741
        %v2748 = vshrl.u32 2131351028, %v2742
        %v2749 = vor.u32 %v2747, %v2748
        %v2750 = vshll.u32 2131351028, %v2741
        %v2751 = vshrl.u32 2102212464, %v2742
        %v2752 = vor.u32 %v2750, %v2751
        %v2753 = vshll.u32 2102212464, %v2741
        %v2754 = vshrl.u32 920167782, %v2742
        %v2755 = vor.u32 %v2753, %v2754
        %v2756 = vshll.u32 920167782, %v2741
        %v2757 = vshrl.u32 1326507024, %v2742
        %v2758 = vor.u32 %v2756, %v2757
        %vm2759 = vcmp.lt.s32.totalorder %v2740, 1
        %vm2760 = vcmp.lt.s32.totalorder %v2740, 2
        %vm2761 = vcmp.lt.s32.totalorder %v2740, 3
        %vm2762 = vcmp.lt.s32.totalorder %v2740, 4
        %v2763 = vsel %vm2759, %v2743, %v2746
        %v2764 = vsel %vm2762, %v2752, 2102212464
        %v2765 = vsel %vm2761, %v2749, %v2764
        %v2766 = vsel %vm2760, %v2763, %v2765
        %v2767 = vsel %vm2759, %v2746, %v2749
        %v2768 = vsel %vm2762, %v2755, 920167782
        %v2769 = vsel %vm2761, %v2752, %v2768
        %v2770 = vsel %vm2760, %v2767, %v2769
        %v2771 = vsel %vm2759, %v2749, %v2752
        %v2772 = vsel %vm2762, %v2758, 1326507024
        %v2773 = vsel %vm2761, %v2755, %v2772
        %v2774 = vsel %vm2760, %v2771, %v2773
        %v2775 = vshll.u32 %v2735, 8
        %v2776 = vmul.u32.u64.compose %v2775, %v2774
        %v2777 = vextract.low.u32 %v2776
        %v2778 = vextract.high.u32 %v2776
        %v2779 = vmul.u32.u64.compose %v2775, %v2770
        %v2780 = vextract.low.u32 %v2779
        %v2781 = vextract.high.u32 %v2779
        %v2782 = vmul.u32 %v2775, %v2766
        %v2783 = vadd.s32 %v2778, %v2780
        %vm2784 = vc.u32 %v2778, %v2780
        %v2785 = vadd.s32 %v2781, 1
        %v2786 = vsel %vm2784, %v2785, %v2781
        %v2787 = vadd.s32 %v2782, %v2786
        %v2788 = vadd.s32 %v2787, 536870912
        %v2789 = vshrl.u32 %v2788, 30
        %v2790 = vshll.u32 %v2789, 30
        %v2791 = vsub.s32 %v2787, %v2790
        %vm2792 = vcmp.lt.s32.totalorder %v2791, 0
        %v2793 = vsub.s32 0, %v2791
        %v2794 = vsel %vm2792, %v2793, %v2791
        %v2795 = vclz %v2794
        %v2796 = vsub.s32 %v2795, 2
        %vm2797 = vcmp.gt.s32.totalorder 0, %v2796
        %v2798 = vsel %vm2797, 0, %v2796
        %v2799 = vsub.s32 32, %v2798
        %v2800 = vshll.u32 %v2791, %v2798
        %v2801 = vshrl.u32 %v2783, %v2799
        %v2802 = vor.u32 %v2800, %v2801
        %v2803 = vsub.s32 4294967266, %v2798
        %v2804 = vadd.s32 %v2803, 127
        %v2805 = vshll.u32 %v2804, 23
        %v2806 = vor.u32 4788187, %v2805
        %v2807 = vand.u32 2147483647, %v2806
        %v2809 = vcvt.s32.f32 %v2802
        %v2810 = vmul.f32 %v2809, %v2807
        %v2811 = vxor.u32 %v2810, 2147483648
        %v2812 = vsel %vm2729, %v2811, %v2810
        %v2813 = vsub.s32 4, %v2789
        %v2814 = vsel %vm2729, %v2813, %v2789
        %v2815 = vsel %vm2728, %v1611, %v2812
        %v2816 = vsel %vm2728, 0, %v2814
        %v2817 = vcosq.f32.pop %v2815
        %v2818 = vsinq.f32.pop %v2815
        %vm2819 = vweird.f32 %v1611
        %v2820 = vand.u32 %v2816, 3
        %vm2821 = vcmp.lt.s32.totalorder %v2820, 2
        %vm2822 = vcmp.eq.s32.totalorder %v2820, 0
        %v2823 = vxor.u32 %v2818, 2147483648
        %v2824 = vsel %vm2822, %v2817, %v2823
        %vm2825 = vcmp.eq.s32.totalorder %v2820, 2
        %v2826 = vxor.u32 %v2817, 2147483648
        %v2827 = vsel %vm2825, %v2826, %v2818
        %v2828 = vsel %vm2821, %v2824, %v2827
        %v2829 = vsel %vm2819, nan, %v2828
        %v2830 = vand.u32 2147483647, %v1614
        %vm2831 = vcmp.le.f32.partialorder %v2830, 0.7853982
        %vm2832 = vcmp.lt.s32.totalorder %v1614, 0
        %v2833 = vand.u32 %v1614, 2139095040
        %v2834 = vshrl.u32 %v2833, 23
        %v2835 = vsub.s32 %v2834, 127
        %v2836 = vand.u32 2147483647, %v1614
        %v2837 = vand.u32 %v2836, 8388607
        %v2838 = vor.u32 %v2837, 8388608
        %v2839 = vsub.s32 0, %v2838
        %v2840 = vadd.s32 %v2835, 1
        %vm2841 = vcmp.gt.s32.totalorder %v2840, 0
        %v2842 = vsel %vm2841, %v2840, 0
        %v2843 = vshrl.u32 %v2842, 5
        %v2844 = vand.u32 %v2842, 31
        %v2845 = vsub.s32 32, %v2844
        %v2846 = vshrl.u32 683565275, %v2845
        %v2847 = vshll.u32 683565275, %v2844
        %v2848 = vshrl.u32 2475754826, %v2845
        %v2849 = vor.u32 %v2847, %v2848
        %v2850 = vshll.u32 2475754826, %v2844
        %v2851 = vshrl.u32 2131351028, %v2845
        %v2852 = vor.u32 %v2850, %v2851
        %v2853 = vshll.u32 2131351028, %v2844
        %v2854 = vshrl.u32 2102212464, %v2845
        %v2855 = vor.u32 %v2853, %v2854
        %v2856 = vshll.u32 2102212464, %v2844
        %v2857 = vshrl.u32 920167782, %v2845
        %v2858 = vor.u32 %v2856, %v2857
        %v2859 = vshll.u32 920167782, %v2844
        %v2860 = vshrl.u32 1326507024, %v2845
        %v2861 = vor.u32 %v2859, %v2860
        %vm2862 = vcmp.lt.s32.totalorder %v2843, 1
        %vm2863 = vcmp.lt.s32.totalorder %v2843, 2
        %vm2864 = vcmp.lt.s32.totalorder %v2843, 3
        %vm2865 = vcmp.lt.s32.totalorder %v2843, 4
        %v2866 = vsel %vm2862, %v2846, %v2849
        %v2867 = vsel %vm2865, %v2855, 2102212464
        %v2868 = vsel %vm2864, %v2852, %v2867
        %v2869 = vsel %vm2863, %v2866, %v2868
        %v2870 = vsel %vm2862, %v2849, %v2852
        %v2871 = vsel %vm2865, %v2858, 920167782
        %v2872 = vsel %vm2864, %v2855, %v2871
        %v2873 = vsel %vm2863, %v2870, %v2872
        %v2874 = vsel %vm2862, %v2852, %v2855
        %v2875 = vsel %vm2865, %v2861, 1326507024
        %v2876 = vsel %vm2864, %v2858, %v2875
        %v2877 = vsel %vm2863, %v2874, %v2876
        %v2878 = vshll.u32 %v2838, 8
        %v2879 = vmul.u32.u64.compose %v2878, %v2877
        %v2880 = vextract.low.u32 %v2879
        %v2881 = vextract.high.u32 %v2879
        %v2882 = vmul.u32.u64.compose %v2878, %v2873
        %v2883 = vextract.low.u32 %v2882
        %v2884 = vextract.high.u32 %v2882
        %v2885 = vmul.u32 %v2878, %v2869
        %v2886 = vadd.s32 %v2881, %v2883
        %vm2887 = vc.u32 %v2881, %v2883
        %v2888 = vadd.s32 %v2884, 1
        %v2889 = vsel %vm2887, %v2888, %v2884
        %v2890 = vadd.s32 %v2885, %v2889
        %v2891 = vadd.s32 %v2890, 536870912
        %v2892 = vshrl.u32 %v2891, 30
        %v2893 = vshll.u32 %v2892, 30
        %v2894 = vsub.s32 %v2890, %v2893
        %vm2895 = vcmp.lt.s32.totalorder %v2894, 0
        %v2896 = vsub.s32 0, %v2894
        %v2897 = vsel %vm2895, %v2896, %v2894
        %v2898 = vclz %v2897
        %v2899 = vsub.s32 %v2898, 2
        %vm2900 = vcmp.gt.s32.totalorder 0, %v2899
        %v2901 = vsel %vm2900, 0, %v2899
        %v2902 = vsub.s32 32, %v2901
        %v2903 = vshll.u32 %v2894, %v2901
        %v2904 = vshrl.u32 %v2886, %v2902
        %v2905 = vor.u32 %v2903, %v2904
        %v2906 = vsub.s32 4294967266, %v2901
        %v2907 = vadd.s32 %v2906, 127
        %v2908 = vshll.u32 %v2907, 23
        %v2909 = vor.u32 4788187, %v2908
        %v2910 = vand.u32 2147483647, %v2909
        %v2912 = vcvt.s32.f32 %v2905
        %v2913 = vmul.f32 %v2912, %v2910
        %v2914 = vxor.u32 %v2913, 2147483648
        %v2915 = vsel %vm2832, %v2914, %v2913
        %v2916 = vsub.s32 4, %v2892
        %v2917 = vsel %vm2832, %v2916, %v2892
        %v2918 = vsel %vm2831, %v1614, %v2915
        %v2919 = vsel %vm2831, 0, %v2917
        %v2920 = vcosq.f32.pop %v2918
        %v2921 = vsinq.f32.pop %v2918
        %vm2922 = vweird.f32 %v1614
        %v2923 = vand.u32 %v2919, 3
        %vm2924 = vcmp.lt.s32.totalorder %v2923, 2
        %vm2925 = vcmp.eq.s32.totalorder %v2923, 0
        %v2926 = vxor.u32 %v2921, 2147483648
        %v2927 = vsel %vm2925, %v2920, %v2926
        %vm2928 = vcmp.eq.s32.totalorder %v2923, 2
        %v2929 = vxor.u32 %v2920, 2147483648
        %v2930 = vsel %vm2928, %v2929, %v2921
        %v2931 = vsel %vm2924, %v2927, %v2930
        %v2932 = vsel %vm2922, nan, %v2931
        %v2933 = vand.u32 2147483647, %v1619
        %vm2934 = vcmp.le.f32.partialorder %v2933, 0.7853982
        %vm2935 = vcmp.lt.s32.totalorder %v1619, 0
        %v2936 = vand.u32 %v1619, 2139095040
        %v2937 = vshrl.u32 %v2936, 23
        %v2938 = vsub.s32 %v2937, 127
        %v2939 = vand.u32 2147483647, %v1619
        %v2940 = vand.u32 %v2939, 8388607
        %v2941 = vor.u32 %v2940, 8388608
        %v2942 = vsub.s32 0, %v2941
        %v2943 = vadd.s32 %v2938, 1
        %vm2944 = vcmp.gt.s32.totalorder %v2943, 0
        %v2945 = vsel %vm2944, %v2943, 0
        %v2946 = vshrl.u32 %v2945, 5
        %v2947 = vand.u32 %v2945, 31
        %v2948 = vsub.s32 32, %v2947
        %v2949 = vshrl.u32 683565275, %v2948
        %v2950 = vshll.u32 683565275, %v2947
        %v2951 = vshrl.u32 2475754826, %v2948
        %v2952 = vor.u32 %v2950, %v2951
        %v2953 = vshll.u32 2475754826, %v2947
        %v2954 = vshrl.u32 2131351028, %v2948
        %v2955 = vor.u32 %v2953, %v2954
        %v2956 = vshll.u32 2131351028, %v2947
        %v2957 = vshrl.u32 2102212464, %v2948
        %v2958 = vor.u32 %v2956, %v2957
        %v2959 = vshll.u32 2102212464, %v2947
        %v2960 = vshrl.u32 920167782, %v2948
        %v2961 = vor.u32 %v2959, %v2960
        %v2962 = vshll.u32 920167782, %v2947
        %v2963 = vshrl.u32 1326507024, %v2948
        %v2964 = vor.u32 %v2962, %v2963
        %vm2965 = vcmp.lt.s32.totalorder %v2946, 1
        %vm2966 = vcmp.lt.s32.totalorder %v2946, 2
        %vm2967 = vcmp.lt.s32.totalorder %v2946, 3
        %vm2968 = vcmp.lt.s32.totalorder %v2946, 4
        %v2969 = vsel %vm2965, %v2949, %v2952
        %v2970 = vsel %vm2968, %v2958, 2102212464
        %v2971 = vsel %vm2967, %v2955, %v2970
        %v2972 = vsel %vm2966, %v2969, %v2971
        %v2973 = vsel %vm2965, %v2952, %v2955
        %v2974 = vsel %vm2968, %v2961, 920167782
        %v2975 = vsel %vm2967, %v2958, %v2974
        %v2976 = vsel %vm2966, %v2973, %v2975
        %v2977 = vsel %vm2965, %v2955, %v2958
        %v2978 = vsel %vm2968, %v2964, 1326507024
        %v2979 = vsel %vm2967, %v2961, %v2978
        %v2980 = vsel %vm2966, %v2977, %v2979
        %v2981 = vshll.u32 %v2941, 8
        %v2982 = vmul.u32.u64.compose %v2981, %v2980
        %v2983 = vextract.low.u32 %v2982
        %v2984 = vextract.high.u32 %v2982
        %v2985 = vmul.u32.u64.compose %v2981, %v2976
        %v2986 = vextract.low.u32 %v2985
        %v2987 = vextract.high.u32 %v2985
        %v2988 = vmul.u32 %v2981, %v2972
        %v2989 = vadd.s32 %v2984, %v2986
        %vm2990 = vc.u32 %v2984, %v2986
        %v2991 = vadd.s32 %v2987, 1
        %v2992 = vsel %vm2990, %v2991, %v2987
        %v2993 = vadd.s32 %v2988, %v2992
        %v2994 = vadd.s32 %v2993, 536870912
        %v2995 = vshrl.u32 %v2994, 30
        %v2996 = vshll.u32 %v2995, 30
        %v2997 = vsub.s32 %v2993, %v2996
        %vm2998 = vcmp.lt.s32.totalorder %v2997, 0
        %v2999 = vsub.s32 0, %v2997
        %v3000 = vsel %vm2998, %v2999, %v2997
        %v3001 = vclz %v3000
        %v3002 = vsub.s32 %v3001, 2
        %vm3003 = vcmp.gt.s32.totalorder 0, %v3002
        %v3004 = vsel %vm3003, 0, %v3002
        %v3005 = vsub.s32 32, %v3004
        %v3006 = vshll.u32 %v2997, %v3004
        %v3007 = vshrl.u32 %v2989, %v3005
        %v3008 = vor.u32 %v3006, %v3007
        %v3009 = vsub.s32 4294967266, %v3004
        %v3010 = vadd.s32 %v3009, 127
        %v3011 = vshll.u32 %v3010, 23
        %v3012 = vor.u32 4788187, %v3011
        %v3013 = vand.u32 2147483647, %v3012
        %v3015 = vcvt.s32.f32 %v3008
        %v3016 = vmul.f32 %v3015, %v3013
        %v3017 = vxor.u32 %v3016, 2147483648
        %v3018 = vsel %vm2935, %v3017, %v3016
        %v3019 = vsub.s32 4, %v2995
        %v3020 = vsel %vm2935, %v3019, %v2995
        %v3021 = vsel %vm2934, %v1619, %v3018
        %v3022 = vsel %vm2934, 0, %v3020
        %v3023 = vcosq.f32.pop %v3021
        %v3024 = vsinq.f32.pop %v3021
        %vm3025 = vweird.f32 %v1619
        %v3026 = vand.u32 %v3022, 3
        %vm3027 = vcmp.lt.s32.totalorder %v3026, 2
        %vm3028 = vcmp.eq.s32.totalorder %v3026, 0
        %v3029 = vxor.u32 %v3024, 2147483648
        %v3030 = vsel %vm3028, %v3023, %v3029
        %vm3031 = vcmp.eq.s32.totalorder %v3026, 2
        %v3032 = vxor.u32 %v3023, 2147483648
        %v3033 = vsel %vm3031, %v3032, %v3024
        %v3034 = vsel %vm3027, %v3030, %v3033
        %v3035 = vsel %vm3025, nan, %v3034
        %v3036 = vand.u32 2147483647, %v1622
        %vm3037 = vcmp.le.f32.partialorder %v3036, 0.7853982
        %vm3038 = vcmp.lt.s32.totalorder %v1622, 0
        %v3039 = vand.u32 %v1622, 2139095040
        %v3040 = vshrl.u32 %v3039, 23
        %v3041 = vsub.s32 %v3040, 127
        %v3042 = vand.u32 2147483647, %v1622
        %v3043 = vand.u32 %v3042, 8388607
        %v3044 = vor.u32 %v3043, 8388608
        %v3045 = vsub.s32 0, %v3044
        %v3046 = vadd.s32 %v3041, 1
        %vm3047 = vcmp.gt.s32.totalorder %v3046, 0
        %v3048 = vsel %vm3047, %v3046, 0
        %v3049 = vshrl.u32 %v3048, 5
        %v3050 = vand.u32 %v3048, 31
        %v3051 = vsub.s32 32, %v3050
        %v3052 = vshrl.u32 683565275, %v3051
        %v3053 = vshll.u32 683565275, %v3050
        %v3054 = vshrl.u32 2475754826, %v3051
        %v3055 = vor.u32 %v3053, %v3054
        %v3056 = vshll.u32 2475754826, %v3050
        %v3057 = vshrl.u32 2131351028, %v3051
        %v3058 = vor.u32 %v3056, %v3057
        %v3059 = vshll.u32 2131351028, %v3050
        %v3060 = vshrl.u32 2102212464, %v3051
        %v3061 = vor.u32 %v3059, %v3060
        %v3062 = vshll.u32 2102212464, %v3050
        %v3063 = vshrl.u32 920167782, %v3051
        %v3064 = vor.u32 %v3062, %v3063
        %v3065 = vshll.u32 920167782, %v3050
        %v3066 = vshrl.u32 1326507024, %v3051
        %v3067 = vor.u32 %v3065, %v3066
        %vm3068 = vcmp.lt.s32.totalorder %v3049, 1
        %vm3069 = vcmp.lt.s32.totalorder %v3049, 2
        %vm3070 = vcmp.lt.s32.totalorder %v3049, 3
        %vm3071 = vcmp.lt.s32.totalorder %v3049, 4
        %v3072 = vsel %vm3068, %v3052, %v3055
        %v3073 = vsel %vm3071, %v3061, 2102212464
        %v3074 = vsel %vm3070, %v3058, %v3073
        %v3075 = vsel %vm3069, %v3072, %v3074
        %v3076 = vsel %vm3068, %v3055, %v3058
        %v3077 = vsel %vm3071, %v3064, 920167782
        %v3078 = vsel %vm3070, %v3061, %v3077
        %v3079 = vsel %vm3069, %v3076, %v3078
        %v3080 = vsel %vm3068, %v3058, %v3061
        %v3081 = vsel %vm3071, %v3067, 1326507024
        %v3082 = vsel %vm3070, %v3064, %v3081
        %v3083 = vsel %vm3069, %v3080, %v3082
        %v3084 = vshll.u32 %v3044, 8
        %v3085 = vmul.u32.u64.compose %v3084, %v3083
        %v3086 = vextract.low.u32 %v3085
        %v3087 = vextract.high.u32 %v3085
        %v3088 = vmul.u32.u64.compose %v3084, %v3079
        %v3089 = vextract.low.u32 %v3088
        %v3090 = vextract.high.u32 %v3088
        %v3091 = vmul.u32 %v3084, %v3075
        %v3092 = vadd.s32 %v3087, %v3089
        %vm3093 = vc.u32 %v3087, %v3089
        %v3094 = vadd.s32 %v3090, 1
        %v3095 = vsel %vm3093, %v3094, %v3090
        %v3096 = vadd.s32 %v3091, %v3095
        %v3097 = vadd.s32 %v3096, 536870912
        %v3098 = vshrl.u32 %v3097, 30
        %v3099 = vshll.u32 %v3098, 30
        %v3100 = vsub.s32 %v3096, %v3099
        %vm3101 = vcmp.lt.s32.totalorder %v3100, 0
        %v3102 = vsub.s32 0, %v3100
        %v3103 = vsel %vm3101, %v3102, %v3100
        %v3104 = vclz %v3103
        %v3105 = vsub.s32 %v3104, 2
        %vm3106 = vcmp.gt.s32.totalorder 0, %v3105
        %v3107 = vsel %vm3106, 0, %v3105
        %v3108 = vsub.s32 32, %v3107
        %v3109 = vshll.u32 %v3100, %v3107
        %v3110 = vshrl.u32 %v3092, %v3108
        %v3111 = vor.u32 %v3109, %v3110
        %v3112 = vsub.s32 4294967266, %v3107
        %v3113 = vadd.s32 %v3112, 127
        %v3114 = vshll.u32 %v3113, 23
        %v3115 = vor.u32 4788187, %v3114
        %v3116 = vand.u32 2147483647, %v3115
        %v3118 = vcvt.s32.f32 %v3111
        %v3119 = vmul.f32 %v3118, %v3116
        %v3120 = vxor.u32 %v3119, 2147483648
        %v3121 = vsel %vm3038, %v3120, %v3119
        %v3122 = vsub.s32 4, %v3098
        %v3123 = vsel %vm3038, %v3122, %v3098
        %v3124 = vsel %vm3037, %v1622, %v3121
        %v3125 = vsel %vm3037, 0, %v3123
        %v3126 = vcosq.f32.pop %v3124
        %v3127 = vsinq.f32.pop %v3124
        %vm3128 = vweird.f32 %v1622
        %v3129 = vand.u32 %v3125, 3
        %vm3130 = vcmp.lt.s32.totalorder %v3129, 2
        %vm3131 = vcmp.eq.s32.totalorder %v3129, 0
        %v3132 = vxor.u32 %v3127, 2147483648
        %v3133 = vsel %vm3131, %v3126, %v3132
        %vm3134 = vcmp.eq.s32.totalorder %v3129, 2
        %v3135 = vxor.u32 %v3126, 2147483648
        %v3136 = vsel %vm3134, %v3135, %v3127
        %v3137 = vsel %vm3130, %v3133, %v3136
        %v3138 = vsel %vm3128, nan, %v3137
        %v3139 = vand.u32 2147483647, %v1627
        %vm3140 = vcmp.le.f32.partialorder %v3139, 0.7853982
        %vm3141 = vcmp.lt.s32.totalorder %v1627, 0
        %v3142 = vand.u32 %v1627, 2139095040
        %v3143 = vshrl.u32 %v3142, 23
        %v3144 = vsub.s32 %v3143, 127
        %v3145 = vand.u32 2147483647, %v1627
        %v3146 = vand.u32 %v3145, 8388607
        %v3147 = vor.u32 %v3146, 8388608
        %v3148 = vsub.s32 0, %v3147
        %v3149 = vadd.s32 %v3144, 1
        %vm3150 = vcmp.gt.s32.totalorder %v3149, 0
        %v3151 = vsel %vm3150, %v3149, 0
        %v3152 = vshrl.u32 %v3151, 5
        %v3153 = vand.u32 %v3151, 31
        %v3154 = vsub.s32 32, %v3153
        %v3155 = vshrl.u32 683565275, %v3154
        %v3156 = vshll.u32 683565275, %v3153
        %v3157 = vshrl.u32 2475754826, %v3154
        %v3158 = vor.u32 %v3156, %v3157
        %v3159 = vshll.u32 2475754826, %v3153
        %v3160 = vshrl.u32 2131351028, %v3154
        %v3161 = vor.u32 %v3159, %v3160
        %v3162 = vshll.u32 2131351028, %v3153
        %v3163 = vshrl.u32 2102212464, %v3154
        %v3164 = vor.u32 %v3162, %v3163
        %v3165 = vshll.u32 2102212464, %v3153
        %v3166 = vshrl.u32 920167782, %v3154
        %v3167 = vor.u32 %v3165, %v3166
        %v3168 = vshll.u32 920167782, %v3153
        %v3169 = vshrl.u32 1326507024, %v3154
        %v3170 = vor.u32 %v3168, %v3169
        %vm3171 = vcmp.lt.s32.totalorder %v3152, 1
        %vm3172 = vcmp.lt.s32.totalorder %v3152, 2
        %vm3173 = vcmp.lt.s32.totalorder %v3152, 3
        %vm3174 = vcmp.lt.s32.totalorder %v3152, 4
        %v3175 = vsel %vm3171, %v3155, %v3158
        %v3176 = vsel %vm3174, %v3164, 2102212464
        %v3177 = vsel %vm3173, %v3161, %v3176
        %v3178 = vsel %vm3172, %v3175, %v3177
        %v3179 = vsel %vm3171, %v3158, %v3161
        %v3180 = vsel %vm3174, %v3167, 920167782
        %v3181 = vsel %vm3173, %v3164, %v3180
        %v3182 = vsel %vm3172, %v3179, %v3181
        %v3183 = vsel %vm3171, %v3161, %v3164
        %v3184 = vsel %vm3174, %v3170, 1326507024
        %v3185 = vsel %vm3173, %v3167, %v3184
        %v3186 = vsel %vm3172, %v3183, %v3185
        %v3187 = vshll.u32 %v3147, 8
        %v3188 = vmul.u32.u64.compose %v3187, %v3186
        %v3189 = vextract.low.u32 %v3188
        %v3190 = vextract.high.u32 %v3188
        %v3191 = vmul.u32.u64.compose %v3187, %v3182
        %v3192 = vextract.low.u32 %v3191
        %v3193 = vextract.high.u32 %v3191
        %v3194 = vmul.u32 %v3187, %v3178
        %v3195 = vadd.s32 %v3190, %v3192
        %vm3196 = vc.u32 %v3190, %v3192
        %v3197 = vadd.s32 %v3193, 1
        %v3198 = vsel %vm3196, %v3197, %v3193
        %v3199 = vadd.s32 %v3194, %v3198
        %v3200 = vadd.s32 %v3199, 536870912
        %v3201 = vshrl.u32 %v3200, 30
        %v3202 = vshll.u32 %v3201, 30
        %v3203 = vsub.s32 %v3199, %v3202
        %vm3204 = vcmp.lt.s32.totalorder %v3203, 0
        %v3205 = vsub.s32 0, %v3203
        %v3206 = vsel %vm3204, %v3205, %v3203
        %v3207 = vclz %v3206
        %v3208 = vsub.s32 %v3207, 2
        %vm3209 = vcmp.gt.s32.totalorder 0, %v3208
        %v3210 = vsel %vm3209, 0, %v3208
        %v3211 = vsub.s32 32, %v3210
        %v3212 = vshll.u32 %v3203, %v3210
        %v3213 = vshrl.u32 %v3195, %v3211
        %v3214 = vor.u32 %v3212, %v3213
        %v3215 = vsub.s32 4294967266, %v3210
        %v3216 = vadd.s32 %v3215, 127
        %v3217 = vshll.u32 %v3216, 23
        %v3218 = vor.u32 4788187, %v3217
        %v3219 = vand.u32 2147483647, %v3218
        %v3221 = vcvt.s32.f32 %v3214
        %v3222 = vmul.f32 %v3221, %v3219
        %v3223 = vxor.u32 %v3222, 2147483648
        %v3224 = vsel %vm3141, %v3223, %v3222
        %v3225 = vsub.s32 4, %v3201
        %v3226 = vsel %vm3141, %v3225, %v3201
        %v3227 = vsel %vm3140, %v1627, %v3224
        %v3228 = vsel %vm3140, 0, %v3226
        %v3229 = vcosq.f32.pop %v3227
        %v3230 = vsinq.f32.pop %v3227
        %vm3231 = vweird.f32 %v1627
        %v3232 = vand.u32 %v3228, 3
        %vm3233 = vcmp.lt.s32.totalorder %v3232, 2
        %vm3234 = vcmp.eq.s32.totalorder %v3232, 0
        %v3235 = vxor.u32 %v3230, 2147483648
        %v3236 = vsel %vm3234, %v3229, %v3235
        %vm3237 = vcmp.eq.s32.totalorder %v3232, 2
        %v3238 = vxor.u32 %v3229, 2147483648
        %v3239 = vsel %vm3237, %v3238, %v3230
        %v3240 = vsel %vm3233, %v3236, %v3239
        %v3241 = vsel %vm3231, nan, %v3240
        %v3242 = vand.u32 2147483647, %v1630
        %vm3243 = vcmp.le.f32.partialorder %v3242, 0.7853982
        %vm3244 = vcmp.lt.s32.totalorder %v1630, 0
        %v3245 = vand.u32 %v1630, 2139095040
        %v3246 = vshrl.u32 %v3245, 23
        %v3247 = vsub.s32 %v3246, 127
        %v3248 = vand.u32 2147483647, %v1630
        %v3249 = vand.u32 %v3248, 8388607
        %v3250 = vor.u32 %v3249, 8388608
        %v3251 = vsub.s32 0, %v3250
        %v3252 = vadd.s32 %v3247, 1
        %vm3253 = vcmp.gt.s32.totalorder %v3252, 0
        %v3254 = vsel %vm3253, %v3252, 0
        %v3255 = vshrl.u32 %v3254, 5
        %v3256 = vand.u32 %v3254, 31
        %v3257 = vsub.s32 32, %v3256
        %v3258 = vshrl.u32 683565275, %v3257
        %v3259 = vshll.u32 683565275, %v3256
        %v3260 = vshrl.u32 2475754826, %v3257
        %v3261 = vor.u32 %v3259, %v3260
        %v3262 = vshll.u32 2475754826, %v3256
        %v3263 = vshrl.u32 2131351028, %v3257
        %v3264 = vor.u32 %v3262, %v3263
        %v3265 = vshll.u32 2131351028, %v3256
        %v3266 = vshrl.u32 2102212464, %v3257
        %v3267 = vor.u32 %v3265, %v3266
        %v3268 = vshll.u32 2102212464, %v3256
        %v3269 = vshrl.u32 920167782, %v3257
        %v3270 = vor.u32 %v3268, %v3269
        %v3271 = vshll.u32 920167782, %v3256
        %v3272 = vshrl.u32 1326507024, %v3257
        %v3273 = vor.u32 %v3271, %v3272
        %vm3274 = vcmp.lt.s32.totalorder %v3255, 1
        %vm3275 = vcmp.lt.s32.totalorder %v3255, 2
        %vm3276 = vcmp.lt.s32.totalorder %v3255, 3
        %vm3277 = vcmp.lt.s32.totalorder %v3255, 4
        %v3278 = vsel %vm3274, %v3258, %v3261
        %v3279 = vsel %vm3277, %v3267, 2102212464
        %v3280 = vsel %vm3276, %v3264, %v3279
        %v3281 = vsel %vm3275, %v3278, %v3280
        %v3282 = vsel %vm3274, %v3261, %v3264
        %v3283 = vsel %vm3277, %v3270, 920167782
        %v3284 = vsel %vm3276, %v3267, %v3283
        %v3285 = vsel %vm3275, %v3282, %v3284
        %v3286 = vsel %vm3274, %v3264, %v3267
        %v3287 = vsel %vm3277, %v3273, 1326507024
        %v3288 = vsel %vm3276, %v3270, %v3287
        %v3289 = vsel %vm3275, %v3286, %v3288
        %v3290 = vshll.u32 %v3250, 8
        %v3291 = vmul.u32.u64.compose %v3290, %v3289
        %v3292 = vextract.low.u32 %v3291
        %v3293 = vextract.high.u32 %v3291
        %v3294 = vmul.u32.u64.compose %v3290, %v3285
        %v3295 = vextract.low.u32 %v3294
        %v3296 = vextract.high.u32 %v3294
        %v3297 = vmul.u32 %v3290, %v3281
        %v3298 = vadd.s32 %v3293, %v3295
        %vm3299 = vc.u32 %v3293, %v3295
        %v3300 = vadd.s32 %v3296, 1
        %v3301 = vsel %vm3299, %v3300, %v3296
        %v3302 = vadd.s32 %v3297, %v3301
        %v3303 = vadd.s32 %v3302, 536870912
        %v3304 = vshrl.u32 %v3303, 30
        %v3305 = vshll.u32 %v3304, 30
        %v3306 = vsub.s32 %v3302, %v3305
        %vm3307 = vcmp.lt.s32.totalorder %v3306, 0
        %v3308 = vsub.s32 0, %v3306
        %v3309 = vsel %vm3307, %v3308, %v3306
        %v3310 = vclz %v3309
        %v3311 = vsub.s32 %v3310, 2
        %vm3312 = vcmp.gt.s32.totalorder 0, %v3311
        %v3313 = vsel %vm3312, 0, %v3311
        %v3314 = vsub.s32 32, %v3313
        %v3315 = vshll.u32 %v3306, %v3313
        %v3316 = vshrl.u32 %v3298, %v3314
        %v3317 = vor.u32 %v3315, %v3316
        %v3318 = vsub.s32 4294967266, %v3313
        %v3319 = vadd.s32 %v3318, 127
        %v3320 = vshll.u32 %v3319, 23
        %v3321 = vor.u32 4788187, %v3320
        %v3322 = vand.u32 2147483647, %v3321
        %v3324 = vcvt.s32.f32 %v3317
        %v3325 = vmul.f32 %v3324, %v3322
        %v3326 = vxor.u32 %v3325, 2147483648
        %v3327 = vsel %vm3244, %v3326, %v3325
        %v3328 = vsub.s32 4, %v3304
        %v3329 = vsel %vm3244, %v3328, %v3304
        %v3330 = vsel %vm3243, %v1630, %v3327
        %v3331 = vsel %vm3243, 0, %v3329
        %v3332 = vcosq.f32.pop %v3330
        %v3333 = vsinq.f32.pop %v3330
        %vm3334 = vweird.f32 %v1630
        %v3335 = vand.u32 %v3331, 3
        %vm3336 = vcmp.lt.s32.totalorder %v3335, 2
        %vm3337 = vcmp.eq.s32.totalorder %v3335, 0
        %v3338 = vxor.u32 %v3333, 2147483648
        %v3339 = vsel %vm3337, %v3332, %v3338
        %vm3340 = vcmp.eq.s32.totalorder %v3335, 2
        %v3341 = vxor.u32 %v3332, 2147483648
        %v3342 = vsel %vm3340, %v3341, %v3333
        %v3343 = vsel %vm3336, %v3339, %v3342
        %v3344 = vsel %vm3334, nan, %v3343
        %v3345 = vand.u32 2147483647, %v1635
        %vm3346 = vcmp.le.f32.partialorder %v3345, 0.7853982
        %vm3347 = vcmp.lt.s32.totalorder %v1635, 0
        %v3348 = vand.u32 %v1635, 2139095040
        %v3349 = vshrl.u32 %v3348, 23
        %v3350 = vsub.s32 %v3349, 127
        %v3351 = vand.u32 2147483647, %v1635
        %v3352 = vand.u32 %v3351, 8388607
        %v3353 = vor.u32 %v3352, 8388608
        %v3354 = vsub.s32 0, %v3353
        %v3355 = vadd.s32 %v3350, 1
        %vm3356 = vcmp.gt.s32.totalorder %v3355, 0
        %v3357 = vsel %vm3356, %v3355, 0
        %v3358 = vshrl.u32 %v3357, 5
        %v3359 = vand.u32 %v3357, 31
        %v3360 = vsub.s32 32, %v3359
        %v3361 = vshrl.u32 683565275, %v3360
        %v3362 = vshll.u32 683565275, %v3359
        %v3363 = vshrl.u32 2475754826, %v3360
        %v3364 = vor.u32 %v3362, %v3363
        %v3365 = vshll.u32 2475754826, %v3359
        %v3366 = vshrl.u32 2131351028, %v3360
        %v3367 = vor.u32 %v3365, %v3366
        %v3368 = vshll.u32 2131351028, %v3359
        %v3369 = vshrl.u32 2102212464, %v3360
        %v3370 = vor.u32 %v3368, %v3369
        %v3371 = vshll.u32 2102212464, %v3359
        %v3372 = vshrl.u32 920167782, %v3360
        %v3373 = vor.u32 %v3371, %v3372
        %v3374 = vshll.u32 920167782, %v3359
        %v3375 = vshrl.u32 1326507024, %v3360
        %v3376 = vor.u32 %v3374, %v3375
        %vm3377 = vcmp.lt.s32.totalorder %v3358, 1
        %vm3378 = vcmp.lt.s32.totalorder %v3358, 2
        %vm3379 = vcmp.lt.s32.totalorder %v3358, 3
        %vm3380 = vcmp.lt.s32.totalorder %v3358, 4
        %v3381 = vsel %vm3377, %v3361, %v3364
        %v3382 = vsel %vm3380, %v3370, 2102212464
        %v3383 = vsel %vm3379, %v3367, %v3382
        %v3384 = vsel %vm3378, %v3381, %v3383
        %v3385 = vsel %vm3377, %v3364, %v3367
        %v3386 = vsel %vm3380, %v3373, 920167782
        %v3387 = vsel %vm3379, %v3370, %v3386
        %v3388 = vsel %vm3378, %v3385, %v3387
        %v3389 = vsel %vm3377, %v3367, %v3370
        %v3390 = vsel %vm3380, %v3376, 1326507024
        %v3391 = vsel %vm3379, %v3373, %v3390
        %v3392 = vsel %vm3378, %v3389, %v3391
        %v3393 = vshll.u32 %v3353, 8
        %v3394 = vmul.u32.u64.compose %v3393, %v3392
        %v3395 = vextract.low.u32 %v3394
        %v3396 = vextract.high.u32 %v3394
        %v3397 = vmul.u32.u64.compose %v3393, %v3388
        %v3398 = vextract.low.u32 %v3397
        %v3399 = vextract.high.u32 %v3397
        %v3400 = vmul.u32 %v3393, %v3384
        %v3401 = vadd.s32 %v3396, %v3398
        %vm3402 = vc.u32 %v3396, %v3398
        %v3403 = vadd.s32 %v3399, 1
        %v3404 = vsel %vm3402, %v3403, %v3399
        %v3405 = vadd.s32 %v3400, %v3404
        %v3406 = vadd.s32 %v3405, 536870912
        %v3407 = vshrl.u32 %v3406, 30
        %v3408 = vshll.u32 %v3407, 30
        %v3409 = vsub.s32 %v3405, %v3408
        %vm3410 = vcmp.lt.s32.totalorder %v3409, 0
        %v3411 = vsub.s32 0, %v3409
        %v3412 = vsel %vm3410, %v3411, %v3409
        %v3413 = vclz %v3412
        %v3414 = vsub.s32 %v3413, 2
        %vm3415 = vcmp.gt.s32.totalorder 0, %v3414
        %v3416 = vsel %vm3415, 0, %v3414
        %v3417 = vsub.s32 32, %v3416
        %v3418 = vshll.u32 %v3409, %v3416
        %v3419 = vshrl.u32 %v3401, %v3417
        %v3420 = vor.u32 %v3418, %v3419
        %v3421 = vsub.s32 4294967266, %v3416
        %v3422 = vadd.s32 %v3421, 127
        %v3423 = vshll.u32 %v3422, 23
        %v3424 = vor.u32 4788187, %v3423
        %v3425 = vand.u32 2147483647, %v3424
        %v3427 = vcvt.s32.f32 %v3420
        %v3428 = vmul.f32 %v3427, %v3425
        %v3429 = vxor.u32 %v3428, 2147483648
        %v3430 = vsel %vm3347, %v3429, %v3428
        %v3431 = vsub.s32 4, %v3407
        %v3432 = vsel %vm3347, %v3431, %v3407
        %v3433 = vsel %vm3346, %v1635, %v3430
        %v3434 = vsel %vm3346, 0, %v3432
        %v3435 = vcosq.f32.pop %v3433
        %v3436 = vsinq.f32.pop %v3433
        %vm3437 = vweird.f32 %v1635
        %v3438 = vand.u32 %v3434, 3
        %vm3439 = vcmp.lt.s32.totalorder %v3438, 2
        %vm3440 = vcmp.eq.s32.totalorder %v3438, 0
        %v3441 = vxor.u32 %v3436, 2147483648
        %v3442 = vsel %vm3440, %v3435, %v3441
        %vm3443 = vcmp.eq.s32.totalorder %v3438, 2
        %v3444 = vxor.u32 %v3435, 2147483648
        %v3445 = vsel %vm3443, %v3444, %v3436
        %v3446 = vsel %vm3439, %v3442, %v3445
        %v3447 = vsel %vm3437, nan, %v3446
        %v3448 = vand.u32 2147483647, %v1638
        %vm3449 = vcmp.le.f32.partialorder %v3448, 0.7853982
        %vm3450 = vcmp.lt.s32.totalorder %v1638, 0
        %v3451 = vand.u32 %v1638, 2139095040
        %v3452 = vshrl.u32 %v3451, 23
        %v3453 = vsub.s32 %v3452, 127
        %v3454 = vand.u32 2147483647, %v1638
        %v3455 = vand.u32 %v3454, 8388607
        %v3456 = vor.u32 %v3455, 8388608
        %v3457 = vsub.s32 0, %v3456
        %v3458 = vadd.s32 %v3453, 1
        %vm3459 = vcmp.gt.s32.totalorder %v3458, 0
        %v3460 = vsel %vm3459, %v3458, 0
        %v3461 = vshrl.u32 %v3460, 5
        %v3462 = vand.u32 %v3460, 31
        %v3463 = vsub.s32 32, %v3462
        %v3464 = vshrl.u32 683565275, %v3463
        %v3465 = vshll.u32 683565275, %v3462
        %v3466 = vshrl.u32 2475754826, %v3463
        %v3467 = vor.u32 %v3465, %v3466
        %v3468 = vshll.u32 2475754826, %v3462
        %v3469 = vshrl.u32 2131351028, %v3463
        %v3470 = vor.u32 %v3468, %v3469
        %v3471 = vshll.u32 2131351028, %v3462
        %v3472 = vshrl.u32 2102212464, %v3463
        %v3473 = vor.u32 %v3471, %v3472
        %v3474 = vshll.u32 2102212464, %v3462
        %v3475 = vshrl.u32 920167782, %v3463
        %v3476 = vor.u32 %v3474, %v3475
        %v3477 = vshll.u32 920167782, %v3462
        %v3478 = vshrl.u32 1326507024, %v3463
        %v3479 = vor.u32 %v3477, %v3478
        %vm3480 = vcmp.lt.s32.totalorder %v3461, 1
        %vm3481 = vcmp.lt.s32.totalorder %v3461, 2
        %vm3482 = vcmp.lt.s32.totalorder %v3461, 3
        %vm3483 = vcmp.lt.s32.totalorder %v3461, 4
        %v3484 = vsel %vm3480, %v3464, %v3467
        %v3485 = vsel %vm3483, %v3473, 2102212464
        %v3486 = vsel %vm3482, %v3470, %v3485
        %v3487 = vsel %vm3481, %v3484, %v3486
        %v3488 = vsel %vm3480, %v3467, %v3470
        %v3489 = vsel %vm3483, %v3476, 920167782
        %v3490 = vsel %vm3482, %v3473, %v3489
        %v3491 = vsel %vm3481, %v3488, %v3490
        %v3492 = vsel %vm3480, %v3470, %v3473
        %v3493 = vsel %vm3483, %v3479, 1326507024
        %v3494 = vsel %vm3482, %v3476, %v3493
        %v3495 = vsel %vm3481, %v3492, %v3494
        %v3496 = vshll.u32 %v3456, 8
        %v3497 = vmul.u32.u64.compose %v3496, %v3495
        %v3498 = vextract.low.u32 %v3497
        %v3499 = vextract.high.u32 %v3497
        %v3500 = vmul.u32.u64.compose %v3496, %v3491
        %v3501 = vextract.low.u32 %v3500
        %v3502 = vextract.high.u32 %v3500
        %v3503 = vmul.u32 %v3496, %v3487
        %v3504 = vadd.s32 %v3499, %v3501
        %vm3505 = vc.u32 %v3499, %v3501
        %v3506 = vadd.s32 %v3502, 1
        %v3507 = vsel %vm3505, %v3506, %v3502
        %v3508 = vadd.s32 %v3503, %v3507
        %v3509 = vadd.s32 %v3508, 536870912
        %v3510 = vshrl.u32 %v3509, 30
        %v3511 = vshll.u32 %v3510, 30
        %v3512 = vsub.s32 %v3508, %v3511
        %vm3513 = vcmp.lt.s32.totalorder %v3512, 0
        %v3514 = vsub.s32 0, %v3512
        %v3515 = vsel %vm3513, %v3514, %v3512
        %v3516 = vclz %v3515
        %v3517 = vsub.s32 %v3516, 2
        %vm3518 = vcmp.gt.s32.totalorder 0, %v3517
        %v3519 = vsel %vm3518, 0, %v3517
        %v3520 = vsub.s32 32, %v3519
        %v3521 = vshll.u32 %v3512, %v3519
        %v3522 = vshrl.u32 %v3504, %v3520
        %v3523 = vor.u32 %v3521, %v3522
        %v3524 = vsub.s32 4294967266, %v3519
        %v3525 = vadd.s32 %v3524, 127
        %v3526 = vshll.u32 %v3525, 23
        %v3527 = vor.u32 4788187, %v3526
        %v3528 = vand.u32 2147483647, %v3527
        %v3530 = vcvt.s32.f32 %v3523
        %v3531 = vmul.f32 %v3530, %v3528
        %v3532 = vxor.u32 %v3531, 2147483648
        %v3533 = vsel %vm3450, %v3532, %v3531
        %v3534 = vsub.s32 4, %v3510
        %v3535 = vsel %vm3450, %v3534, %v3510
        %v3536 = vsel %vm3449, %v1638, %v3533
        %v3537 = vsel %vm3449, 0, %v3535
        %v3538 = vcosq.f32.pop %v3536
        %v3539 = vsinq.f32.pop %v3536
        %vm3540 = vweird.f32 %v1638
        %v3541 = vand.u32 %v3537, 3
        %vm3542 = vcmp.lt.s32.totalorder %v3541, 2
        %vm3543 = vcmp.eq.s32.totalorder %v3541, 0
        %v3544 = vxor.u32 %v3539, 2147483648
        %v3545 = vsel %vm3543, %v3538, %v3544
        %vm3546 = vcmp.eq.s32.totalorder %v3541, 2
        %v3547 = vxor.u32 %v3538, 2147483648
        %v3548 = vsel %vm3546, %v3547, %v3539
        %v3549 = vsel %vm3542, %v3545, %v3548
        %v3550 = vsel %vm3540, nan, %v3549
        %v3551 = vand.u32 2147483647, %v1643
        %vm3552 = vcmp.le.f32.partialorder %v3551, 0.7853982
        %vm3553 = vcmp.lt.s32.totalorder %v1643, 0
        %v3554 = vand.u32 %v1643, 2139095040
        %v3555 = vshrl.u32 %v3554, 23
        %v3556 = vsub.s32 %v3555, 127
        %v3557 = vand.u32 2147483647, %v1643
        %v3558 = vand.u32 %v3557, 8388607
        %v3559 = vor.u32 %v3558, 8388608
        %v3560 = vsub.s32 0, %v3559
        %v3561 = vadd.s32 %v3556, 1
        %vm3562 = vcmp.gt.s32.totalorder %v3561, 0
        %v3563 = vsel %vm3562, %v3561, 0
        %v3564 = vshrl.u32 %v3563, 5
        %v3565 = vand.u32 %v3563, 31
        %v3566 = vsub.s32 32, %v3565
        %v3567 = vshrl.u32 683565275, %v3566
        %v3568 = vshll.u32 683565275, %v3565
        %v3569 = vshrl.u32 2475754826, %v3566
        %v3570 = vor.u32 %v3568, %v3569
        %v3571 = vshll.u32 2475754826, %v3565
        %v3572 = vshrl.u32 2131351028, %v3566
        %v3573 = vor.u32 %v3571, %v3572
        %v3574 = vshll.u32 2131351028, %v3565
        %v3575 = vshrl.u32 2102212464, %v3566
        %v3576 = vor.u32 %v3574, %v3575
        %v3577 = vshll.u32 2102212464, %v3565
        %v3578 = vshrl.u32 920167782, %v3566
        %v3579 = vor.u32 %v3577, %v3578
        %v3580 = vshll.u32 920167782, %v3565
        %v3581 = vshrl.u32 1326507024, %v3566
        %v3582 = vor.u32 %v3580, %v3581
        %vm3583 = vcmp.lt.s32.totalorder %v3564, 1
        %vm3584 = vcmp.lt.s32.totalorder %v3564, 2
        %vm3585 = vcmp.lt.s32.totalorder %v3564, 3
        %vm3586 = vcmp.lt.s32.totalorder %v3564, 4
        %v3587 = vsel %vm3583, %v3567, %v3570
        %v3588 = vsel %vm3586, %v3576, 2102212464
        %v3589 = vsel %vm3585, %v3573, %v3588
        %v3590 = vsel %vm3584, %v3587, %v3589
        %v3591 = vsel %vm3583, %v3570, %v3573
        %v3592 = vsel %vm3586, %v3579, 920167782
        %v3593 = vsel %vm3585, %v3576, %v3592
        %v3594 = vsel %vm3584, %v3591, %v3593
        %v3595 = vsel %vm3583, %v3573, %v3576
        %v3596 = vsel %vm3586, %v3582, 1326507024
        %v3597 = vsel %vm3585, %v3579, %v3596
        %v3598 = vsel %vm3584, %v3595, %v3597
        %v3599 = vshll.u32 %v3559, 8
        %v3600 = vmul.u32.u64.compose %v3599, %v3598
        %v3601 = vextract.low.u32 %v3600
        %v3602 = vextract.high.u32 %v3600
        %v3603 = vmul.u32.u64.compose %v3599, %v3594
        %v3604 = vextract.low.u32 %v3603
        %v3605 = vextract.high.u32 %v3603
        %v3606 = vmul.u32 %v3599, %v3590
        %v3607 = vadd.s32 %v3602, %v3604
        %vm3608 = vc.u32 %v3602, %v3604
        %v3609 = vadd.s32 %v3605, 1
        %v3610 = vsel %vm3608, %v3609, %v3605
        %v3611 = vadd.s32 %v3606, %v3610
        %v3612 = vadd.s32 %v3611, 536870912
        %v3613 = vshrl.u32 %v3612, 30
        %v3614 = vshll.u32 %v3613, 30
        %v3615 = vsub.s32 %v3611, %v3614
        %vm3616 = vcmp.lt.s32.totalorder %v3615, 0
        %v3617 = vsub.s32 0, %v3615
        %v3618 = vsel %vm3616, %v3617, %v3615
        %v3619 = vclz %v3618
        %v3620 = vsub.s32 %v3619, 2
        %vm3621 = vcmp.gt.s32.totalorder 0, %v3620
        %v3622 = vsel %vm3621, 0, %v3620
        %v3623 = vsub.s32 32, %v3622
        %v3624 = vshll.u32 %v3615, %v3622
        %v3625 = vshrl.u32 %v3607, %v3623
        %v3626 = vor.u32 %v3624, %v3625
        %v3627 = vsub.s32 4294967266, %v3622
        %v3628 = vadd.s32 %v3627, 127
        %v3629 = vshll.u32 %v3628, 23
        %v3630 = vor.u32 4788187, %v3629
        %v3631 = vand.u32 2147483647, %v3630
        %v3633 = vcvt.s32.f32 %v3626
        %v3634 = vmul.f32 %v3633, %v3631
        %v3635 = vxor.u32 %v3634, 2147483648
        %v3636 = vsel %vm3553, %v3635, %v3634
        %v3637 = vsub.s32 4, %v3613
        %v3638 = vsel %vm3553, %v3637, %v3613
        %v3639 = vsel %vm3552, %v1643, %v3636
        %v3640 = vsel %vm3552, 0, %v3638
        %v3641 = vcosq.f32.pop %v3639
        %v3642 = vsinq.f32.pop %v3639
        %vm3643 = vweird.f32 %v1643
        %v3644 = vand.u32 %v3640, 3
        %vm3645 = vcmp.lt.s32.totalorder %v3644, 2
        %vm3646 = vcmp.eq.s32.totalorder %v3644, 0
        %v3647 = vxor.u32 %v3642, 2147483648
        %v3648 = vsel %vm3646, %v3641, %v3647
        %vm3649 = vcmp.eq.s32.totalorder %v3644, 2
        %v3650 = vxor.u32 %v3641, 2147483648
        %v3651 = vsel %vm3649, %v3650, %v3642
        %v3652 = vsel %vm3645, %v3648, %v3651
        %v3653 = vsel %vm3643, nan, %v3652
        %v3654 = vand.u32 2147483647, %v1646
        %vm3655 = vcmp.le.f32.partialorder %v3654, 0.7853982
        %vm3656 = vcmp.lt.s32.totalorder %v1646, 0
        %v3657 = vand.u32 %v1646, 2139095040
        %v3658 = vshrl.u32 %v3657, 23
        %v3659 = vsub.s32 %v3658, 127
        %v3660 = vand.u32 2147483647, %v1646
        %v3661 = vand.u32 %v3660, 8388607
        %v3662 = vor.u32 %v3661, 8388608
        %v3663 = vsub.s32 0, %v3662
        %v3664 = vadd.s32 %v3659, 1
        %vm3665 = vcmp.gt.s32.totalorder %v3664, 0
        %v3666 = vsel %vm3665, %v3664, 0
        %v3667 = vshrl.u32 %v3666, 5
        %v3668 = vand.u32 %v3666, 31
        %v3669 = vsub.s32 32, %v3668
        %v3670 = vshrl.u32 683565275, %v3669
        %v3671 = vshll.u32 683565275, %v3668
        %v3672 = vshrl.u32 2475754826, %v3669
        %v3673 = vor.u32 %v3671, %v3672
        %v3674 = vshll.u32 2475754826, %v3668
        %v3675 = vshrl.u32 2131351028, %v3669
        %v3676 = vor.u32 %v3674, %v3675
        %v3677 = vshll.u32 2131351028, %v3668
        %v3678 = vshrl.u32 2102212464, %v3669
        %v3679 = vor.u32 %v3677, %v3678
        %v3680 = vshll.u32 2102212464, %v3668
        %v3681 = vshrl.u32 920167782, %v3669
        %v3682 = vor.u32 %v3680, %v3681
        %v3683 = vshll.u32 920167782, %v3668
        %v3684 = vshrl.u32 1326507024, %v3669
        %v3685 = vor.u32 %v3683, %v3684
        %vm3686 = vcmp.lt.s32.totalorder %v3667, 1
        %vm3687 = vcmp.lt.s32.totalorder %v3667, 2
        %vm3688 = vcmp.lt.s32.totalorder %v3667, 3
        %vm3689 = vcmp.lt.s32.totalorder %v3667, 4
        %v3690 = vsel %vm3686, %v3670, %v3673
        %v3691 = vsel %vm3689, %v3679, 2102212464
        %v3692 = vsel %vm3688, %v3676, %v3691
        %v3693 = vsel %vm3687, %v3690, %v3692
        %v3694 = vsel %vm3686, %v3673, %v3676
        %v3695 = vsel %vm3689, %v3682, 920167782
        %v3696 = vsel %vm3688, %v3679, %v3695
        %v3697 = vsel %vm3687, %v3694, %v3696
        %v3698 = vsel %vm3686, %v3676, %v3679
        %v3699 = vsel %vm3689, %v3685, 1326507024
        %v3700 = vsel %vm3688, %v3682, %v3699
        %v3701 = vsel %vm3687, %v3698, %v3700
        %v3702 = vshll.u32 %v3662, 8
        %v3703 = vmul.u32.u64.compose %v3702, %v3701
        %v3704 = vextract.low.u32 %v3703
        %v3705 = vextract.high.u32 %v3703
        %v3706 = vmul.u32.u64.compose %v3702, %v3697
        %v3707 = vextract.low.u32 %v3706
        %v3708 = vextract.high.u32 %v3706
        %v3709 = vmul.u32 %v3702, %v3693
        %v3710 = vadd.s32 %v3705, %v3707
        %vm3711 = vc.u32 %v3705, %v3707
        %v3712 = vadd.s32 %v3708, 1
        %v3713 = vsel %vm3711, %v3712, %v3708
        %v3714 = vadd.s32 %v3709, %v3713
        %v3715 = vadd.s32 %v3714, 536870912
        %v3716 = vshrl.u32 %v3715, 30
        %v3717 = vshll.u32 %v3716, 30
        %v3718 = vsub.s32 %v3714, %v3717
        %vm3719 = vcmp.lt.s32.totalorder %v3718, 0
        %v3720 = vsub.s32 0, %v3718
        %v3721 = vsel %vm3719, %v3720, %v3718
        %v3722 = vclz %v3721
        %v3723 = vsub.s32 %v3722, 2
        %vm3724 = vcmp.gt.s32.totalorder 0, %v3723
        %v3725 = vsel %vm3724, 0, %v3723
        %v3726 = vsub.s32 32, %v3725
        %v3727 = vshll.u32 %v3718, %v3725
        %v3728 = vshrl.u32 %v3710, %v3726
        %v3729 = vor.u32 %v3727, %v3728
        %v3730 = vsub.s32 4294967266, %v3725
        %v3731 = vadd.s32 %v3730, 127
        %v3732 = vshll.u32 %v3731, 23
        %v3733 = vor.u32 4788187, %v3732
        %v3734 = vand.u32 2147483647, %v3733
        %v3736 = vcvt.s32.f32 %v3729
        %v3737 = vmul.f32 %v3736, %v3734
        %v3738 = vxor.u32 %v3737, 2147483648
        %v3739 = vsel %vm3656, %v3738, %v3737
        %v3740 = vsub.s32 4, %v3716
        %v3741 = vsel %vm3656, %v3740, %v3716
        %v3742 = vsel %vm3655, %v1646, %v3739
        %v3743 = vsel %vm3655, 0, %v3741
        %v3744 = vcosq.f32.pop %v3742
        %v3745 = vsinq.f32.pop %v3742
        %vm3746 = vweird.f32 %v1646
        %v3747 = vand.u32 %v3743, 3
        %vm3748 = vcmp.lt.s32.totalorder %v3747, 2
        %vm3749 = vcmp.eq.s32.totalorder %v3747, 0
        %v3750 = vxor.u32 %v3745, 2147483648
        %v3751 = vsel %vm3749, %v3744, %v3750
        %vm3752 = vcmp.eq.s32.totalorder %v3747, 2
        %v3753 = vxor.u32 %v3744, 2147483648
        %v3754 = vsel %vm3752, %v3753, %v3745
        %v3755 = vsel %vm3748, %v3751, %v3754
        %v3756 = vsel %vm3746, nan, %v3755
        %v3757 = vand.u32 2147483647, %v1651
        %vm3758 = vcmp.le.f32.partialorder %v3757, 0.7853982
        %vm3759 = vcmp.lt.s32.totalorder %v1651, 0
        %v3760 = vand.u32 %v1651, 2139095040
        %v3761 = vshrl.u32 %v3760, 23
        %v3762 = vsub.s32 %v3761, 127
        %v3763 = vand.u32 2147483647, %v1651
        %v3764 = vand.u32 %v3763, 8388607
        %v3765 = vor.u32 %v3764, 8388608
        %v3766 = vsub.s32 0, %v3765
        %v3767 = vadd.s32 %v3762, 1
        %vm3768 = vcmp.gt.s32.totalorder %v3767, 0
        %v3769 = vsel %vm3768, %v3767, 0
        %v3770 = vshrl.u32 %v3769, 5
        %v3771 = vand.u32 %v3769, 31
        %v3772 = vsub.s32 32, %v3771
        %v3773 = vshrl.u32 683565275, %v3772
        %v3774 = vshll.u32 683565275, %v3771
        %v3775 = vshrl.u32 2475754826, %v3772
        %v3776 = vor.u32 %v3774, %v3775
        %v3777 = vshll.u32 2475754826, %v3771
        %v3778 = vshrl.u32 2131351028, %v3772
        %v3779 = vor.u32 %v3777, %v3778
        %v3780 = vshll.u32 2131351028, %v3771
        %v3781 = vshrl.u32 2102212464, %v3772
        %v3782 = vor.u32 %v3780, %v3781
        %v3783 = vshll.u32 2102212464, %v3771
        %v3784 = vshrl.u32 920167782, %v3772
        %v3785 = vor.u32 %v3783, %v3784
        %v3786 = vshll.u32 920167782, %v3771
        %v3787 = vshrl.u32 1326507024, %v3772
        %v3788 = vor.u32 %v3786, %v3787
        %vm3789 = vcmp.lt.s32.totalorder %v3770, 1
        %vm3790 = vcmp.lt.s32.totalorder %v3770, 2
        %vm3791 = vcmp.lt.s32.totalorder %v3770, 3
        %vm3792 = vcmp.lt.s32.totalorder %v3770, 4
        %v3793 = vsel %vm3789, %v3773, %v3776
        %v3794 = vsel %vm3792, %v3782, 2102212464
        %v3795 = vsel %vm3791, %v3779, %v3794
        %v3796 = vsel %vm3790, %v3793, %v3795
        %v3797 = vsel %vm3789, %v3776, %v3779
        %v3798 = vsel %vm3792, %v3785, 920167782
        %v3799 = vsel %vm3791, %v3782, %v3798
        %v3800 = vsel %vm3790, %v3797, %v3799
        %v3801 = vsel %vm3789, %v3779, %v3782
        %v3802 = vsel %vm3792, %v3788, 1326507024
        %v3803 = vsel %vm3791, %v3785, %v3802
        %v3804 = vsel %vm3790, %v3801, %v3803
        %v3805 = vshll.u32 %v3765, 8
        %v3806 = vmul.u32.u64.compose %v3805, %v3804
        %v3807 = vextract.low.u32 %v3806
        %v3808 = vextract.high.u32 %v3806
        %v3809 = vmul.u32.u64.compose %v3805, %v3800
        %v3810 = vextract.low.u32 %v3809
        %v3811 = vextract.high.u32 %v3809
        %v3812 = vmul.u32 %v3805, %v3796
        %v3813 = vadd.s32 %v3808, %v3810
        %vm3814 = vc.u32 %v3808, %v3810
        %v3815 = vadd.s32 %v3811, 1
        %v3816 = vsel %vm3814, %v3815, %v3811
        %v3817 = vadd.s32 %v3812, %v3816
        %v3818 = vadd.s32 %v3817, 536870912
        %v3819 = vshrl.u32 %v3818, 30
        %v3820 = vshll.u32 %v3819, 30
        %v3821 = vsub.s32 %v3817, %v3820
        %vm3822 = vcmp.lt.s32.totalorder %v3821, 0
        %v3823 = vsub.s32 0, %v3821
        %v3824 = vsel %vm3822, %v3823, %v3821
        %v3825 = vclz %v3824
        %v3826 = vsub.s32 %v3825, 2
        %vm3827 = vcmp.gt.s32.totalorder 0, %v3826
        %v3828 = vsel %vm3827, 0, %v3826
        %v3829 = vsub.s32 32, %v3828
        %v3830 = vshll.u32 %v3821, %v3828
        %v3831 = vshrl.u32 %v3813, %v3829
        %v3832 = vor.u32 %v3830, %v3831
        %v3833 = vsub.s32 4294967266, %v3828
        %v3834 = vadd.s32 %v3833, 127
        %v3835 = vshll.u32 %v3834, 23
        %v3836 = vor.u32 4788187, %v3835
        %v3837 = vand.u32 2147483647, %v3836
        %v3839 = vcvt.s32.f32 %v3832
        %v3840 = vmul.f32 %v3839, %v3837
        %v3841 = vxor.u32 %v3840, 2147483648
        %v3842 = vsel %vm3759, %v3841, %v3840
        %v3843 = vsub.s32 4, %v3819
        %v3844 = vsel %vm3759, %v3843, %v3819
        %v3845 = vsel %vm3758, %v1651, %v3842
        %v3846 = vsel %vm3758, 0, %v3844
        %v3847 = vcosq.f32.pop %v3845
        %v3848 = vsinq.f32.pop %v3845
        %vm3849 = vweird.f32 %v1651
        %v3850 = vand.u32 %v3846, 3
        %vm3851 = vcmp.lt.s32.totalorder %v3850, 2
        %vm3852 = vcmp.eq.s32.totalorder %v3850, 0
        %v3853 = vxor.u32 %v3848, 2147483648
        %v3854 = vsel %vm3852, %v3847, %v3853
        %vm3855 = vcmp.eq.s32.totalorder %v3850, 2
        %v3856 = vxor.u32 %v3847, 2147483648
        %v3857 = vsel %vm3855, %v3856, %v3848
        %v3858 = vsel %vm3851, %v3854, %v3857
        %v3859 = vsel %vm3849, nan, %v3858
        %v3860 = vand.u32 2147483647, %v1654
        %vm3861 = vcmp.le.f32.partialorder %v3860, 0.7853982
        %vm3862 = vcmp.lt.s32.totalorder %v1654, 0
        %v3863 = vand.u32 %v1654, 2139095040
        %v3864 = vshrl.u32 %v3863, 23
        %v3865 = vsub.s32 %v3864, 127
        %v3866 = vand.u32 2147483647, %v1654
        %v3867 = vand.u32 %v3866, 8388607
        %v3868 = vor.u32 %v3867, 8388608
        %v3869 = vsub.s32 0, %v3868
        %v3870 = vadd.s32 %v3865, 1
        %vm3871 = vcmp.gt.s32.totalorder %v3870, 0
        %v3872 = vsel %vm3871, %v3870, 0
        %v3873 = vshrl.u32 %v3872, 5
        %v3874 = vand.u32 %v3872, 31
        %v3875 = vsub.s32 32, %v3874
        %v3876 = vshrl.u32 683565275, %v3875
        %v3877 = vshll.u32 683565275, %v3874
        %v3878 = vshrl.u32 2475754826, %v3875
        %v3879 = vor.u32 %v3877, %v3878
        %v3880 = vshll.u32 2475754826, %v3874
        %v3881 = vshrl.u32 2131351028, %v3875
        %v3882 = vor.u32 %v3880, %v3881
        %v3883 = vshll.u32 2131351028, %v3874
        %v3884 = vshrl.u32 2102212464, %v3875
        %v3885 = vor.u32 %v3883, %v3884
        %v3886 = vshll.u32 2102212464, %v3874
        %v3887 = vshrl.u32 920167782, %v3875
        %v3888 = vor.u32 %v3886, %v3887
        %v3889 = vshll.u32 920167782, %v3874
        %v3890 = vshrl.u32 1326507024, %v3875
        %v3891 = vor.u32 %v3889, %v3890
        %vm3892 = vcmp.lt.s32.totalorder %v3873, 1
        %vm3893 = vcmp.lt.s32.totalorder %v3873, 2
        %vm3894 = vcmp.lt.s32.totalorder %v3873, 3
        %vm3895 = vcmp.lt.s32.totalorder %v3873, 4
        %v3896 = vsel %vm3892, %v3876, %v3879
        %v3897 = vsel %vm3895, %v3885, 2102212464
        %v3898 = vsel %vm3894, %v3882, %v3897
        %v3899 = vsel %vm3893, %v3896, %v3898
        %v3900 = vsel %vm3892, %v3879, %v3882
        %v3901 = vsel %vm3895, %v3888, 920167782
        %v3902 = vsel %vm3894, %v3885, %v3901
        %v3903 = vsel %vm3893, %v3900, %v3902
        %v3904 = vsel %vm3892, %v3882, %v3885
        %v3905 = vsel %vm3895, %v3891, 1326507024
        %v3906 = vsel %vm3894, %v3888, %v3905
        %v3907 = vsel %vm3893, %v3904, %v3906
        %v3908 = vshll.u32 %v3868, 8
        %v3909 = vmul.u32.u64.compose %v3908, %v3907
        %v3910 = vextract.low.u32 %v3909
        %v3911 = vextract.high.u32 %v3909
        %v3912 = vmul.u32.u64.compose %v3908, %v3903
        %v3913 = vextract.low.u32 %v3912
        %v3914 = vextract.high.u32 %v3912
        %v3915 = vmul.u32 %v3908, %v3899
        %v3916 = vadd.s32 %v3911, %v3913
        %vm3917 = vc.u32 %v3911, %v3913
        %v3918 = vadd.s32 %v3914, 1
        %v3919 = vsel %vm3917, %v3918, %v3914
        %v3920 = vadd.s32 %v3915, %v3919
        %v3921 = vadd.s32 %v3920, 536870912
        %v3922 = vshrl.u32 %v3921, 30
        %v3923 = vshll.u32 %v3922, 30
        %v3924 = vsub.s32 %v3920, %v3923
        %vm3925 = vcmp.lt.s32.totalorder %v3924, 0
        %v3926 = vsub.s32 0, %v3924
        %v3927 = vsel %vm3925, %v3926, %v3924
        %v3928 = vclz %v3927
        %v3929 = vsub.s32 %v3928, 2
        %vm3930 = vcmp.gt.s32.totalorder 0, %v3929
        %v3931 = vsel %vm3930, 0, %v3929
        %v3932 = vsub.s32 32, %v3931
        %v3933 = vshll.u32 %v3924, %v3931
        %v3934 = vshrl.u32 %v3916, %v3932
        %v3935 = vor.u32 %v3933, %v3934
        %v3936 = vsub.s32 4294967266, %v3931
        %v3937 = vadd.s32 %v3936, 127
        %v3938 = vshll.u32 %v3937, 23
        %v3939 = vor.u32 4788187, %v3938
        %v3940 = vand.u32 2147483647, %v3939
        %v3942 = vcvt.s32.f32 %v3935
        %v3943 = vmul.f32 %v3942, %v3940
        %v3944 = vxor.u32 %v3943, 2147483648
        %v3945 = vsel %vm3862, %v3944, %v3943
        %v3946 = vsub.s32 4, %v3922
        %v3947 = vsel %vm3862, %v3946, %v3922
        %v3948 = vsel %vm3861, %v1654, %v3945
        %v3949 = vsel %vm3861, 0, %v3947
        %v3950 = vcosq.f32.pop %v3948
        %v3951 = vsinq.f32.pop %v3948
        %vm3952 = vweird.f32 %v1654
        %v3953 = vand.u32 %v3949, 3
        %vm3954 = vcmp.lt.s32.totalorder %v3953, 2
        %vm3955 = vcmp.eq.s32.totalorder %v3953, 0
        %v3956 = vxor.u32 %v3951, 2147483648
        %v3957 = vsel %vm3955, %v3950, %v3956
        %vm3958 = vcmp.eq.s32.totalorder %v3953, 2
        %v3959 = vxor.u32 %v3950, 2147483648
        %v3960 = vsel %vm3958, %v3959, %v3951
        %v3961 = vsel %vm3954, %v3957, %v3960
        %v3962 = vsel %vm3952, nan, %v3961
        %v3963 = vand.u32 2147483647, %v1659
        %vm3964 = vcmp.le.f32.partialorder %v3963, 0.7853982
        %vm3965 = vcmp.lt.s32.totalorder %v1659, 0
        %v3966 = vand.u32 %v1659, 2139095040
        %v3967 = vshrl.u32 %v3966, 23
        %v3968 = vsub.s32 %v3967, 127
        %v3969 = vand.u32 2147483647, %v1659
        %v3970 = vand.u32 %v3969, 8388607
        %v3971 = vor.u32 %v3970, 8388608
        %v3972 = vsub.s32 0, %v3971
        %v3973 = vadd.s32 %v3968, 1
        %vm3974 = vcmp.gt.s32.totalorder %v3973, 0
        %v3975 = vsel %vm3974, %v3973, 0
        %v3976 = vshrl.u32 %v3975, 5
        %v3977 = vand.u32 %v3975, 31
        %v3978 = vsub.s32 32, %v3977
        %v3979 = vshrl.u32 683565275, %v3978
        %v3980 = vshll.u32 683565275, %v3977
        %v3981 = vshrl.u32 2475754826, %v3978
        %v3982 = vor.u32 %v3980, %v3981
        %v3983 = vshll.u32 2475754826, %v3977
        %v3984 = vshrl.u32 2131351028, %v3978
        %v3985 = vor.u32 %v3983, %v3984
        %v3986 = vshll.u32 2131351028, %v3977
        %v3987 = vshrl.u32 2102212464, %v3978
        %v3988 = vor.u32 %v3986, %v3987
        %v3989 = vshll.u32 2102212464, %v3977
        %v3990 = vshrl.u32 920167782, %v3978
        %v3991 = vor.u32 %v3989, %v3990
        %v3992 = vshll.u32 920167782, %v3977
        %v3993 = vshrl.u32 1326507024, %v3978
        %v3994 = vor.u32 %v3992, %v3993
        %vm3995 = vcmp.lt.s32.totalorder %v3976, 1
        %vm3996 = vcmp.lt.s32.totalorder %v3976, 2
        %vm3997 = vcmp.lt.s32.totalorder %v3976, 3
        %vm3998 = vcmp.lt.s32.totalorder %v3976, 4
        %v3999 = vsel %vm3995, %v3979, %v3982
        %v4000 = vsel %vm3998, %v3988, 2102212464
        %v4001 = vsel %vm3997, %v3985, %v4000
        %v4002 = vsel %vm3996, %v3999, %v4001
        %v4003 = vsel %vm3995, %v3982, %v3985
        %v4004 = vsel %vm3998, %v3991, 920167782
        %v4005 = vsel %vm3997, %v3988, %v4004
        %v4006 = vsel %vm3996, %v4003, %v4005
        %v4007 = vsel %vm3995, %v3985, %v3988
        %v4008 = vsel %vm3998, %v3994, 1326507024
        %v4009 = vsel %vm3997, %v3991, %v4008
        %v4010 = vsel %vm3996, %v4007, %v4009
        %v4011 = vshll.u32 %v3971, 8
        %v4012 = vmul.u32.u64.compose %v4011, %v4010
        %v4013 = vextract.low.u32 %v4012
        %v4014 = vextract.high.u32 %v4012
        %v4015 = vmul.u32.u64.compose %v4011, %v4006
        %v4016 = vextract.low.u32 %v4015
        %v4017 = vextract.high.u32 %v4015
        %v4018 = vmul.u32 %v4011, %v4002
        %v4019 = vadd.s32 %v4014, %v4016
        %vm4020 = vc.u32 %v4014, %v4016
        %v4021 = vadd.s32 %v4017, 1
        %v4022 = vsel %vm4020, %v4021, %v4017
        %v4023 = vadd.s32 %v4018, %v4022
        %v4024 = vadd.s32 %v4023, 536870912
        %v4025 = vshrl.u32 %v4024, 30
        %v4026 = vshll.u32 %v4025, 30
        %v4027 = vsub.s32 %v4023, %v4026
        %vm4028 = vcmp.lt.s32.totalorder %v4027, 0
        %v4029 = vsub.s32 0, %v4027
        %v4030 = vsel %vm4028, %v4029, %v4027
        %v4031 = vclz %v4030
        %v4032 = vsub.s32 %v4031, 2
        %vm4033 = vcmp.gt.s32.totalorder 0, %v4032
        %v4034 = vsel %vm4033, 0, %v4032
        %v4035 = vsub.s32 32, %v4034
        %v4036 = vshll.u32 %v4027, %v4034
        %v4037 = vshrl.u32 %v4019, %v4035
        %v4038 = vor.u32 %v4036, %v4037
        %v4039 = vsub.s32 4294967266, %v4034
        %v4040 = vadd.s32 %v4039, 127
        %v4041 = vshll.u32 %v4040, 23
        %v4042 = vor.u32 4788187, %v4041
        %v4043 = vand.u32 2147483647, %v4042
        %v4045 = vcvt.s32.f32 %v4038
        %v4046 = vmul.f32 %v4045, %v4043
        %v4047 = vxor.u32 %v4046, 2147483648
        %v4048 = vsel %vm3965, %v4047, %v4046
        %v4049 = vsub.s32 4, %v4025
        %v4050 = vsel %vm3965, %v4049, %v4025
        %v4051 = vsel %vm3964, %v1659, %v4048
        %v4052 = vsel %vm3964, 0, %v4050
        %v4053 = vcosq.f32.pop %v4051
        %v4054 = vsinq.f32.pop %v4051
        %vm4055 = vweird.f32 %v1659
        %v4056 = vand.u32 %v4052, 3
        %vm4057 = vcmp.lt.s32.totalorder %v4056, 2
        %vm4058 = vcmp.eq.s32.totalorder %v4056, 0
        %v4059 = vxor.u32 %v4054, 2147483648
        %v4060 = vsel %vm4058, %v4053, %v4059
        %vm4061 = vcmp.eq.s32.totalorder %v4056, 2
        %v4062 = vxor.u32 %v4053, 2147483648
        %v4063 = vsel %vm4061, %v4062, %v4054
        %v4064 = vsel %vm4057, %v4060, %v4063
        %v4065 = vsel %vm4055, nan, %v4064
        %v4066 = vand.u32 2147483647, %v1662
        %vm4067 = vcmp.le.f32.partialorder %v4066, 0.7853982
        %vm4068 = vcmp.lt.s32.totalorder %v1662, 0
        %v4069 = vand.u32 %v1662, 2139095040
        %v4070 = vshrl.u32 %v4069, 23
        %v4071 = vsub.s32 %v4070, 127
        %v4072 = vand.u32 2147483647, %v1662
        %v4073 = vand.u32 %v4072, 8388607
        %v4074 = vor.u32 %v4073, 8388608
        %v4075 = vsub.s32 0, %v4074
        %v4076 = vadd.s32 %v4071, 1
        %vm4077 = vcmp.gt.s32.totalorder %v4076, 0
        %v4078 = vsel %vm4077, %v4076, 0
        %v4079 = vshrl.u32 %v4078, 5
        %v4080 = vand.u32 %v4078, 31
        %v4081 = vsub.s32 32, %v4080
        %v4082 = vshrl.u32 683565275, %v4081
        %v4083 = vshll.u32 683565275, %v4080
        %v4084 = vshrl.u32 2475754826, %v4081
        %v4085 = vor.u32 %v4083, %v4084
        %v4086 = vshll.u32 2475754826, %v4080
        %v4087 = vshrl.u32 2131351028, %v4081
        %v4088 = vor.u32 %v4086, %v4087
        %v4089 = vshll.u32 2131351028, %v4080
        %v4090 = vshrl.u32 2102212464, %v4081
        %v4091 = vor.u32 %v4089, %v4090
        %v4092 = vshll.u32 2102212464, %v4080
        %v4093 = vshrl.u32 920167782, %v4081
        %v4094 = vor.u32 %v4092, %v4093
        %v4095 = vshll.u32 920167782, %v4080
        %v4096 = vshrl.u32 1326507024, %v4081
        %v4097 = vor.u32 %v4095, %v4096
        %vm4098 = vcmp.lt.s32.totalorder %v4079, 1
        %vm4099 = vcmp.lt.s32.totalorder %v4079, 2
        %vm4100 = vcmp.lt.s32.totalorder %v4079, 3
        %vm4101 = vcmp.lt.s32.totalorder %v4079, 4
        %v4102 = vsel %vm4098, %v4082, %v4085
        %v4103 = vsel %vm4101, %v4091, 2102212464
        %v4104 = vsel %vm4100, %v4088, %v4103
        %v4105 = vsel %vm4099, %v4102, %v4104
        %v4106 = vsel %vm4098, %v4085, %v4088
        %v4107 = vsel %vm4101, %v4094, 920167782
        %v4108 = vsel %vm4100, %v4091, %v4107
        %v4109 = vsel %vm4099, %v4106, %v4108
        %v4110 = vsel %vm4098, %v4088, %v4091
        %v4111 = vsel %vm4101, %v4097, 1326507024
        %v4112 = vsel %vm4100, %v4094, %v4111
        %v4113 = vsel %vm4099, %v4110, %v4112
        %v4114 = vshll.u32 %v4074, 8
        %v4115 = vmul.u32.u64.compose %v4114, %v4113
        %v4116 = vextract.low.u32 %v4115
        %v4117 = vextract.high.u32 %v4115
        %v4118 = vmul.u32.u64.compose %v4114, %v4109
        %v4119 = vextract.low.u32 %v4118
        %v4120 = vextract.high.u32 %v4118
        %v4121 = vmul.u32 %v4114, %v4105
        %v4122 = vadd.s32 %v4117, %v4119
        %vm4123 = vc.u32 %v4117, %v4119
        %v4124 = vadd.s32 %v4120, 1
        %v4125 = vsel %vm4123, %v4124, %v4120
        %v4126 = vadd.s32 %v4121, %v4125
        %v4127 = vadd.s32 %v4126, 536870912
        %v4128 = vshrl.u32 %v4127, 30
        %v4129 = vshll.u32 %v4128, 30
        %v4130 = vsub.s32 %v4126, %v4129
        %vm4131 = vcmp.lt.s32.totalorder %v4130, 0
        %v4132 = vsub.s32 0, %v4130
        %v4133 = vsel %vm4131, %v4132, %v4130
        %v4134 = vclz %v4133
        %v4135 = vsub.s32 %v4134, 2
        %vm4136 = vcmp.gt.s32.totalorder 0, %v4135
        %v4137 = vsel %vm4136, 0, %v4135
        %v4138 = vsub.s32 32, %v4137
        %v4139 = vshll.u32 %v4130, %v4137
        %v4140 = vshrl.u32 %v4122, %v4138
        %v4141 = vor.u32 %v4139, %v4140
        %v4142 = vsub.s32 4294967266, %v4137
        %v4143 = vadd.s32 %v4142, 127
        %v4144 = vshll.u32 %v4143, 23
        %v4145 = vor.u32 4788187, %v4144
        %v4146 = vand.u32 2147483647, %v4145
        %v4148 = vcvt.s32.f32 %v4141
        %v4149 = vmul.f32 %v4148, %v4146
        %v4150 = vxor.u32 %v4149, 2147483648
        %v4151 = vsel %vm4068, %v4150, %v4149
        %v4152 = vsub.s32 4, %v4128
        %v4153 = vsel %vm4068, %v4152, %v4128
        %v4154 = vsel %vm4067, %v1662, %v4151
        %v4155 = vsel %vm4067, 0, %v4153
        %v4156 = vcosq.f32.pop %v4154
        %v4157 = vsinq.f32.pop %v4154
        %vm4158 = vweird.f32 %v1662
        %v4159 = vand.u32 %v4155, 3
        %vm4160 = vcmp.lt.s32.totalorder %v4159, 2
        %vm4161 = vcmp.eq.s32.totalorder %v4159, 0
        %v4162 = vxor.u32 %v4157, 2147483648
        %v4163 = vsel %vm4161, %v4156, %v4162
        %vm4164 = vcmp.eq.s32.totalorder %v4159, 2
        %v4165 = vxor.u32 %v4156, 2147483648
        %v4166 = vsel %vm4164, %v4165, %v4157
        %v4167 = vsel %vm4160, %v4163, %v4166
        %v4168 = vsel %vm4158, nan, %v4167
        %v4169 = vand.u32 2147483647, %v1667
        %vm4170 = vcmp.le.f32.partialorder %v4169, 0.7853982
        %vm4171 = vcmp.lt.s32.totalorder %v1667, 0
        %v4172 = vand.u32 %v1667, 2139095040
        %v4173 = vshrl.u32 %v4172, 23
        %v4174 = vsub.s32 %v4173, 127
        %v4175 = vand.u32 2147483647, %v1667
        %v4176 = vand.u32 %v4175, 8388607
        %v4177 = vor.u32 %v4176, 8388608
        %v4178 = vsub.s32 0, %v4177
        %v4179 = vadd.s32 %v4174, 1
        %vm4180 = vcmp.gt.s32.totalorder %v4179, 0
        %v4181 = vsel %vm4180, %v4179, 0
        %v4182 = vshrl.u32 %v4181, 5
        %v4183 = vand.u32 %v4181, 31
        %v4184 = vsub.s32 32, %v4183
        %v4185 = vshrl.u32 683565275, %v4184
        %v4186 = vshll.u32 683565275, %v4183
        %v4187 = vshrl.u32 2475754826, %v4184
        %v4188 = vor.u32 %v4186, %v4187
        %v4189 = vshll.u32 2475754826, %v4183
        %v4190 = vshrl.u32 2131351028, %v4184
        %v4191 = vor.u32 %v4189, %v4190
        %v4192 = vshll.u32 2131351028, %v4183
        %v4193 = vshrl.u32 2102212464, %v4184
        %v4194 = vor.u32 %v4192, %v4193
        %v4195 = vshll.u32 2102212464, %v4183
        %v4196 = vshrl.u32 920167782, %v4184
        %v4197 = vor.u32 %v4195, %v4196
        %v4198 = vshll.u32 920167782, %v4183
        %v4199 = vshrl.u32 1326507024, %v4184
        %v4200 = vor.u32 %v4198, %v4199
        %vm4201 = vcmp.lt.s32.totalorder %v4182, 1
        %vm4202 = vcmp.lt.s32.totalorder %v4182, 2
        %vm4203 = vcmp.lt.s32.totalorder %v4182, 3
        %vm4204 = vcmp.lt.s32.totalorder %v4182, 4
        %v4205 = vsel %vm4201, %v4185, %v4188
        %v4206 = vsel %vm4204, %v4194, 2102212464
        %v4207 = vsel %vm4203, %v4191, %v4206
        %v4208 = vsel %vm4202, %v4205, %v4207
        %v4209 = vsel %vm4201, %v4188, %v4191
        %v4210 = vsel %vm4204, %v4197, 920167782
        %v4211 = vsel %vm4203, %v4194, %v4210
        %v4212 = vsel %vm4202, %v4209, %v4211
        %v4213 = vsel %vm4201, %v4191, %v4194
        %v4214 = vsel %vm4204, %v4200, 1326507024
        %v4215 = vsel %vm4203, %v4197, %v4214
        %v4216 = vsel %vm4202, %v4213, %v4215
        %v4217 = vshll.u32 %v4177, 8
        %v4218 = vmul.u32.u64.compose %v4217, %v4216
        %v4219 = vextract.low.u32 %v4218
        %v4220 = vextract.high.u32 %v4218
        %v4221 = vmul.u32.u64.compose %v4217, %v4212
        %v4222 = vextract.low.u32 %v4221
        %v4223 = vextract.high.u32 %v4221
        %v4224 = vmul.u32 %v4217, %v4208
        %v4225 = vadd.s32 %v4220, %v4222
        %vm4226 = vc.u32 %v4220, %v4222
        %v4227 = vadd.s32 %v4223, 1
        %v4228 = vsel %vm4226, %v4227, %v4223
        %v4229 = vadd.s32 %v4224, %v4228
        %v4230 = vadd.s32 %v4229, 536870912
        %v4231 = vshrl.u32 %v4230, 30
        %v4232 = vshll.u32 %v4231, 30
        %v4233 = vsub.s32 %v4229, %v4232
        %vm4234 = vcmp.lt.s32.totalorder %v4233, 0
        %v4235 = vsub.s32 0, %v4233
        %v4236 = vsel %vm4234, %v4235, %v4233
        %v4237 = vclz %v4236
        %v4238 = vsub.s32 %v4237, 2
        %vm4239 = vcmp.gt.s32.totalorder 0, %v4238
        %v4240 = vsel %vm4239, 0, %v4238
        %v4241 = vsub.s32 32, %v4240
        %v4242 = vshll.u32 %v4233, %v4240
        %v4243 = vshrl.u32 %v4225, %v4241
        %v4244 = vor.u32 %v4242, %v4243
        %v4245 = vsub.s32 4294967266, %v4240
        %v4246 = vadd.s32 %v4245, 127
        %v4247 = vshll.u32 %v4246, 23
        %v4248 = vor.u32 4788187, %v4247
        %v4249 = vand.u32 2147483647, %v4248
        %v4251 = vcvt.s32.f32 %v4244
        %v4252 = vmul.f32 %v4251, %v4249
        %v4253 = vxor.u32 %v4252, 2147483648
        %v4254 = vsel %vm4171, %v4253, %v4252
        %v4255 = vsub.s32 4, %v4231
        %v4256 = vsel %vm4171, %v4255, %v4231
        %v4257 = vsel %vm4170, %v1667, %v4254
        %v4258 = vsel %vm4170, 0, %v4256
        %v4259 = vcosq.f32.pop %v4257
        %v4260 = vsinq.f32.pop %v4257
        %vm4261 = vweird.f32 %v1667
        %v4262 = vand.u32 %v4258, 3
        %vm4263 = vcmp.lt.s32.totalorder %v4262, 2
        %vm4264 = vcmp.eq.s32.totalorder %v4262, 0
        %v4265 = vxor.u32 %v4260, 2147483648
        %v4266 = vsel %vm4264, %v4259, %v4265
        %vm4267 = vcmp.eq.s32.totalorder %v4262, 2
        %v4268 = vxor.u32 %v4259, 2147483648
        %v4269 = vsel %vm4267, %v4268, %v4260
        %v4270 = vsel %vm4263, %v4266, %v4269
        %v4271 = vsel %vm4261, nan, %v4270
        %v4272 = vand.u32 2147483647, %v1670
        %vm4273 = vcmp.le.f32.partialorder %v4272, 0.7853982
        %vm4274 = vcmp.lt.s32.totalorder %v1670, 0
        %v4275 = vand.u32 %v1670, 2139095040
        %v4276 = vshrl.u32 %v4275, 23
        %v4277 = vsub.s32 %v4276, 127
        %v4278 = vand.u32 2147483647, %v1670
        %v4279 = vand.u32 %v4278, 8388607
        %v4280 = vor.u32 %v4279, 8388608
        %v4281 = vsub.s32 0, %v4280
        %v4282 = vadd.s32 %v4277, 1
        %vm4283 = vcmp.gt.s32.totalorder %v4282, 0
        %v4284 = vsel %vm4283, %v4282, 0
        %v4285 = vshrl.u32 %v4284, 5
        %v4286 = vand.u32 %v4284, 31
        %v4287 = vsub.s32 32, %v4286
        %v4288 = vshrl.u32 683565275, %v4287
        %v4289 = vshll.u32 683565275, %v4286
        %v4290 = vshrl.u32 2475754826, %v4287
        %v4291 = vor.u32 %v4289, %v4290
        %v4292 = vshll.u32 2475754826, %v4286
        %v4293 = vshrl.u32 2131351028, %v4287
        %v4294 = vor.u32 %v4292, %v4293
        %v4295 = vshll.u32 2131351028, %v4286
        %v4296 = vshrl.u32 2102212464, %v4287
        %v4297 = vor.u32 %v4295, %v4296
        %v4298 = vshll.u32 2102212464, %v4286
        %v4299 = vshrl.u32 920167782, %v4287
        %v4300 = vor.u32 %v4298, %v4299
        %v4301 = vshll.u32 920167782, %v4286
        %v4302 = vshrl.u32 1326507024, %v4287
        %v4303 = vor.u32 %v4301, %v4302
        %vm4304 = vcmp.lt.s32.totalorder %v4285, 1
        %vm4305 = vcmp.lt.s32.totalorder %v4285, 2
        %vm4306 = vcmp.lt.s32.totalorder %v4285, 3
        %vm4307 = vcmp.lt.s32.totalorder %v4285, 4
        %v4308 = vsel %vm4304, %v4288, %v4291
        %v4309 = vsel %vm4307, %v4297, 2102212464
        %v4310 = vsel %vm4306, %v4294, %v4309
        %v4311 = vsel %vm4305, %v4308, %v4310
        %v4312 = vsel %vm4304, %v4291, %v4294
        %v4313 = vsel %vm4307, %v4300, 920167782
        %v4314 = vsel %vm4306, %v4297, %v4313
        %v4315 = vsel %vm4305, %v4312, %v4314
        %v4316 = vsel %vm4304, %v4294, %v4297
        %v4317 = vsel %vm4307, %v4303, 1326507024
        %v4318 = vsel %vm4306, %v4300, %v4317
        %v4319 = vsel %vm4305, %v4316, %v4318
        %v4320 = vshll.u32 %v4280, 8
        %v4321 = vmul.u32.u64.compose %v4320, %v4319
        %v4322 = vextract.low.u32 %v4321
        %v4323 = vextract.high.u32 %v4321
        %v4324 = vmul.u32.u64.compose %v4320, %v4315
        %v4325 = vextract.low.u32 %v4324
        %v4326 = vextract.high.u32 %v4324
        %v4327 = vmul.u32 %v4320, %v4311
        %v4328 = vadd.s32 %v4323, %v4325
        %vm4329 = vc.u32 %v4323, %v4325
        %v4330 = vadd.s32 %v4326, 1
        %v4331 = vsel %vm4329, %v4330, %v4326
        %v4332 = vadd.s32 %v4327, %v4331
        %v4333 = vadd.s32 %v4332, 536870912
        %v4334 = vshrl.u32 %v4333, 30
        %v4335 = vshll.u32 %v4334, 30
        %v4336 = vsub.s32 %v4332, %v4335
        %vm4337 = vcmp.lt.s32.totalorder %v4336, 0
        %v4338 = vsub.s32 0, %v4336
        %v4339 = vsel %vm4337, %v4338, %v4336
        %v4340 = vclz %v4339
        %v4341 = vsub.s32 %v4340, 2
        %vm4342 = vcmp.gt.s32.totalorder 0, %v4341
        %v4343 = vsel %vm4342, 0, %v4341
        %v4344 = vsub.s32 32, %v4343
        %v4345 = vshll.u32 %v4336, %v4343
        %v4346 = vshrl.u32 %v4328, %v4344
        %v4347 = vor.u32 %v4345, %v4346
        %v4348 = vsub.s32 4294967266, %v4343
        %v4349 = vadd.s32 %v4348, 127
        %v4350 = vshll.u32 %v4349, 23
        %v4351 = vor.u32 4788187, %v4350
        %v4352 = vand.u32 2147483647, %v4351
        %v4354 = vcvt.s32.f32 %v4347
        %v4355 = vmul.f32 %v4354, %v4352
        %v4356 = vxor.u32 %v4355, 2147483648
        %v4357 = vsel %vm4274, %v4356, %v4355
        %v4358 = vsub.s32 4, %v4334
        %v4359 = vsel %vm4274, %v4358, %v4334
        %v4360 = vsel %vm4273, %v1670, %v4357
        %v4361 = vsel %vm4273, 0, %v4359
        %v4362 = vcosq.f32.pop %v4360
        %v4363 = vsinq.f32.pop %v4360
        %vm4364 = vweird.f32 %v1670
        %v4365 = vand.u32 %v4361, 3
        %vm4366 = vcmp.lt.s32.totalorder %v4365, 2
        %vm4367 = vcmp.eq.s32.totalorder %v4365, 0
        %v4368 = vxor.u32 %v4363, 2147483648
        %v4369 = vsel %vm4367, %v4362, %v4368
        %vm4370 = vcmp.eq.s32.totalorder %v4365, 2
        %v4371 = vxor.u32 %v4362, 2147483648
        %v4372 = vsel %vm4370, %v4371, %v4363
        %v4373 = vsel %vm4366, %v4369, %v4372
        %v4374 = vsel %vm4364, nan, %v4373
        %v4375 = vand.u32 2147483647, %v1675
        %vm4376 = vcmp.le.f32.partialorder %v4375, 0.7853982
        %vm4377 = vcmp.lt.s32.totalorder %v1675, 0
        %v4378 = vand.u32 %v1675, 2139095040
        %v4379 = vshrl.u32 %v4378, 23
        %v4380 = vsub.s32 %v4379, 127
        %v4381 = vand.u32 2147483647, %v1675
        %v4382 = vand.u32 %v4381, 8388607
        %v4383 = vor.u32 %v4382, 8388608
        %v4384 = vsub.s32 0, %v4383
        %v4385 = vadd.s32 %v4380, 1
        %vm4386 = vcmp.gt.s32.totalorder %v4385, 0
        %v4387 = vsel %vm4386, %v4385, 0
        %v4388 = vshrl.u32 %v4387, 5
        %v4389 = vand.u32 %v4387, 31
        %v4390 = vsub.s32 32, %v4389
        %v4391 = vshrl.u32 683565275, %v4390
        %v4392 = vshll.u32 683565275, %v4389
        %v4393 = vshrl.u32 2475754826, %v4390
        %v4394 = vor.u32 %v4392, %v4393
        %v4395 = vshll.u32 2475754826, %v4389
        %v4396 = vshrl.u32 2131351028, %v4390
        %v4397 = vor.u32 %v4395, %v4396
        %v4398 = vshll.u32 2131351028, %v4389
        %v4399 = vshrl.u32 2102212464, %v4390
        %v4400 = vor.u32 %v4398, %v4399
        %v4401 = vshll.u32 2102212464, %v4389
        %v4402 = vshrl.u32 920167782, %v4390
        %v4403 = vor.u32 %v4401, %v4402
        %v4404 = vshll.u32 920167782, %v4389
        %v4405 = vshrl.u32 1326507024, %v4390
        %v4406 = vor.u32 %v4404, %v4405
        %vm4407 = vcmp.lt.s32.totalorder %v4388, 1
        %vm4408 = vcmp.lt.s32.totalorder %v4388, 2
        %vm4409 = vcmp.lt.s32.totalorder %v4388, 3
        %vm4410 = vcmp.lt.s32.totalorder %v4388, 4
        %v4411 = vsel %vm4407, %v4391, %v4394
        %v4412 = vsel %vm4410, %v4400, 2102212464
        %v4413 = vsel %vm4409, %v4397, %v4412
        %v4414 = vsel %vm4408, %v4411, %v4413
        %v4415 = vsel %vm4407, %v4394, %v4397
        %v4416 = vsel %vm4410, %v4403, 920167782
        %v4417 = vsel %vm4409, %v4400, %v4416
        %v4418 = vsel %vm4408, %v4415, %v4417
        %v4419 = vsel %vm4407, %v4397, %v4400
        %v4420 = vsel %vm4410, %v4406, 1326507024
        %v4421 = vsel %vm4409, %v4403, %v4420
        %v4422 = vsel %vm4408, %v4419, %v4421
        %v4423 = vshll.u32 %v4383, 8
        %v4424 = vmul.u32.u64.compose %v4423, %v4422
        %v4425 = vextract.low.u32 %v4424
        %v4426 = vextract.high.u32 %v4424
        %v4427 = vmul.u32.u64.compose %v4423, %v4418
        %v4428 = vextract.low.u32 %v4427
        %v4429 = vextract.high.u32 %v4427
        %v4430 = vmul.u32 %v4423, %v4414
        %v4431 = vadd.s32 %v4426, %v4428
        %vm4432 = vc.u32 %v4426, %v4428
        %v4433 = vadd.s32 %v4429, 1
        %v4434 = vsel %vm4432, %v4433, %v4429
        %v4435 = vadd.s32 %v4430, %v4434
        %v4436 = vadd.s32 %v4435, 536870912
        %v4437 = vshrl.u32 %v4436, 30
        %v4438 = vshll.u32 %v4437, 30
        %v4439 = vsub.s32 %v4435, %v4438
        %vm4440 = vcmp.lt.s32.totalorder %v4439, 0
        %v4441 = vsub.s32 0, %v4439
        %v4442 = vsel %vm4440, %v4441, %v4439
        %v4443 = vclz %v4442
        %v4444 = vsub.s32 %v4443, 2
        %vm4445 = vcmp.gt.s32.totalorder 0, %v4444
        %v4446 = vsel %vm4445, 0, %v4444
        %v4447 = vsub.s32 32, %v4446
        %v4448 = vshll.u32 %v4439, %v4446
        %v4449 = vshrl.u32 %v4431, %v4447
        %v4450 = vor.u32 %v4448, %v4449
        %v4451 = vsub.s32 4294967266, %v4446
        %v4452 = vadd.s32 %v4451, 127
        %v4453 = vshll.u32 %v4452, 23
        %v4454 = vor.u32 4788187, %v4453
        %v4455 = vand.u32 2147483647, %v4454
        %v4457 = vcvt.s32.f32 %v4450
        %v4458 = vmul.f32 %v4457, %v4455
        %v4459 = vxor.u32 %v4458, 2147483648
        %v4460 = vsel %vm4377, %v4459, %v4458
        %v4461 = vsub.s32 4, %v4437
        %v4462 = vsel %vm4377, %v4461, %v4437
        %v4463 = vsel %vm4376, %v1675, %v4460
        %v4464 = vsel %vm4376, 0, %v4462
        %v4465 = vcosq.f32.pop %v4463
        %v4466 = vsinq.f32.pop %v4463
        %vm4467 = vweird.f32 %v1675
        %v4468 = vand.u32 %v4464, 3
        %vm4469 = vcmp.lt.s32.totalorder %v4468, 2
        %vm4470 = vcmp.eq.s32.totalorder %v4468, 0
        %v4471 = vxor.u32 %v4466, 2147483648
        %v4472 = vsel %vm4470, %v4465, %v4471
        %vm4473 = vcmp.eq.s32.totalorder %v4468, 2
        %v4474 = vxor.u32 %v4465, 2147483648
        %v4475 = vsel %vm4473, %v4474, %v4466
        %v4476 = vsel %vm4469, %v4472, %v4475
        %v4477 = vsel %vm4467, nan, %v4476
        %v4478 = vand.u32 2147483647, %v1678
        %vm4479 = vcmp.le.f32.partialorder %v4478, 0.7853982
        %vm4480 = vcmp.lt.s32.totalorder %v1678, 0
        %v4481 = vand.u32 %v1678, 2139095040
        %v4482 = vshrl.u32 %v4481, 23
        %v4483 = vsub.s32 %v4482, 127
        %v4484 = vand.u32 2147483647, %v1678
        %v4485 = vand.u32 %v4484, 8388607
        %v4486 = vor.u32 %v4485, 8388608
        %v4487 = vsub.s32 0, %v4486
        %v4488 = vadd.s32 %v4483, 1
        %vm4489 = vcmp.gt.s32.totalorder %v4488, 0
        %v4490 = vsel %vm4489, %v4488, 0
        %v4491 = vshrl.u32 %v4490, 5
        %v4492 = vand.u32 %v4490, 31
        %v4493 = vsub.s32 32, %v4492
        %v4494 = vshrl.u32 683565275, %v4493
        %v4495 = vshll.u32 683565275, %v4492
        %v4496 = vshrl.u32 2475754826, %v4493
        %v4497 = vor.u32 %v4495, %v4496
        %v4498 = vshll.u32 2475754826, %v4492
        %v4499 = vshrl.u32 2131351028, %v4493
        %v4500 = vor.u32 %v4498, %v4499
        %v4501 = vshll.u32 2131351028, %v4492
        %v4502 = vshrl.u32 2102212464, %v4493
        %v4503 = vor.u32 %v4501, %v4502
        %v4504 = vshll.u32 2102212464, %v4492
        %v4505 = vshrl.u32 920167782, %v4493
        %v4506 = vor.u32 %v4504, %v4505
        %v4507 = vshll.u32 920167782, %v4492
        %v4508 = vshrl.u32 1326507024, %v4493
        %v4509 = vor.u32 %v4507, %v4508
        %vm4510 = vcmp.lt.s32.totalorder %v4491, 1
        %vm4511 = vcmp.lt.s32.totalorder %v4491, 2
        %vm4512 = vcmp.lt.s32.totalorder %v4491, 3
        %vm4513 = vcmp.lt.s32.totalorder %v4491, 4
        %v4514 = vsel %vm4510, %v4494, %v4497
        %v4515 = vsel %vm4513, %v4503, 2102212464
        %v4516 = vsel %vm4512, %v4500, %v4515
        %v4517 = vsel %vm4511, %v4514, %v4516
        %v4518 = vsel %vm4510, %v4497, %v4500
        %v4519 = vsel %vm4513, %v4506, 920167782
        %v4520 = vsel %vm4512, %v4503, %v4519
        %v4521 = vsel %vm4511, %v4518, %v4520
        %v4522 = vsel %vm4510, %v4500, %v4503
        %v4523 = vsel %vm4513, %v4509, 1326507024
        %v4524 = vsel %vm4512, %v4506, %v4523
        %v4525 = vsel %vm4511, %v4522, %v4524
        %v4526 = vshll.u32 %v4486, 8
        %v4527 = vmul.u32.u64.compose %v4526, %v4525
        %v4528 = vextract.low.u32 %v4527
        %v4529 = vextract.high.u32 %v4527
        %v4530 = vmul.u32.u64.compose %v4526, %v4521
        %v4531 = vextract.low.u32 %v4530
        %v4532 = vextract.high.u32 %v4530
        %v4533 = vmul.u32 %v4526, %v4517
        %v4534 = vadd.s32 %v4529, %v4531
        %vm4535 = vc.u32 %v4529, %v4531
        %v4536 = vadd.s32 %v4532, 1
        %v4537 = vsel %vm4535, %v4536, %v4532
        %v4538 = vadd.s32 %v4533, %v4537
        %v4539 = vadd.s32 %v4538, 536870912
        %v4540 = vshrl.u32 %v4539, 30
        %v4541 = vshll.u32 %v4540, 30
        %v4542 = vsub.s32 %v4538, %v4541
        %vm4543 = vcmp.lt.s32.totalorder %v4542, 0
        %v4544 = vsub.s32 0, %v4542
        %v4545 = vsel %vm4543, %v4544, %v4542
        %v4546 = vclz %v4545
        %v4547 = vsub.s32 %v4546, 2
        %vm4548 = vcmp.gt.s32.totalorder 0, %v4547
        %v4549 = vsel %vm4548, 0, %v4547
        %v4550 = vsub.s32 32, %v4549
        %v4551 = vshll.u32 %v4542, %v4549
        %v4552 = vshrl.u32 %v4534, %v4550
        %v4553 = vor.u32 %v4551, %v4552
        %v4554 = vsub.s32 4294967266, %v4549
        %v4555 = vadd.s32 %v4554, 127
        %v4556 = vshll.u32 %v4555, 23
        %v4557 = vor.u32 4788187, %v4556
        %v4558 = vand.u32 2147483647, %v4557
        %v4560 = vcvt.s32.f32 %v4553
        %v4561 = vmul.f32 %v4560, %v4558
        %v4562 = vxor.u32 %v4561, 2147483648
        %v4563 = vsel %vm4480, %v4562, %v4561
        %v4564 = vsub.s32 4, %v4540
        %v4565 = vsel %vm4480, %v4564, %v4540
        %v4566 = vsel %vm4479, %v1678, %v4563
        %v4567 = vsel %vm4479, 0, %v4565
        %v4568 = vcosq.f32.pop %v4566
        %v4569 = vsinq.f32.pop %v4566
        %vm4570 = vweird.f32 %v1678
        %v4571 = vand.u32 %v4567, 3
        %vm4572 = vcmp.lt.s32.totalorder %v4571, 2
        %vm4573 = vcmp.eq.s32.totalorder %v4571, 0
        %v4574 = vxor.u32 %v4569, 2147483648
        %v4575 = vsel %vm4573, %v4568, %v4574
        %vm4576 = vcmp.eq.s32.totalorder %v4571, 2
        %v4577 = vxor.u32 %v4568, 2147483648
        %v4578 = vsel %vm4576, %v4577, %v4569
        %v4579 = vsel %vm4572, %v4575, %v4578
        %v4580 = vsel %vm4570, nan, %v4579
        %v4581 = vand.u32 2147483647, %v1683
        %vm4582 = vcmp.le.f32.partialorder %v4581, 0.7853982
        %vm4583 = vcmp.lt.s32.totalorder %v1683, 0
        %v4584 = vand.u32 %v1683, 2139095040
        %v4585 = vshrl.u32 %v4584, 23
        %v4586 = vsub.s32 %v4585, 127
        %v4587 = vand.u32 2147483647, %v1683
        %v4588 = vand.u32 %v4587, 8388607
        %v4589 = vor.u32 %v4588, 8388608
        %v4590 = vsub.s32 0, %v4589
        %v4591 = vadd.s32 %v4586, 1
        %vm4592 = vcmp.gt.s32.totalorder %v4591, 0
        %v4593 = vsel %vm4592, %v4591, 0
        %v4594 = vshrl.u32 %v4593, 5
        %v4595 = vand.u32 %v4593, 31
        %v4596 = vsub.s32 32, %v4595
        %v4597 = vshrl.u32 683565275, %v4596
        %v4598 = vshll.u32 683565275, %v4595
        %v4599 = vshrl.u32 2475754826, %v4596
        %v4600 = vor.u32 %v4598, %v4599
        %v4601 = vshll.u32 2475754826, %v4595
        %v4602 = vshrl.u32 2131351028, %v4596
        %v4603 = vor.u32 %v4601, %v4602
        %v4604 = vshll.u32 2131351028, %v4595
        %v4605 = vshrl.u32 2102212464, %v4596
        %v4606 = vor.u32 %v4604, %v4605
        %v4607 = vshll.u32 2102212464, %v4595
        %v4608 = vshrl.u32 920167782, %v4596
        %v4609 = vor.u32 %v4607, %v4608
        %v4610 = vshll.u32 920167782, %v4595
        %v4611 = vshrl.u32 1326507024, %v4596
        %v4612 = vor.u32 %v4610, %v4611
        %vm4613 = vcmp.lt.s32.totalorder %v4594, 1
        %vm4614 = vcmp.lt.s32.totalorder %v4594, 2
        %vm4615 = vcmp.lt.s32.totalorder %v4594, 3
        %vm4616 = vcmp.lt.s32.totalorder %v4594, 4
        %v4617 = vsel %vm4613, %v4597, %v4600
        %v4618 = vsel %vm4616, %v4606, 2102212464
        %v4619 = vsel %vm4615, %v4603, %v4618
        %v4620 = vsel %vm4614, %v4617, %v4619
        %v4621 = vsel %vm4613, %v4600, %v4603
        %v4622 = vsel %vm4616, %v4609, 920167782
        %v4623 = vsel %vm4615, %v4606, %v4622
        %v4624 = vsel %vm4614, %v4621, %v4623
        %v4625 = vsel %vm4613, %v4603, %v4606
        %v4626 = vsel %vm4616, %v4612, 1326507024
        %v4627 = vsel %vm4615, %v4609, %v4626
        %v4628 = vsel %vm4614, %v4625, %v4627
        %v4629 = vshll.u32 %v4589, 8
        %v4630 = vmul.u32.u64.compose %v4629, %v4628
        %v4631 = vextract.low.u32 %v4630
        %v4632 = vextract.high.u32 %v4630
        %v4633 = vmul.u32.u64.compose %v4629, %v4624
        %v4634 = vextract.low.u32 %v4633
        %v4635 = vextract.high.u32 %v4633
        %v4636 = vmul.u32 %v4629, %v4620
        %v4637 = vadd.s32 %v4632, %v4634
        %vm4638 = vc.u32 %v4632, %v4634
        %v4639 = vadd.s32 %v4635, 1
        %v4640 = vsel %vm4638, %v4639, %v4635
        %v4641 = vadd.s32 %v4636, %v4640
        %v4642 = vadd.s32 %v4641, 536870912
        %v4643 = vshrl.u32 %v4642, 30
        %v4644 = vshll.u32 %v4643, 30
        %v4645 = vsub.s32 %v4641, %v4644
        %vm4646 = vcmp.lt.s32.totalorder %v4645, 0
        %v4647 = vsub.s32 0, %v4645
        %v4648 = vsel %vm4646, %v4647, %v4645
        %v4649 = vclz %v4648
        %v4650 = vsub.s32 %v4649, 2
        %vm4651 = vcmp.gt.s32.totalorder 0, %v4650
        %v4652 = vsel %vm4651, 0, %v4650
        %v4653 = vsub.s32 32, %v4652
        %v4654 = vshll.u32 %v4645, %v4652
        %v4655 = vshrl.u32 %v4637, %v4653
        %v4656 = vor.u32 %v4654, %v4655
        %v4657 = vsub.s32 4294967266, %v4652
        %v4658 = vadd.s32 %v4657, 127
        %v4659 = vshll.u32 %v4658, 23
        %v4660 = vor.u32 4788187, %v4659
        %v4661 = vand.u32 2147483647, %v4660
        %v4663 = vcvt.s32.f32 %v4656
        %v4664 = vmul.f32 %v4663, %v4661
        %v4665 = vxor.u32 %v4664, 2147483648
        %v4666 = vsel %vm4583, %v4665, %v4664
        %v4667 = vsub.s32 4, %v4643
        %v4668 = vsel %vm4583, %v4667, %v4643
        %v4669 = vsel %vm4582, %v1683, %v4666
        %v4670 = vsel %vm4582, 0, %v4668
        %v4671 = vcosq.f32.pop %v4669
        %v4672 = vsinq.f32.pop %v4669
        %vm4673 = vweird.f32 %v1683
        %v4674 = vand.u32 %v4670, 3
        %vm4675 = vcmp.lt.s32.totalorder %v4674, 2
        %vm4676 = vcmp.eq.s32.totalorder %v4674, 0
        %v4677 = vxor.u32 %v4672, 2147483648
        %v4678 = vsel %vm4676, %v4671, %v4677
        %vm4679 = vcmp.eq.s32.totalorder %v4674, 2
        %v4680 = vxor.u32 %v4671, 2147483648
        %v4681 = vsel %vm4679, %v4680, %v4672
        %v4682 = vsel %vm4675, %v4678, %v4681
        %v4683 = vsel %vm4673, nan, %v4682
        %v4684 = vand.u32 2147483647, %v1686
        %vm4685 = vcmp.le.f32.partialorder %v4684, 0.7853982
        %vm4686 = vcmp.lt.s32.totalorder %v1686, 0
        %v4687 = vand.u32 %v1686, 2139095040
        %v4688 = vshrl.u32 %v4687, 23
        %v4689 = vsub.s32 %v4688, 127
        %v4690 = vand.u32 2147483647, %v1686
        %v4691 = vand.u32 %v4690, 8388607
        %v4692 = vor.u32 %v4691, 8388608
        %v4693 = vsub.s32 0, %v4692
        %v4694 = vadd.s32 %v4689, 1
        %vm4695 = vcmp.gt.s32.totalorder %v4694, 0
        %v4696 = vsel %vm4695, %v4694, 0
        %v4697 = vshrl.u32 %v4696, 5
        %v4698 = vand.u32 %v4696, 31
        %v4699 = vsub.s32 32, %v4698
        %v4700 = vshrl.u32 683565275, %v4699
        %v4701 = vshll.u32 683565275, %v4698
        %v4702 = vshrl.u32 2475754826, %v4699
        %v4703 = vor.u32 %v4701, %v4702
        %v4704 = vshll.u32 2475754826, %v4698
        %v4705 = vshrl.u32 2131351028, %v4699
        %v4706 = vor.u32 %v4704, %v4705
        %v4707 = vshll.u32 2131351028, %v4698
        %v4708 = vshrl.u32 2102212464, %v4699
        %v4709 = vor.u32 %v4707, %v4708
        %v4710 = vshll.u32 2102212464, %v4698
        %v4711 = vshrl.u32 920167782, %v4699
        %v4712 = vor.u32 %v4710, %v4711
        %v4713 = vshll.u32 920167782, %v4698
        %v4714 = vshrl.u32 1326507024, %v4699
        %v4715 = vor.u32 %v4713, %v4714
        %vm4716 = vcmp.lt.s32.totalorder %v4697, 1
        %vm4717 = vcmp.lt.s32.totalorder %v4697, 2
        %vm4718 = vcmp.lt.s32.totalorder %v4697, 3
        %vm4719 = vcmp.lt.s32.totalorder %v4697, 4
        %v4720 = vsel %vm4716, %v4700, %v4703
        %v4721 = vsel %vm4719, %v4709, 2102212464
        %v4722 = vsel %vm4718, %v4706, %v4721
        %v4723 = vsel %vm4717, %v4720, %v4722
        %v4724 = vsel %vm4716, %v4703, %v4706
        %v4725 = vsel %vm4719, %v4712, 920167782
        %v4726 = vsel %vm4718, %v4709, %v4725
        %v4727 = vsel %vm4717, %v4724, %v4726
        %v4728 = vsel %vm4716, %v4706, %v4709
        %v4729 = vsel %vm4719, %v4715, 1326507024
        %v4730 = vsel %vm4718, %v4712, %v4729
        %v4731 = vsel %vm4717, %v4728, %v4730
        %v4732 = vshll.u32 %v4692, 8
        %v4733 = vmul.u32.u64.compose %v4732, %v4731
        %v4734 = vextract.low.u32 %v4733
        %v4735 = vextract.high.u32 %v4733
        %v4736 = vmul.u32.u64.compose %v4732, %v4727
        %v4737 = vextract.low.u32 %v4736
        %v4738 = vextract.high.u32 %v4736
        %v4739 = vmul.u32 %v4732, %v4723
        %v4740 = vadd.s32 %v4735, %v4737
        %vm4741 = vc.u32 %v4735, %v4737
        %v4742 = vadd.s32 %v4738, 1
        %v4743 = vsel %vm4741, %v4742, %v4738
        %v4744 = vadd.s32 %v4739, %v4743
        %v4745 = vadd.s32 %v4744, 536870912
        %v4746 = vshrl.u32 %v4745, 30
        %v4747 = vshll.u32 %v4746, 30
        %v4748 = vsub.s32 %v4744, %v4747
        %vm4749 = vcmp.lt.s32.totalorder %v4748, 0
        %v4750 = vsub.s32 0, %v4748
        %v4751 = vsel %vm4749, %v4750, %v4748
        %v4752 = vclz %v4751
        %v4753 = vsub.s32 %v4752, 2
        %vm4754 = vcmp.gt.s32.totalorder 0, %v4753
        %v4755 = vsel %vm4754, 0, %v4753
        %v4756 = vsub.s32 32, %v4755
        %v4757 = vshll.u32 %v4748, %v4755
        %v4758 = vshrl.u32 %v4740, %v4756
        %v4759 = vor.u32 %v4757, %v4758
        %v4760 = vsub.s32 4294967266, %v4755
        %v4761 = vadd.s32 %v4760, 127
        %v4762 = vshll.u32 %v4761, 23
        %v4763 = vor.u32 4788187, %v4762
        %v4764 = vand.u32 2147483647, %v4763
        %v4766 = vcvt.s32.f32 %v4759
        %v4767 = vmul.f32 %v4766, %v4764
        %v4768 = vxor.u32 %v4767, 2147483648
        %v4769 = vsel %vm4686, %v4768, %v4767
        %v4770 = vsub.s32 4, %v4746
        %v4771 = vsel %vm4686, %v4770, %v4746
        %v4772 = vsel %vm4685, %v1686, %v4769
        %v4773 = vsel %vm4685, 0, %v4771
        %v4774 = vcosq.f32.pop %v4772
        %v4775 = vsinq.f32.pop %v4772
        %vm4776 = vweird.f32 %v1686
        %v4777 = vand.u32 %v4773, 3
        %vm4778 = vcmp.lt.s32.totalorder %v4777, 2
        %vm4779 = vcmp.eq.s32.totalorder %v4777, 0
        %v4780 = vxor.u32 %v4775, 2147483648
        %v4781 = vsel %vm4779, %v4774, %v4780
        %vm4782 = vcmp.eq.s32.totalorder %v4777, 2
        %v4783 = vxor.u32 %v4774, 2147483648
        %v4784 = vsel %vm4782, %v4783, %v4775
        %v4785 = vsel %vm4778, %v4781, %v4784
        %v4786 = vsel %vm4776, nan, %v4785
        %v4787 = vand.u32 2147483647, %v1691
        %vm4788 = vcmp.le.f32.partialorder %v4787, 0.7853982
        %vm4789 = vcmp.lt.s32.totalorder %v1691, 0
        %v4790 = vand.u32 %v1691, 2139095040
        %v4791 = vshrl.u32 %v4790, 23
        %v4792 = vsub.s32 %v4791, 127
        %v4793 = vand.u32 2147483647, %v1691
        %v4794 = vand.u32 %v4793, 8388607
        %v4795 = vor.u32 %v4794, 8388608
        %v4796 = vsub.s32 0, %v4795
        %v4797 = vadd.s32 %v4792, 1
        %vm4798 = vcmp.gt.s32.totalorder %v4797, 0
        %v4799 = vsel %vm4798, %v4797, 0
        %v4800 = vshrl.u32 %v4799, 5
        %v4801 = vand.u32 %v4799, 31
        %v4802 = vsub.s32 32, %v4801
        %v4803 = vshrl.u32 683565275, %v4802
        %v4804 = vshll.u32 683565275, %v4801
        %v4805 = vshrl.u32 2475754826, %v4802
        %v4806 = vor.u32 %v4804, %v4805
        %v4807 = vshll.u32 2475754826, %v4801
        %v4808 = vshrl.u32 2131351028, %v4802
        %v4809 = vor.u32 %v4807, %v4808
        %v4810 = vshll.u32 2131351028, %v4801
        %v4811 = vshrl.u32 2102212464, %v4802
        %v4812 = vor.u32 %v4810, %v4811
        %v4813 = vshll.u32 2102212464, %v4801
        %v4814 = vshrl.u32 920167782, %v4802
        %v4815 = vor.u32 %v4813, %v4814
        %v4816 = vshll.u32 920167782, %v4801
        %v4817 = vshrl.u32 1326507024, %v4802
        %v4818 = vor.u32 %v4816, %v4817
        %vm4819 = vcmp.lt.s32.totalorder %v4800, 1
        %vm4820 = vcmp.lt.s32.totalorder %v4800, 2
        %vm4821 = vcmp.lt.s32.totalorder %v4800, 3
        %vm4822 = vcmp.lt.s32.totalorder %v4800, 4
        %v4823 = vsel %vm4819, %v4803, %v4806
        %v4824 = vsel %vm4822, %v4812, 2102212464
        %v4825 = vsel %vm4821, %v4809, %v4824
        %v4826 = vsel %vm4820, %v4823, %v4825
        %v4827 = vsel %vm4819, %v4806, %v4809
        %v4828 = vsel %vm4822, %v4815, 920167782
        %v4829 = vsel %vm4821, %v4812, %v4828
        %v4830 = vsel %vm4820, %v4827, %v4829
        %v4831 = vsel %vm4819, %v4809, %v4812
        %v4832 = vsel %vm4822, %v4818, 1326507024
        %v4833 = vsel %vm4821, %v4815, %v4832
        %v4834 = vsel %vm4820, %v4831, %v4833
        %v4835 = vshll.u32 %v4795, 8
        %v4836 = vmul.u32.u64.compose %v4835, %v4834
        %v4837 = vextract.low.u32 %v4836
        %v4838 = vextract.high.u32 %v4836
        %v4839 = vmul.u32.u64.compose %v4835, %v4830
        %v4840 = vextract.low.u32 %v4839
        %v4841 = vextract.high.u32 %v4839
        %v4842 = vmul.u32 %v4835, %v4826
        %v4843 = vadd.s32 %v4838, %v4840
        %vm4844 = vc.u32 %v4838, %v4840
        %v4845 = vadd.s32 %v4841, 1
        %v4846 = vsel %vm4844, %v4845, %v4841
        %v4847 = vadd.s32 %v4842, %v4846
        %v4848 = vadd.s32 %v4847, 536870912
        %v4849 = vshrl.u32 %v4848, 30
        %v4850 = vshll.u32 %v4849, 30
        %v4851 = vsub.s32 %v4847, %v4850
        %vm4852 = vcmp.lt.s32.totalorder %v4851, 0
        %v4853 = vsub.s32 0, %v4851
        %v4854 = vsel %vm4852, %v4853, %v4851
        %v4855 = vclz %v4854
        %v4856 = vsub.s32 %v4855, 2
        %vm4857 = vcmp.gt.s32.totalorder 0, %v4856
        %v4858 = vsel %vm4857, 0, %v4856
        %v4859 = vsub.s32 32, %v4858
        %v4860 = vshll.u32 %v4851, %v4858
        %v4861 = vshrl.u32 %v4843, %v4859
        %v4862 = vor.u32 %v4860, %v4861
        %v4863 = vsub.s32 4294967266, %v4858
        %v4864 = vadd.s32 %v4863, 127
        %v4865 = vshll.u32 %v4864, 23
        %v4866 = vor.u32 4788187, %v4865
        %v4867 = vand.u32 2147483647, %v4866
        %v4869 = vcvt.s32.f32 %v4862
        %v4870 = vmul.f32 %v4869, %v4867
        %v4871 = vxor.u32 %v4870, 2147483648
        %v4872 = vsel %vm4789, %v4871, %v4870
        %v4873 = vsub.s32 4, %v4849
        %v4874 = vsel %vm4789, %v4873, %v4849
        %v4875 = vsel %vm4788, %v1691, %v4872
        %v4876 = vsel %vm4788, 0, %v4874
        %v4877 = vcosq.f32.pop %v4875
        %v4878 = vsinq.f32.pop %v4875
        %vm4879 = vweird.f32 %v1691
        %v4880 = vand.u32 %v4876, 3
        %vm4881 = vcmp.lt.s32.totalorder %v4880, 2
        %vm4882 = vcmp.eq.s32.totalorder %v4880, 0
        %v4883 = vxor.u32 %v4878, 2147483648
        %v4884 = vsel %vm4882, %v4877, %v4883
        %vm4885 = vcmp.eq.s32.totalorder %v4880, 2
        %v4886 = vxor.u32 %v4877, 2147483648
        %v4887 = vsel %vm4885, %v4886, %v4878
        %v4888 = vsel %vm4881, %v4884, %v4887
        %v4889 = vsel %vm4879, nan, %v4888
        %v4890 = vand.u32 2147483647, %v1694
        %vm4891 = vcmp.le.f32.partialorder %v4890, 0.7853982
        %vm4892 = vcmp.lt.s32.totalorder %v1694, 0
        %v4893 = vand.u32 %v1694, 2139095040
        %v4894 = vshrl.u32 %v4893, 23
        %v4895 = vsub.s32 %v4894, 127
        %v4896 = vand.u32 2147483647, %v1694
        %v4897 = vand.u32 %v4896, 8388607
        %v4898 = vor.u32 %v4897, 8388608
        %v4899 = vsub.s32 0, %v4898
        %v4900 = vadd.s32 %v4895, 1
        %vm4901 = vcmp.gt.s32.totalorder %v4900, 0
        %v4902 = vsel %vm4901, %v4900, 0
        %v4903 = vshrl.u32 %v4902, 5
        %v4904 = vand.u32 %v4902, 31
        %v4905 = vsub.s32 32, %v4904
        %v4906 = vshrl.u32 683565275, %v4905
        %v4907 = vshll.u32 683565275, %v4904
        %v4908 = vshrl.u32 2475754826, %v4905
        %v4909 = vor.u32 %v4907, %v4908
        %v4910 = vshll.u32 2475754826, %v4904
        %v4911 = vshrl.u32 2131351028, %v4905
        %v4912 = vor.u32 %v4910, %v4911
        %v4913 = vshll.u32 2131351028, %v4904
        %v4914 = vshrl.u32 2102212464, %v4905
        %v4915 = vor.u32 %v4913, %v4914
        %v4916 = vshll.u32 2102212464, %v4904
        %v4917 = vshrl.u32 920167782, %v4905
        %v4918 = vor.u32 %v4916, %v4917
        %v4919 = vshll.u32 920167782, %v4904
        %v4920 = vshrl.u32 1326507024, %v4905
        %v4921 = vor.u32 %v4919, %v4920
        %vm4922 = vcmp.lt.s32.totalorder %v4903, 1
        %vm4923 = vcmp.lt.s32.totalorder %v4903, 2
        %vm4924 = vcmp.lt.s32.totalorder %v4903, 3
        %vm4925 = vcmp.lt.s32.totalorder %v4903, 4
        %v4926 = vsel %vm4922, %v4906, %v4909
        %v4927 = vsel %vm4925, %v4915, 2102212464
        %v4928 = vsel %vm4924, %v4912, %v4927
        %v4929 = vsel %vm4923, %v4926, %v4928
        %v4930 = vsel %vm4922, %v4909, %v4912
        %v4931 = vsel %vm4925, %v4918, 920167782
        %v4932 = vsel %vm4924, %v4915, %v4931
        %v4933 = vsel %vm4923, %v4930, %v4932
        %v4934 = vsel %vm4922, %v4912, %v4915
        %v4935 = vsel %vm4925, %v4921, 1326507024
        %v4936 = vsel %vm4924, %v4918, %v4935
        %v4937 = vsel %vm4923, %v4934, %v4936
        %v4938 = vshll.u32 %v4898, 8
        %v4939 = vmul.u32.u64.compose %v4938, %v4937
        %v4940 = vextract.low.u32 %v4939
        %v4941 = vextract.high.u32 %v4939
        %v4942 = vmul.u32.u64.compose %v4938, %v4933
        %v4943 = vextract.low.u32 %v4942
        %v4944 = vextract.high.u32 %v4942
        %v4945 = vmul.u32 %v4938, %v4929
        %v4946 = vadd.s32 %v4941, %v4943
        %vm4947 = vc.u32 %v4941, %v4943
        %v4948 = vadd.s32 %v4944, 1
        %v4949 = vsel %vm4947, %v4948, %v4944
        %v4950 = vadd.s32 %v4945, %v4949
        %v4951 = vadd.s32 %v4950, 536870912
        %v4952 = vshrl.u32 %v4951, 30
        %v4953 = vshll.u32 %v4952, 30
        %v4954 = vsub.s32 %v4950, %v4953
        %vm4955 = vcmp.lt.s32.totalorder %v4954, 0
        %v4956 = vsub.s32 0, %v4954
        %v4957 = vsel %vm4955, %v4956, %v4954
        %v4958 = vclz %v4957
        %v4959 = vsub.s32 %v4958, 2
        %vm4960 = vcmp.gt.s32.totalorder 0, %v4959
        %v4961 = vsel %vm4960, 0, %v4959
        %v4962 = vsub.s32 32, %v4961
        %v4963 = vshll.u32 %v4954, %v4961
        %v4964 = vshrl.u32 %v4946, %v4962
        %v4965 = vor.u32 %v4963, %v4964
        %v4966 = vsub.s32 4294967266, %v4961
        %v4967 = vadd.s32 %v4966, 127
        %v4968 = vshll.u32 %v4967, 23
        %v4969 = vor.u32 4788187, %v4968
        %v4970 = vand.u32 2147483647, %v4969
        %v4972 = vcvt.s32.f32 %v4965
        %v4973 = vmul.f32 %v4972, %v4970
        %v4974 = vxor.u32 %v4973, 2147483648
        %v4975 = vsel %vm4892, %v4974, %v4973
        %v4976 = vsub.s32 4, %v4952
        %v4977 = vsel %vm4892, %v4976, %v4952
        %v4978 = vsel %vm4891, %v1694, %v4975
        %v4979 = vsel %vm4891, 0, %v4977
        %v4980 = vcosq.f32.pop %v4978
        %v4981 = vsinq.f32.pop %v4978
        %vm4982 = vweird.f32 %v1694
        %v4983 = vand.u32 %v4979, 3
        %vm4984 = vcmp.lt.s32.totalorder %v4983, 2
        %vm4985 = vcmp.eq.s32.totalorder %v4983, 0
        %v4986 = vxor.u32 %v4981, 2147483648
        %v4987 = vsel %vm4985, %v4980, %v4986
        %vm4988 = vcmp.eq.s32.totalorder %v4983, 2
        %v4989 = vxor.u32 %v4980, 2147483648
        %v4990 = vsel %vm4988, %v4989, %v4981
        %v4991 = vsel %vm4984, %v4987, %v4990
        %v4992 = vsel %vm4982, nan, %v4991
        %v4993 = vmul.f32 %v905, %v1799
        %v4994 = vmul.f32 %v908, %v1902
        %v4995 = vmul.f32 %v913, %v2005
        %v4996 = vmul.f32 %v916, %v2108
        %v4997 = vmul.f32 %v921, %v2211
        %v4998 = vmul.f32 %v924, %v2314
        %v4999 = vmul.f32 %v929, %v2417
        %v5000 = vmul.f32 %v932, %v2520
        %v5001 = vmul.f32 %v937, %v2623
        %v5002 = vmul.f32 %v940, %v2726
        %v5003 = vmul.f32 %v945, %v2829
        %v5004 = vmul.f32 %v948, %v2932
        %v5005 = vmul.f32 %v953, %v3035
        %v5006 = vmul.f32 %v956, %v3138
        %v5007 = vmul.f32 %v961, %v3241
        %v5008 = vmul.f32 %v964, %v3344
        %v5009 = vmul.f32 %v969, %v3447
        %v5010 = vmul.f32 %v972, %v3550
        %v5011 = vmul.f32 %v977, %v3653
        %v5012 = vmul.f32 %v980, %v3756
        %v5013 = vmul.f32 %v985, %v3859
        %v5014 = vmul.f32 %v988, %v3962
        %v5015 = vmul.f32 %v993, %v4065
        %v5016 = vmul.f32 %v996, %v4168
        %v5017 = vmul.f32 %v1001, %v4271
        %v5018 = vmul.f32 %v1004, %v4374
        %v5019 = vmul.f32 %v1009, %v4477
        %v5020 = vmul.f32 %v1012, %v4580
        %v5021 = vmul.f32 %v1017, %v4683
        %v5022 = vmul.f32 %v1020, %v4786
        %v5023 = vmul.f32 %v1025, %v4889
        %v5024 = vmul.f32 %v1028, %v4992
        %v5025 = vld [vmem:[%s457] sm:$0xff]
        %v5026 = vld [vmem:[%s457 + $0x8] sm:$0xff]
        %v5027 = vld [vmem:[%s457 + $0x10] sm:$0xff]
        %v5028 = vld [vmem:[%s457 + $0x18] sm:$0xff]
        %v5029 = vld [vmem:[%s457 + $0x20] sm:$0xff]
        %v5030 = vld [vmem:[%s457 + $0x28] sm:$0xff]
        %v5031 = vld [vmem:[%s457 + $0x30] sm:$0xff]
        %v5032 = vld [vmem:[%s457 + $0x38] sm:$0xff]
        %v5033 = vld [vmem:[%s457 + $0x40] sm:$0xff]
        %v5034 = vld [vmem:[%s457 + $0x48] sm:$0xff]
        %v5035 = vld [vmem:[%s457 + $0x50] sm:$0xff]
        %v5036 = vld [vmem:[%s457 + $0x58] sm:$0xff]
        %v5037 = vld [vmem:[%s457 + $0x60] sm:$0xff]
        %v5038 = vld [vmem:[%s457 + $0x68] sm:$0xff]
        %v5039 = vld [vmem:[%s457 + $0x70] sm:$0xff]
        %v5040 = vld [vmem:[%s457 + $0x78] sm:$0xff]
        %v5041 = vld [vmem:[%s457 + $0x80] sm:$0xff]
        %v5042 = vld [vmem:[%s457 + $0x88] sm:$0xff]
        %v5043 = vld [vmem:[%s457 + $0x90] sm:$0xff]
        %v5044 = vld [vmem:[%s457 + $0x98] sm:$0xff]
        %v5045 = vld [vmem:[%s457 + $0xa0] sm:$0xff]
        %v5046 = vld [vmem:[%s457 + $0xa8] sm:$0xff]
        %v5047 = vld [vmem:[%s457 + $0xb0] sm:$0xff]
        %v5048 = vld [vmem:[%s457 + $0xb8] sm:$0xff]
        %v5049 = vld [vmem:[%s457 + $0xc0] sm:$0xff]
        %v5050 = vld [vmem:[%s457 + $0xc8] sm:$0xff]
        %v5051 = vld [vmem:[%s457 + $0xd0] sm:$0xff]
        %v5052 = vld [vmem:[%s457 + $0xd8] sm:$0xff]
        %v5053 = vld [vmem:[%s457 + $0xe0] sm:$0xff]
        %v5054 = vld [vmem:[%s457 + $0xe8] sm:$0xff]
        %v5055 = vld [vmem:[%s457 + $0xf0] sm:$0xff]
        %v5056 = vld [vmem:[%s457 + $0xf8] sm:$0xff]
        %v5057 = vand.u32 2147483647, %v1571
        %vm5058 = vcmp.le.f32.partialorder %v5057, 0.7853982
        %vm5059 = vcmp.lt.s32.totalorder %v1571, 0
        %v5060 = vand.u32 %v1571, 2139095040
        %v5061 = vshrl.u32 %v5060, 23
        %v5062 = vsub.s32 %v5061, 127
        %v5063 = vand.u32 2147483647, %v1571
        %v5064 = vand.u32 %v5063, 8388607
        %v5065 = vor.u32 %v5064, 8388608
        %v5066 = vsub.s32 0, %v5065
        %v5067 = vadd.s32 %v5062, 1
        %vm5068 = vcmp.gt.s32.totalorder %v5067, 0
        %v5069 = vsel %vm5068, %v5067, 0
        %v5070 = vshrl.u32 %v5069, 5
        %v5071 = vand.u32 %v5069, 31
        %v5072 = vsub.s32 32, %v5071
        %v5073 = vshrl.u32 683565275, %v5072
        %v5074 = vshll.u32 683565275, %v5071
        %v5075 = vshrl.u32 2475754826, %v5072
        %v5076 = vor.u32 %v5074, %v5075
        %v5077 = vshll.u32 2475754826, %v5071
        %v5078 = vshrl.u32 2131351028, %v5072
        %v5079 = vor.u32 %v5077, %v5078
        %v5080 = vshll.u32 2131351028, %v5071
        %v5081 = vshrl.u32 2102212464, %v5072
        %v5082 = vor.u32 %v5080, %v5081
        %v5083 = vshll.u32 2102212464, %v5071
        %v5084 = vshrl.u32 920167782, %v5072
        %v5085 = vor.u32 %v5083, %v5084
        %v5086 = vshll.u32 920167782, %v5071
        %v5087 = vshrl.u32 1326507024, %v5072
        %v5088 = vor.u32 %v5086, %v5087
        %vm5089 = vcmp.lt.s32.totalorder %v5070, 1
        %vm5090 = vcmp.lt.s32.totalorder %v5070, 2
        %vm5091 = vcmp.lt.s32.totalorder %v5070, 3
        %vm5092 = vcmp.lt.s32.totalorder %v5070, 4
        %v5093 = vsel %vm5089, %v5073, %v5076
        %v5094 = vsel %vm5092, %v5082, 2102212464
        %v5095 = vsel %vm5091, %v5079, %v5094
        %v5096 = vsel %vm5090, %v5093, %v5095
        %v5097 = vsel %vm5089, %v5076, %v5079
        %v5098 = vsel %vm5092, %v5085, 920167782
        %v5099 = vsel %vm5091, %v5082, %v5098
        %v5100 = vsel %vm5090, %v5097, %v5099
        %v5101 = vsel %vm5089, %v5079, %v5082
        %v5102 = vsel %vm5092, %v5088, 1326507024
        %v5103 = vsel %vm5091, %v5085, %v5102
        %v5104 = vsel %vm5090, %v5101, %v5103
        %v5105 = vshll.u32 %v5065, 8
        %v5106 = vmul.u32.u64.compose %v5105, %v5104
        %v5107 = vextract.low.u32 %v5106
        %v5108 = vextract.high.u32 %v5106
        %v5109 = vmul.u32.u64.compose %v5105, %v5100
        %v5110 = vextract.low.u32 %v5109
        %v5111 = vextract.high.u32 %v5109
        %v5112 = vmul.u32 %v5105, %v5096
        %v5113 = vadd.s32 %v5108, %v5110
        %vm5114 = vc.u32 %v5108, %v5110
        %v5115 = vadd.s32 %v5111, 1
        %v5116 = vsel %vm5114, %v5115, %v5111
        %v5117 = vadd.s32 %v5112, %v5116
        %v5118 = vadd.s32 %v5117, 536870912
        %v5119 = vshrl.u32 %v5118, 30
        %v5120 = vshll.u32 %v5119, 30
        %v5121 = vsub.s32 %v5117, %v5120
        %vm5122 = vcmp.lt.s32.totalorder %v5121, 0
        %v5123 = vsub.s32 0, %v5121
        %v5124 = vsel %vm5122, %v5123, %v5121
        %v5125 = vclz %v5124
        %v5126 = vsub.s32 %v5125, 2
        %vm5127 = vcmp.gt.s32.totalorder 0, %v5126
        %v5128 = vsel %vm5127, 0, %v5126
        %v5129 = vsub.s32 32, %v5128
        %v5130 = vshll.u32 %v5121, %v5128
        %v5131 = vshrl.u32 %v5113, %v5129
        %v5132 = vor.u32 %v5130, %v5131
        %v5133 = vsub.s32 4294967266, %v5128
        %v5134 = vadd.s32 %v5133, 127
        %v5135 = vshll.u32 %v5134, 23
        %v5136 = vor.u32 4788187, %v5135
        %v5137 = vand.u32 2147483647, %v5136
        %v5139 = vcvt.s32.f32 %v5132
        %v5140 = vmul.f32 %v5139, %v5137
        %v5141 = vxor.u32 %v5140, 2147483648
        %v5142 = vsel %vm5059, %v5141, %v5140
        %v5143 = vsub.s32 4, %v5119
        %v5144 = vsel %vm5059, %v5143, %v5119
        %v5145 = vsel %vm5058, %v1571, %v5142
        %v5146 = vsel %vm5058, 0, %v5144
        %v5147 = vcosq.f32.pop %v5145
        %v5148 = vsinq.f32.pop %v5145
        %vm5149 = vweird.f32 %v1571
        %v5150 = vadd.s32 %v5146, 3
        %v5151 = vand.u32 %v5150, 3
        %vm5152 = vcmp.lt.s32.totalorder %v5151, 2
        %vm5153 = vcmp.eq.s32.totalorder %v5151, 0
        %v5154 = vxor.u32 %v5148, 2147483648
        %v5155 = vsel %vm5153, %v5147, %v5154
        %vm5156 = vcmp.eq.s32.totalorder %v5151, 2
        %v5157 = vxor.u32 %v5147, 2147483648
        %v5158 = vsel %vm5156, %v5157, %v5148
        %v5159 = vsel %vm5152, %v5155, %v5158
        %v5160 = vsel %vm5149, nan, %v5159
        %v5161 = vand.u32 2147483647, %v1574
        %vm5162 = vcmp.le.f32.partialorder %v5161, 0.7853982
        %vm5163 = vcmp.lt.s32.totalorder %v1574, 0
        %v5164 = vand.u32 %v1574, 2139095040
        %v5165 = vshrl.u32 %v5164, 23
        %v5166 = vsub.s32 %v5165, 127
        %v5167 = vand.u32 2147483647, %v1574
        %v5168 = vand.u32 %v5167, 8388607
        %v5169 = vor.u32 %v5168, 8388608
        %v5170 = vsub.s32 0, %v5169
        %v5171 = vadd.s32 %v5166, 1
        %vm5172 = vcmp.gt.s32.totalorder %v5171, 0
        %v5173 = vsel %vm5172, %v5171, 0
        %v5174 = vshrl.u32 %v5173, 5
        %v5175 = vand.u32 %v5173, 31
        %v5176 = vsub.s32 32, %v5175
        %v5177 = vshrl.u32 683565275, %v5176
        %v5178 = vshll.u32 683565275, %v5175
        %v5179 = vshrl.u32 2475754826, %v5176
        %v5180 = vor.u32 %v5178, %v5179
        %v5181 = vshll.u32 2475754826, %v5175
        %v5182 = vshrl.u32 2131351028, %v5176
        %v5183 = vor.u32 %v5181, %v5182
        %v5184 = vshll.u32 2131351028, %v5175
        %v5185 = vshrl.u32 2102212464, %v5176
        %v5186 = vor.u32 %v5184, %v5185
        %v5187 = vshll.u32 2102212464, %v5175
        %v5188 = vshrl.u32 920167782, %v5176
        %v5189 = vor.u32 %v5187, %v5188
        %v5190 = vshll.u32 920167782, %v5175
        %v5191 = vshrl.u32 1326507024, %v5176
        %v5192 = vor.u32 %v5190, %v5191
        %vm5193 = vcmp.lt.s32.totalorder %v5174, 1
        %vm5194 = vcmp.lt.s32.totalorder %v5174, 2
        %vm5195 = vcmp.lt.s32.totalorder %v5174, 3
        %vm5196 = vcmp.lt.s32.totalorder %v5174, 4
        %v5197 = vsel %vm5193, %v5177, %v5180
        %v5198 = vsel %vm5196, %v5186, 2102212464
        %v5199 = vsel %vm5195, %v5183, %v5198
        %v5200 = vsel %vm5194, %v5197, %v5199
        %v5201 = vsel %vm5193, %v5180, %v5183
        %v5202 = vsel %vm5196, %v5189, 920167782
        %v5203 = vsel %vm5195, %v5186, %v5202
        %v5204 = vsel %vm5194, %v5201, %v5203
        %v5205 = vsel %vm5193, %v5183, %v5186
        %v5206 = vsel %vm5196, %v5192, 1326507024
        %v5207 = vsel %vm5195, %v5189, %v5206
        %v5208 = vsel %vm5194, %v5205, %v5207
        %v5209 = vshll.u32 %v5169, 8
        %v5210 = vmul.u32.u64.compose %v5209, %v5208
        %v5211 = vextract.low.u32 %v5210
        %v5212 = vextract.high.u32 %v5210
        %v5213 = vmul.u32.u64.compose %v5209, %v5204
        %v5214 = vextract.low.u32 %v5213
        %v5215 = vextract.high.u32 %v5213
        %v5216 = vmul.u32 %v5209, %v5200
        %v5217 = vadd.s32 %v5212, %v5214
        %vm5218 = vc.u32 %v5212, %v5214
        %v5219 = vadd.s32 %v5215, 1
        %v5220 = vsel %vm5218, %v5219, %v5215
        %v5221 = vadd.s32 %v5216, %v5220
        %v5222 = vadd.s32 %v5221, 536870912
        %v5223 = vshrl.u32 %v5222, 30
        %v5224 = vshll.u32 %v5223, 30
        %v5225 = vsub.s32 %v5221, %v5224
        %vm5226 = vcmp.lt.s32.totalorder %v5225, 0
        %v5227 = vsub.s32 0, %v5225
        %v5228 = vsel %vm5226, %v5227, %v5225
        %v5229 = vclz %v5228
        %v5230 = vsub.s32 %v5229, 2
        %vm5231 = vcmp.gt.s32.totalorder 0, %v5230
        %v5232 = vsel %vm5231, 0, %v5230
        %v5233 = vsub.s32 32, %v5232
        %v5234 = vshll.u32 %v5225, %v5232
        %v5235 = vshrl.u32 %v5217, %v5233
        %v5236 = vor.u32 %v5234, %v5235
        %v5237 = vsub.s32 4294967266, %v5232
        %v5238 = vadd.s32 %v5237, 127
        %v5239 = vshll.u32 %v5238, 23
        %v5240 = vor.u32 4788187, %v5239
        %v5241 = vand.u32 2147483647, %v5240
        %v5243 = vcvt.s32.f32 %v5236
        %v5244 = vmul.f32 %v5243, %v5241
        %v5245 = vxor.u32 %v5244, 2147483648
        %v5246 = vsel %vm5163, %v5245, %v5244
        %v5247 = vsub.s32 4, %v5223
        %v5248 = vsel %vm5163, %v5247, %v5223
        %v5249 = vsel %vm5162, %v1574, %v5246
        %v5250 = vsel %vm5162, 0, %v5248
        %v5251 = vcosq.f32.pop %v5249
        %v5252 = vsinq.f32.pop %v5249
        %vm5253 = vweird.f32 %v1574
        %v5254 = vadd.s32 %v5250, 3
        %v5255 = vand.u32 %v5254, 3
        %vm5256 = vcmp.lt.s32.totalorder %v5255, 2
        %vm5257 = vcmp.eq.s32.totalorder %v5255, 0
        %v5258 = vxor.u32 %v5252, 2147483648
        %v5259 = vsel %vm5257, %v5251, %v5258
        %vm5260 = vcmp.eq.s32.totalorder %v5255, 2
        %v5261 = vxor.u32 %v5251, 2147483648
        %v5262 = vsel %vm5260, %v5261, %v5252
        %v5263 = vsel %vm5256, %v5259, %v5262
        %v5264 = vsel %vm5253, nan, %v5263
        %v5265 = vand.u32 2147483647, %v1579
        %vm5266 = vcmp.le.f32.partialorder %v5265, 0.7853982
        %vm5267 = vcmp.lt.s32.totalorder %v1579, 0
        %v5268 = vand.u32 %v1579, 2139095040
        %v5269 = vshrl.u32 %v5268, 23
        %v5270 = vsub.s32 %v5269, 127
        %v5271 = vand.u32 2147483647, %v1579
        %v5272 = vand.u32 %v5271, 8388607
        %v5273 = vor.u32 %v5272, 8388608
        %v5274 = vsub.s32 0, %v5273
        %v5275 = vadd.s32 %v5270, 1
        %vm5276 = vcmp.gt.s32.totalorder %v5275, 0
        %v5277 = vsel %vm5276, %v5275, 0
        %v5278 = vshrl.u32 %v5277, 5
        %v5279 = vand.u32 %v5277, 31
        %v5280 = vsub.s32 32, %v5279
        %v5281 = vshrl.u32 683565275, %v5280
        %v5282 = vshll.u32 683565275, %v5279
        %v5283 = vshrl.u32 2475754826, %v5280
        %v5284 = vor.u32 %v5282, %v5283
        %v5285 = vshll.u32 2475754826, %v5279
        %v5286 = vshrl.u32 2131351028, %v5280
        %v5287 = vor.u32 %v5285, %v5286
        %v5288 = vshll.u32 2131351028, %v5279
        %v5289 = vshrl.u32 2102212464, %v5280
        %v5290 = vor.u32 %v5288, %v5289
        %v5291 = vshll.u32 2102212464, %v5279
        %v5292 = vshrl.u32 920167782, %v5280
        %v5293 = vor.u32 %v5291, %v5292
        %v5294 = vshll.u32 920167782, %v5279
        %v5295 = vshrl.u32 1326507024, %v5280
        %v5296 = vor.u32 %v5294, %v5295
        %vm5297 = vcmp.lt.s32.totalorder %v5278, 1
        %vm5298 = vcmp.lt.s32.totalorder %v5278, 2
        %vm5299 = vcmp.lt.s32.totalorder %v5278, 3
        %vm5300 = vcmp.lt.s32.totalorder %v5278, 4
        %v5301 = vsel %vm5297, %v5281, %v5284
        %v5302 = vsel %vm5300, %v5290, 2102212464
        %v5303 = vsel %vm5299, %v5287, %v5302
        %v5304 = vsel %vm5298, %v5301, %v5303
        %v5305 = vsel %vm5297, %v5284, %v5287
        %v5306 = vsel %vm5300, %v5293, 920167782
        %v5307 = vsel %vm5299, %v5290, %v5306
        %v5308 = vsel %vm5298, %v5305, %v5307
        %v5309 = vsel %vm5297, %v5287, %v5290
        %v5310 = vsel %vm5300, %v5296, 1326507024
        %v5311 = vsel %vm5299, %v5293, %v5310
        %v5312 = vsel %vm5298, %v5309, %v5311
        %v5313 = vshll.u32 %v5273, 8
        %v5314 = vmul.u32.u64.compose %v5313, %v5312
        %v5315 = vextract.low.u32 %v5314
        %v5316 = vextract.high.u32 %v5314
        %v5317 = vmul.u32.u64.compose %v5313, %v5308
        %v5318 = vextract.low.u32 %v5317
        %v5319 = vextract.high.u32 %v5317
        %v5320 = vmul.u32 %v5313, %v5304
        %v5321 = vadd.s32 %v5316, %v5318
        %vm5322 = vc.u32 %v5316, %v5318
        %v5323 = vadd.s32 %v5319, 1
        %v5324 = vsel %vm5322, %v5323, %v5319
        %v5325 = vadd.s32 %v5320, %v5324
        %v5326 = vadd.s32 %v5325, 536870912
        %v5327 = vshrl.u32 %v5326, 30
        %v5328 = vshll.u32 %v5327, 30
        %v5329 = vsub.s32 %v5325, %v5328
        %vm5330 = vcmp.lt.s32.totalorder %v5329, 0
        %v5331 = vsub.s32 0, %v5329
        %v5332 = vsel %vm5330, %v5331, %v5329
        %v5333 = vclz %v5332
        %v5334 = vsub.s32 %v5333, 2
        %vm5335 = vcmp.gt.s32.totalorder 0, %v5334
        %v5336 = vsel %vm5335, 0, %v5334
        %v5337 = vsub.s32 32, %v5336
        %v5338 = vshll.u32 %v5329, %v5336
        %v5339 = vshrl.u32 %v5321, %v5337
        %v5340 = vor.u32 %v5338, %v5339
        %v5341 = vsub.s32 4294967266, %v5336
        %v5342 = vadd.s32 %v5341, 127
        %v5343 = vshll.u32 %v5342, 23
        %v5344 = vor.u32 4788187, %v5343
        %v5345 = vand.u32 2147483647, %v5344
        %v5347 = vcvt.s32.f32 %v5340
        %v5348 = vmul.f32 %v5347, %v5345
        %v5349 = vxor.u32 %v5348, 2147483648
        %v5350 = vsel %vm5267, %v5349, %v5348
        %v5351 = vsub.s32 4, %v5327
        %v5352 = vsel %vm5267, %v5351, %v5327
        %v5353 = vsel %vm5266, %v1579, %v5350
        %v5354 = vsel %vm5266, 0, %v5352
        %v5355 = vcosq.f32.pop %v5353
        %v5356 = vsinq.f32.pop %v5353
        %vm5357 = vweird.f32 %v1579
        %v5358 = vadd.s32 %v5354, 3
        %v5359 = vand.u32 %v5358, 3
        %vm5360 = vcmp.lt.s32.totalorder %v5359, 2
        %vm5361 = vcmp.eq.s32.totalorder %v5359, 0
        %v5362 = vxor.u32 %v5356, 2147483648
        %v5363 = vsel %vm5361, %v5355, %v5362
        %vm5364 = vcmp.eq.s32.totalorder %v5359, 2
        %v5365 = vxor.u32 %v5355, 2147483648
        %v5366 = vsel %vm5364, %v5365, %v5356
        %v5367 = vsel %vm5360, %v5363, %v5366
        %v5368 = vsel %vm5357, nan, %v5367
        %v5369 = vand.u32 2147483647, %v1582
        %vm5370 = vcmp.le.f32.partialorder %v5369, 0.7853982
        %vm5371 = vcmp.lt.s32.totalorder %v1582, 0
        %v5372 = vand.u32 %v1582, 2139095040
        %v5373 = vshrl.u32 %v5372, 23
        %v5374 = vsub.s32 %v5373, 127
        %v5375 = vand.u32 2147483647, %v1582
        %v5376 = vand.u32 %v5375, 8388607
        %v5377 = vor.u32 %v5376, 8388608
        %v5378 = vsub.s32 0, %v5377
        %v5379 = vadd.s32 %v5374, 1
        %vm5380 = vcmp.gt.s32.totalorder %v5379, 0
        %v5381 = vsel %vm5380, %v5379, 0
        %v5382 = vshrl.u32 %v5381, 5
        %v5383 = vand.u32 %v5381, 31
        %v5384 = vsub.s32 32, %v5383
        %v5385 = vshrl.u32 683565275, %v5384
        %v5386 = vshll.u32 683565275, %v5383
        %v5387 = vshrl.u32 2475754826, %v5384
        %v5388 = vor.u32 %v5386, %v5387
        %v5389 = vshll.u32 2475754826, %v5383
        %v5390 = vshrl.u32 2131351028, %v5384
        %v5391 = vor.u32 %v5389, %v5390
        %v5392 = vshll.u32 2131351028, %v5383
        %v5393 = vshrl.u32 2102212464, %v5384
        %v5394 = vor.u32 %v5392, %v5393
        %v5395 = vshll.u32 2102212464, %v5383
        %v5396 = vshrl.u32 920167782, %v5384
        %v5397 = vor.u32 %v5395, %v5396
        %v5398 = vshll.u32 920167782, %v5383
        %v5399 = vshrl.u32 1326507024, %v5384
        %v5400 = vor.u32 %v5398, %v5399
        %vm5401 = vcmp.lt.s32.totalorder %v5382, 1
        %vm5402 = vcmp.lt.s32.totalorder %v5382, 2
        %vm5403 = vcmp.lt.s32.totalorder %v5382, 3
        %vm5404 = vcmp.lt.s32.totalorder %v5382, 4
        %v5405 = vsel %vm5401, %v5385, %v5388
        %v5406 = vsel %vm5404, %v5394, 2102212464
        %v5407 = vsel %vm5403, %v5391, %v5406
        %v5408 = vsel %vm5402, %v5405, %v5407
        %v5409 = vsel %vm5401, %v5388, %v5391
        %v5410 = vsel %vm5404, %v5397, 920167782
        %v5411 = vsel %vm5403, %v5394, %v5410
        %v5412 = vsel %vm5402, %v5409, %v5411
        %v5413 = vsel %vm5401, %v5391, %v5394
        %v5414 = vsel %vm5404, %v5400, 1326507024
        %v5415 = vsel %vm5403, %v5397, %v5414
        %v5416 = vsel %vm5402, %v5413, %v5415
        %v5417 = vshll.u32 %v5377, 8
        %v5418 = vmul.u32.u64.compose %v5417, %v5416
        %v5419 = vextract.low.u32 %v5418
        %v5420 = vextract.high.u32 %v5418
        %v5421 = vmul.u32.u64.compose %v5417, %v5412
        %v5422 = vextract.low.u32 %v5421
        %v5423 = vextract.high.u32 %v5421
        %v5424 = vmul.u32 %v5417, %v5408
        %v5425 = vadd.s32 %v5420, %v5422
        %vm5426 = vc.u32 %v5420, %v5422
        %v5427 = vadd.s32 %v5423, 1
        %v5428 = vsel %vm5426, %v5427, %v5423
        %v5429 = vadd.s32 %v5424, %v5428
        %v5430 = vadd.s32 %v5429, 536870912
        %v5431 = vshrl.u32 %v5430, 30
        %v5432 = vshll.u32 %v5431, 30
        %v5433 = vsub.s32 %v5429, %v5432
        %vm5434 = vcmp.lt.s32.totalorder %v5433, 0
        %v5435 = vsub.s32 0, %v5433
        %v5436 = vsel %vm5434, %v5435, %v5433
        %v5437 = vclz %v5436
        %v5438 = vsub.s32 %v5437, 2
        %vm5439 = vcmp.gt.s32.totalorder 0, %v5438
        %v5440 = vsel %vm5439, 0, %v5438
        %v5441 = vsub.s32 32, %v5440
        %v5442 = vshll.u32 %v5433, %v5440
        %v5443 = vshrl.u32 %v5425, %v5441
        %v5444 = vor.u32 %v5442, %v5443
        %v5445 = vsub.s32 4294967266, %v5440
        %v5446 = vadd.s32 %v5445, 127
        %v5447 = vshll.u32 %v5446, 23
        %v5448 = vor.u32 4788187, %v5447
        %v5449 = vand.u32 2147483647, %v5448
        %v5451 = vcvt.s32.f32 %v5444
        %v5452 = vmul.f32 %v5451, %v5449
        %v5453 = vxor.u32 %v5452, 2147483648
        %v5454 = vsel %vm5371, %v5453, %v5452
        %v5455 = vsub.s32 4, %v5431
        %v5456 = vsel %vm5371, %v5455, %v5431
        %v5457 = vsel %vm5370, %v1582, %v5454
        %v5458 = vsel %vm5370, 0, %v5456
        %v5459 = vcosq.f32.pop %v5457
        %v5460 = vsinq.f32.pop %v5457
        %vm5461 = vweird.f32 %v1582
        %v5462 = vadd.s32 %v5458, 3
        %v5463 = vand.u32 %v5462, 3
        %vm5464 = vcmp.lt.s32.totalorder %v5463, 2
        %vm5465 = vcmp.eq.s32.totalorder %v5463, 0
        %v5466 = vxor.u32 %v5460, 2147483648
        %v5467 = vsel %vm5465, %v5459, %v5466
        %vm5468 = vcmp.eq.s32.totalorder %v5463, 2
        %v5469 = vxor.u32 %v5459, 2147483648
        %v5470 = vsel %vm5468, %v5469, %v5460
        %v5471 = vsel %vm5464, %v5467, %v5470
        %v5472 = vsel %vm5461, nan, %v5471
        %v5473 = vand.u32 2147483647, %v1587
        %vm5474 = vcmp.le.f32.partialorder %v5473, 0.7853982
        %vm5475 = vcmp.lt.s32.totalorder %v1587, 0
        %v5476 = vand.u32 %v1587, 2139095040
        %v5477 = vshrl.u32 %v5476, 23
        %v5478 = vsub.s32 %v5477, 127
        %v5479 = vand.u32 2147483647, %v1587
        %v5480 = vand.u32 %v5479, 8388607
        %v5481 = vor.u32 %v5480, 8388608
        %v5482 = vsub.s32 0, %v5481
        %v5483 = vadd.s32 %v5478, 1
        %vm5484 = vcmp.gt.s32.totalorder %v5483, 0
        %v5485 = vsel %vm5484, %v5483, 0
        %v5486 = vshrl.u32 %v5485, 5
        %v5487 = vand.u32 %v5485, 31
        %v5488 = vsub.s32 32, %v5487
        %v5489 = vshrl.u32 683565275, %v5488
        %v5490 = vshll.u32 683565275, %v5487
        %v5491 = vshrl.u32 2475754826, %v5488
        %v5492 = vor.u32 %v5490, %v5491
        %v5493 = vshll.u32 2475754826, %v5487
        %v5494 = vshrl.u32 2131351028, %v5488
        %v5495 = vor.u32 %v5493, %v5494
        %v5496 = vshll.u32 2131351028, %v5487
        %v5497 = vshrl.u32 2102212464, %v5488
        %v5498 = vor.u32 %v5496, %v5497
        %v5499 = vshll.u32 2102212464, %v5487
        %v5500 = vshrl.u32 920167782, %v5488
        %v5501 = vor.u32 %v5499, %v5500
        %v5502 = vshll.u32 920167782, %v5487
        %v5503 = vshrl.u32 1326507024, %v5488
        %v5504 = vor.u32 %v5502, %v5503
        %vm5505 = vcmp.lt.s32.totalorder %v5486, 1
        %vm5506 = vcmp.lt.s32.totalorder %v5486, 2
        %vm5507 = vcmp.lt.s32.totalorder %v5486, 3
        %vm5508 = vcmp.lt.s32.totalorder %v5486, 4
        %v5509 = vsel %vm5505, %v5489, %v5492
        %v5510 = vsel %vm5508, %v5498, 2102212464
        %v5511 = vsel %vm5507, %v5495, %v5510
        %v5512 = vsel %vm5506, %v5509, %v5511
        %v5513 = vsel %vm5505, %v5492, %v5495
        %v5514 = vsel %vm5508, %v5501, 920167782
        %v5515 = vsel %vm5507, %v5498, %v5514
        %v5516 = vsel %vm5506, %v5513, %v5515
        %v5517 = vsel %vm5505, %v5495, %v5498
        %v5518 = vsel %vm5508, %v5504, 1326507024
        %v5519 = vsel %vm5507, %v5501, %v5518
        %v5520 = vsel %vm5506, %v5517, %v5519
        %v5521 = vshll.u32 %v5481, 8
        %v5522 = vmul.u32.u64.compose %v5521, %v5520
        %v5523 = vextract.low.u32 %v5522
        %v5524 = vextract.high.u32 %v5522
        %v5525 = vmul.u32.u64.compose %v5521, %v5516
        %v5526 = vextract.low.u32 %v5525
        %v5527 = vextract.high.u32 %v5525
        %v5528 = vmul.u32 %v5521, %v5512
        %v5529 = vadd.s32 %v5524, %v5526
        %vm5530 = vc.u32 %v5524, %v5526
        %v5531 = vadd.s32 %v5527, 1
        %v5532 = vsel %vm5530, %v5531, %v5527
        %v5533 = vadd.s32 %v5528, %v5532
        %v5534 = vadd.s32 %v5533, 536870912
        %v5535 = vshrl.u32 %v5534, 30
        %v5536 = vshll.u32 %v5535, 30
        %v5537 = vsub.s32 %v5533, %v5536
        %vm5538 = vcmp.lt.s32.totalorder %v5537, 0
        %v5539 = vsub.s32 0, %v5537
        %v5540 = vsel %vm5538, %v5539, %v5537
        %v5541 = vclz %v5540
        %v5542 = vsub.s32 %v5541, 2
        %vm5543 = vcmp.gt.s32.totalorder 0, %v5542
        %v5544 = vsel %vm5543, 0, %v5542
        %v5545 = vsub.s32 32, %v5544
        %v5546 = vshll.u32 %v5537, %v5544
        %v5547 = vshrl.u32 %v5529, %v5545
        %v5548 = vor.u32 %v5546, %v5547
        %v5549 = vsub.s32 4294967266, %v5544
        %v5550 = vadd.s32 %v5549, 127
        %v5551 = vshll.u32 %v5550, 23
        %v5552 = vor.u32 4788187, %v5551
        %v5553 = vand.u32 2147483647, %v5552
        %v5555 = vcvt.s32.f32 %v5548
        %v5556 = vmul.f32 %v5555, %v5553
        %v5557 = vxor.u32 %v5556, 2147483648
        %v5558 = vsel %vm5475, %v5557, %v5556
        %v5559 = vsub.s32 4, %v5535
        %v5560 = vsel %vm5475, %v5559, %v5535
        %v5561 = vsel %vm5474, %v1587, %v5558
        %v5562 = vsel %vm5474, 0, %v5560
        %v5563 = vcosq.f32.pop %v5561
        %v5564 = vsinq.f32.pop %v5561
        %vm5565 = vweird.f32 %v1587
        %v5566 = vadd.s32 %v5562, 3
        %v5567 = vand.u32 %v5566, 3
        %vm5568 = vcmp.lt.s32.totalorder %v5567, 2
        %vm5569 = vcmp.eq.s32.totalorder %v5567, 0
        %v5570 = vxor.u32 %v5564, 2147483648
        %v5571 = vsel %vm5569, %v5563, %v5570
        %vm5572 = vcmp.eq.s32.totalorder %v5567, 2
        %v5573 = vxor.u32 %v5563, 2147483648
        %v5574 = vsel %vm5572, %v5573, %v5564
        %v5575 = vsel %vm5568, %v5571, %v5574
        %v5576 = vsel %vm5565, nan, %v5575
        %v5577 = vand.u32 2147483647, %v1590
        %vm5578 = vcmp.le.f32.partialorder %v5577, 0.7853982
        %vm5579 = vcmp.lt.s32.totalorder %v1590, 0
        %v5580 = vand.u32 %v1590, 2139095040
        %v5581 = vshrl.u32 %v5580, 23
        %v5582 = vsub.s32 %v5581, 127
        %v5583 = vand.u32 2147483647, %v1590
        %v5584 = vand.u32 %v5583, 8388607
        %v5585 = vor.u32 %v5584, 8388608
        %v5586 = vsub.s32 0, %v5585
        %v5587 = vadd.s32 %v5582, 1
        %vm5588 = vcmp.gt.s32.totalorder %v5587, 0
        %v5589 = vsel %vm5588, %v5587, 0
        %v5590 = vshrl.u32 %v5589, 5
        %v5591 = vand.u32 %v5589, 31
        %v5592 = vsub.s32 32, %v5591
        %v5593 = vshrl.u32 683565275, %v5592
        %v5594 = vshll.u32 683565275, %v5591
        %v5595 = vshrl.u32 2475754826, %v5592
        %v5596 = vor.u32 %v5594, %v5595
        %v5597 = vshll.u32 2475754826, %v5591
        %v5598 = vshrl.u32 2131351028, %v5592
        %v5599 = vor.u32 %v5597, %v5598
        %v5600 = vshll.u32 2131351028, %v5591
        %v5601 = vshrl.u32 2102212464, %v5592
        %v5602 = vor.u32 %v5600, %v5601
        %v5603 = vshll.u32 2102212464, %v5591
        %v5604 = vshrl.u32 920167782, %v5592
        %v5605 = vor.u32 %v5603, %v5604
        %v5606 = vshll.u32 920167782, %v5591
        %v5607 = vshrl.u32 1326507024, %v5592
        %v5608 = vor.u32 %v5606, %v5607
        %vm5609 = vcmp.lt.s32.totalorder %v5590, 1
        %vm5610 = vcmp.lt.s32.totalorder %v5590, 2
        %vm5611 = vcmp.lt.s32.totalorder %v5590, 3
        %vm5612 = vcmp.lt.s32.totalorder %v5590, 4
        %v5613 = vsel %vm5609, %v5593, %v5596
        %v5614 = vsel %vm5612, %v5602, 2102212464
        %v5615 = vsel %vm5611, %v5599, %v5614
        %v5616 = vsel %vm5610, %v5613, %v5615
        %v5617 = vsel %vm5609, %v5596, %v5599
        %v5618 = vsel %vm5612, %v5605, 920167782
        %v5619 = vsel %vm5611, %v5602, %v5618
        %v5620 = vsel %vm5610, %v5617, %v5619
        %v5621 = vsel %vm5609, %v5599, %v5602
        %v5622 = vsel %vm5612, %v5608, 1326507024
        %v5623 = vsel %vm5611, %v5605, %v5622
        %v5624 = vsel %vm5610, %v5621, %v5623
        %v5625 = vshll.u32 %v5585, 8
        %v5626 = vmul.u32.u64.compose %v5625, %v5624
        %v5627 = vextract.low.u32 %v5626
        %v5628 = vextract.high.u32 %v5626
        %v5629 = vmul.u32.u64.compose %v5625, %v5620
        %v5630 = vextract.low.u32 %v5629
        %v5631 = vextract.high.u32 %v5629
        %v5632 = vmul.u32 %v5625, %v5616
        %v5633 = vadd.s32 %v5628, %v5630
        %vm5634 = vc.u32 %v5628, %v5630
        %v5635 = vadd.s32 %v5631, 1
        %v5636 = vsel %vm5634, %v5635, %v5631
        %v5637 = vadd.s32 %v5632, %v5636
        %v5638 = vadd.s32 %v5637, 536870912
        %v5639 = vshrl.u32 %v5638, 30
        %v5640 = vshll.u32 %v5639, 30
        %v5641 = vsub.s32 %v5637, %v5640
        %vm5642 = vcmp.lt.s32.totalorder %v5641, 0
        %v5643 = vsub.s32 0, %v5641
        %v5644 = vsel %vm5642, %v5643, %v5641
        %v5645 = vclz %v5644
        %v5646 = vsub.s32 %v5645, 2
        %vm5647 = vcmp.gt.s32.totalorder 0, %v5646
        %v5648 = vsel %vm5647, 0, %v5646
        %v5649 = vsub.s32 32, %v5648
        %v5650 = vshll.u32 %v5641, %v5648
        %v5651 = vshrl.u32 %v5633, %v5649
        %v5652 = vor.u32 %v5650, %v5651
        %v5653 = vsub.s32 4294967266, %v5648
        %v5654 = vadd.s32 %v5653, 127
        %v5655 = vshll.u32 %v5654, 23
        %v5656 = vor.u32 4788187, %v5655
        %v5657 = vand.u32 2147483647, %v5656
        %v5659 = vcvt.s32.f32 %v5652
        %v5660 = vmul.f32 %v5659, %v5657
        %v5661 = vxor.u32 %v5660, 2147483648
        %v5662 = vsel %vm5579, %v5661, %v5660
        %v5663 = vsub.s32 4, %v5639
        %v5664 = vsel %vm5579, %v5663, %v5639
        %v5665 = vsel %vm5578, %v1590, %v5662
        %v5666 = vsel %vm5578, 0, %v5664
        %v5667 = vcosq.f32.pop %v5665
        %v5668 = vsinq.f32.pop %v5665
        %vm5669 = vweird.f32 %v1590
        %v5670 = vadd.s32 %v5666, 3
        %v5671 = vand.u32 %v5670, 3
        %vm5672 = vcmp.lt.s32.totalorder %v5671, 2
        %vm5673 = vcmp.eq.s32.totalorder %v5671, 0
        %v5674 = vxor.u32 %v5668, 2147483648
        %v5675 = vsel %vm5673, %v5667, %v5674
        %vm5676 = vcmp.eq.s32.totalorder %v5671, 2
        %v5677 = vxor.u32 %v5667, 2147483648
        %v5678 = vsel %vm5676, %v5677, %v5668
        %v5679 = vsel %vm5672, %v5675, %v5678
        %v5680 = vsel %vm5669, nan, %v5679
        %v5681 = vand.u32 2147483647, %v1595
        %vm5682 = vcmp.le.f32.partialorder %v5681, 0.7853982
        %vm5683 = vcmp.lt.s32.totalorder %v1595, 0
        %v5684 = vand.u32 %v1595, 2139095040
        %v5685 = vshrl.u32 %v5684, 23
        %v5686 = vsub.s32 %v5685, 127
        %v5687 = vand.u32 2147483647, %v1595
        %v5688 = vand.u32 %v5687, 8388607
        %v5689 = vor.u32 %v5688, 8388608
        %v5690 = vsub.s32 0, %v5689
        %v5691 = vadd.s32 %v5686, 1
        %vm5692 = vcmp.gt.s32.totalorder %v5691, 0
        %v5693 = vsel %vm5692, %v5691, 0
        %v5694 = vshrl.u32 %v5693, 5
        %v5695 = vand.u32 %v5693, 31
        %v5696 = vsub.s32 32, %v5695
        %v5697 = vshrl.u32 683565275, %v5696
        %v5698 = vshll.u32 683565275, %v5695
        %v5699 = vshrl.u32 2475754826, %v5696
        %v5700 = vor.u32 %v5698, %v5699
        %v5701 = vshll.u32 2475754826, %v5695
        %v5702 = vshrl.u32 2131351028, %v5696
        %v5703 = vor.u32 %v5701, %v5702
        %v5704 = vshll.u32 2131351028, %v5695
        %v5705 = vshrl.u32 2102212464, %v5696
        %v5706 = vor.u32 %v5704, %v5705
        %v5707 = vshll.u32 2102212464, %v5695
        %v5708 = vshrl.u32 920167782, %v5696
        %v5709 = vor.u32 %v5707, %v5708
        %v5710 = vshll.u32 920167782, %v5695
        %v5711 = vshrl.u32 1326507024, %v5696
        %v5712 = vor.u32 %v5710, %v5711
        %vm5713 = vcmp.lt.s32.totalorder %v5694, 1
        %vm5714 = vcmp.lt.s32.totalorder %v5694, 2
        %vm5715 = vcmp.lt.s32.totalorder %v5694, 3
        %vm5716 = vcmp.lt.s32.totalorder %v5694, 4
        %v5717 = vsel %vm5713, %v5697, %v5700
        %v5718 = vsel %vm5716, %v5706, 2102212464
        %v5719 = vsel %vm5715, %v5703, %v5718
        %v5720 = vsel %vm5714, %v5717, %v5719
        %v5721 = vsel %vm5713, %v5700, %v5703
        %v5722 = vsel %vm5716, %v5709, 920167782
        %v5723 = vsel %vm5715, %v5706, %v5722
        %v5724 = vsel %vm5714, %v5721, %v5723
        %v5725 = vsel %vm5713, %v5703, %v5706
        %v5726 = vsel %vm5716, %v5712, 1326507024
        %v5727 = vsel %vm5715, %v5709, %v5726
        %v5728 = vsel %vm5714, %v5725, %v5727
        %v5729 = vshll.u32 %v5689, 8
        %v5730 = vmul.u32.u64.compose %v5729, %v5728
        %v5731 = vextract.low.u32 %v5730
        %v5732 = vextract.high.u32 %v5730
        %v5733 = vmul.u32.u64.compose %v5729, %v5724
        %v5734 = vextract.low.u32 %v5733
        %v5735 = vextract.high.u32 %v5733
        %v5736 = vmul.u32 %v5729, %v5720
        %v5737 = vadd.s32 %v5732, %v5734
        %vm5738 = vc.u32 %v5732, %v5734
        %v5739 = vadd.s32 %v5735, 1
        %v5740 = vsel %vm5738, %v5739, %v5735
        %v5741 = vadd.s32 %v5736, %v5740
        %v5742 = vadd.s32 %v5741, 536870912
        %v5743 = vshrl.u32 %v5742, 30
        %v5744 = vshll.u32 %v5743, 30
        %v5745 = vsub.s32 %v5741, %v5744
        %vm5746 = vcmp.lt.s32.totalorder %v5745, 0
        %v5747 = vsub.s32 0, %v5745
        %v5748 = vsel %vm5746, %v5747, %v5745
        %v5749 = vclz %v5748
        %v5750 = vsub.s32 %v5749, 2
        %vm5751 = vcmp.gt.s32.totalorder 0, %v5750
        %v5752 = vsel %vm5751, 0, %v5750
        %v5753 = vsub.s32 32, %v5752
        %v5754 = vshll.u32 %v5745, %v5752
        %v5755 = vshrl.u32 %v5737, %v5753
        %v5756 = vor.u32 %v5754, %v5755
        %v5757 = vsub.s32 4294967266, %v5752
        %v5758 = vadd.s32 %v5757, 127
        %v5759 = vshll.u32 %v5758, 23
        %v5760 = vor.u32 4788187, %v5759
        %v5761 = vand.u32 2147483647, %v5760
        %v5763 = vcvt.s32.f32 %v5756
        %v5764 = vmul.f32 %v5763, %v5761
        %v5765 = vxor.u32 %v5764, 2147483648
        %v5766 = vsel %vm5683, %v5765, %v5764
        %v5767 = vsub.s32 4, %v5743
        %v5768 = vsel %vm5683, %v5767, %v5743
        %v5769 = vsel %vm5682, %v1595, %v5766
        %v5770 = vsel %vm5682, 0, %v5768
        %v5771 = vcosq.f32.pop %v5769
        %v5772 = vsinq.f32.pop %v5769
        %vm5773 = vweird.f32 %v1595
        %v5774 = vadd.s32 %v5770, 3
        %v5775 = vand.u32 %v5774, 3
        %vm5776 = vcmp.lt.s32.totalorder %v5775, 2
        %vm5777 = vcmp.eq.s32.totalorder %v5775, 0
        %v5778 = vxor.u32 %v5772, 2147483648
        %v5779 = vsel %vm5777, %v5771, %v5778
        %vm5780 = vcmp.eq.s32.totalorder %v5775, 2
        %v5781 = vxor.u32 %v5771, 2147483648
        %v5782 = vsel %vm5780, %v5781, %v5772
        %v5783 = vsel %vm5776, %v5779, %v5782
        %v5784 = vsel %vm5773, nan, %v5783
        %v5785 = vand.u32 2147483647, %v1598
        %vm5786 = vcmp.le.f32.partialorder %v5785, 0.7853982
        %vm5787 = vcmp.lt.s32.totalorder %v1598, 0
        %v5788 = vand.u32 %v1598, 2139095040
        %v5789 = vshrl.u32 %v5788, 23
        %v5790 = vsub.s32 %v5789, 127
        %v5791 = vand.u32 2147483647, %v1598
        %v5792 = vand.u32 %v5791, 8388607
        %v5793 = vor.u32 %v5792, 8388608
        %v5794 = vsub.s32 0, %v5793
        %v5795 = vadd.s32 %v5790, 1
        %vm5796 = vcmp.gt.s32.totalorder %v5795, 0
        %v5797 = vsel %vm5796, %v5795, 0
        %v5798 = vshrl.u32 %v5797, 5
        %v5799 = vand.u32 %v5797, 31
        %v5800 = vsub.s32 32, %v5799
        %v5801 = vshrl.u32 683565275, %v5800
        %v5802 = vshll.u32 683565275, %v5799
        %v5803 = vshrl.u32 2475754826, %v5800
        %v5804 = vor.u32 %v5802, %v5803
        %v5805 = vshll.u32 2475754826, %v5799
        %v5806 = vshrl.u32 2131351028, %v5800
        %v5807 = vor.u32 %v5805, %v5806
        %v5808 = vshll.u32 2131351028, %v5799
        %v5809 = vshrl.u32 2102212464, %v5800
        %v5810 = vor.u32 %v5808, %v5809
        %v5811 = vshll.u32 2102212464, %v5799
        %v5812 = vshrl.u32 920167782, %v5800
        %v5813 = vor.u32 %v5811, %v5812
        %v5814 = vshll.u32 920167782, %v5799
        %v5815 = vshrl.u32 1326507024, %v5800
        %v5816 = vor.u32 %v5814, %v5815
        %vm5817 = vcmp.lt.s32.totalorder %v5798, 1
        %vm5818 = vcmp.lt.s32.totalorder %v5798, 2
        %vm5819 = vcmp.lt.s32.totalorder %v5798, 3
        %vm5820 = vcmp.lt.s32.totalorder %v5798, 4
        %v5821 = vsel %vm5817, %v5801, %v5804
        %v5822 = vsel %vm5820, %v5810, 2102212464
        %v5823 = vsel %vm5819, %v5807, %v5822
        %v5824 = vsel %vm5818, %v5821, %v5823
        %v5825 = vsel %vm5817, %v5804, %v5807
        %v5826 = vsel %vm5820, %v5813, 920167782
        %v5827 = vsel %vm5819, %v5810, %v5826
        %v5828 = vsel %vm5818, %v5825, %v5827
        %v5829 = vsel %vm5817, %v5807, %v5810
        %v5830 = vsel %vm5820, %v5816, 1326507024
        %v5831 = vsel %vm5819, %v5813, %v5830
        %v5832 = vsel %vm5818, %v5829, %v5831
        %v5833 = vshll.u32 %v5793, 8
        %v5834 = vmul.u32.u64.compose %v5833, %v5832
        %v5835 = vextract.low.u32 %v5834
        %v5836 = vextract.high.u32 %v5834
        %v5837 = vmul.u32.u64.compose %v5833, %v5828
        %v5838 = vextract.low.u32 %v5837
        %v5839 = vextract.high.u32 %v5837
        %v5840 = vmul.u32 %v5833, %v5824
        %v5841 = vadd.s32 %v5836, %v5838
        %vm5842 = vc.u32 %v5836, %v5838
        %v5843 = vadd.s32 %v5839, 1
        %v5844 = vsel %vm5842, %v5843, %v5839
        %v5845 = vadd.s32 %v5840, %v5844
        %v5846 = vadd.s32 %v5845, 536870912
        %v5847 = vshrl.u32 %v5846, 30
        %v5848 = vshll.u32 %v5847, 30
        %v5849 = vsub.s32 %v5845, %v5848
        %vm5850 = vcmp.lt.s32.totalorder %v5849, 0
        %v5851 = vsub.s32 0, %v5849
        %v5852 = vsel %vm5850, %v5851, %v5849
        %v5853 = vclz %v5852
        %v5854 = vsub.s32 %v5853, 2
        %vm5855 = vcmp.gt.s32.totalorder 0, %v5854
        %v5856 = vsel %vm5855, 0, %v5854
        %v5857 = vsub.s32 32, %v5856
        %v5858 = vshll.u32 %v5849, %v5856
        %v5859 = vshrl.u32 %v5841, %v5857
        %v5860 = vor.u32 %v5858, %v5859
        %v5861 = vsub.s32 4294967266, %v5856
        %v5862 = vadd.s32 %v5861, 127
        %v5863 = vshll.u32 %v5862, 23
        %v5864 = vor.u32 4788187, %v5863
        %v5865 = vand.u32 2147483647, %v5864
        %v5867 = vcvt.s32.f32 %v5860
        %v5868 = vmul.f32 %v5867, %v5865
        %v5869 = vxor.u32 %v5868, 2147483648
        %v5870 = vsel %vm5787, %v5869, %v5868
        %v5871 = vsub.s32 4, %v5847
        %v5872 = vsel %vm5787, %v5871, %v5847
        %v5873 = vsel %vm5786, %v1598, %v5870
        %v5874 = vsel %vm5786, 0, %v5872
        %v5875 = vcosq.f32.pop %v5873
        %v5876 = vsinq.f32.pop %v5873
        %vm5877 = vweird.f32 %v1598
        %v5878 = vadd.s32 %v5874, 3
        %v5879 = vand.u32 %v5878, 3
        %vm5880 = vcmp.lt.s32.totalorder %v5879, 2
        %vm5881 = vcmp.eq.s32.totalorder %v5879, 0
        %v5882 = vxor.u32 %v5876, 2147483648
        %v5883 = vsel %vm5881, %v5875, %v5882
        %vm5884 = vcmp.eq.s32.totalorder %v5879, 2
        %v5885 = vxor.u32 %v5875, 2147483648
        %v5886 = vsel %vm5884, %v5885, %v5876
        %v5887 = vsel %vm5880, %v5883, %v5886
        %v5888 = vsel %vm5877, nan, %v5887
        %v5889 = vand.u32 2147483647, %v1603
        %vm5890 = vcmp.le.f32.partialorder %v5889, 0.7853982
        %vm5891 = vcmp.lt.s32.totalorder %v1603, 0
        %v5892 = vand.u32 %v1603, 2139095040
        %v5893 = vshrl.u32 %v5892, 23
        %v5894 = vsub.s32 %v5893, 127
        %v5895 = vand.u32 2147483647, %v1603
        %v5896 = vand.u32 %v5895, 8388607
        %v5897 = vor.u32 %v5896, 8388608
        %v5898 = vsub.s32 0, %v5897
        %v5899 = vadd.s32 %v5894, 1
        %vm5900 = vcmp.gt.s32.totalorder %v5899, 0
        %v5901 = vsel %vm5900, %v5899, 0
        %v5902 = vshrl.u32 %v5901, 5
        %v5903 = vand.u32 %v5901, 31
        %v5904 = vsub.s32 32, %v5903
        %v5905 = vshrl.u32 683565275, %v5904
        %v5906 = vshll.u32 683565275, %v5903
        %v5907 = vshrl.u32 2475754826, %v5904
        %v5908 = vor.u32 %v5906, %v5907
        %v5909 = vshll.u32 2475754826, %v5903
        %v5910 = vshrl.u32 2131351028, %v5904
        %v5911 = vor.u32 %v5909, %v5910
        %v5912 = vshll.u32 2131351028, %v5903
        %v5913 = vshrl.u32 2102212464, %v5904
        %v5914 = vor.u32 %v5912, %v5913
        %v5915 = vshll.u32 2102212464, %v5903
        %v5916 = vshrl.u32 920167782, %v5904
        %v5917 = vor.u32 %v5915, %v5916
        %v5918 = vshll.u32 920167782, %v5903
        %v5919 = vshrl.u32 1326507024, %v5904
        %v5920 = vor.u32 %v5918, %v5919
        %vm5921 = vcmp.lt.s32.totalorder %v5902, 1
        %vm5922 = vcmp.lt.s32.totalorder %v5902, 2
        %vm5923 = vcmp.lt.s32.totalorder %v5902, 3
        %vm5924 = vcmp.lt.s32.totalorder %v5902, 4
        %v5925 = vsel %vm5921, %v5905, %v5908
        %v5926 = vsel %vm5924, %v5914, 2102212464
        %v5927 = vsel %vm5923, %v5911, %v5926
        %v5928 = vsel %vm5922, %v5925, %v5927
        %v5929 = vsel %vm5921, %v5908, %v5911
        %v5930 = vsel %vm5924, %v5917, 920167782
        %v5931 = vsel %vm5923, %v5914, %v5930
        %v5932 = vsel %vm5922, %v5929, %v5931
        %v5933 = vsel %vm5921, %v5911, %v5914
        %v5934 = vsel %vm5924, %v5920, 1326507024
        %v5935 = vsel %vm5923, %v5917, %v5934
        %v5936 = vsel %vm5922, %v5933, %v5935
        %v5937 = vshll.u32 %v5897, 8
        %v5938 = vmul.u32.u64.compose %v5937, %v5936
        %v5939 = vextract.low.u32 %v5938
        %v5940 = vextract.high.u32 %v5938
        %v5941 = vmul.u32.u64.compose %v5937, %v5932
        %v5942 = vextract.low.u32 %v5941
        %v5943 = vextract.high.u32 %v5941
        %v5944 = vmul.u32 %v5937, %v5928
        %v5945 = vadd.s32 %v5940, %v5942
        %vm5946 = vc.u32 %v5940, %v5942
        %v5947 = vadd.s32 %v5943, 1
        %v5948 = vsel %vm5946, %v5947, %v5943
        %v5949 = vadd.s32 %v5944, %v5948
        %v5950 = vadd.s32 %v5949, 536870912
        %v5951 = vshrl.u32 %v5950, 30
        %v5952 = vshll.u32 %v5951, 30
        %v5953 = vsub.s32 %v5949, %v5952
        %vm5954 = vcmp.lt.s32.totalorder %v5953, 0
        %v5955 = vsub.s32 0, %v5953
        %v5956 = vsel %vm5954, %v5955, %v5953
        %v5957 = vclz %v5956
        %v5958 = vsub.s32 %v5957, 2
        %vm5959 = vcmp.gt.s32.totalorder 0, %v5958
        %v5960 = vsel %vm5959, 0, %v5958
        %v5961 = vsub.s32 32, %v5960
        %v5962 = vshll.u32 %v5953, %v5960
        %v5963 = vshrl.u32 %v5945, %v5961
        %v5964 = vor.u32 %v5962, %v5963
        %v5965 = vsub.s32 4294967266, %v5960
        %v5966 = vadd.s32 %v5965, 127
        %v5967 = vshll.u32 %v5966, 23
        %v5968 = vor.u32 4788187, %v5967
        %v5969 = vand.u32 2147483647, %v5968
        %v5971 = vcvt.s32.f32 %v5964
        %v5972 = vmul.f32 %v5971, %v5969
        %v5973 = vxor.u32 %v5972, 2147483648
        %v5974 = vsel %vm5891, %v5973, %v5972
        %v5975 = vsub.s32 4, %v5951
        %v5976 = vsel %vm5891, %v5975, %v5951
        %v5977 = vsel %vm5890, %v1603, %v5974
        %v5978 = vsel %vm5890, 0, %v5976
        %v5979 = vcosq.f32.pop %v5977
        %v5980 = vsinq.f32.pop %v5977
        %vm5981 = vweird.f32 %v1603
        %v5982 = vadd.s32 %v5978, 3
        %v5983 = vand.u32 %v5982, 3
        %vm5984 = vcmp.lt.s32.totalorder %v5983, 2
        %vm5985 = vcmp.eq.s32.totalorder %v5983, 0
        %v5986 = vxor.u32 %v5980, 2147483648
        %v5987 = vsel %vm5985, %v5979, %v5986
        %vm5988 = vcmp.eq.s32.totalorder %v5983, 2
        %v5989 = vxor.u32 %v5979, 2147483648
        %v5990 = vsel %vm5988, %v5989, %v5980
        %v5991 = vsel %vm5984, %v5987, %v5990
        %v5992 = vsel %vm5981, nan, %v5991
        %v5993 = vand.u32 2147483647, %v1606
        %vm5994 = vcmp.le.f32.partialorder %v5993, 0.7853982
        %vm5995 = vcmp.lt.s32.totalorder %v1606, 0
        %v5996 = vand.u32 %v1606, 2139095040
        %v5997 = vshrl.u32 %v5996, 23
        %v5998 = vsub.s32 %v5997, 127
        %v5999 = vand.u32 2147483647, %v1606
        %v6000 = vand.u32 %v5999, 8388607
        %v6001 = vor.u32 %v6000, 8388608
        %v6002 = vsub.s32 0, %v6001
        %v6003 = vadd.s32 %v5998, 1
        %vm6004 = vcmp.gt.s32.totalorder %v6003, 0
        %v6005 = vsel %vm6004, %v6003, 0
        %v6006 = vshrl.u32 %v6005, 5
        %v6007 = vand.u32 %v6005, 31
        %v6008 = vsub.s32 32, %v6007
        %v6009 = vshrl.u32 683565275, %v6008
        %v6010 = vshll.u32 683565275, %v6007
        %v6011 = vshrl.u32 2475754826, %v6008
        %v6012 = vor.u32 %v6010, %v6011
        %v6013 = vshll.u32 2475754826, %v6007
        %v6014 = vshrl.u32 2131351028, %v6008
        %v6015 = vor.u32 %v6013, %v6014
        %v6016 = vshll.u32 2131351028, %v6007
        %v6017 = vshrl.u32 2102212464, %v6008
        %v6018 = vor.u32 %v6016, %v6017
        %v6019 = vshll.u32 2102212464, %v6007
        %v6020 = vshrl.u32 920167782, %v6008
        %v6021 = vor.u32 %v6019, %v6020
        %v6022 = vshll.u32 920167782, %v6007
        %v6023 = vshrl.u32 1326507024, %v6008
        %v6024 = vor.u32 %v6022, %v6023
        %vm6025 = vcmp.lt.s32.totalorder %v6006, 1
        %vm6026 = vcmp.lt.s32.totalorder %v6006, 2
        %vm6027 = vcmp.lt.s32.totalorder %v6006, 3
        %vm6028 = vcmp.lt.s32.totalorder %v6006, 4
        %v6029 = vsel %vm6025, %v6009, %v6012
        %v6030 = vsel %vm6028, %v6018, 2102212464
        %v6031 = vsel %vm6027, %v6015, %v6030
        %v6032 = vsel %vm6026, %v6029, %v6031
        %v6033 = vsel %vm6025, %v6012, %v6015
        %v6034 = vsel %vm6028, %v6021, 920167782
        %v6035 = vsel %vm6027, %v6018, %v6034
        %v6036 = vsel %vm6026, %v6033, %v6035
        %v6037 = vsel %vm6025, %v6015, %v6018
        %v6038 = vsel %vm6028, %v6024, 1326507024
        %v6039 = vsel %vm6027, %v6021, %v6038
        %v6040 = vsel %vm6026, %v6037, %v6039
        %v6041 = vshll.u32 %v6001, 8
        %v6042 = vmul.u32.u64.compose %v6041, %v6040
        %v6043 = vextract.low.u32 %v6042
        %v6044 = vextract.high.u32 %v6042
        %v6045 = vmul.u32.u64.compose %v6041, %v6036
        %v6046 = vextract.low.u32 %v6045
        %v6047 = vextract.high.u32 %v6045
        %v6048 = vmul.u32 %v6041, %v6032
        %v6049 = vadd.s32 %v6044, %v6046
        %vm6050 = vc.u32 %v6044, %v6046
        %v6051 = vadd.s32 %v6047, 1
        %v6052 = vsel %vm6050, %v6051, %v6047
        %v6053 = vadd.s32 %v6048, %v6052
        %v6054 = vadd.s32 %v6053, 536870912
        %v6055 = vshrl.u32 %v6054, 30
        %v6056 = vshll.u32 %v6055, 30
        %v6057 = vsub.s32 %v6053, %v6056
        %vm6058 = vcmp.lt.s32.totalorder %v6057, 0
        %v6059 = vsub.s32 0, %v6057
        %v6060 = vsel %vm6058, %v6059, %v6057
        %v6061 = vclz %v6060
        %v6062 = vsub.s32 %v6061, 2
        %vm6063 = vcmp.gt.s32.totalorder 0, %v6062
        %v6064 = vsel %vm6063, 0, %v6062
        %v6065 = vsub.s32 32, %v6064
        %v6066 = vshll.u32 %v6057, %v6064
        %v6067 = vshrl.u32 %v6049, %v6065
        %v6068 = vor.u32 %v6066, %v6067
        %v6069 = vsub.s32 4294967266, %v6064
        %v6070 = vadd.s32 %v6069, 127
        %v6071 = vshll.u32 %v6070, 23
        %v6072 = vor.u32 4788187, %v6071
        %v6073 = vand.u32 2147483647, %v6072
        %v6075 = vcvt.s32.f32 %v6068
        %v6076 = vmul.f32 %v6075, %v6073
        %v6077 = vxor.u32 %v6076, 2147483648
        %v6078 = vsel %vm5995, %v6077, %v6076
        %v6079 = vsub.s32 4, %v6055
        %v6080 = vsel %vm5995, %v6079, %v6055
        %v6081 = vsel %vm5994, %v1606, %v6078
        %v6082 = vsel %vm5994, 0, %v6080
        %v6083 = vcosq.f32.pop %v6081
        %v6084 = vsinq.f32.pop %v6081
        %vm6085 = vweird.f32 %v1606
        %v6086 = vadd.s32 %v6082, 3
        %v6087 = vand.u32 %v6086, 3
        %vm6088 = vcmp.lt.s32.totalorder %v6087, 2
        %vm6089 = vcmp.eq.s32.totalorder %v6087, 0
        %v6090 = vxor.u32 %v6084, 2147483648
        %v6091 = vsel %vm6089, %v6083, %v6090
        %vm6092 = vcmp.eq.s32.totalorder %v6087, 2
        %v6093 = vxor.u32 %v6083, 2147483648
        %v6094 = vsel %vm6092, %v6093, %v6084
        %v6095 = vsel %vm6088, %v6091, %v6094
        %v6096 = vsel %vm6085, nan, %v6095
        %v6097 = vand.u32 2147483647, %v1611
        %vm6098 = vcmp.le.f32.partialorder %v6097, 0.7853982
        %vm6099 = vcmp.lt.s32.totalorder %v1611, 0
        %v6100 = vand.u32 %v1611, 2139095040
        %v6101 = vshrl.u32 %v6100, 23
        %v6102 = vsub.s32 %v6101, 127
        %v6103 = vand.u32 2147483647, %v1611
        %v6104 = vand.u32 %v6103, 8388607
        %v6105 = vor.u32 %v6104, 8388608
        %v6106 = vsub.s32 0, %v6105
        %v6107 = vadd.s32 %v6102, 1
        %vm6108 = vcmp.gt.s32.totalorder %v6107, 0
        %v6109 = vsel %vm6108, %v6107, 0
        %v6110 = vshrl.u32 %v6109, 5
        %v6111 = vand.u32 %v6109, 31
        %v6112 = vsub.s32 32, %v6111
        %v6113 = vshrl.u32 683565275, %v6112
        %v6114 = vshll.u32 683565275, %v6111
        %v6115 = vshrl.u32 2475754826, %v6112
        %v6116 = vor.u32 %v6114, %v6115
        %v6117 = vshll.u32 2475754826, %v6111
        %v6118 = vshrl.u32 2131351028, %v6112
        %v6119 = vor.u32 %v6117, %v6118
        %v6120 = vshll.u32 2131351028, %v6111
        %v6121 = vshrl.u32 2102212464, %v6112
        %v6122 = vor.u32 %v6120, %v6121
        %v6123 = vshll.u32 2102212464, %v6111
        %v6124 = vshrl.u32 920167782, %v6112
        %v6125 = vor.u32 %v6123, %v6124
        %v6126 = vshll.u32 920167782, %v6111
        %v6127 = vshrl.u32 1326507024, %v6112
        %v6128 = vor.u32 %v6126, %v6127
        %vm6129 = vcmp.lt.s32.totalorder %v6110, 1
        %vm6130 = vcmp.lt.s32.totalorder %v6110, 2
        %vm6131 = vcmp.lt.s32.totalorder %v6110, 3
        %vm6132 = vcmp.lt.s32.totalorder %v6110, 4
        %v6133 = vsel %vm6129, %v6113, %v6116
        %v6134 = vsel %vm6132, %v6122, 2102212464
        %v6135 = vsel %vm6131, %v6119, %v6134
        %v6136 = vsel %vm6130, %v6133, %v6135
        %v6137 = vsel %vm6129, %v6116, %v6119
        %v6138 = vsel %vm6132, %v6125, 920167782
        %v6139 = vsel %vm6131, %v6122, %v6138
        %v6140 = vsel %vm6130, %v6137, %v6139
        %v6141 = vsel %vm6129, %v6119, %v6122
        %v6142 = vsel %vm6132, %v6128, 1326507024
        %v6143 = vsel %vm6131, %v6125, %v6142
        %v6144 = vsel %vm6130, %v6141, %v6143
        %v6145 = vshll.u32 %v6105, 8
        %v6146 = vmul.u32.u64.compose %v6145, %v6144
        %v6147 = vextract.low.u32 %v6146
        %v6148 = vextract.high.u32 %v6146
        %v6149 = vmul.u32.u64.compose %v6145, %v6140
        %v6150 = vextract.low.u32 %v6149
        %v6151 = vextract.high.u32 %v6149
        %v6152 = vmul.u32 %v6145, %v6136
        %v6153 = vadd.s32 %v6148, %v6150
        %vm6154 = vc.u32 %v6148, %v6150
        %v6155 = vadd.s32 %v6151, 1
        %v6156 = vsel %vm6154, %v6155, %v6151
        %v6157 = vadd.s32 %v6152, %v6156
        %v6158 = vadd.s32 %v6157, 536870912
        %v6159 = vshrl.u32 %v6158, 30
        %v6160 = vshll.u32 %v6159, 30
        %v6161 = vsub.s32 %v6157, %v6160
        %vm6162 = vcmp.lt.s32.totalorder %v6161, 0
        %v6163 = vsub.s32 0, %v6161
        %v6164 = vsel %vm6162, %v6163, %v6161
        %v6165 = vclz %v6164
        %v6166 = vsub.s32 %v6165, 2
        %vm6167 = vcmp.gt.s32.totalorder 0, %v6166
        %v6168 = vsel %vm6167, 0, %v6166
        %v6169 = vsub.s32 32, %v6168
        %v6170 = vshll.u32 %v6161, %v6168
        %v6171 = vshrl.u32 %v6153, %v6169
        %v6172 = vor.u32 %v6170, %v6171
        %v6173 = vsub.s32 4294967266, %v6168
        %v6174 = vadd.s32 %v6173, 127
        %v6175 = vshll.u32 %v6174, 23
        %v6176 = vor.u32 4788187, %v6175
        %v6177 = vand.u32 2147483647, %v6176
        %v6179 = vcvt.s32.f32 %v6172
        %v6180 = vmul.f32 %v6179, %v6177
        %v6181 = vxor.u32 %v6180, 2147483648
        %v6182 = vsel %vm6099, %v6181, %v6180
        %v6183 = vsub.s32 4, %v6159
        %v6184 = vsel %vm6099, %v6183, %v6159
        %v6185 = vsel %vm6098, %v1611, %v6182
        %v6186 = vsel %vm6098, 0, %v6184
        %v6187 = vcosq.f32.pop %v6185
        %v6188 = vsinq.f32.pop %v6185
        %vm6189 = vweird.f32 %v1611
        %v6190 = vadd.s32 %v6186, 3
        %v6191 = vand.u32 %v6190, 3
        %vm6192 = vcmp.lt.s32.totalorder %v6191, 2
        %vm6193 = vcmp.eq.s32.totalorder %v6191, 0
        %v6194 = vxor.u32 %v6188, 2147483648
        %v6195 = vsel %vm6193, %v6187, %v6194
        %vm6196 = vcmp.eq.s32.totalorder %v6191, 2
        %v6197 = vxor.u32 %v6187, 2147483648
        %v6198 = vsel %vm6196, %v6197, %v6188
        %v6199 = vsel %vm6192, %v6195, %v6198
        %v6200 = vsel %vm6189, nan, %v6199
        %v6201 = vand.u32 2147483647, %v1614
        %vm6202 = vcmp.le.f32.partialorder %v6201, 0.7853982
        %vm6203 = vcmp.lt.s32.totalorder %v1614, 0
        %v6204 = vand.u32 %v1614, 2139095040
        %v6205 = vshrl.u32 %v6204, 23
        %v6206 = vsub.s32 %v6205, 127
        %v6207 = vand.u32 2147483647, %v1614
        %v6208 = vand.u32 %v6207, 8388607
        %v6209 = vor.u32 %v6208, 8388608
        %v6210 = vsub.s32 0, %v6209
        %v6211 = vadd.s32 %v6206, 1
        %vm6212 = vcmp.gt.s32.totalorder %v6211, 0
        %v6213 = vsel %vm6212, %v6211, 0
        %v6214 = vshrl.u32 %v6213, 5
        %v6215 = vand.u32 %v6213, 31
        %v6216 = vsub.s32 32, %v6215
        %v6217 = vshrl.u32 683565275, %v6216
        %v6218 = vshll.u32 683565275, %v6215
        %v6219 = vshrl.u32 2475754826, %v6216
        %v6220 = vor.u32 %v6218, %v6219
        %v6221 = vshll.u32 2475754826, %v6215
        %v6222 = vshrl.u32 2131351028, %v6216
        %v6223 = vor.u32 %v6221, %v6222
        %v6224 = vshll.u32 2131351028, %v6215
        %v6225 = vshrl.u32 2102212464, %v6216
        %v6226 = vor.u32 %v6224, %v6225
        %v6227 = vshll.u32 2102212464, %v6215
        %v6228 = vshrl.u32 920167782, %v6216
        %v6229 = vor.u32 %v6227, %v6228
        %v6230 = vshll.u32 920167782, %v6215
        %v6231 = vshrl.u32 1326507024, %v6216
        %v6232 = vor.u32 %v6230, %v6231
        %vm6233 = vcmp.lt.s32.totalorder %v6214, 1
        %vm6234 = vcmp.lt.s32.totalorder %v6214, 2
        %vm6235 = vcmp.lt.s32.totalorder %v6214, 3
        %vm6236 = vcmp.lt.s32.totalorder %v6214, 4
        %v6237 = vsel %vm6233, %v6217, %v6220
        %v6238 = vsel %vm6236, %v6226, 2102212464
        %v6239 = vsel %vm6235, %v6223, %v6238
        %v6240 = vsel %vm6234, %v6237, %v6239
        %v6241 = vsel %vm6233, %v6220, %v6223
        %v6242 = vsel %vm6236, %v6229, 920167782
        %v6243 = vsel %vm6235, %v6226, %v6242
        %v6244 = vsel %vm6234, %v6241, %v6243
        %v6245 = vsel %vm6233, %v6223, %v6226
        %v6246 = vsel %vm6236, %v6232, 1326507024
        %v6247 = vsel %vm6235, %v6229, %v6246
        %v6248 = vsel %vm6234, %v6245, %v6247
        %v6249 = vshll.u32 %v6209, 8
        %v6250 = vmul.u32.u64.compose %v6249, %v6248
        %v6251 = vextract.low.u32 %v6250
        %v6252 = vextract.high.u32 %v6250
        %v6253 = vmul.u32.u64.compose %v6249, %v6244
        %v6254 = vextract.low.u32 %v6253
        %v6255 = vextract.high.u32 %v6253
        %v6256 = vmul.u32 %v6249, %v6240
        %v6257 = vadd.s32 %v6252, %v6254
        %vm6258 = vc.u32 %v6252, %v6254
        %v6259 = vadd.s32 %v6255, 1
        %v6260 = vsel %vm6258, %v6259, %v6255
        %v6261 = vadd.s32 %v6256, %v6260
        %v6262 = vadd.s32 %v6261, 536870912
        %v6263 = vshrl.u32 %v6262, 30
        %v6264 = vshll.u32 %v6263, 30
        %v6265 = vsub.s32 %v6261, %v6264
        %vm6266 = vcmp.lt.s32.totalorder %v6265, 0
        %v6267 = vsub.s32 0, %v6265
        %v6268 = vsel %vm6266, %v6267, %v6265
        %v6269 = vclz %v6268
        %v6270 = vsub.s32 %v6269, 2
        %vm6271 = vcmp.gt.s32.totalorder 0, %v6270
        %v6272 = vsel %vm6271, 0, %v6270
        %v6273 = vsub.s32 32, %v6272
        %v6274 = vshll.u32 %v6265, %v6272
        %v6275 = vshrl.u32 %v6257, %v6273
        %v6276 = vor.u32 %v6274, %v6275
        %v6277 = vsub.s32 4294967266, %v6272
        %v6278 = vadd.s32 %v6277, 127
        %v6279 = vshll.u32 %v6278, 23
        %v6280 = vor.u32 4788187, %v6279
        %v6281 = vand.u32 2147483647, %v6280
        %v6283 = vcvt.s32.f32 %v6276
        %v6284 = vmul.f32 %v6283, %v6281
        %v6285 = vxor.u32 %v6284, 2147483648
        %v6286 = vsel %vm6203, %v6285, %v6284
        %v6287 = vsub.s32 4, %v6263
        %v6288 = vsel %vm6203, %v6287, %v6263
        %v6289 = vsel %vm6202, %v1614, %v6286
        %v6290 = vsel %vm6202, 0, %v6288
        %v6291 = vcosq.f32.pop %v6289
        %v6292 = vsinq.f32.pop %v6289
        %vm6293 = vweird.f32 %v1614
        %v6294 = vadd.s32 %v6290, 3
        %v6295 = vand.u32 %v6294, 3
        %vm6296 = vcmp.lt.s32.totalorder %v6295, 2
        %vm6297 = vcmp.eq.s32.totalorder %v6295, 0
        %v6298 = vxor.u32 %v6292, 2147483648
        %v6299 = vsel %vm6297, %v6291, %v6298
        %vm6300 = vcmp.eq.s32.totalorder %v6295, 2
        %v6301 = vxor.u32 %v6291, 2147483648
        %v6302 = vsel %vm6300, %v6301, %v6292
        %v6303 = vsel %vm6296, %v6299, %v6302
        %v6304 = vsel %vm6293, nan, %v6303
        %v6305 = vand.u32 2147483647, %v1619
        %vm6306 = vcmp.le.f32.partialorder %v6305, 0.7853982
        %vm6307 = vcmp.lt.s32.totalorder %v1619, 0
        %v6308 = vand.u32 %v1619, 2139095040
        %v6309 = vshrl.u32 %v6308, 23
        %v6310 = vsub.s32 %v6309, 127
        %v6311 = vand.u32 2147483647, %v1619
        %v6312 = vand.u32 %v6311, 8388607
        %v6313 = vor.u32 %v6312, 8388608
        %v6314 = vsub.s32 0, %v6313
        %v6315 = vadd.s32 %v6310, 1
        %vm6316 = vcmp.gt.s32.totalorder %v6315, 0
        %v6317 = vsel %vm6316, %v6315, 0
        %v6318 = vshrl.u32 %v6317, 5
        %v6319 = vand.u32 %v6317, 31
        %v6320 = vsub.s32 32, %v6319
        %v6321 = vshrl.u32 683565275, %v6320
        %v6322 = vshll.u32 683565275, %v6319
        %v6323 = vshrl.u32 2475754826, %v6320
        %v6324 = vor.u32 %v6322, %v6323
        %v6325 = vshll.u32 2475754826, %v6319
        %v6326 = vshrl.u32 2131351028, %v6320
        %v6327 = vor.u32 %v6325, %v6326
        %v6328 = vshll.u32 2131351028, %v6319
        %v6329 = vshrl.u32 2102212464, %v6320
        %v6330 = vor.u32 %v6328, %v6329
        %v6331 = vshll.u32 2102212464, %v6319
        %v6332 = vshrl.u32 920167782, %v6320
        %v6333 = vor.u32 %v6331, %v6332
        %v6334 = vshll.u32 920167782, %v6319
        %v6335 = vshrl.u32 1326507024, %v6320
        %v6336 = vor.u32 %v6334, %v6335
        %vm6337 = vcmp.lt.s32.totalorder %v6318, 1
        %vm6338 = vcmp.lt.s32.totalorder %v6318, 2
        %vm6339 = vcmp.lt.s32.totalorder %v6318, 3
        %vm6340 = vcmp.lt.s32.totalorder %v6318, 4
        %v6341 = vsel %vm6337, %v6321, %v6324
        %v6342 = vsel %vm6340, %v6330, 2102212464
        %v6343 = vsel %vm6339, %v6327, %v6342
        %v6344 = vsel %vm6338, %v6341, %v6343
        %v6345 = vsel %vm6337, %v6324, %v6327
        %v6346 = vsel %vm6340, %v6333, 920167782
        %v6347 = vsel %vm6339, %v6330, %v6346
        %v6348 = vsel %vm6338, %v6345, %v6347
        %v6349 = vsel %vm6337, %v6327, %v6330
        %v6350 = vsel %vm6340, %v6336, 1326507024
        %v6351 = vsel %vm6339, %v6333, %v6350
        %v6352 = vsel %vm6338, %v6349, %v6351
        %v6353 = vshll.u32 %v6313, 8
        %v6354 = vmul.u32.u64.compose %v6353, %v6352
        %v6355 = vextract.low.u32 %v6354
        %v6356 = vextract.high.u32 %v6354
        %v6357 = vmul.u32.u64.compose %v6353, %v6348
        %v6358 = vextract.low.u32 %v6357
        %v6359 = vextract.high.u32 %v6357
        %v6360 = vmul.u32 %v6353, %v6344
        %v6361 = vadd.s32 %v6356, %v6358
        %vm6362 = vc.u32 %v6356, %v6358
        %v6363 = vadd.s32 %v6359, 1
        %v6364 = vsel %vm6362, %v6363, %v6359
        %v6365 = vadd.s32 %v6360, %v6364
        %v6366 = vadd.s32 %v6365, 536870912
        %v6367 = vshrl.u32 %v6366, 30
        %v6368 = vshll.u32 %v6367, 30
        %v6369 = vsub.s32 %v6365, %v6368
        %vm6370 = vcmp.lt.s32.totalorder %v6369, 0
        %v6371 = vsub.s32 0, %v6369
        %v6372 = vsel %vm6370, %v6371, %v6369
        %v6373 = vclz %v6372
        %v6374 = vsub.s32 %v6373, 2
        %vm6375 = vcmp.gt.s32.totalorder 0, %v6374
        %v6376 = vsel %vm6375, 0, %v6374
        %v6377 = vsub.s32 32, %v6376
        %v6378 = vshll.u32 %v6369, %v6376
        %v6379 = vshrl.u32 %v6361, %v6377
        %v6380 = vor.u32 %v6378, %v6379
        %v6381 = vsub.s32 4294967266, %v6376
        %v6382 = vadd.s32 %v6381, 127
        %v6383 = vshll.u32 %v6382, 23
        %v6384 = vor.u32 4788187, %v6383
        %v6385 = vand.u32 2147483647, %v6384
        %v6387 = vcvt.s32.f32 %v6380
        %v6388 = vmul.f32 %v6387, %v6385
        %v6389 = vxor.u32 %v6388, 2147483648
        %v6390 = vsel %vm6307, %v6389, %v6388
        %v6391 = vsub.s32 4, %v6367
        %v6392 = vsel %vm6307, %v6391, %v6367
        %v6393 = vsel %vm6306, %v1619, %v6390
        %v6394 = vsel %vm6306, 0, %v6392
        %v6395 = vcosq.f32.pop %v6393
        %v6396 = vsinq.f32.pop %v6393
        %vm6397 = vweird.f32 %v1619
        %v6398 = vadd.s32 %v6394, 3
        %v6399 = vand.u32 %v6398, 3
        %vm6400 = vcmp.lt.s32.totalorder %v6399, 2
        %vm6401 = vcmp.eq.s32.totalorder %v6399, 0
        %v6402 = vxor.u32 %v6396, 2147483648
        %v6403 = vsel %vm6401, %v6395, %v6402
        %vm6404 = vcmp.eq.s32.totalorder %v6399, 2
        %v6405 = vxor.u32 %v6395, 2147483648
        %v6406 = vsel %vm6404, %v6405, %v6396
        %v6407 = vsel %vm6400, %v6403, %v6406
        %v6408 = vsel %vm6397, nan, %v6407
        %v6409 = vand.u32 2147483647, %v1622
        %vm6410 = vcmp.le.f32.partialorder %v6409, 0.7853982
        %vm6411 = vcmp.lt.s32.totalorder %v1622, 0
        %v6412 = vand.u32 %v1622, 2139095040
        %v6413 = vshrl.u32 %v6412, 23
        %v6414 = vsub.s32 %v6413, 127
        %v6415 = vand.u32 2147483647, %v1622
        %v6416 = vand.u32 %v6415, 8388607
        %v6417 = vor.u32 %v6416, 8388608
        %v6418 = vsub.s32 0, %v6417
        %v6419 = vadd.s32 %v6414, 1
        %vm6420 = vcmp.gt.s32.totalorder %v6419, 0
        %v6421 = vsel %vm6420, %v6419, 0
        %v6422 = vshrl.u32 %v6421, 5
        %v6423 = vand.u32 %v6421, 31
        %v6424 = vsub.s32 32, %v6423
        %v6425 = vshrl.u32 683565275, %v6424
        %v6426 = vshll.u32 683565275, %v6423
        %v6427 = vshrl.u32 2475754826, %v6424
        %v6428 = vor.u32 %v6426, %v6427
        %v6429 = vshll.u32 2475754826, %v6423
        %v6430 = vshrl.u32 2131351028, %v6424
        %v6431 = vor.u32 %v6429, %v6430
        %v6432 = vshll.u32 2131351028, %v6423
        %v6433 = vshrl.u32 2102212464, %v6424
        %v6434 = vor.u32 %v6432, %v6433
        %v6435 = vshll.u32 2102212464, %v6423
        %v6436 = vshrl.u32 920167782, %v6424
        %v6437 = vor.u32 %v6435, %v6436
        %v6438 = vshll.u32 920167782, %v6423
        %v6439 = vshrl.u32 1326507024, %v6424
        %v6440 = vor.u32 %v6438, %v6439
        %vm6441 = vcmp.lt.s32.totalorder %v6422, 1
        %vm6442 = vcmp.lt.s32.totalorder %v6422, 2
        %vm6443 = vcmp.lt.s32.totalorder %v6422, 3
        %vm6444 = vcmp.lt.s32.totalorder %v6422, 4
        %v6445 = vsel %vm6441, %v6425, %v6428
        %v6446 = vsel %vm6444, %v6434, 2102212464
        %v6447 = vsel %vm6443, %v6431, %v6446
        %v6448 = vsel %vm6442, %v6445, %v6447
        %v6449 = vsel %vm6441, %v6428, %v6431
        %v6450 = vsel %vm6444, %v6437, 920167782
        %v6451 = vsel %vm6443, %v6434, %v6450
        %v6452 = vsel %vm6442, %v6449, %v6451
        %v6453 = vsel %vm6441, %v6431, %v6434
        %v6454 = vsel %vm6444, %v6440, 1326507024
        %v6455 = vsel %vm6443, %v6437, %v6454
        %v6456 = vsel %vm6442, %v6453, %v6455
        %v6457 = vshll.u32 %v6417, 8
        %v6458 = vmul.u32.u64.compose %v6457, %v6456
        %v6459 = vextract.low.u32 %v6458
        %v6460 = vextract.high.u32 %v6458
        %v6461 = vmul.u32.u64.compose %v6457, %v6452
        %v6462 = vextract.low.u32 %v6461
        %v6463 = vextract.high.u32 %v6461
        %v6464 = vmul.u32 %v6457, %v6448
        %v6465 = vadd.s32 %v6460, %v6462
        %vm6466 = vc.u32 %v6460, %v6462
        %v6467 = vadd.s32 %v6463, 1
        %v6468 = vsel %vm6466, %v6467, %v6463
        %v6469 = vadd.s32 %v6464, %v6468
        %v6470 = vadd.s32 %v6469, 536870912
        %v6471 = vshrl.u32 %v6470, 30
        %v6472 = vshll.u32 %v6471, 30
        %v6473 = vsub.s32 %v6469, %v6472
        %vm6474 = vcmp.lt.s32.totalorder %v6473, 0
        %v6475 = vsub.s32 0, %v6473
        %v6476 = vsel %vm6474, %v6475, %v6473
        %v6477 = vclz %v6476
        %v6478 = vsub.s32 %v6477, 2
        %vm6479 = vcmp.gt.s32.totalorder 0, %v6478
        %v6480 = vsel %vm6479, 0, %v6478
        %v6481 = vsub.s32 32, %v6480
        %v6482 = vshll.u32 %v6473, %v6480
        %v6483 = vshrl.u32 %v6465, %v6481
        %v6484 = vor.u32 %v6482, %v6483
        %v6485 = vsub.s32 4294967266, %v6480
        %v6486 = vadd.s32 %v6485, 127
        %v6487 = vshll.u32 %v6486, 23
        %v6488 = vor.u32 4788187, %v6487
        %v6489 = vand.u32 2147483647, %v6488
        %v6491 = vcvt.s32.f32 %v6484
        %v6492 = vmul.f32 %v6491, %v6489
        %v6493 = vxor.u32 %v6492, 2147483648
        %v6494 = vsel %vm6411, %v6493, %v6492
        %v6495 = vsub.s32 4, %v6471
        %v6496 = vsel %vm6411, %v6495, %v6471
        %v6497 = vsel %vm6410, %v1622, %v6494
        %v6498 = vsel %vm6410, 0, %v6496
        %v6499 = vcosq.f32.pop %v6497
        %v6500 = vsinq.f32.pop %v6497
        %vm6501 = vweird.f32 %v1622
        %v6502 = vadd.s32 %v6498, 3
        %v6503 = vand.u32 %v6502, 3
        %vm6504 = vcmp.lt.s32.totalorder %v6503, 2
        %vm6505 = vcmp.eq.s32.totalorder %v6503, 0
        %v6506 = vxor.u32 %v6500, 2147483648
        %v6507 = vsel %vm6505, %v6499, %v6506
        %vm6508 = vcmp.eq.s32.totalorder %v6503, 2
        %v6509 = vxor.u32 %v6499, 2147483648
        %v6510 = vsel %vm6508, %v6509, %v6500
        %v6511 = vsel %vm6504, %v6507, %v6510
        %v6512 = vsel %vm6501, nan, %v6511
        %v6513 = vand.u32 2147483647, %v1627
        %vm6514 = vcmp.le.f32.partialorder %v6513, 0.7853982
        %vm6515 = vcmp.lt.s32.totalorder %v1627, 0
        %v6516 = vand.u32 %v1627, 2139095040
        %v6517 = vshrl.u32 %v6516, 23
        %v6518 = vsub.s32 %v6517, 127
        %v6519 = vand.u32 2147483647, %v1627
        %v6520 = vand.u32 %v6519, 8388607
        %v6521 = vor.u32 %v6520, 8388608
        %v6522 = vsub.s32 0, %v6521
        %v6523 = vadd.s32 %v6518, 1
        %vm6524 = vcmp.gt.s32.totalorder %v6523, 0
        %v6525 = vsel %vm6524, %v6523, 0
        %v6526 = vshrl.u32 %v6525, 5
        %v6527 = vand.u32 %v6525, 31
        %v6528 = vsub.s32 32, %v6527
        %v6529 = vshrl.u32 683565275, %v6528
        %v6530 = vshll.u32 683565275, %v6527
        %v6531 = vshrl.u32 2475754826, %v6528
        %v6532 = vor.u32 %v6530, %v6531
        %v6533 = vshll.u32 2475754826, %v6527
        %v6534 = vshrl.u32 2131351028, %v6528
        %v6535 = vor.u32 %v6533, %v6534
        %v6536 = vshll.u32 2131351028, %v6527
        %v6537 = vshrl.u32 2102212464, %v6528
        %v6538 = vor.u32 %v6536, %v6537
        %v6539 = vshll.u32 2102212464, %v6527
        %v6540 = vshrl.u32 920167782, %v6528
        %v6541 = vor.u32 %v6539, %v6540
        %v6542 = vshll.u32 920167782, %v6527
        %v6543 = vshrl.u32 1326507024, %v6528
        %v6544 = vor.u32 %v6542, %v6543
        %vm6545 = vcmp.lt.s32.totalorder %v6526, 1
        %vm6546 = vcmp.lt.s32.totalorder %v6526, 2
        %vm6547 = vcmp.lt.s32.totalorder %v6526, 3
        %vm6548 = vcmp.lt.s32.totalorder %v6526, 4
        %v6549 = vsel %vm6545, %v6529, %v6532
        %v6550 = vsel %vm6548, %v6538, 2102212464
        %v6551 = vsel %vm6547, %v6535, %v6550
        %v6552 = vsel %vm6546, %v6549, %v6551
        %v6553 = vsel %vm6545, %v6532, %v6535
        %v6554 = vsel %vm6548, %v6541, 920167782
        %v6555 = vsel %vm6547, %v6538, %v6554
        %v6556 = vsel %vm6546, %v6553, %v6555
        %v6557 = vsel %vm6545, %v6535, %v6538
        %v6558 = vsel %vm6548, %v6544, 1326507024
        %v6559 = vsel %vm6547, %v6541, %v6558
        %v6560 = vsel %vm6546, %v6557, %v6559
        %v6561 = vshll.u32 %v6521, 8
        %v6562 = vmul.u32.u64.compose %v6561, %v6560
        %v6563 = vextract.low.u32 %v6562
        %v6564 = vextract.high.u32 %v6562
        %v6565 = vmul.u32.u64.compose %v6561, %v6556
        %v6566 = vextract.low.u32 %v6565
        %v6567 = vextract.high.u32 %v6565
        %v6568 = vmul.u32 %v6561, %v6552
        %v6569 = vadd.s32 %v6564, %v6566
        %vm6570 = vc.u32 %v6564, %v6566
        %v6571 = vadd.s32 %v6567, 1
        %v6572 = vsel %vm6570, %v6571, %v6567
        %v6573 = vadd.s32 %v6568, %v6572
        %v6574 = vadd.s32 %v6573, 536870912
        %v6575 = vshrl.u32 %v6574, 30
        %v6576 = vshll.u32 %v6575, 30
        %v6577 = vsub.s32 %v6573, %v6576
        %vm6578 = vcmp.lt.s32.totalorder %v6577, 0
        %v6579 = vsub.s32 0, %v6577
        %v6580 = vsel %vm6578, %v6579, %v6577
        %v6581 = vclz %v6580
        %v6582 = vsub.s32 %v6581, 2
        %vm6583 = vcmp.gt.s32.totalorder 0, %v6582
        %v6584 = vsel %vm6583, 0, %v6582
        %v6585 = vsub.s32 32, %v6584
        %v6586 = vshll.u32 %v6577, %v6584
        %v6587 = vshrl.u32 %v6569, %v6585
        %v6588 = vor.u32 %v6586, %v6587
        %v6589 = vsub.s32 4294967266, %v6584
        %v6590 = vadd.s32 %v6589, 127
        %v6591 = vshll.u32 %v6590, 23
        %v6592 = vor.u32 4788187, %v6591
        %v6593 = vand.u32 2147483647, %v6592
        %v6595 = vcvt.s32.f32 %v6588
        %v6596 = vmul.f32 %v6595, %v6593
        %v6597 = vxor.u32 %v6596, 2147483648
        %v6598 = vsel %vm6515, %v6597, %v6596
        %v6599 = vsub.s32 4, %v6575
        %v6600 = vsel %vm6515, %v6599, %v6575
        %v6601 = vsel %vm6514, %v1627, %v6598
        %v6602 = vsel %vm6514, 0, %v6600
        %v6603 = vcosq.f32.pop %v6601
        %v6604 = vsinq.f32.pop %v6601
        %vm6605 = vweird.f32 %v1627
        %v6606 = vadd.s32 %v6602, 3
        %v6607 = vand.u32 %v6606, 3
        %vm6608 = vcmp.lt.s32.totalorder %v6607, 2
        %vm6609 = vcmp.eq.s32.totalorder %v6607, 0
        %v6610 = vxor.u32 %v6604, 2147483648
        %v6611 = vsel %vm6609, %v6603, %v6610
        %vm6612 = vcmp.eq.s32.totalorder %v6607, 2
        %v6613 = vxor.u32 %v6603, 2147483648
        %v6614 = vsel %vm6612, %v6613, %v6604
        %v6615 = vsel %vm6608, %v6611, %v6614
        %v6616 = vsel %vm6605, nan, %v6615
        %v6617 = vand.u32 2147483647, %v1630
        %vm6618 = vcmp.le.f32.partialorder %v6617, 0.7853982
        %vm6619 = vcmp.lt.s32.totalorder %v1630, 0
        %v6620 = vand.u32 %v1630, 2139095040
        %v6621 = vshrl.u32 %v6620, 23
        %v6622 = vsub.s32 %v6621, 127
        %v6623 = vand.u32 2147483647, %v1630
        %v6624 = vand.u32 %v6623, 8388607
        %v6625 = vor.u32 %v6624, 8388608
        %v6626 = vsub.s32 0, %v6625
        %v6627 = vadd.s32 %v6622, 1
        %vm6628 = vcmp.gt.s32.totalorder %v6627, 0
        %v6629 = vsel %vm6628, %v6627, 0
        %v6630 = vshrl.u32 %v6629, 5
        %v6631 = vand.u32 %v6629, 31
        %v6632 = vsub.s32 32, %v6631
        %v6633 = vshrl.u32 683565275, %v6632
        %v6634 = vshll.u32 683565275, %v6631
        %v6635 = vshrl.u32 2475754826, %v6632
        %v6636 = vor.u32 %v6634, %v6635
        %v6637 = vshll.u32 2475754826, %v6631
        %v6638 = vshrl.u32 2131351028, %v6632
        %v6639 = vor.u32 %v6637, %v6638
        %v6640 = vshll.u32 2131351028, %v6631
        %v6641 = vshrl.u32 2102212464, %v6632
        %v6642 = vor.u32 %v6640, %v6641
        %v6643 = vshll.u32 2102212464, %v6631
        %v6644 = vshrl.u32 920167782, %v6632
        %v6645 = vor.u32 %v6643, %v6644
        %v6646 = vshll.u32 920167782, %v6631
        %v6647 = vshrl.u32 1326507024, %v6632
        %v6648 = vor.u32 %v6646, %v6647
        %vm6649 = vcmp.lt.s32.totalorder %v6630, 1
        %vm6650 = vcmp.lt.s32.totalorder %v6630, 2
        %vm6651 = vcmp.lt.s32.totalorder %v6630, 3
        %vm6652 = vcmp.lt.s32.totalorder %v6630, 4
        %v6653 = vsel %vm6649, %v6633, %v6636
        %v6654 = vsel %vm6652, %v6642, 2102212464
        %v6655 = vsel %vm6651, %v6639, %v6654
        %v6656 = vsel %vm6650, %v6653, %v6655
        %v6657 = vsel %vm6649, %v6636, %v6639
        %v6658 = vsel %vm6652, %v6645, 920167782
        %v6659 = vsel %vm6651, %v6642, %v6658
        %v6660 = vsel %vm6650, %v6657, %v6659
        %v6661 = vsel %vm6649, %v6639, %v6642
        %v6662 = vsel %vm6652, %v6648, 1326507024
        %v6663 = vsel %vm6651, %v6645, %v6662
        %v6664 = vsel %vm6650, %v6661, %v6663
        %v6665 = vshll.u32 %v6625, 8
        %v6666 = vmul.u32.u64.compose %v6665, %v6664
        %v6667 = vextract.low.u32 %v6666
        %v6668 = vextract.high.u32 %v6666
        %v6669 = vmul.u32.u64.compose %v6665, %v6660
        %v6670 = vextract.low.u32 %v6669
        %v6671 = vextract.high.u32 %v6669
        %v6672 = vmul.u32 %v6665, %v6656
        %v6673 = vadd.s32 %v6668, %v6670
        %vm6674 = vc.u32 %v6668, %v6670
        %v6675 = vadd.s32 %v6671, 1
        %v6676 = vsel %vm6674, %v6675, %v6671
        %v6677 = vadd.s32 %v6672, %v6676
        %v6678 = vadd.s32 %v6677, 536870912
        %v6679 = vshrl.u32 %v6678, 30
        %v6680 = vshll.u32 %v6679, 30
        %v6681 = vsub.s32 %v6677, %v6680
        %vm6682 = vcmp.lt.s32.totalorder %v6681, 0
        %v6683 = vsub.s32 0, %v6681
        %v6684 = vsel %vm6682, %v6683, %v6681
        %v6685 = vclz %v6684
        %v6686 = vsub.s32 %v6685, 2
        %vm6687 = vcmp.gt.s32.totalorder 0, %v6686
        %v6688 = vsel %vm6687, 0, %v6686
        %v6689 = vsub.s32 32, %v6688
        %v6690 = vshll.u32 %v6681, %v6688
        %v6691 = vshrl.u32 %v6673, %v6689
        %v6692 = vor.u32 %v6690, %v6691
        %v6693 = vsub.s32 4294967266, %v6688
        %v6694 = vadd.s32 %v6693, 127
        %v6695 = vshll.u32 %v6694, 23
        %v6696 = vor.u32 4788187, %v6695
        %v6697 = vand.u32 2147483647, %v6696
        %v6699 = vcvt.s32.f32 %v6692
        %v6700 = vmul.f32 %v6699, %v6697
        %v6701 = vxor.u32 %v6700, 2147483648
        %v6702 = vsel %vm6619, %v6701, %v6700
        %v6703 = vsub.s32 4, %v6679
        %v6704 = vsel %vm6619, %v6703, %v6679
        %v6705 = vsel %vm6618, %v1630, %v6702
        %v6706 = vsel %vm6618, 0, %v6704
        %v6707 = vcosq.f32.pop %v6705
        %v6708 = vsinq.f32.pop %v6705
        %vm6709 = vweird.f32 %v1630
        %v6710 = vadd.s32 %v6706, 3
        %v6711 = vand.u32 %v6710, 3
        %vm6712 = vcmp.lt.s32.totalorder %v6711, 2
        %vm6713 = vcmp.eq.s32.totalorder %v6711, 0
        %v6714 = vxor.u32 %v6708, 2147483648
        %v6715 = vsel %vm6713, %v6707, %v6714
        %vm6716 = vcmp.eq.s32.totalorder %v6711, 2
        %v6717 = vxor.u32 %v6707, 2147483648
        %v6718 = vsel %vm6716, %v6717, %v6708
        %v6719 = vsel %vm6712, %v6715, %v6718
        %v6720 = vsel %vm6709, nan, %v6719
        %v6721 = vand.u32 2147483647, %v1635
        %vm6722 = vcmp.le.f32.partialorder %v6721, 0.7853982
        %vm6723 = vcmp.lt.s32.totalorder %v1635, 0
        %v6724 = vand.u32 %v1635, 2139095040
        %v6725 = vshrl.u32 %v6724, 23
        %v6726 = vsub.s32 %v6725, 127
        %v6727 = vand.u32 2147483647, %v1635
        %v6728 = vand.u32 %v6727, 8388607
        %v6729 = vor.u32 %v6728, 8388608
        %v6730 = vsub.s32 0, %v6729
        %v6731 = vadd.s32 %v6726, 1
        %vm6732 = vcmp.gt.s32.totalorder %v6731, 0
        %v6733 = vsel %vm6732, %v6731, 0
        %v6734 = vshrl.u32 %v6733, 5
        %v6735 = vand.u32 %v6733, 31
        %v6736 = vsub.s32 32, %v6735
        %v6737 = vshrl.u32 683565275, %v6736
        %v6738 = vshll.u32 683565275, %v6735
        %v6739 = vshrl.u32 2475754826, %v6736
        %v6740 = vor.u32 %v6738, %v6739
        %v6741 = vshll.u32 2475754826, %v6735
        %v6742 = vshrl.u32 2131351028, %v6736
        %v6743 = vor.u32 %v6741, %v6742
        %v6744 = vshll.u32 2131351028, %v6735
        %v6745 = vshrl.u32 2102212464, %v6736
        %v6746 = vor.u32 %v6744, %v6745
        %v6747 = vshll.u32 2102212464, %v6735
        %v6748 = vshrl.u32 920167782, %v6736
        %v6749 = vor.u32 %v6747, %v6748
        %v6750 = vshll.u32 920167782, %v6735
        %v6751 = vshrl.u32 1326507024, %v6736
        %v6752 = vor.u32 %v6750, %v6751
        %vm6753 = vcmp.lt.s32.totalorder %v6734, 1
        %vm6754 = vcmp.lt.s32.totalorder %v6734, 2
        %vm6755 = vcmp.lt.s32.totalorder %v6734, 3
        %vm6756 = vcmp.lt.s32.totalorder %v6734, 4
        %v6757 = vsel %vm6753, %v6737, %v6740
        %v6758 = vsel %vm6756, %v6746, 2102212464
        %v6759 = vsel %vm6755, %v6743, %v6758
        %v6760 = vsel %vm6754, %v6757, %v6759
        %v6761 = vsel %vm6753, %v6740, %v6743
        %v6762 = vsel %vm6756, %v6749, 920167782
        %v6763 = vsel %vm6755, %v6746, %v6762
        %v6764 = vsel %vm6754, %v6761, %v6763
        %v6765 = vsel %vm6753, %v6743, %v6746
        %v6766 = vsel %vm6756, %v6752, 1326507024
        %v6767 = vsel %vm6755, %v6749, %v6766
        %v6768 = vsel %vm6754, %v6765, %v6767
        %v6769 = vshll.u32 %v6729, 8
        %v6770 = vmul.u32.u64.compose %v6769, %v6768
        %v6771 = vextract.low.u32 %v6770
        %v6772 = vextract.high.u32 %v6770
        %v6773 = vmul.u32.u64.compose %v6769, %v6764
        %v6774 = vextract.low.u32 %v6773
        %v6775 = vextract.high.u32 %v6773
        %v6776 = vmul.u32 %v6769, %v6760
        %v6777 = vadd.s32 %v6772, %v6774
        %vm6778 = vc.u32 %v6772, %v6774
        %v6779 = vadd.s32 %v6775, 1
        %v6780 = vsel %vm6778, %v6779, %v6775
        %v6781 = vadd.s32 %v6776, %v6780
        %v6782 = vadd.s32 %v6781, 536870912
        %v6783 = vshrl.u32 %v6782, 30
        %v6784 = vshll.u32 %v6783, 30
        %v6785 = vsub.s32 %v6781, %v6784
        %vm6786 = vcmp.lt.s32.totalorder %v6785, 0
        %v6787 = vsub.s32 0, %v6785
        %v6788 = vsel %vm6786, %v6787, %v6785
        %v6789 = vclz %v6788
        %v6790 = vsub.s32 %v6789, 2
        %vm6791 = vcmp.gt.s32.totalorder 0, %v6790
        %v6792 = vsel %vm6791, 0, %v6790
        %v6793 = vsub.s32 32, %v6792
        %v6794 = vshll.u32 %v6785, %v6792
        %v6795 = vshrl.u32 %v6777, %v6793
        %v6796 = vor.u32 %v6794, %v6795
        %v6797 = vsub.s32 4294967266, %v6792
        %v6798 = vadd.s32 %v6797, 127
        %v6799 = vshll.u32 %v6798, 23
        %v6800 = vor.u32 4788187, %v6799
        %v6801 = vand.u32 2147483647, %v6800
        %v6803 = vcvt.s32.f32 %v6796
        %v6804 = vmul.f32 %v6803, %v6801
        %v6805 = vxor.u32 %v6804, 2147483648
        %v6806 = vsel %vm6723, %v6805, %v6804
        %v6807 = vsub.s32 4, %v6783
        %v6808 = vsel %vm6723, %v6807, %v6783
        %v6809 = vsel %vm6722, %v1635, %v6806
        %v6810 = vsel %vm6722, 0, %v6808
        %v6811 = vcosq.f32.pop %v6809
        %v6812 = vsinq.f32.pop %v6809
        %vm6813 = vweird.f32 %v1635
        %v6814 = vadd.s32 %v6810, 3
        %v6815 = vand.u32 %v6814, 3
        %vm6816 = vcmp.lt.s32.totalorder %v6815, 2
        %vm6817 = vcmp.eq.s32.totalorder %v6815, 0
        %v6818 = vxor.u32 %v6812, 2147483648
        %v6819 = vsel %vm6817, %v6811, %v6818
        %vm6820 = vcmp.eq.s32.totalorder %v6815, 2
        %v6821 = vxor.u32 %v6811, 2147483648
        %v6822 = vsel %vm6820, %v6821, %v6812
        %v6823 = vsel %vm6816, %v6819, %v6822
        %v6824 = vsel %vm6813, nan, %v6823
        %v6825 = vand.u32 2147483647, %v1638
        %vm6826 = vcmp.le.f32.partialorder %v6825, 0.7853982
        %vm6827 = vcmp.lt.s32.totalorder %v1638, 0
        %v6828 = vand.u32 %v1638, 2139095040
        %v6829 = vshrl.u32 %v6828, 23
        %v6830 = vsub.s32 %v6829, 127
        %v6831 = vand.u32 2147483647, %v1638
        %v6832 = vand.u32 %v6831, 8388607
        %v6833 = vor.u32 %v6832, 8388608
        %v6834 = vsub.s32 0, %v6833
        %v6835 = vadd.s32 %v6830, 1
        %vm6836 = vcmp.gt.s32.totalorder %v6835, 0
        %v6837 = vsel %vm6836, %v6835, 0
        %v6838 = vshrl.u32 %v6837, 5
        %v6839 = vand.u32 %v6837, 31
        %v6840 = vsub.s32 32, %v6839
        %v6841 = vshrl.u32 683565275, %v6840
        %v6842 = vshll.u32 683565275, %v6839
        %v6843 = vshrl.u32 2475754826, %v6840
        %v6844 = vor.u32 %v6842, %v6843
        %v6845 = vshll.u32 2475754826, %v6839
        %v6846 = vshrl.u32 2131351028, %v6840
        %v6847 = vor.u32 %v6845, %v6846
        %v6848 = vshll.u32 2131351028, %v6839
        %v6849 = vshrl.u32 2102212464, %v6840
        %v6850 = vor.u32 %v6848, %v6849
        %v6851 = vshll.u32 2102212464, %v6839
        %v6852 = vshrl.u32 920167782, %v6840
        %v6853 = vor.u32 %v6851, %v6852
        %v6854 = vshll.u32 920167782, %v6839
        %v6855 = vshrl.u32 1326507024, %v6840
        %v6856 = vor.u32 %v6854, %v6855
        %vm6857 = vcmp.lt.s32.totalorder %v6838, 1
        %vm6858 = vcmp.lt.s32.totalorder %v6838, 2
        %vm6859 = vcmp.lt.s32.totalorder %v6838, 3
        %vm6860 = vcmp.lt.s32.totalorder %v6838, 4
        %v6861 = vsel %vm6857, %v6841, %v6844
        %v6862 = vsel %vm6860, %v6850, 2102212464
        %v6863 = vsel %vm6859, %v6847, %v6862
        %v6864 = vsel %vm6858, %v6861, %v6863
        %v6865 = vsel %vm6857, %v6844, %v6847
        %v6866 = vsel %vm6860, %v6853, 920167782
        %v6867 = vsel %vm6859, %v6850, %v6866
        %v6868 = vsel %vm6858, %v6865, %v6867
        %v6869 = vsel %vm6857, %v6847, %v6850
        %v6870 = vsel %vm6860, %v6856, 1326507024
        %v6871 = vsel %vm6859, %v6853, %v6870
        %v6872 = vsel %vm6858, %v6869, %v6871
        %v6873 = vshll.u32 %v6833, 8
        %v6874 = vmul.u32.u64.compose %v6873, %v6872
        %v6875 = vextract.low.u32 %v6874
        %v6876 = vextract.high.u32 %v6874
        %v6877 = vmul.u32.u64.compose %v6873, %v6868
        %v6878 = vextract.low.u32 %v6877
        %v6879 = vextract.high.u32 %v6877
        %v6880 = vmul.u32 %v6873, %v6864
        %v6881 = vadd.s32 %v6876, %v6878
        %vm6882 = vc.u32 %v6876, %v6878
        %v6883 = vadd.s32 %v6879, 1
        %v6884 = vsel %vm6882, %v6883, %v6879
        %v6885 = vadd.s32 %v6880, %v6884
        %v6886 = vadd.s32 %v6885, 536870912
        %v6887 = vshrl.u32 %v6886, 30
        %v6888 = vshll.u32 %v6887, 30
        %v6889 = vsub.s32 %v6885, %v6888
        %vm6890 = vcmp.lt.s32.totalorder %v6889, 0
        %v6891 = vsub.s32 0, %v6889
        %v6892 = vsel %vm6890, %v6891, %v6889
        %v6893 = vclz %v6892
        %v6894 = vsub.s32 %v6893, 2
        %vm6895 = vcmp.gt.s32.totalorder 0, %v6894
        %v6896 = vsel %vm6895, 0, %v6894
        %v6897 = vsub.s32 32, %v6896
        %v6898 = vshll.u32 %v6889, %v6896
        %v6899 = vshrl.u32 %v6881, %v6897
        %v6900 = vor.u32 %v6898, %v6899
        %v6901 = vsub.s32 4294967266, %v6896
        %v6902 = vadd.s32 %v6901, 127
        %v6903 = vshll.u32 %v6902, 23
        %v6904 = vor.u32 4788187, %v6903
        %v6905 = vand.u32 2147483647, %v6904
        %v6907 = vcvt.s32.f32 %v6900
        %v6908 = vmul.f32 %v6907, %v6905
        %v6909 = vxor.u32 %v6908, 2147483648
        %v6910 = vsel %vm6827, %v6909, %v6908
        %v6911 = vsub.s32 4, %v6887
        %v6912 = vsel %vm6827, %v6911, %v6887
        %v6913 = vsel %vm6826, %v1638, %v6910
        %v6914 = vsel %vm6826, 0, %v6912
        %v6915 = vcosq.f32.pop %v6913
        %v6916 = vsinq.f32.pop %v6913
        %vm6917 = vweird.f32 %v1638
        %v6918 = vadd.s32 %v6914, 3
        %v6919 = vand.u32 %v6918, 3
        %vm6920 = vcmp.lt.s32.totalorder %v6919, 2
        %vm6921 = vcmp.eq.s32.totalorder %v6919, 0
        %v6922 = vxor.u32 %v6916, 2147483648
        %v6923 = vsel %vm6921, %v6915, %v6922
        %vm6924 = vcmp.eq.s32.totalorder %v6919, 2
        %v6925 = vxor.u32 %v6915, 2147483648
        %v6926 = vsel %vm6924, %v6925, %v6916
        %v6927 = vsel %vm6920, %v6923, %v6926
        %v6928 = vsel %vm6917, nan, %v6927
        %v6929 = vand.u32 2147483647, %v1643
        %vm6930 = vcmp.le.f32.partialorder %v6929, 0.7853982
        %vm6931 = vcmp.lt.s32.totalorder %v1643, 0
        %v6932 = vand.u32 %v1643, 2139095040
        %v6933 = vshrl.u32 %v6932, 23
        %v6934 = vsub.s32 %v6933, 127
        %v6935 = vand.u32 2147483647, %v1643
        %v6936 = vand.u32 %v6935, 8388607
        %v6937 = vor.u32 %v6936, 8388608
        %v6938 = vsub.s32 0, %v6937
        %v6939 = vadd.s32 %v6934, 1
        %vm6940 = vcmp.gt.s32.totalorder %v6939, 0
        %v6941 = vsel %vm6940, %v6939, 0
        %v6942 = vshrl.u32 %v6941, 5
        %v6943 = vand.u32 %v6941, 31
        %v6944 = vsub.s32 32, %v6943
        %v6945 = vshrl.u32 683565275, %v6944
        %v6946 = vshll.u32 683565275, %v6943
        %v6947 = vshrl.u32 2475754826, %v6944
        %v6948 = vor.u32 %v6946, %v6947
        %v6949 = vshll.u32 2475754826, %v6943
        %v6950 = vshrl.u32 2131351028, %v6944
        %v6951 = vor.u32 %v6949, %v6950
        %v6952 = vshll.u32 2131351028, %v6943
        %v6953 = vshrl.u32 2102212464, %v6944
        %v6954 = vor.u32 %v6952, %v6953
        %v6955 = vshll.u32 2102212464, %v6943
        %v6956 = vshrl.u32 920167782, %v6944
        %v6957 = vor.u32 %v6955, %v6956
        %v6958 = vshll.u32 920167782, %v6943
        %v6959 = vshrl.u32 1326507024, %v6944
        %v6960 = vor.u32 %v6958, %v6959
        %vm6961 = vcmp.lt.s32.totalorder %v6942, 1
        %vm6962 = vcmp.lt.s32.totalorder %v6942, 2
        %vm6963 = vcmp.lt.s32.totalorder %v6942, 3
        %vm6964 = vcmp.lt.s32.totalorder %v6942, 4
        %v6965 = vsel %vm6961, %v6945, %v6948
        %v6966 = vsel %vm6964, %v6954, 2102212464
        %v6967 = vsel %vm6963, %v6951, %v6966
        %v6968 = vsel %vm6962, %v6965, %v6967
        %v6969 = vsel %vm6961, %v6948, %v6951
        %v6970 = vsel %vm6964, %v6957, 920167782
        %v6971 = vsel %vm6963, %v6954, %v6970
        %v6972 = vsel %vm6962, %v6969, %v6971
        %v6973 = vsel %vm6961, %v6951, %v6954
        %v6974 = vsel %vm6964, %v6960, 1326507024
        %v6975 = vsel %vm6963, %v6957, %v6974
        %v6976 = vsel %vm6962, %v6973, %v6975
        %v6977 = vshll.u32 %v6937, 8
        %v6978 = vmul.u32.u64.compose %v6977, %v6976
        %v6979 = vextract.low.u32 %v6978
        %v6980 = vextract.high.u32 %v6978
        %v6981 = vmul.u32.u64.compose %v6977, %v6972
        %v6982 = vextract.low.u32 %v6981
        %v6983 = vextract.high.u32 %v6981
        %v6984 = vmul.u32 %v6977, %v6968
        %v6985 = vadd.s32 %v6980, %v6982
        %vm6986 = vc.u32 %v6980, %v6982
        %v6987 = vadd.s32 %v6983, 1
        %v6988 = vsel %vm6986, %v6987, %v6983
        %v6989 = vadd.s32 %v6984, %v6988
        %v6990 = vadd.s32 %v6989, 536870912
        %v6991 = vshrl.u32 %v6990, 30
        %v6992 = vshll.u32 %v6991, 30
        %v6993 = vsub.s32 %v6989, %v6992
        %vm6994 = vcmp.lt.s32.totalorder %v6993, 0
        %v6995 = vsub.s32 0, %v6993
        %v6996 = vsel %vm6994, %v6995, %v6993
        %v6997 = vclz %v6996
        %v6998 = vsub.s32 %v6997, 2
        %vm6999 = vcmp.gt.s32.totalorder 0, %v6998
        %v7000 = vsel %vm6999, 0, %v6998
        %v7001 = vsub.s32 32, %v7000
        %v7002 = vshll.u32 %v6993, %v7000
        %v7003 = vshrl.u32 %v6985, %v7001
        %v7004 = vor.u32 %v7002, %v7003
        %v7005 = vsub.s32 4294967266, %v7000
        %v7006 = vadd.s32 %v7005, 127
        %v7007 = vshll.u32 %v7006, 23
        %v7008 = vor.u32 4788187, %v7007
        %v7009 = vand.u32 2147483647, %v7008
        %v7011 = vcvt.s32.f32 %v7004
        %v7012 = vmul.f32 %v7011, %v7009
        %v7013 = vxor.u32 %v7012, 2147483648
        %v7014 = vsel %vm6931, %v7013, %v7012
        %v7015 = vsub.s32 4, %v6991
        %v7016 = vsel %vm6931, %v7015, %v6991
        %v7017 = vsel %vm6930, %v1643, %v7014
        %v7018 = vsel %vm6930, 0, %v7016
        %v7019 = vcosq.f32.pop %v7017
        %v7020 = vsinq.f32.pop %v7017
        %vm7021 = vweird.f32 %v1643
        %v7022 = vadd.s32 %v7018, 3
        %v7023 = vand.u32 %v7022, 3
        %vm7024 = vcmp.lt.s32.totalorder %v7023, 2
        %vm7025 = vcmp.eq.s32.totalorder %v7023, 0
        %v7026 = vxor.u32 %v7020, 2147483648
        %v7027 = vsel %vm7025, %v7019, %v7026
        %vm7028 = vcmp.eq.s32.totalorder %v7023, 2
        %v7029 = vxor.u32 %v7019, 2147483648
        %v7030 = vsel %vm7028, %v7029, %v7020
        %v7031 = vsel %vm7024, %v7027, %v7030
        %v7032 = vsel %vm7021, nan, %v7031
        %v7033 = vand.u32 2147483647, %v1646
        %vm7034 = vcmp.le.f32.partialorder %v7033, 0.7853982
        %vm7035 = vcmp.lt.s32.totalorder %v1646, 0
        %v7036 = vand.u32 %v1646, 2139095040
        %v7037 = vshrl.u32 %v7036, 23
        %v7038 = vsub.s32 %v7037, 127
        %v7039 = vand.u32 2147483647, %v1646
        %v7040 = vand.u32 %v7039, 8388607
        %v7041 = vor.u32 %v7040, 8388608
        %v7042 = vsub.s32 0, %v7041
        %v7043 = vadd.s32 %v7038, 1
        %vm7044 = vcmp.gt.s32.totalorder %v7043, 0
        %v7045 = vsel %vm7044, %v7043, 0
        %v7046 = vshrl.u32 %v7045, 5
        %v7047 = vand.u32 %v7045, 31
        %v7048 = vsub.s32 32, %v7047
        %v7049 = vshrl.u32 683565275, %v7048
        %v7050 = vshll.u32 683565275, %v7047
        %v7051 = vshrl.u32 2475754826, %v7048
        %v7052 = vor.u32 %v7050, %v7051
        %v7053 = vshll.u32 2475754826, %v7047
        %v7054 = vshrl.u32 2131351028, %v7048
        %v7055 = vor.u32 %v7053, %v7054
        %v7056 = vshll.u32 2131351028, %v7047
        %v7057 = vshrl.u32 2102212464, %v7048
        %v7058 = vor.u32 %v7056, %v7057
        %v7059 = vshll.u32 2102212464, %v7047
        %v7060 = vshrl.u32 920167782, %v7048
        %v7061 = vor.u32 %v7059, %v7060
        %v7062 = vshll.u32 920167782, %v7047
        %v7063 = vshrl.u32 1326507024, %v7048
        %v7064 = vor.u32 %v7062, %v7063
        %vm7065 = vcmp.lt.s32.totalorder %v7046, 1
        %vm7066 = vcmp.lt.s32.totalorder %v7046, 2
        %vm7067 = vcmp.lt.s32.totalorder %v7046, 3
        %vm7068 = vcmp.lt.s32.totalorder %v7046, 4
        %v7069 = vsel %vm7065, %v7049, %v7052
        %v7070 = vsel %vm7068, %v7058, 2102212464
        %v7071 = vsel %vm7067, %v7055, %v7070
        %v7072 = vsel %vm7066, %v7069, %v7071
        %v7073 = vsel %vm7065, %v7052, %v7055
        %v7074 = vsel %vm7068, %v7061, 920167782
        %v7075 = vsel %vm7067, %v7058, %v7074
        %v7076 = vsel %vm7066, %v7073, %v7075
        %v7077 = vsel %vm7065, %v7055, %v7058
        %v7078 = vsel %vm7068, %v7064, 1326507024
        %v7079 = vsel %vm7067, %v7061, %v7078
        %v7080 = vsel %vm7066, %v7077, %v7079
        %v7081 = vshll.u32 %v7041, 8
        %v7082 = vmul.u32.u64.compose %v7081, %v7080
        %v7083 = vextract.low.u32 %v7082
        %v7084 = vextract.high.u32 %v7082
        %v7085 = vmul.u32.u64.compose %v7081, %v7076
        %v7086 = vextract.low.u32 %v7085
        %v7087 = vextract.high.u32 %v7085
        %v7088 = vmul.u32 %v7081, %v7072
        %v7089 = vadd.s32 %v7084, %v7086
        %vm7090 = vc.u32 %v7084, %v7086
        %v7091 = vadd.s32 %v7087, 1
        %v7092 = vsel %vm7090, %v7091, %v7087
        %v7093 = vadd.s32 %v7088, %v7092
        %v7094 = vadd.s32 %v7093, 536870912
        %v7095 = vshrl.u32 %v7094, 30
        %v7096 = vshll.u32 %v7095, 30
        %v7097 = vsub.s32 %v7093, %v7096
        %vm7098 = vcmp.lt.s32.totalorder %v7097, 0
        %v7099 = vsub.s32 0, %v7097
        %v7100 = vsel %vm7098, %v7099, %v7097
        %v7101 = vclz %v7100
        %v7102 = vsub.s32 %v7101, 2
        %vm7103 = vcmp.gt.s32.totalorder 0, %v7102
        %v7104 = vsel %vm7103, 0, %v7102
        %v7105 = vsub.s32 32, %v7104
        %v7106 = vshll.u32 %v7097, %v7104
        %v7107 = vshrl.u32 %v7089, %v7105
        %v7108 = vor.u32 %v7106, %v7107
        %v7109 = vsub.s32 4294967266, %v7104
        %v7110 = vadd.s32 %v7109, 127
        %v7111 = vshll.u32 %v7110, 23
        %v7112 = vor.u32 4788187, %v7111
        %v7113 = vand.u32 2147483647, %v7112
        %v7115 = vcvt.s32.f32 %v7108
        %v7116 = vmul.f32 %v7115, %v7113
        %v7117 = vxor.u32 %v7116, 2147483648
        %v7118 = vsel %vm7035, %v7117, %v7116
        %v7119 = vsub.s32 4, %v7095
        %v7120 = vsel %vm7035, %v7119, %v7095
        %v7121 = vsel %vm7034, %v1646, %v7118
        %v7122 = vsel %vm7034, 0, %v7120
        %v7123 = vcosq.f32.pop %v7121
        %v7124 = vsinq.f32.pop %v7121
        %vm7125 = vweird.f32 %v1646
        %v7126 = vadd.s32 %v7122, 3
        %v7127 = vand.u32 %v7126, 3
        %vm7128 = vcmp.lt.s32.totalorder %v7127, 2
        %vm7129 = vcmp.eq.s32.totalorder %v7127, 0
        %v7130 = vxor.u32 %v7124, 2147483648
        %v7131 = vsel %vm7129, %v7123, %v7130
        %vm7132 = vcmp.eq.s32.totalorder %v7127, 2
        %v7133 = vxor.u32 %v7123, 2147483648
        %v7134 = vsel %vm7132, %v7133, %v7124
        %v7135 = vsel %vm7128, %v7131, %v7134
        %v7136 = vsel %vm7125, nan, %v7135
        %v7137 = vand.u32 2147483647, %v1651
        %vm7138 = vcmp.le.f32.partialorder %v7137, 0.7853982
        %vm7139 = vcmp.lt.s32.totalorder %v1651, 0
        %v7140 = vand.u32 %v1651, 2139095040
        %v7141 = vshrl.u32 %v7140, 23
        %v7142 = vsub.s32 %v7141, 127
        %v7143 = vand.u32 2147483647, %v1651
        %v7144 = vand.u32 %v7143, 8388607
        %v7145 = vor.u32 %v7144, 8388608
        %v7146 = vsub.s32 0, %v7145
        %v7147 = vadd.s32 %v7142, 1
        %vm7148 = vcmp.gt.s32.totalorder %v7147, 0
        %v7149 = vsel %vm7148, %v7147, 0
        %v7150 = vshrl.u32 %v7149, 5
        %v7151 = vand.u32 %v7149, 31
        %v7152 = vsub.s32 32, %v7151
        %v7153 = vshrl.u32 683565275, %v7152
        %v7154 = vshll.u32 683565275, %v7151
        %v7155 = vshrl.u32 2475754826, %v7152
        %v7156 = vor.u32 %v7154, %v7155
        %v7157 = vshll.u32 2475754826, %v7151
        %v7158 = vshrl.u32 2131351028, %v7152
        %v7159 = vor.u32 %v7157, %v7158
        %v7160 = vshll.u32 2131351028, %v7151
        %v7161 = vshrl.u32 2102212464, %v7152
        %v7162 = vor.u32 %v7160, %v7161
        %v7163 = vshll.u32 2102212464, %v7151
        %v7164 = vshrl.u32 920167782, %v7152
        %v7165 = vor.u32 %v7163, %v7164
        %v7166 = vshll.u32 920167782, %v7151
        %v7167 = vshrl.u32 1326507024, %v7152
        %v7168 = vor.u32 %v7166, %v7167
        %vm7169 = vcmp.lt.s32.totalorder %v7150, 1
        %vm7170 = vcmp.lt.s32.totalorder %v7150, 2
        %vm7171 = vcmp.lt.s32.totalorder %v7150, 3
        %vm7172 = vcmp.lt.s32.totalorder %v7150, 4
        %v7173 = vsel %vm7169, %v7153, %v7156
        %v7174 = vsel %vm7172, %v7162, 2102212464
        %v7175 = vsel %vm7171, %v7159, %v7174
        %v7176 = vsel %vm7170, %v7173, %v7175
        %v7177 = vsel %vm7169, %v7156, %v7159
        %v7178 = vsel %vm7172, %v7165, 920167782
        %v7179 = vsel %vm7171, %v7162, %v7178
        %v7180 = vsel %vm7170, %v7177, %v7179
        %v7181 = vsel %vm7169, %v7159, %v7162
        %v7182 = vsel %vm7172, %v7168, 1326507024
        %v7183 = vsel %vm7171, %v7165, %v7182
        %v7184 = vsel %vm7170, %v7181, %v7183
        %v7185 = vshll.u32 %v7145, 8
        %v7186 = vmul.u32.u64.compose %v7185, %v7184
        %v7187 = vextract.low.u32 %v7186
        %v7188 = vextract.high.u32 %v7186
        %v7189 = vmul.u32.u64.compose %v7185, %v7180
        %v7190 = vextract.low.u32 %v7189
        %v7191 = vextract.high.u32 %v7189
        %v7192 = vmul.u32 %v7185, %v7176
        %v7193 = vadd.s32 %v7188, %v7190
        %vm7194 = vc.u32 %v7188, %v7190
        %v7195 = vadd.s32 %v7191, 1
        %v7196 = vsel %vm7194, %v7195, %v7191
        %v7197 = vadd.s32 %v7192, %v7196
        %v7198 = vadd.s32 %v7197, 536870912
        %v7199 = vshrl.u32 %v7198, 30
        %v7200 = vshll.u32 %v7199, 30
        %v7201 = vsub.s32 %v7197, %v7200
        %vm7202 = vcmp.lt.s32.totalorder %v7201, 0
        %v7203 = vsub.s32 0, %v7201
        %v7204 = vsel %vm7202, %v7203, %v7201
        %v7205 = vclz %v7204
        %v7206 = vsub.s32 %v7205, 2
        %vm7207 = vcmp.gt.s32.totalorder 0, %v7206
        %v7208 = vsel %vm7207, 0, %v7206
        %v7209 = vsub.s32 32, %v7208
        %v7210 = vshll.u32 %v7201, %v7208
        %v7211 = vshrl.u32 %v7193, %v7209
        %v7212 = vor.u32 %v7210, %v7211
        %v7213 = vsub.s32 4294967266, %v7208
        %v7214 = vadd.s32 %v7213, 127
        %v7215 = vshll.u32 %v7214, 23
        %v7216 = vor.u32 4788187, %v7215
        %v7217 = vand.u32 2147483647, %v7216
        %v7219 = vcvt.s32.f32 %v7212
        %v7220 = vmul.f32 %v7219, %v7217
        %v7221 = vxor.u32 %v7220, 2147483648
        %v7222 = vsel %vm7139, %v7221, %v7220
        %v7223 = vsub.s32 4, %v7199
        %v7224 = vsel %vm7139, %v7223, %v7199
        %v7225 = vsel %vm7138, %v1651, %v7222
        %v7226 = vsel %vm7138, 0, %v7224
        %v7227 = vcosq.f32.pop %v7225
        %v7228 = vsinq.f32.pop %v7225
        %vm7229 = vweird.f32 %v1651
        %v7230 = vadd.s32 %v7226, 3
        %v7231 = vand.u32 %v7230, 3
        %vm7232 = vcmp.lt.s32.totalorder %v7231, 2
        %vm7233 = vcmp.eq.s32.totalorder %v7231, 0
        %v7234 = vxor.u32 %v7228, 2147483648
        %v7235 = vsel %vm7233, %v7227, %v7234
        %vm7236 = vcmp.eq.s32.totalorder %v7231, 2
        %v7237 = vxor.u32 %v7227, 2147483648
        %v7238 = vsel %vm7236, %v7237, %v7228
        %v7239 = vsel %vm7232, %v7235, %v7238
        %v7240 = vsel %vm7229, nan, %v7239
        %v7241 = vand.u32 2147483647, %v1654
        %vm7242 = vcmp.le.f32.partialorder %v7241, 0.7853982
        %vm7243 = vcmp.lt.s32.totalorder %v1654, 0
        %v7244 = vand.u32 %v1654, 2139095040
        %v7245 = vshrl.u32 %v7244, 23
        %v7246 = vsub.s32 %v7245, 127
        %v7247 = vand.u32 2147483647, %v1654
        %v7248 = vand.u32 %v7247, 8388607
        %v7249 = vor.u32 %v7248, 8388608
        %v7250 = vsub.s32 0, %v7249
        %v7251 = vadd.s32 %v7246, 1
        %vm7252 = vcmp.gt.s32.totalorder %v7251, 0
        %v7253 = vsel %vm7252, %v7251, 0
        %v7254 = vshrl.u32 %v7253, 5
        %v7255 = vand.u32 %v7253, 31
        %v7256 = vsub.s32 32, %v7255
        %v7257 = vshrl.u32 683565275, %v7256
        %v7258 = vshll.u32 683565275, %v7255
        %v7259 = vshrl.u32 2475754826, %v7256
        %v7260 = vor.u32 %v7258, %v7259
        %v7261 = vshll.u32 2475754826, %v7255
        %v7262 = vshrl.u32 2131351028, %v7256
        %v7263 = vor.u32 %v7261, %v7262
        %v7264 = vshll.u32 2131351028, %v7255
        %v7265 = vshrl.u32 2102212464, %v7256
        %v7266 = vor.u32 %v7264, %v7265
        %v7267 = vshll.u32 2102212464, %v7255
        %v7268 = vshrl.u32 920167782, %v7256
        %v7269 = vor.u32 %v7267, %v7268
        %v7270 = vshll.u32 920167782, %v7255
        %v7271 = vshrl.u32 1326507024, %v7256
        %v7272 = vor.u32 %v7270, %v7271
        %vm7273 = vcmp.lt.s32.totalorder %v7254, 1
        %vm7274 = vcmp.lt.s32.totalorder %v7254, 2
        %vm7275 = vcmp.lt.s32.totalorder %v7254, 3
        %vm7276 = vcmp.lt.s32.totalorder %v7254, 4
        %v7277 = vsel %vm7273, %v7257, %v7260
        %v7278 = vsel %vm7276, %v7266, 2102212464
        %v7279 = vsel %vm7275, %v7263, %v7278
        %v7280 = vsel %vm7274, %v7277, %v7279
        %v7281 = vsel %vm7273, %v7260, %v7263
        %v7282 = vsel %vm7276, %v7269, 920167782
        %v7283 = vsel %vm7275, %v7266, %v7282
        %v7284 = vsel %vm7274, %v7281, %v7283
        %v7285 = vsel %vm7273, %v7263, %v7266
        %v7286 = vsel %vm7276, %v7272, 1326507024
        %v7287 = vsel %vm7275, %v7269, %v7286
        %v7288 = vsel %vm7274, %v7285, %v7287
        %v7289 = vshll.u32 %v7249, 8
        %v7290 = vmul.u32.u64.compose %v7289, %v7288
        %v7291 = vextract.low.u32 %v7290
        %v7292 = vextract.high.u32 %v7290
        %v7293 = vmul.u32.u64.compose %v7289, %v7284
        %v7294 = vextract.low.u32 %v7293
        %v7295 = vextract.high.u32 %v7293
        %v7296 = vmul.u32 %v7289, %v7280
        %v7297 = vadd.s32 %v7292, %v7294
        %vm7298 = vc.u32 %v7292, %v7294
        %v7299 = vadd.s32 %v7295, 1
        %v7300 = vsel %vm7298, %v7299, %v7295
        %v7301 = vadd.s32 %v7296, %v7300
        %v7302 = vadd.s32 %v7301, 536870912
        %v7303 = vshrl.u32 %v7302, 30
        %v7304 = vshll.u32 %v7303, 30
        %v7305 = vsub.s32 %v7301, %v7304
        %vm7306 = vcmp.lt.s32.totalorder %v7305, 0
        %v7307 = vsub.s32 0, %v7305
        %v7308 = vsel %vm7306, %v7307, %v7305
        %v7309 = vclz %v7308
        %v7310 = vsub.s32 %v7309, 2
        %vm7311 = vcmp.gt.s32.totalorder 0, %v7310
        %v7312 = vsel %vm7311, 0, %v7310
        %v7313 = vsub.s32 32, %v7312
        %v7314 = vshll.u32 %v7305, %v7312
        %v7315 = vshrl.u32 %v7297, %v7313
        %v7316 = vor.u32 %v7314, %v7315
        %v7317 = vsub.s32 4294967266, %v7312
        %v7318 = vadd.s32 %v7317, 127
        %v7319 = vshll.u32 %v7318, 23
        %v7320 = vor.u32 4788187, %v7319
        %v7321 = vand.u32 2147483647, %v7320
        %v7323 = vcvt.s32.f32 %v7316
        %v7324 = vmul.f32 %v7323, %v7321
        %v7325 = vxor.u32 %v7324, 2147483648
        %v7326 = vsel %vm7243, %v7325, %v7324
        %v7327 = vsub.s32 4, %v7303
        %v7328 = vsel %vm7243, %v7327, %v7303
        %v7329 = vsel %vm7242, %v1654, %v7326
        %v7330 = vsel %vm7242, 0, %v7328
        %v7331 = vcosq.f32.pop %v7329
        %v7332 = vsinq.f32.pop %v7329
        %vm7333 = vweird.f32 %v1654
        %v7334 = vadd.s32 %v7330, 3
        %v7335 = vand.u32 %v7334, 3
        %vm7336 = vcmp.lt.s32.totalorder %v7335, 2
        %vm7337 = vcmp.eq.s32.totalorder %v7335, 0
        %v7338 = vxor.u32 %v7332, 2147483648
        %v7339 = vsel %vm7337, %v7331, %v7338
        %vm7340 = vcmp.eq.s32.totalorder %v7335, 2
        %v7341 = vxor.u32 %v7331, 2147483648
        %v7342 = vsel %vm7340, %v7341, %v7332
        %v7343 = vsel %vm7336, %v7339, %v7342
        %v7344 = vsel %vm7333, nan, %v7343
        %v7345 = vand.u32 2147483647, %v1659
        %vm7346 = vcmp.le.f32.partialorder %v7345, 0.7853982
        %vm7347 = vcmp.lt.s32.totalorder %v1659, 0
        %v7348 = vand.u32 %v1659, 2139095040
        %v7349 = vshrl.u32 %v7348, 23
        %v7350 = vsub.s32 %v7349, 127
        %v7351 = vand.u32 2147483647, %v1659
        %v7352 = vand.u32 %v7351, 8388607
        %v7353 = vor.u32 %v7352, 8388608
        %v7354 = vsub.s32 0, %v7353
        %v7355 = vadd.s32 %v7350, 1
        %vm7356 = vcmp.gt.s32.totalorder %v7355, 0
        %v7357 = vsel %vm7356, %v7355, 0
        %v7358 = vshrl.u32 %v7357, 5
        %v7359 = vand.u32 %v7357, 31
        %v7360 = vsub.s32 32, %v7359
        %v7361 = vshrl.u32 683565275, %v7360
        %v7362 = vshll.u32 683565275, %v7359
        %v7363 = vshrl.u32 2475754826, %v7360
        %v7364 = vor.u32 %v7362, %v7363
        %v7365 = vshll.u32 2475754826, %v7359
        %v7366 = vshrl.u32 2131351028, %v7360
        %v7367 = vor.u32 %v7365, %v7366
        %v7368 = vshll.u32 2131351028, %v7359
        %v7369 = vshrl.u32 2102212464, %v7360
        %v7370 = vor.u32 %v7368, %v7369
        %v7371 = vshll.u32 2102212464, %v7359
        %v7372 = vshrl.u32 920167782, %v7360
        %v7373 = vor.u32 %v7371, %v7372
        %v7374 = vshll.u32 920167782, %v7359
        %v7375 = vshrl.u32 1326507024, %v7360
        %v7376 = vor.u32 %v7374, %v7375
        %vm7377 = vcmp.lt.s32.totalorder %v7358, 1
        %vm7378 = vcmp.lt.s32.totalorder %v7358, 2
        %vm7379 = vcmp.lt.s32.totalorder %v7358, 3
        %vm7380 = vcmp.lt.s32.totalorder %v7358, 4
        %v7381 = vsel %vm7377, %v7361, %v7364
        %v7382 = vsel %vm7380, %v7370, 2102212464
        %v7383 = vsel %vm7379, %v7367, %v7382
        %v7384 = vsel %vm7378, %v7381, %v7383
        %v7385 = vsel %vm7377, %v7364, %v7367
        %v7386 = vsel %vm7380, %v7373, 920167782
        %v7387 = vsel %vm7379, %v7370, %v7386
        %v7388 = vsel %vm7378, %v7385, %v7387
        %v7389 = vsel %vm7377, %v7367, %v7370
        %v7390 = vsel %vm7380, %v7376, 1326507024
        %v7391 = vsel %vm7379, %v7373, %v7390
        %v7392 = vsel %vm7378, %v7389, %v7391
        %v7393 = vshll.u32 %v7353, 8
        %v7394 = vmul.u32.u64.compose %v7393, %v7392
        %v7395 = vextract.low.u32 %v7394
        %v7396 = vextract.high.u32 %v7394
        %v7397 = vmul.u32.u64.compose %v7393, %v7388
        %v7398 = vextract.low.u32 %v7397
        %v7399 = vextract.high.u32 %v7397
        %v7400 = vmul.u32 %v7393, %v7384
        %v7401 = vadd.s32 %v7396, %v7398
        %vm7402 = vc.u32 %v7396, %v7398
        %v7403 = vadd.s32 %v7399, 1
        %v7404 = vsel %vm7402, %v7403, %v7399
        %v7405 = vadd.s32 %v7400, %v7404
        %v7406 = vadd.s32 %v7405, 536870912
        %v7407 = vshrl.u32 %v7406, 30
        %v7408 = vshll.u32 %v7407, 30
        %v7409 = vsub.s32 %v7405, %v7408
        %vm7410 = vcmp.lt.s32.totalorder %v7409, 0
        %v7411 = vsub.s32 0, %v7409
        %v7412 = vsel %vm7410, %v7411, %v7409
        %v7413 = vclz %v7412
        %v7414 = vsub.s32 %v7413, 2
        %vm7415 = vcmp.gt.s32.totalorder 0, %v7414
        %v7416 = vsel %vm7415, 0, %v7414
        %v7417 = vsub.s32 32, %v7416
        %v7418 = vshll.u32 %v7409, %v7416
        %v7419 = vshrl.u32 %v7401, %v7417
        %v7420 = vor.u32 %v7418, %v7419
        %v7421 = vsub.s32 4294967266, %v7416
        %v7422 = vadd.s32 %v7421, 127
        %v7423 = vshll.u32 %v7422, 23
        %v7424 = vor.u32 4788187, %v7423
        %v7425 = vand.u32 2147483647, %v7424
        %v7427 = vcvt.s32.f32 %v7420
        %v7428 = vmul.f32 %v7427, %v7425
        %v7429 = vxor.u32 %v7428, 2147483648
        %v7430 = vsel %vm7347, %v7429, %v7428
        %v7431 = vsub.s32 4, %v7407
        %v7432 = vsel %vm7347, %v7431, %v7407
        %v7433 = vsel %vm7346, %v1659, %v7430
        %v7434 = vsel %vm7346, 0, %v7432
        %v7435 = vcosq.f32.pop %v7433
        %v7436 = vsinq.f32.pop %v7433
        %vm7437 = vweird.f32 %v1659
        %v7438 = vadd.s32 %v7434, 3
        %v7439 = vand.u32 %v7438, 3
        %vm7440 = vcmp.lt.s32.totalorder %v7439, 2
        %vm7441 = vcmp.eq.s32.totalorder %v7439, 0
        %v7442 = vxor.u32 %v7436, 2147483648
        %v7443 = vsel %vm7441, %v7435, %v7442
        %vm7444 = vcmp.eq.s32.totalorder %v7439, 2
        %v7445 = vxor.u32 %v7435, 2147483648
        %v7446 = vsel %vm7444, %v7445, %v7436
        %v7447 = vsel %vm7440, %v7443, %v7446
        %v7448 = vsel %vm7437, nan, %v7447
        %v7449 = vand.u32 2147483647, %v1662
        %vm7450 = vcmp.le.f32.partialorder %v7449, 0.7853982
        %vm7451 = vcmp.lt.s32.totalorder %v1662, 0
        %v7452 = vand.u32 %v1662, 2139095040
        %v7453 = vshrl.u32 %v7452, 23
        %v7454 = vsub.s32 %v7453, 127
        %v7455 = vand.u32 2147483647, %v1662
        %v7456 = vand.u32 %v7455, 8388607
        %v7457 = vor.u32 %v7456, 8388608
        %v7458 = vsub.s32 0, %v7457
        %v7459 = vadd.s32 %v7454, 1
        %vm7460 = vcmp.gt.s32.totalorder %v7459, 0
        %v7461 = vsel %vm7460, %v7459, 0
        %v7462 = vshrl.u32 %v7461, 5
        %v7463 = vand.u32 %v7461, 31
        %v7464 = vsub.s32 32, %v7463
        %v7465 = vshrl.u32 683565275, %v7464
        %v7466 = vshll.u32 683565275, %v7463
        %v7467 = vshrl.u32 2475754826, %v7464
        %v7468 = vor.u32 %v7466, %v7467
        %v7469 = vshll.u32 2475754826, %v7463
        %v7470 = vshrl.u32 2131351028, %v7464
        %v7471 = vor.u32 %v7469, %v7470
        %v7472 = vshll.u32 2131351028, %v7463
        %v7473 = vshrl.u32 2102212464, %v7464
        %v7474 = vor.u32 %v7472, %v7473
        %v7475 = vshll.u32 2102212464, %v7463
        %v7476 = vshrl.u32 920167782, %v7464
        %v7477 = vor.u32 %v7475, %v7476
        %v7478 = vshll.u32 920167782, %v7463
        %v7479 = vshrl.u32 1326507024, %v7464
        %v7480 = vor.u32 %v7478, %v7479
        %vm7481 = vcmp.lt.s32.totalorder %v7462, 1
        %vm7482 = vcmp.lt.s32.totalorder %v7462, 2
        %vm7483 = vcmp.lt.s32.totalorder %v7462, 3
        %vm7484 = vcmp.lt.s32.totalorder %v7462, 4
        %v7485 = vsel %vm7481, %v7465, %v7468
        %v7486 = vsel %vm7484, %v7474, 2102212464
        %v7487 = vsel %vm7483, %v7471, %v7486
        %v7488 = vsel %vm7482, %v7485, %v7487
        %v7489 = vsel %vm7481, %v7468, %v7471
        %v7490 = vsel %vm7484, %v7477, 920167782
        %v7491 = vsel %vm7483, %v7474, %v7490
        %v7492 = vsel %vm7482, %v7489, %v7491
        %v7493 = vsel %vm7481, %v7471, %v7474
        %v7494 = vsel %vm7484, %v7480, 1326507024
        %v7495 = vsel %vm7483, %v7477, %v7494
        %v7496 = vsel %vm7482, %v7493, %v7495
        %v7497 = vshll.u32 %v7457, 8
        %v7498 = vmul.u32.u64.compose %v7497, %v7496
        %v7499 = vextract.low.u32 %v7498
        %v7500 = vextract.high.u32 %v7498
        %v7501 = vmul.u32.u64.compose %v7497, %v7492
        %v7502 = vextract.low.u32 %v7501
        %v7503 = vextract.high.u32 %v7501
        %v7504 = vmul.u32 %v7497, %v7488
        %v7505 = vadd.s32 %v7500, %v7502
        %vm7506 = vc.u32 %v7500, %v7502
        %v7507 = vadd.s32 %v7503, 1
        %v7508 = vsel %vm7506, %v7507, %v7503
        %v7509 = vadd.s32 %v7504, %v7508
        %v7510 = vadd.s32 %v7509, 536870912
        %v7511 = vshrl.u32 %v7510, 30
        %v7512 = vshll.u32 %v7511, 30
        %v7513 = vsub.s32 %v7509, %v7512
        %vm7514 = vcmp.lt.s32.totalorder %v7513, 0
        %v7515 = vsub.s32 0, %v7513
        %v7516 = vsel %vm7514, %v7515, %v7513
        %v7517 = vclz %v7516
        %v7518 = vsub.s32 %v7517, 2
        %vm7519 = vcmp.gt.s32.totalorder 0, %v7518
        %v7520 = vsel %vm7519, 0, %v7518
        %v7521 = vsub.s32 32, %v7520
        %v7522 = vshll.u32 %v7513, %v7520
        %v7523 = vshrl.u32 %v7505, %v7521
        %v7524 = vor.u32 %v7522, %v7523
        %v7525 = vsub.s32 4294967266, %v7520
        %v7526 = vadd.s32 %v7525, 127
        %v7527 = vshll.u32 %v7526, 23
        %v7528 = vor.u32 4788187, %v7527
        %v7529 = vand.u32 2147483647, %v7528
        %v7531 = vcvt.s32.f32 %v7524
        %v7532 = vmul.f32 %v7531, %v7529
        %v7533 = vxor.u32 %v7532, 2147483648
        %v7534 = vsel %vm7451, %v7533, %v7532
        %v7535 = vsub.s32 4, %v7511
        %v7536 = vsel %vm7451, %v7535, %v7511
        %v7537 = vsel %vm7450, %v1662, %v7534
        %v7538 = vsel %vm7450, 0, %v7536
        %v7539 = vcosq.f32.pop %v7537
        %v7540 = vsinq.f32.pop %v7537
        %vm7541 = vweird.f32 %v1662
        %v7542 = vadd.s32 %v7538, 3
        %v7543 = vand.u32 %v7542, 3
        %vm7544 = vcmp.lt.s32.totalorder %v7543, 2
        %vm7545 = vcmp.eq.s32.totalorder %v7543, 0
        %v7546 = vxor.u32 %v7540, 2147483648
        %v7547 = vsel %vm7545, %v7539, %v7546
        %vm7548 = vcmp.eq.s32.totalorder %v7543, 2
        %v7549 = vxor.u32 %v7539, 2147483648
        %v7550 = vsel %vm7548, %v7549, %v7540
        %v7551 = vsel %vm7544, %v7547, %v7550
        %v7552 = vsel %vm7541, nan, %v7551
        %v7553 = vand.u32 2147483647, %v1667
        %vm7554 = vcmp.le.f32.partialorder %v7553, 0.7853982
        %vm7555 = vcmp.lt.s32.totalorder %v1667, 0
        %v7556 = vand.u32 %v1667, 2139095040
        %v7557 = vshrl.u32 %v7556, 23
        %v7558 = vsub.s32 %v7557, 127
        %v7559 = vand.u32 2147483647, %v1667
        %v7560 = vand.u32 %v7559, 8388607
        %v7561 = vor.u32 %v7560, 8388608
        %v7562 = vsub.s32 0, %v7561
        %v7563 = vadd.s32 %v7558, 1
        %vm7564 = vcmp.gt.s32.totalorder %v7563, 0
        %v7565 = vsel %vm7564, %v7563, 0
        %v7566 = vshrl.u32 %v7565, 5
        %v7567 = vand.u32 %v7565, 31
        %v7568 = vsub.s32 32, %v7567
        %v7569 = vshrl.u32 683565275, %v7568
        %v7570 = vshll.u32 683565275, %v7567
        %v7571 = vshrl.u32 2475754826, %v7568
        %v7572 = vor.u32 %v7570, %v7571
        %v7573 = vshll.u32 2475754826, %v7567
        %v7574 = vshrl.u32 2131351028, %v7568
        %v7575 = vor.u32 %v7573, %v7574
        %v7576 = vshll.u32 2131351028, %v7567
        %v7577 = vshrl.u32 2102212464, %v7568
        %v7578 = vor.u32 %v7576, %v7577
        %v7579 = vshll.u32 2102212464, %v7567
        %v7580 = vshrl.u32 920167782, %v7568
        %v7581 = vor.u32 %v7579, %v7580
        %v7582 = vshll.u32 920167782, %v7567
        %v7583 = vshrl.u32 1326507024, %v7568
        %v7584 = vor.u32 %v7582, %v7583
        %vm7585 = vcmp.lt.s32.totalorder %v7566, 1
        %vm7586 = vcmp.lt.s32.totalorder %v7566, 2
        %vm7587 = vcmp.lt.s32.totalorder %v7566, 3
        %vm7588 = vcmp.lt.s32.totalorder %v7566, 4
        %v7589 = vsel %vm7585, %v7569, %v7572
        %v7590 = vsel %vm7588, %v7578, 2102212464
        %v7591 = vsel %vm7587, %v7575, %v7590
        %v7592 = vsel %vm7586, %v7589, %v7591
        %v7593 = vsel %vm7585, %v7572, %v7575
        %v7594 = vsel %vm7588, %v7581, 920167782
        %v7595 = vsel %vm7587, %v7578, %v7594
        %v7596 = vsel %vm7586, %v7593, %v7595
        %v7597 = vsel %vm7585, %v7575, %v7578
        %v7598 = vsel %vm7588, %v7584, 1326507024
        %v7599 = vsel %vm7587, %v7581, %v7598
        %v7600 = vsel %vm7586, %v7597, %v7599
        %v7601 = vshll.u32 %v7561, 8
        %v7602 = vmul.u32.u64.compose %v7601, %v7600
        %v7603 = vextract.low.u32 %v7602
        %v7604 = vextract.high.u32 %v7602
        %v7605 = vmul.u32.u64.compose %v7601, %v7596
        %v7606 = vextract.low.u32 %v7605
        %v7607 = vextract.high.u32 %v7605
        %v7608 = vmul.u32 %v7601, %v7592
        %v7609 = vadd.s32 %v7604, %v7606
        %vm7610 = vc.u32 %v7604, %v7606
        %v7611 = vadd.s32 %v7607, 1
        %v7612 = vsel %vm7610, %v7611, %v7607
        %v7613 = vadd.s32 %v7608, %v7612
        %v7614 = vadd.s32 %v7613, 536870912
        %v7615 = vshrl.u32 %v7614, 30
        %v7616 = vshll.u32 %v7615, 30
        %v7617 = vsub.s32 %v7613, %v7616
        %vm7618 = vcmp.lt.s32.totalorder %v7617, 0
        %v7619 = vsub.s32 0, %v7617
        %v7620 = vsel %vm7618, %v7619, %v7617
        %v7621 = vclz %v7620
        %v7622 = vsub.s32 %v7621, 2
        %vm7623 = vcmp.gt.s32.totalorder 0, %v7622
        %v7624 = vsel %vm7623, 0, %v7622
        %v7625 = vsub.s32 32, %v7624
        %v7626 = vshll.u32 %v7617, %v7624
        %v7627 = vshrl.u32 %v7609, %v7625
        %v7628 = vor.u32 %v7626, %v7627
        %v7629 = vsub.s32 4294967266, %v7624
        %v7630 = vadd.s32 %v7629, 127
        %v7631 = vshll.u32 %v7630, 23
        %v7632 = vor.u32 4788187, %v7631
        %v7633 = vand.u32 2147483647, %v7632
        %v7635 = vcvt.s32.f32 %v7628
        %v7636 = vmul.f32 %v7635, %v7633
        %v7637 = vxor.u32 %v7636, 2147483648
        %v7638 = vsel %vm7555, %v7637, %v7636
        %v7639 = vsub.s32 4, %v7615
        %v7640 = vsel %vm7555, %v7639, %v7615
        %v7641 = vsel %vm7554, %v1667, %v7638
        %v7642 = vsel %vm7554, 0, %v7640
        %v7643 = vcosq.f32.pop %v7641
        %v7644 = vsinq.f32.pop %v7641
        %vm7645 = vweird.f32 %v1667
        %v7646 = vadd.s32 %v7642, 3
        %v7647 = vand.u32 %v7646, 3
        %vm7648 = vcmp.lt.s32.totalorder %v7647, 2
        %vm7649 = vcmp.eq.s32.totalorder %v7647, 0
        %v7650 = vxor.u32 %v7644, 2147483648
        %v7651 = vsel %vm7649, %v7643, %v7650
        %vm7652 = vcmp.eq.s32.totalorder %v7647, 2
        %v7653 = vxor.u32 %v7643, 2147483648
        %v7654 = vsel %vm7652, %v7653, %v7644
        %v7655 = vsel %vm7648, %v7651, %v7654
        %v7656 = vsel %vm7645, nan, %v7655
        %v7657 = vand.u32 2147483647, %v1670
        %vm7658 = vcmp.le.f32.partialorder %v7657, 0.7853982
        %vm7659 = vcmp.lt.s32.totalorder %v1670, 0
        %v7660 = vand.u32 %v1670, 2139095040
        %v7661 = vshrl.u32 %v7660, 23
        %v7662 = vsub.s32 %v7661, 127
        %v7663 = vand.u32 2147483647, %v1670
        %v7664 = vand.u32 %v7663, 8388607
        %v7665 = vor.u32 %v7664, 8388608
        %v7666 = vsub.s32 0, %v7665
        %v7667 = vadd.s32 %v7662, 1
        %vm7668 = vcmp.gt.s32.totalorder %v7667, 0
        %v7669 = vsel %vm7668, %v7667, 0
        %v7670 = vshrl.u32 %v7669, 5
        %v7671 = vand.u32 %v7669, 31
        %v7672 = vsub.s32 32, %v7671
        %v7673 = vshrl.u32 683565275, %v7672
        %v7674 = vshll.u32 683565275, %v7671
        %v7675 = vshrl.u32 2475754826, %v7672
        %v7676 = vor.u32 %v7674, %v7675
        %v7677 = vshll.u32 2475754826, %v7671
        %v7678 = vshrl.u32 2131351028, %v7672
        %v7679 = vor.u32 %v7677, %v7678
        %v7680 = vshll.u32 2131351028, %v7671
        %v7681 = vshrl.u32 2102212464, %v7672
        %v7682 = vor.u32 %v7680, %v7681
        %v7683 = vshll.u32 2102212464, %v7671
        %v7684 = vshrl.u32 920167782, %v7672
        %v7685 = vor.u32 %v7683, %v7684
        %v7686 = vshll.u32 920167782, %v7671
        %v7687 = vshrl.u32 1326507024, %v7672
        %v7688 = vor.u32 %v7686, %v7687
        %vm7689 = vcmp.lt.s32.totalorder %v7670, 1
        %vm7690 = vcmp.lt.s32.totalorder %v7670, 2
        %vm7691 = vcmp.lt.s32.totalorder %v7670, 3
        %vm7692 = vcmp.lt.s32.totalorder %v7670, 4
        %v7693 = vsel %vm7689, %v7673, %v7676
        %v7694 = vsel %vm7692, %v7682, 2102212464
        %v7695 = vsel %vm7691, %v7679, %v7694
        %v7696 = vsel %vm7690, %v7693, %v7695
        %v7697 = vsel %vm7689, %v7676, %v7679
        %v7698 = vsel %vm7692, %v7685, 920167782
        %v7699 = vsel %vm7691, %v7682, %v7698
        %v7700 = vsel %vm7690, %v7697, %v7699
        %v7701 = vsel %vm7689, %v7679, %v7682
        %v7702 = vsel %vm7692, %v7688, 1326507024
        %v7703 = vsel %vm7691, %v7685, %v7702
        %v7704 = vsel %vm7690, %v7701, %v7703
        %v7705 = vshll.u32 %v7665, 8
        %v7706 = vmul.u32.u64.compose %v7705, %v7704
        %v7707 = vextract.low.u32 %v7706
        %v7708 = vextract.high.u32 %v7706
        %v7709 = vmul.u32.u64.compose %v7705, %v7700
        %v7710 = vextract.low.u32 %v7709
        %v7711 = vextract.high.u32 %v7709
        %v7712 = vmul.u32 %v7705, %v7696
        %v7713 = vadd.s32 %v7708, %v7710
        %vm7714 = vc.u32 %v7708, %v7710
        %v7715 = vadd.s32 %v7711, 1
        %v7716 = vsel %vm7714, %v7715, %v7711
        %v7717 = vadd.s32 %v7712, %v7716
        %v7718 = vadd.s32 %v7717, 536870912
        %v7719 = vshrl.u32 %v7718, 30
        %v7720 = vshll.u32 %v7719, 30
        %v7721 = vsub.s32 %v7717, %v7720
        %vm7722 = vcmp.lt.s32.totalorder %v7721, 0
        %v7723 = vsub.s32 0, %v7721
        %v7724 = vsel %vm7722, %v7723, %v7721
        %v7725 = vclz %v7724
        %v7726 = vsub.s32 %v7725, 2
        %vm7727 = vcmp.gt.s32.totalorder 0, %v7726
        %v7728 = vsel %vm7727, 0, %v7726
        %v7729 = vsub.s32 32, %v7728
        %v7730 = vshll.u32 %v7721, %v7728
        %v7731 = vshrl.u32 %v7713, %v7729
        %v7732 = vor.u32 %v7730, %v7731
        %v7733 = vsub.s32 4294967266, %v7728
        %v7734 = vadd.s32 %v7733, 127
        %v7735 = vshll.u32 %v7734, 23
        %v7736 = vor.u32 4788187, %v7735
        %v7737 = vand.u32 2147483647, %v7736
        %v7739 = vcvt.s32.f32 %v7732
        %v7740 = vmul.f32 %v7739, %v7737
        %v7741 = vxor.u32 %v7740, 2147483648
        %v7742 = vsel %vm7659, %v7741, %v7740
        %v7743 = vsub.s32 4, %v7719
        %v7744 = vsel %vm7659, %v7743, %v7719
        %v7745 = vsel %vm7658, %v1670, %v7742
        %v7746 = vsel %vm7658, 0, %v7744
        %v7747 = vcosq.f32.pop %v7745
        %v7748 = vsinq.f32.pop %v7745
        %vm7749 = vweird.f32 %v1670
        %v7750 = vadd.s32 %v7746, 3
        %v7751 = vand.u32 %v7750, 3
        %vm7752 = vcmp.lt.s32.totalorder %v7751, 2
        %vm7753 = vcmp.eq.s32.totalorder %v7751, 0
        %v7754 = vxor.u32 %v7748, 2147483648
        %v7755 = vsel %vm7753, %v7747, %v7754
        %vm7756 = vcmp.eq.s32.totalorder %v7751, 2
        %v7757 = vxor.u32 %v7747, 2147483648
        %v7758 = vsel %vm7756, %v7757, %v7748
        %v7759 = vsel %vm7752, %v7755, %v7758
        %v7760 = vsel %vm7749, nan, %v7759
        %v7761 = vand.u32 2147483647, %v1675
        %vm7762 = vcmp.le.f32.partialorder %v7761, 0.7853982
        %vm7763 = vcmp.lt.s32.totalorder %v1675, 0
        %v7764 = vand.u32 %v1675, 2139095040
        %v7765 = vshrl.u32 %v7764, 23
        %v7766 = vsub.s32 %v7765, 127
        %v7767 = vand.u32 2147483647, %v1675
        %v7768 = vand.u32 %v7767, 8388607
        %v7769 = vor.u32 %v7768, 8388608
        %v7770 = vsub.s32 0, %v7769
        %v7771 = vadd.s32 %v7766, 1
        %vm7772 = vcmp.gt.s32.totalorder %v7771, 0
        %v7773 = vsel %vm7772, %v7771, 0
        %v7774 = vshrl.u32 %v7773, 5
        %v7775 = vand.u32 %v7773, 31
        %v7776 = vsub.s32 32, %v7775
        %v7777 = vshrl.u32 683565275, %v7776
        %v7778 = vshll.u32 683565275, %v7775
        %v7779 = vshrl.u32 2475754826, %v7776
        %v7780 = vor.u32 %v7778, %v7779
        %v7781 = vshll.u32 2475754826, %v7775
        %v7782 = vshrl.u32 2131351028, %v7776
        %v7783 = vor.u32 %v7781, %v7782
        %v7784 = vshll.u32 2131351028, %v7775
        %v7785 = vshrl.u32 2102212464, %v7776
        %v7786 = vor.u32 %v7784, %v7785
        %v7787 = vshll.u32 2102212464, %v7775
        %v7788 = vshrl.u32 920167782, %v7776
        %v7789 = vor.u32 %v7787, %v7788
        %v7790 = vshll.u32 920167782, %v7775
        %v7791 = vshrl.u32 1326507024, %v7776
        %v7792 = vor.u32 %v7790, %v7791
        %vm7793 = vcmp.lt.s32.totalorder %v7774, 1
        %vm7794 = vcmp.lt.s32.totalorder %v7774, 2
        %vm7795 = vcmp.lt.s32.totalorder %v7774, 3
        %vm7796 = vcmp.lt.s32.totalorder %v7774, 4
        %v7797 = vsel %vm7793, %v7777, %v7780
        %v7798 = vsel %vm7796, %v7786, 2102212464
        %v7799 = vsel %vm7795, %v7783, %v7798
        %v7800 = vsel %vm7794, %v7797, %v7799
        %v7801 = vsel %vm7793, %v7780, %v7783
        %v7802 = vsel %vm7796, %v7789, 920167782
        %v7803 = vsel %vm7795, %v7786, %v7802
        %v7804 = vsel %vm7794, %v7801, %v7803
        %v7805 = vsel %vm7793, %v7783, %v7786
        %v7806 = vsel %vm7796, %v7792, 1326507024
        %v7807 = vsel %vm7795, %v7789, %v7806
        %v7808 = vsel %vm7794, %v7805, %v7807
        %v7809 = vshll.u32 %v7769, 8
        %v7810 = vmul.u32.u64.compose %v7809, %v7808
        %v7811 = vextract.low.u32 %v7810
        %v7812 = vextract.high.u32 %v7810
        %v7813 = vmul.u32.u64.compose %v7809, %v7804
        %v7814 = vextract.low.u32 %v7813
        %v7815 = vextract.high.u32 %v7813
        %v7816 = vmul.u32 %v7809, %v7800
        %v7817 = vadd.s32 %v7812, %v7814
        %vm7818 = vc.u32 %v7812, %v7814
        %v7819 = vadd.s32 %v7815, 1
        %v7820 = vsel %vm7818, %v7819, %v7815
        %v7821 = vadd.s32 %v7816, %v7820
        %v7822 = vadd.s32 %v7821, 536870912
        %v7823 = vshrl.u32 %v7822, 30
        %v7824 = vshll.u32 %v7823, 30
        %v7825 = vsub.s32 %v7821, %v7824
        %vm7826 = vcmp.lt.s32.totalorder %v7825, 0
        %v7827 = vsub.s32 0, %v7825
        %v7828 = vsel %vm7826, %v7827, %v7825
        %v7829 = vclz %v7828
        %v7830 = vsub.s32 %v7829, 2
        %vm7831 = vcmp.gt.s32.totalorder 0, %v7830
        %v7832 = vsel %vm7831, 0, %v7830
        %v7833 = vsub.s32 32, %v7832
        %v7834 = vshll.u32 %v7825, %v7832
        %v7835 = vshrl.u32 %v7817, %v7833
        %v7836 = vor.u32 %v7834, %v7835
        %v7837 = vsub.s32 4294967266, %v7832
        %v7838 = vadd.s32 %v7837, 127
        %v7839 = vshll.u32 %v7838, 23
        %v7840 = vor.u32 4788187, %v7839
        %v7841 = vand.u32 2147483647, %v7840
        %v7843 = vcvt.s32.f32 %v7836
        %v7844 = vmul.f32 %v7843, %v7841
        %v7845 = vxor.u32 %v7844, 2147483648
        %v7846 = vsel %vm7763, %v7845, %v7844
        %v7847 = vsub.s32 4, %v7823
        %v7848 = vsel %vm7763, %v7847, %v7823
        %v7849 = vsel %vm7762, %v1675, %v7846
        %v7850 = vsel %vm7762, 0, %v7848
        %v7851 = vcosq.f32.pop %v7849
        %v7852 = vsinq.f32.pop %v7849
        %vm7853 = vweird.f32 %v1675
        %v7854 = vadd.s32 %v7850, 3
        %v7855 = vand.u32 %v7854, 3
        %vm7856 = vcmp.lt.s32.totalorder %v7855, 2
        %vm7857 = vcmp.eq.s32.totalorder %v7855, 0
        %v7858 = vxor.u32 %v7852, 2147483648
        %v7859 = vsel %vm7857, %v7851, %v7858
        %vm7860 = vcmp.eq.s32.totalorder %v7855, 2
        %v7861 = vxor.u32 %v7851, 2147483648
        %v7862 = vsel %vm7860, %v7861, %v7852
        %v7863 = vsel %vm7856, %v7859, %v7862
        %v7864 = vsel %vm7853, nan, %v7863
        %v7865 = vand.u32 2147483647, %v1678
        %vm7866 = vcmp.le.f32.partialorder %v7865, 0.7853982
        %vm7867 = vcmp.lt.s32.totalorder %v1678, 0
        %v7868 = vand.u32 %v1678, 2139095040
        %v7869 = vshrl.u32 %v7868, 23
        %v7870 = vsub.s32 %v7869, 127
        %v7871 = vand.u32 2147483647, %v1678
        %v7872 = vand.u32 %v7871, 8388607
        %v7873 = vor.u32 %v7872, 8388608
        %v7874 = vsub.s32 0, %v7873
        %v7875 = vadd.s32 %v7870, 1
        %vm7876 = vcmp.gt.s32.totalorder %v7875, 0
        %v7877 = vsel %vm7876, %v7875, 0
        %v7878 = vshrl.u32 %v7877, 5
        %v7879 = vand.u32 %v7877, 31
        %v7880 = vsub.s32 32, %v7879
        %v7881 = vshrl.u32 683565275, %v7880
        %v7882 = vshll.u32 683565275, %v7879
        %v7883 = vshrl.u32 2475754826, %v7880
        %v7884 = vor.u32 %v7882, %v7883
        %v7885 = vshll.u32 2475754826, %v7879
        %v7886 = vshrl.u32 2131351028, %v7880
        %v7887 = vor.u32 %v7885, %v7886
        %v7888 = vshll.u32 2131351028, %v7879
        %v7889 = vshrl.u32 2102212464, %v7880
        %v7890 = vor.u32 %v7888, %v7889
        %v7891 = vshll.u32 2102212464, %v7879
        %v7892 = vshrl.u32 920167782, %v7880
        %v7893 = vor.u32 %v7891, %v7892
        %v7894 = vshll.u32 920167782, %v7879
        %v7895 = vshrl.u32 1326507024, %v7880
        %v7896 = vor.u32 %v7894, %v7895
        %vm7897 = vcmp.lt.s32.totalorder %v7878, 1
        %vm7898 = vcmp.lt.s32.totalorder %v7878, 2
        %vm7899 = vcmp.lt.s32.totalorder %v7878, 3
        %vm7900 = vcmp.lt.s32.totalorder %v7878, 4
        %v7901 = vsel %vm7897, %v7881, %v7884
        %v7902 = vsel %vm7900, %v7890, 2102212464
        %v7903 = vsel %vm7899, %v7887, %v7902
        %v7904 = vsel %vm7898, %v7901, %v7903
        %v7905 = vsel %vm7897, %v7884, %v7887
        %v7906 = vsel %vm7900, %v7893, 920167782
        %v7907 = vsel %vm7899, %v7890, %v7906
        %v7908 = vsel %vm7898, %v7905, %v7907
        %v7909 = vsel %vm7897, %v7887, %v7890
        %v7910 = vsel %vm7900, %v7896, 1326507024
        %v7911 = vsel %vm7899, %v7893, %v7910
        %v7912 = vsel %vm7898, %v7909, %v7911
        %v7913 = vshll.u32 %v7873, 8
        %v7914 = vmul.u32.u64.compose %v7913, %v7912
        %v7915 = vextract.low.u32 %v7914
        %v7916 = vextract.high.u32 %v7914
        %v7917 = vmul.u32.u64.compose %v7913, %v7908
        %v7918 = vextract.low.u32 %v7917
        %v7919 = vextract.high.u32 %v7917
        %v7920 = vmul.u32 %v7913, %v7904
        %v7921 = vadd.s32 %v7916, %v7918
        %vm7922 = vc.u32 %v7916, %v7918
        %v7923 = vadd.s32 %v7919, 1
        %v7924 = vsel %vm7922, %v7923, %v7919
        %v7925 = vadd.s32 %v7920, %v7924
        %v7926 = vadd.s32 %v7925, 536870912
        %v7927 = vshrl.u32 %v7926, 30
        %v7928 = vshll.u32 %v7927, 30
        %v7929 = vsub.s32 %v7925, %v7928
        %vm7930 = vcmp.lt.s32.totalorder %v7929, 0
        %v7931 = vsub.s32 0, %v7929
        %v7932 = vsel %vm7930, %v7931, %v7929
        %v7933 = vclz %v7932
        %v7934 = vsub.s32 %v7933, 2
        %vm7935 = vcmp.gt.s32.totalorder 0, %v7934
        %v7936 = vsel %vm7935, 0, %v7934
        %v7937 = vsub.s32 32, %v7936
        %v7938 = vshll.u32 %v7929, %v7936
        %v7939 = vshrl.u32 %v7921, %v7937
        %v7940 = vor.u32 %v7938, %v7939
        %v7941 = vsub.s32 4294967266, %v7936
        %v7942 = vadd.s32 %v7941, 127
        %v7943 = vshll.u32 %v7942, 23
        %v7944 = vor.u32 4788187, %v7943
        %v7945 = vand.u32 2147483647, %v7944
        %v7947 = vcvt.s32.f32 %v7940
        %v7948 = vmul.f32 %v7947, %v7945
        %v7949 = vxor.u32 %v7948, 2147483648
        %v7950 = vsel %vm7867, %v7949, %v7948
        %v7951 = vsub.s32 4, %v7927
        %v7952 = vsel %vm7867, %v7951, %v7927
        %v7953 = vsel %vm7866, %v1678, %v7950
        %v7954 = vsel %vm7866, 0, %v7952
        %v7955 = vcosq.f32.pop %v7953
        %v7956 = vsinq.f32.pop %v7953
        %vm7957 = vweird.f32 %v1678
        %v7958 = vadd.s32 %v7954, 3
        %v7959 = vand.u32 %v7958, 3
        %vm7960 = vcmp.lt.s32.totalorder %v7959, 2
        %vm7961 = vcmp.eq.s32.totalorder %v7959, 0
        %v7962 = vxor.u32 %v7956, 2147483648
        %v7963 = vsel %vm7961, %v7955, %v7962
        %vm7964 = vcmp.eq.s32.totalorder %v7959, 2
        %v7965 = vxor.u32 %v7955, 2147483648
        %v7966 = vsel %vm7964, %v7965, %v7956
        %v7967 = vsel %vm7960, %v7963, %v7966
        %v7968 = vsel %vm7957, nan, %v7967
        %v7969 = vand.u32 2147483647, %v1683
        %vm7970 = vcmp.le.f32.partialorder %v7969, 0.7853982
        %vm7971 = vcmp.lt.s32.totalorder %v1683, 0
        %v7972 = vand.u32 %v1683, 2139095040
        %v7973 = vshrl.u32 %v7972, 23
        %v7974 = vsub.s32 %v7973, 127
        %v7975 = vand.u32 2147483647, %v1683
        %v7976 = vand.u32 %v7975, 8388607
        %v7977 = vor.u32 %v7976, 8388608
        %v7978 = vsub.s32 0, %v7977
        %v7979 = vadd.s32 %v7974, 1
        %vm7980 = vcmp.gt.s32.totalorder %v7979, 0
        %v7981 = vsel %vm7980, %v7979, 0
        %v7982 = vshrl.u32 %v7981, 5
        %v7983 = vand.u32 %v7981, 31
        %v7984 = vsub.s32 32, %v7983
        %v7985 = vshrl.u32 683565275, %v7984
        %v7986 = vshll.u32 683565275, %v7983
        %v7987 = vshrl.u32 2475754826, %v7984
        %v7988 = vor.u32 %v7986, %v7987
        %v7989 = vshll.u32 2475754826, %v7983
        %v7990 = vshrl.u32 2131351028, %v7984
        %v7991 = vor.u32 %v7989, %v7990
        %v7992 = vshll.u32 2131351028, %v7983
        %v7993 = vshrl.u32 2102212464, %v7984
        %v7994 = vor.u32 %v7992, %v7993
        %v7995 = vshll.u32 2102212464, %v7983
        %v7996 = vshrl.u32 920167782, %v7984
        %v7997 = vor.u32 %v7995, %v7996
        %v7998 = vshll.u32 920167782, %v7983
        %v7999 = vshrl.u32 1326507024, %v7984
        %v8000 = vor.u32 %v7998, %v7999
        %vm8001 = vcmp.lt.s32.totalorder %v7982, 1
        %vm8002 = vcmp.lt.s32.totalorder %v7982, 2
        %vm8003 = vcmp.lt.s32.totalorder %v7982, 3
        %vm8004 = vcmp.lt.s32.totalorder %v7982, 4
        %v8005 = vsel %vm8001, %v7985, %v7988
        %v8006 = vsel %vm8004, %v7994, 2102212464
        %v8007 = vsel %vm8003, %v7991, %v8006
        %v8008 = vsel %vm8002, %v8005, %v8007
        %v8009 = vsel %vm8001, %v7988, %v7991
        %v8010 = vsel %vm8004, %v7997, 920167782
        %v8011 = vsel %vm8003, %v7994, %v8010
        %v8012 = vsel %vm8002, %v8009, %v8011
        %v8013 = vsel %vm8001, %v7991, %v7994
        %v8014 = vsel %vm8004, %v8000, 1326507024
        %v8015 = vsel %vm8003, %v7997, %v8014
        %v8016 = vsel %vm8002, %v8013, %v8015
        %v8017 = vshll.u32 %v7977, 8
        %v8018 = vmul.u32.u64.compose %v8017, %v8016
        %v8019 = vextract.low.u32 %v8018
        %v8020 = vextract.high.u32 %v8018
        %v8021 = vmul.u32.u64.compose %v8017, %v8012
        %v8022 = vextract.low.u32 %v8021
        %v8023 = vextract.high.u32 %v8021
        %v8024 = vmul.u32 %v8017, %v8008
        %v8025 = vadd.s32 %v8020, %v8022
        %vm8026 = vc.u32 %v8020, %v8022
        %v8027 = vadd.s32 %v8023, 1
        %v8028 = vsel %vm8026, %v8027, %v8023
        %v8029 = vadd.s32 %v8024, %v8028
        %v8030 = vadd.s32 %v8029, 536870912
        %v8031 = vshrl.u32 %v8030, 30
        %v8032 = vshll.u32 %v8031, 30
        %v8033 = vsub.s32 %v8029, %v8032
        %vm8034 = vcmp.lt.s32.totalorder %v8033, 0
        %v8035 = vsub.s32 0, %v8033
        %v8036 = vsel %vm8034, %v8035, %v8033
        %v8037 = vclz %v8036
        %v8038 = vsub.s32 %v8037, 2
        %vm8039 = vcmp.gt.s32.totalorder 0, %v8038
        %v8040 = vsel %vm8039, 0, %v8038
        %v8041 = vsub.s32 32, %v8040
        %v8042 = vshll.u32 %v8033, %v8040
        %v8043 = vshrl.u32 %v8025, %v8041
        %v8044 = vor.u32 %v8042, %v8043
        %v8045 = vsub.s32 4294967266, %v8040
        %v8046 = vadd.s32 %v8045, 127
        %v8047 = vshll.u32 %v8046, 23
        %v8048 = vor.u32 4788187, %v8047
        %v8049 = vand.u32 2147483647, %v8048
        %v8051 = vcvt.s32.f32 %v8044
        %v8052 = vmul.f32 %v8051, %v8049
        %v8053 = vxor.u32 %v8052, 2147483648
        %v8054 = vsel %vm7971, %v8053, %v8052
        %v8055 = vsub.s32 4, %v8031
        %v8056 = vsel %vm7971, %v8055, %v8031
        %v8057 = vsel %vm7970, %v1683, %v8054
        %v8058 = vsel %vm7970, 0, %v8056
        %v8059 = vcosq.f32.pop %v8057
        %v8060 = vsinq.f32.pop %v8057
        %vm8061 = vweird.f32 %v1683
        %v8062 = vadd.s32 %v8058, 3
        %v8063 = vand.u32 %v8062, 3
        %vm8064 = vcmp.lt.s32.totalorder %v8063, 2
        %vm8065 = vcmp.eq.s32.totalorder %v8063, 0
        %v8066 = vxor.u32 %v8060, 2147483648
        %v8067 = vsel %vm8065, %v8059, %v8066
        %vm8068 = vcmp.eq.s32.totalorder %v8063, 2
        %v8069 = vxor.u32 %v8059, 2147483648
        %v8070 = vsel %vm8068, %v8069, %v8060
        %v8071 = vsel %vm8064, %v8067, %v8070
        %v8072 = vsel %vm8061, nan, %v8071
        %v8073 = vand.u32 2147483647, %v1686
        %vm8074 = vcmp.le.f32.partialorder %v8073, 0.7853982
        %vm8075 = vcmp.lt.s32.totalorder %v1686, 0
        %v8076 = vand.u32 %v1686, 2139095040
        %v8077 = vshrl.u32 %v8076, 23
        %v8078 = vsub.s32 %v8077, 127
        %v8079 = vand.u32 2147483647, %v1686
        %v8080 = vand.u32 %v8079, 8388607
        %v8081 = vor.u32 %v8080, 8388608
        %v8082 = vsub.s32 0, %v8081
        %v8083 = vadd.s32 %v8078, 1
        %vm8084 = vcmp.gt.s32.totalorder %v8083, 0
        %v8085 = vsel %vm8084, %v8083, 0
        %v8086 = vshrl.u32 %v8085, 5
        %v8087 = vand.u32 %v8085, 31
        %v8088 = vsub.s32 32, %v8087
        %v8089 = vshrl.u32 683565275, %v8088
        %v8090 = vshll.u32 683565275, %v8087
        %v8091 = vshrl.u32 2475754826, %v8088
        %v8092 = vor.u32 %v8090, %v8091
        %v8093 = vshll.u32 2475754826, %v8087
        %v8094 = vshrl.u32 2131351028, %v8088
        %v8095 = vor.u32 %v8093, %v8094
        %v8096 = vshll.u32 2131351028, %v8087
        %v8097 = vshrl.u32 2102212464, %v8088
        %v8098 = vor.u32 %v8096, %v8097
        %v8099 = vshll.u32 2102212464, %v8087
        %v8100 = vshrl.u32 920167782, %v8088
        %v8101 = vor.u32 %v8099, %v8100
        %v8102 = vshll.u32 920167782, %v8087
        %v8103 = vshrl.u32 1326507024, %v8088
        %v8104 = vor.u32 %v8102, %v8103
        %vm8105 = vcmp.lt.s32.totalorder %v8086, 1
        %vm8106 = vcmp.lt.s32.totalorder %v8086, 2
        %vm8107 = vcmp.lt.s32.totalorder %v8086, 3
        %vm8108 = vcmp.lt.s32.totalorder %v8086, 4
        %v8109 = vsel %vm8105, %v8089, %v8092
        %v8110 = vsel %vm8108, %v8098, 2102212464
        %v8111 = vsel %vm8107, %v8095, %v8110
        %v8112 = vsel %vm8106, %v8109, %v8111
        %v8113 = vsel %vm8105, %v8092, %v8095
        %v8114 = vsel %vm8108, %v8101, 920167782
        %v8115 = vsel %vm8107, %v8098, %v8114
        %v8116 = vsel %vm8106, %v8113, %v8115
        %v8117 = vsel %vm8105, %v8095, %v8098
        %v8118 = vsel %vm8108, %v8104, 1326507024
        %v8119 = vsel %vm8107, %v8101, %v8118
        %v8120 = vsel %vm8106, %v8117, %v8119
        %v8121 = vshll.u32 %v8081, 8
        %v8122 = vmul.u32.u64.compose %v8121, %v8120
        %v8123 = vextract.low.u32 %v8122
        %v8124 = vextract.high.u32 %v8122
        %v8125 = vmul.u32.u64.compose %v8121, %v8116
        %v8126 = vextract.low.u32 %v8125
        %v8127 = vextract.high.u32 %v8125
        %v8128 = vmul.u32 %v8121, %v8112
        %v8129 = vadd.s32 %v8124, %v8126
        %vm8130 = vc.u32 %v8124, %v8126
        %v8131 = vadd.s32 %v8127, 1
        %v8132 = vsel %vm8130, %v8131, %v8127
        %v8133 = vadd.s32 %v8128, %v8132
        %v8134 = vadd.s32 %v8133, 536870912
        %v8135 = vshrl.u32 %v8134, 30
        %v8136 = vshll.u32 %v8135, 30
        %v8137 = vsub.s32 %v8133, %v8136
        %vm8138 = vcmp.lt.s32.totalorder %v8137, 0
        %v8139 = vsub.s32 0, %v8137
        %v8140 = vsel %vm8138, %v8139, %v8137
        %v8141 = vclz %v8140
        %v8142 = vsub.s32 %v8141, 2
        %vm8143 = vcmp.gt.s32.totalorder 0, %v8142
        %v8144 = vsel %vm8143, 0, %v8142
        %v8145 = vsub.s32 32, %v8144
        %v8146 = vshll.u32 %v8137, %v8144
        %v8147 = vshrl.u32 %v8129, %v8145
        %v8148 = vor.u32 %v8146, %v8147
        %v8149 = vsub.s32 4294967266, %v8144
        %v8150 = vadd.s32 %v8149, 127
        %v8151 = vshll.u32 %v8150, 23
        %v8152 = vor.u32 4788187, %v8151
        %v8153 = vand.u32 2147483647, %v8152
        %v8155 = vcvt.s32.f32 %v8148
        %v8156 = vmul.f32 %v8155, %v8153
        %v8157 = vxor.u32 %v8156, 2147483648
        %v8158 = vsel %vm8075, %v8157, %v8156
        %v8159 = vsub.s32 4, %v8135
        %v8160 = vsel %vm8075, %v8159, %v8135
        %v8161 = vsel %vm8074, %v1686, %v8158
        %v8162 = vsel %vm8074, 0, %v8160
        %v8163 = vcosq.f32.pop %v8161
        %v8164 = vsinq.f32.pop %v8161
        %vm8165 = vweird.f32 %v1686
        %v8166 = vadd.s32 %v8162, 3
        %v8167 = vand.u32 %v8166, 3
        %vm8168 = vcmp.lt.s32.totalorder %v8167, 2
        %vm8169 = vcmp.eq.s32.totalorder %v8167, 0
        %v8170 = vxor.u32 %v8164, 2147483648
        %v8171 = vsel %vm8169, %v8163, %v8170
        %vm8172 = vcmp.eq.s32.totalorder %v8167, 2
        %v8173 = vxor.u32 %v8163, 2147483648
        %v8174 = vsel %vm8172, %v8173, %v8164
        %v8175 = vsel %vm8168, %v8171, %v8174
        %v8176 = vsel %vm8165, nan, %v8175
        %v8177 = vand.u32 2147483647, %v1691
        %vm8178 = vcmp.le.f32.partialorder %v8177, 0.7853982
        %vm8179 = vcmp.lt.s32.totalorder %v1691, 0
        %v8180 = vand.u32 %v1691, 2139095040
        %v8181 = vshrl.u32 %v8180, 23
        %v8182 = vsub.s32 %v8181, 127
        %v8183 = vand.u32 2147483647, %v1691
        %v8184 = vand.u32 %v8183, 8388607
        %v8185 = vor.u32 %v8184, 8388608
        %v8186 = vsub.s32 0, %v8185
        %v8187 = vadd.s32 %v8182, 1
        %vm8188 = vcmp.gt.s32.totalorder %v8187, 0
        %v8189 = vsel %vm8188, %v8187, 0
        %v8190 = vshrl.u32 %v8189, 5
        %v8191 = vand.u32 %v8189, 31
        %v8192 = vsub.s32 32, %v8191
        %v8193 = vshrl.u32 683565275, %v8192
        %v8194 = vshll.u32 683565275, %v8191
        %v8195 = vshrl.u32 2475754826, %v8192
        %v8196 = vor.u32 %v8194, %v8195
        %v8197 = vshll.u32 2475754826, %v8191
        %v8198 = vshrl.u32 2131351028, %v8192
        %v8199 = vor.u32 %v8197, %v8198
        %v8200 = vshll.u32 2131351028, %v8191
        %v8201 = vshrl.u32 2102212464, %v8192
        %v8202 = vor.u32 %v8200, %v8201
        %v8203 = vshll.u32 2102212464, %v8191
        %v8204 = vshrl.u32 920167782, %v8192
        %v8205 = vor.u32 %v8203, %v8204
        %v8206 = vshll.u32 920167782, %v8191
        %v8207 = vshrl.u32 1326507024, %v8192
        %v8208 = vor.u32 %v8206, %v8207
        %vm8209 = vcmp.lt.s32.totalorder %v8190, 1
        %vm8210 = vcmp.lt.s32.totalorder %v8190, 2
        %vm8211 = vcmp.lt.s32.totalorder %v8190, 3
        %vm8212 = vcmp.lt.s32.totalorder %v8190, 4
        %v8213 = vsel %vm8209, %v8193, %v8196
        %v8214 = vsel %vm8212, %v8202, 2102212464
        %v8215 = vsel %vm8211, %v8199, %v8214
        %v8216 = vsel %vm8210, %v8213, %v8215
        %v8217 = vsel %vm8209, %v8196, %v8199
        %v8218 = vsel %vm8212, %v8205, 920167782
        %v8219 = vsel %vm8211, %v8202, %v8218
        %v8220 = vsel %vm8210, %v8217, %v8219
        %v8221 = vsel %vm8209, %v8199, %v8202
        %v8222 = vsel %vm8212, %v8208, 1326507024
        %v8223 = vsel %vm8211, %v8205, %v8222
        %v8224 = vsel %vm8210, %v8221, %v8223
        %v8225 = vshll.u32 %v8185, 8
        %v8226 = vmul.u32.u64.compose %v8225, %v8224
        %v8227 = vextract.low.u32 %v8226
        %v8228 = vextract.high.u32 %v8226
        %v8229 = vmul.u32.u64.compose %v8225, %v8220
        %v8230 = vextract.low.u32 %v8229
        %v8231 = vextract.high.u32 %v8229
        %v8232 = vmul.u32 %v8225, %v8216
        %v8233 = vadd.s32 %v8228, %v8230
        %vm8234 = vc.u32 %v8228, %v8230
        %v8235 = vadd.s32 %v8231, 1
        %v8236 = vsel %vm8234, %v8235, %v8231
        %v8237 = vadd.s32 %v8232, %v8236
        %v8238 = vadd.s32 %v8237, 536870912
        %v8239 = vshrl.u32 %v8238, 30
        %v8240 = vshll.u32 %v8239, 30
        %v8241 = vsub.s32 %v8237, %v8240
        %vm8242 = vcmp.lt.s32.totalorder %v8241, 0
        %v8243 = vsub.s32 0, %v8241
        %v8244 = vsel %vm8242, %v8243, %v8241
        %v8245 = vclz %v8244
        %v8246 = vsub.s32 %v8245, 2
        %vm8247 = vcmp.gt.s32.totalorder 0, %v8246
        %v8248 = vsel %vm8247, 0, %v8246
        %v8249 = vsub.s32 32, %v8248
        %v8250 = vshll.u32 %v8241, %v8248
        %v8251 = vshrl.u32 %v8233, %v8249
        %v8252 = vor.u32 %v8250, %v8251
        %v8253 = vsub.s32 4294967266, %v8248
        %v8254 = vadd.s32 %v8253, 127
        %v8255 = vshll.u32 %v8254, 23
        %v8256 = vor.u32 4788187, %v8255
        %v8257 = vand.u32 2147483647, %v8256
        %v8259 = vcvt.s32.f32 %v8252
        %v8260 = vmul.f32 %v8259, %v8257
        %v8261 = vxor.u32 %v8260, 2147483648
        %v8262 = vsel %vm8179, %v8261, %v8260
        %v8263 = vsub.s32 4, %v8239
        %v8264 = vsel %vm8179, %v8263, %v8239
        %v8265 = vsel %vm8178, %v1691, %v8262
        %v8266 = vsel %vm8178, 0, %v8264
        %v8267 = vcosq.f32.pop %v8265
        %v8268 = vsinq.f32.pop %v8265
        %vm8269 = vweird.f32 %v1691
        %v8270 = vadd.s32 %v8266, 3
        %v8271 = vand.u32 %v8270, 3
        %vm8272 = vcmp.lt.s32.totalorder %v8271, 2
        %vm8273 = vcmp.eq.s32.totalorder %v8271, 0
        %v8274 = vxor.u32 %v8268, 2147483648
        %v8275 = vsel %vm8273, %v8267, %v8274
        %vm8276 = vcmp.eq.s32.totalorder %v8271, 2
        %v8277 = vxor.u32 %v8267, 2147483648
        %v8278 = vsel %vm8276, %v8277, %v8268
        %v8279 = vsel %vm8272, %v8275, %v8278
        %v8280 = vsel %vm8269, nan, %v8279
        %v8281 = vand.u32 2147483647, %v1694
        %vm8282 = vcmp.le.f32.partialorder %v8281, 0.7853982
        %vm8283 = vcmp.lt.s32.totalorder %v1694, 0
        %v8284 = vand.u32 %v1694, 2139095040
        %v8285 = vshrl.u32 %v8284, 23
        %v8286 = vsub.s32 %v8285, 127
        %v8287 = vand.u32 2147483647, %v1694
        %v8288 = vand.u32 %v8287, 8388607
        %v8289 = vor.u32 %v8288, 8388608
        %v8290 = vsub.s32 0, %v8289
        %v8291 = vadd.s32 %v8286, 1
        %vm8292 = vcmp.gt.s32.totalorder %v8291, 0
        %v8293 = vsel %vm8292, %v8291, 0
        %v8294 = vshrl.u32 %v8293, 5
        %v8295 = vand.u32 %v8293, 31
        %v8296 = vsub.s32 32, %v8295
        %v8297 = vshrl.u32 683565275, %v8296
        %v8298 = vshll.u32 683565275, %v8295
        %v8299 = vshrl.u32 2475754826, %v8296
        %v8300 = vor.u32 %v8298, %v8299
        %v8301 = vshll.u32 2475754826, %v8295
        %v8302 = vshrl.u32 2131351028, %v8296
        %v8303 = vor.u32 %v8301, %v8302
        %v8304 = vshll.u32 2131351028, %v8295
        %v8305 = vshrl.u32 2102212464, %v8296
        %v8306 = vor.u32 %v8304, %v8305
        %v8307 = vshll.u32 2102212464, %v8295
        %v8308 = vshrl.u32 920167782, %v8296
        %v8309 = vor.u32 %v8307, %v8308
        %v8310 = vshll.u32 920167782, %v8295
        %v8311 = vshrl.u32 1326507024, %v8296
        %v8312 = vor.u32 %v8310, %v8311
        %vm8313 = vcmp.lt.s32.totalorder %v8294, 1
        %vm8314 = vcmp.lt.s32.totalorder %v8294, 2
        %vm8315 = vcmp.lt.s32.totalorder %v8294, 3
        %vm8316 = vcmp.lt.s32.totalorder %v8294, 4
        %v8317 = vsel %vm8313, %v8297, %v8300
        %v8318 = vsel %vm8316, %v8306, 2102212464
        %v8319 = vsel %vm8315, %v8303, %v8318
        %v8320 = vsel %vm8314, %v8317, %v8319
        %v8321 = vsel %vm8313, %v8300, %v8303
        %v8322 = vsel %vm8316, %v8309, 920167782
        %v8323 = vsel %vm8315, %v8306, %v8322
        %v8324 = vsel %vm8314, %v8321, %v8323
        %v8325 = vsel %vm8313, %v8303, %v8306
        %v8326 = vsel %vm8316, %v8312, 1326507024
        %v8327 = vsel %vm8315, %v8309, %v8326
        %v8328 = vsel %vm8314, %v8325, %v8327
        %v8329 = vshll.u32 %v8289, 8
        %v8330 = vmul.u32.u64.compose %v8329, %v8328
        %v8331 = vextract.low.u32 %v8330
        %v8332 = vextract.high.u32 %v8330
        %v8333 = vmul.u32.u64.compose %v8329, %v8324
        %v8334 = vextract.low.u32 %v8333
        %v8335 = vextract.high.u32 %v8333
        %v8336 = vmul.u32 %v8329, %v8320
        %v8337 = vadd.s32 %v8332, %v8334
        %vm8338 = vc.u32 %v8332, %v8334
        %v8339 = vadd.s32 %v8335, 1
        %v8340 = vsel %vm8338, %v8339, %v8335
        %v8341 = vadd.s32 %v8336, %v8340
        %v8342 = vadd.s32 %v8341, 536870912
        %v8343 = vshrl.u32 %v8342, 30
        %v8344 = vshll.u32 %v8343, 30
        %v8345 = vsub.s32 %v8341, %v8344
        %vm8346 = vcmp.lt.s32.totalorder %v8345, 0
        %v8347 = vsub.s32 0, %v8345
        %v8348 = vsel %vm8346, %v8347, %v8345
        %v8349 = vclz %v8348
        %v8350 = vsub.s32 %v8349, 2
        %vm8351 = vcmp.gt.s32.totalorder 0, %v8350
        %v8352 = vsel %vm8351, 0, %v8350
        %v8353 = vsub.s32 32, %v8352
        %v8354 = vshll.u32 %v8345, %v8352
        %v8355 = vshrl.u32 %v8337, %v8353
        %v8356 = vor.u32 %v8354, %v8355
        %v8357 = vsub.s32 4294967266, %v8352
        %v8358 = vadd.s32 %v8357, 127
        %v8359 = vshll.u32 %v8358, 23
        %v8360 = vor.u32 4788187, %v8359
        %v8361 = vand.u32 2147483647, %v8360
        %v8363 = vcvt.s32.f32 %v8356
        %v8364 = vmul.f32 %v8363, %v8361
        %v8365 = vxor.u32 %v8364, 2147483648
        %v8366 = vsel %vm8283, %v8365, %v8364
        %v8367 = vsub.s32 4, %v8343
        %v8368 = vsel %vm8283, %v8367, %v8343
        %v8369 = vsel %vm8282, %v1694, %v8366
        %v8370 = vsel %vm8282, 0, %v8368
        %v8371 = vcosq.f32.pop %v8369
        %v8372 = vsinq.f32.pop %v8369
        %vm8373 = vweird.f32 %v1694
        %v8374 = vadd.s32 %v8370, 3
        %v8375 = vand.u32 %v8374, 3
        %vm8376 = vcmp.lt.s32.totalorder %v8375, 2
        %vm8377 = vcmp.eq.s32.totalorder %v8375, 0
        %v8378 = vxor.u32 %v8372, 2147483648
        %v8379 = vsel %vm8377, %v8371, %v8378
        %vm8380 = vcmp.eq.s32.totalorder %v8375, 2
        %v8381 = vxor.u32 %v8371, 2147483648
        %v8382 = vsel %vm8380, %v8381, %v8372
        %v8383 = vsel %vm8376, %v8379, %v8382
        %v8384 = vsel %vm8373, nan, %v8383
        %v8385 = vmul.f32 %v5025, %v5160
        %v8386 = vmul.f32 %v5026, %v5264
        %v8387 = vmul.f32 %v5027, %v5368
        %v8388 = vmul.f32 %v5028, %v5472
        %v8389 = vmul.f32 %v5029, %v5576
        %v8390 = vmul.f32 %v5030, %v5680
        %v8391 = vmul.f32 %v5031, %v5784
        %v8392 = vmul.f32 %v5032, %v5888
        %v8393 = vmul.f32 %v5033, %v5992
        %v8394 = vmul.f32 %v5034, %v6096
        %v8395 = vmul.f32 %v5035, %v6200
        %v8396 = vmul.f32 %v5036, %v6304
        %v8397 = vmul.f32 %v5037, %v6408
        %v8398 = vmul.f32 %v5038, %v6512
        %v8399 = vmul.f32 %v5039, %v6616
        %v8400 = vmul.f32 %v5040, %v6720
        %v8401 = vmul.f32 %v5041, %v6824
        %v8402 = vmul.f32 %v5042, %v6928
        %v8403 = vmul.f32 %v5043, %v7032
        %v8404 = vmul.f32 %v5044, %v7136
        %v8405 = vmul.f32 %v5045, %v7240
        %v8406 = vmul.f32 %v5046, %v7344
        %v8407 = vmul.f32 %v5047, %v7448
        %v8408 = vmul.f32 %v5048, %v7552
        %v8409 = vmul.f32 %v5049, %v7656
        %v8410 = vmul.f32 %v5050, %v7760
        %v8411 = vmul.f32 %v5051, %v7864
        %v8412 = vmul.f32 %v5052, %v7968
        %v8413 = vmul.f32 %v5053, %v8072
        %v8414 = vmul.f32 %v5054, %v8176
        %v8415 = vmul.f32 %v5055, %v8280
        %v8416 = vmul.f32 %v5056, %v8384
        %v8417 = vmul.f32 %v905, %v8385
        %v8418 = vmul.f32 %v908, %v8386
        %v8419 = vmul.f32 %v913, %v8387
        %v8420 = vmul.f32 %v916, %v8388
        %v8421 = vmul.f32 %v921, %v8389
        %v8422 = vmul.f32 %v924, %v8390
        %v8423 = vmul.f32 %v929, %v8391
        %v8424 = vmul.f32 %v932, %v8392
        %v8425 = vmul.f32 %v937, %v8393
        %v8426 = vmul.f32 %v940, %v8394
        %v8427 = vmul.f32 %v945, %v8395
        %v8428 = vmul.f32 %v948, %v8396
        %v8429 = vmul.f32 %v953, %v8397
        %v8430 = vmul.f32 %v956, %v8398
        %v8431 = vmul.f32 %v961, %v8399
        %v8432 = vmul.f32 %v964, %v8400
        %v8433 = vmul.f32 %v969, %v8401
        %v8434 = vmul.f32 %v972, %v8402
        %v8435 = vmul.f32 %v977, %v8403
        %v8436 = vmul.f32 %v980, %v8404
        %v8437 = vmul.f32 %v985, %v8405
        %v8438 = vmul.f32 %v988, %v8406
        %v8439 = vmul.f32 %v993, %v8407
        %v8440 = vmul.f32 %v996, %v8408
        %v8441 = vmul.f32 %v1001, %v8409
        %v8442 = vmul.f32 %v1004, %v8410
        %v8443 = vmul.f32 %v1009, %v8411
        %v8444 = vmul.f32 %v1012, %v8412
        %v8445 = vmul.f32 %v1017, %v8413
        %v8446 = vmul.f32 %v1020, %v8414
        %v8447 = vmul.f32 %v1025, %v8415
        %v8448 = vmul.f32 %v1028, %v8416
        %8449 = vst [vmem:[%s434] sm:$0xff] %v905
        %8450 = vst [vmem:[%s434 + $0x8] sm:$0xff] %v908
        %8451 = vst [vmem:[%s434 + $0x10] sm:$0xff] %v913
        %8452 = vst [vmem:[%s434 + $0x18] sm:$0xff] %v916
        %8453 = vst [vmem:[%s434 + $0x20] sm:$0xff] %v921
        %8454 = vst [vmem:[%s434 + $0x28] sm:$0xff] %v924
        %8455 = vst [vmem:[%s434 + $0x30] sm:$0xff] %v929
        %8456 = vst [vmem:[%s434 + $0x38] sm:$0xff] %v932
        %8457 = vst [vmem:[%s434 + $0x40] sm:$0xff] %v937
        %8458 = vst [vmem:[%s434 + $0x48] sm:$0xff] %v940
        %8459 = vst [vmem:[%s434 + $0x50] sm:$0xff] %v945
        %8460 = vst [vmem:[%s434 + $0x58] sm:$0xff] %v948
        %8461 = vst [vmem:[%s434 + $0x60] sm:$0xff] %v953
        %8462 = vst [vmem:[%s434 + $0x68] sm:$0xff] %v956
        %8463 = vst [vmem:[%s434 + $0x70] sm:$0xff] %v961
        %8464 = vst [vmem:[%s434 + $0x78] sm:$0xff] %v964
        %8465 = vst [vmem:[%s434 + $0x80] sm:$0xff] %v969
        %8466 = vst [vmem:[%s434 + $0x88] sm:$0xff] %v972
        %8467 = vst [vmem:[%s434 + $0x90] sm:$0xff] %v977
        %8468 = vst [vmem:[%s434 + $0x98] sm:$0xff] %v980
        %8469 = vst [vmem:[%s434 + $0xa0] sm:$0xff] %v985
        %8470 = vst [vmem:[%s434 + $0xa8] sm:$0xff] %v988
        %8471 = vst [vmem:[%s434 + $0xb0] sm:$0xff] %v993
        %8472 = vst [vmem:[%s434 + $0xb8] sm:$0xff] %v996
        %8473 = vst [vmem:[%s434 + $0xc0] sm:$0xff] %v1001
        %8474 = vst [vmem:[%s434 + $0xc8] sm:$0xff] %v1004
        %8475 = vst [vmem:[%s434 + $0xd0] sm:$0xff] %v1009
        %8476 = vst [vmem:[%s434 + $0xd8] sm:$0xff] %v1012
        %8477 = vst [vmem:[%s434 + $0xe0] sm:$0xff] %v1017
        %8478 = vst [vmem:[%s434 + $0xe8] sm:$0xff] %v1020
        %8479 = vst [vmem:[%s434 + $0xf0] sm:$0xff] %v1025
        %8480 = vst [vmem:[%s434 + $0xf8] sm:$0xff] %v1028
        %8481 = vst [vmem:[%s441] sm:$0xff] %v1571
        %8482 = vst [vmem:[%s441 + $0x8] sm:$0xff] %v1574
        %8483 = vst [vmem:[%s441 + $0x10] sm:$0xff] %v1579
        %8484 = vst [vmem:[%s441 + $0x18] sm:$0xff] %v1582
        %8485 = vst [vmem:[%s441 + $0x20] sm:$0xff] %v1587
        %8486 = vst [vmem:[%s441 + $0x28] sm:$0xff] %v1590
        %8487 = vst [vmem:[%s441 + $0x30] sm:$0xff] %v1595
        %8488 = vst [vmem:[%s441 + $0x38] sm:$0xff] %v1598
        %8489 = vst [vmem:[%s441 + $0x40] sm:$0xff] %v1603
        %8490 = vst [vmem:[%s441 + $0x48] sm:$0xff] %v1606
        %8491 = vst [vmem:[%s441 + $0x50] sm:$0xff] %v1611
        %8492 = vst [vmem:[%s441 + $0x58] sm:$0xff] %v1614
        %8493 = vst [vmem:[%s441 + $0x60] sm:$0xff] %v1619
        %8494 = vst [vmem:[%s441 + $0x68] sm:$0xff] %v1622
        %8495 = vst [vmem:[%s441 + $0x70] sm:$0xff] %v1627
        %8496 = vst [vmem:[%s441 + $0x78] sm:$0xff] %v1630
        %8497 = vst [vmem:[%s441 + $0x80] sm:$0xff] %v1635
        %8498 = vst [vmem:[%s441 + $0x88] sm:$0xff] %v1638
        %8499 = vst [vmem:[%s441 + $0x90] sm:$0xff] %v1643
        %8500 = vst [vmem:[%s441 + $0x98] sm:$0xff] %v1646
        %8501 = vst [vmem:[%s441 + $0xa0] sm:$0xff] %v1651
        %8502 = vst [vmem:[%s441 + $0xa8] sm:$0xff] %v1654
        %8503 = vst [vmem:[%s441 + $0xb0] sm:$0xff] %v1659
        %8504 = vst [vmem:[%s441 + $0xb8] sm:$0xff] %v1662
        %8505 = vst [vmem:[%s441 + $0xc0] sm:$0xff] %v1667
        %8506 = vst [vmem:[%s441 + $0xc8] sm:$0xff] %v1670
        %8507 = vst [vmem:[%s441 + $0xd0] sm:$0xff] %v1675
        %8508 = vst [vmem:[%s441 + $0xd8] sm:$0xff] %v1678
        %8509 = vst [vmem:[%s441 + $0xe0] sm:$0xff] %v1683
        %8510 = vst [vmem:[%s441 + $0xe8] sm:$0xff] %v1686
        %8511 = vst [vmem:[%s441 + $0xf0] sm:$0xff] %v1691
        %8512 = vst [vmem:[%s441 + $0xf8] sm:$0xff] %v1694
        %8513 = vst [vmem:[%s468] sm:$0xff] %v4993
        %8514 = vst [vmem:[%s468 + $0x10] sm:$0xff] %v4994
        %8515 = vst [vmem:[%s468 + $0x20] sm:$0xff] %v4995
        %8516 = vst [vmem:[%s468 + $0x30] sm:$0xff] %v4996
        %8517 = vst [vmem:[%s468 + $0x40] sm:$0xff] %v4997
        %8518 = vst [vmem:[%s468 + $0x50] sm:$0xff] %v4998
        %8519 = vst [vmem:[%s468 + $0x60] sm:$0xff] %v4999
        %8520 = vst [vmem:[%s468 + $0x70] sm:$0xff] %v5000
        %8521 = vst [vmem:[%s468 + $0x80] sm:$0xff] %v5001
        %8522 = vst [vmem:[%s468 + $0x90] sm:$0xff] %v5002
        %8523 = vst [vmem:[%s468 + $0xa0] sm:$0xff] %v5003
        %8524 = vst [vmem:[%s468 + $0xb0] sm:$0xff] %v5004
        %8525 = vst [vmem:[%s468 + $0xc0] sm:$0xff] %v5005
        %8526 = vst [vmem:[%s468 + $0xd0] sm:$0xff] %v5006
        %8527 = vst [vmem:[%s468 + $0xe0] sm:$0xff] %v5007
        %8528 = vst [vmem:[%s468 + $0xf0] sm:$0xff] %v5008
        %8529 = vst [vmem:[%s468 + $0x100] sm:$0xff] %v5009
        %8530 = vst [vmem:[%s468 + $0x110] sm:$0xff] %v5010
        %8531 = vst [vmem:[%s468 + $0x120] sm:$0xff] %v5011
        %8532 = vst [vmem:[%s468 + $0x130] sm:$0xff] %v5012
        %8533 = vst [vmem:[%s468 + $0x140] sm:$0xff] %v5013
        %8534 = vst [vmem:[%s468 + $0x150] sm:$0xff] %v5014
        %8535 = vst [vmem:[%s468 + $0x160] sm:$0xff] %v5015
        %8536 = vst [vmem:[%s468 + $0x170] sm:$0xff] %v5016
        %8537 = vst [vmem:[%s468 + $0x180] sm:$0xff] %v5017
        %8538 = vst [vmem:[%s468 + $0x190] sm:$0xff] %v5018
        %8539 = vst [vmem:[%s468 + $0x1a0] sm:$0xff] %v5019
        %8540 = vst [vmem:[%s468 + $0x1b0] sm:$0xff] %v5020
        %8541 = vst [vmem:[%s468 + $0x1c0] sm:$0xff] %v5021
        %8542 = vst [vmem:[%s468 + $0x1d0] sm:$0xff] %v5022
        %8543 = vst [vmem:[%s468 + $0x1e0] sm:$0xff] %v5023
        %8544 = vst [vmem:[%s468 + $0x1f0] sm:$0xff] %v5024
        %8545 = vst [vmem:[%s468 + $0x8] sm:$0xff] %v8417
        %8546 = vst [vmem:[%s468 + $0x18] sm:$0xff] %v8418
        %8547 = vst [vmem:[%s468 + $0x28] sm:$0xff] %v8419
        %8548 = vst [vmem:[%s468 + $0x38] sm:$0xff] %v8420
        %8549 = vst [vmem:[%s468 + $0x48] sm:$0xff] %v8421
        %8550 = vst [vmem:[%s468 + $0x58] sm:$0xff] %v8422
        %8551 = vst [vmem:[%s468 + $0x68] sm:$0xff] %v8423
        %8552 = vst [vmem:[%s468 + $0x78] sm:$0xff] %v8424
        %8553 = vst [vmem:[%s468 + $0x88] sm:$0xff] %v8425
        %8554 = vst [vmem:[%s468 + $0x98] sm:$0xff] %v8426
        %8555 = vst [vmem:[%s468 + $0xa8] sm:$0xff] %v8427
        %8556 = vst [vmem:[%s468 + $0xb8] sm:$0xff] %v8428
        %8557 = vst [vmem:[%s468 + $0xc8] sm:$0xff] %v8429
        %8558 = vst [vmem:[%s468 + $0xd8] sm:$0xff] %v8430
        %8559 = vst [vmem:[%s468 + $0xe8] sm:$0xff] %v8431
        %8560 = vst [vmem:[%s468 + $0xf8] sm:$0xff] %v8432
        %8561 = vst [vmem:[%s468 + $0x108] sm:$0xff] %v8433
        %8562 = vst [vmem:[%s468 + $0x118] sm:$0xff] %v8434
        %8563 = vst [vmem:[%s468 + $0x128] sm:$0xff] %v8435
        %8564 = vst [vmem:[%s468 + $0x138] sm:$0xff] %v8436
        %8565 = vst [vmem:[%s468 + $0x148] sm:$0xff] %v8437
        %8566 = vst [vmem:[%s468 + $0x158] sm:$0xff] %v8438
        %8567 = vst [vmem:[%s468 + $0x168] sm:$0xff] %v8439
        %8568 = vst [vmem:[%s468 + $0x178] sm:$0xff] %v8440
        %8569 = vst [vmem:[%s468 + $0x188] sm:$0xff] %v8441
        %8570 = vst [vmem:[%s468 + $0x198] sm:$0xff] %v8442
        %8571 = vst [vmem:[%s468 + $0x1a8] sm:$0xff] %v8443
        %8572 = vst [vmem:[%s468 + $0x1b8] sm:$0xff] %v8444
        %8573 = vst [vmem:[%s468 + $0x1c8] sm:$0xff] %v8445
        %8574 = vst [vmem:[%s468 + $0x1d8] sm:$0xff] %v8446
        %8575 = vst [vmem:[%s468 + $0x1e8] sm:$0xff] %v8447
        %8576 = vst [vmem:[%s468 + $0x1f8] sm:$0xff] %v8448
        %s8577 = smul.u32 32, %s31
        %p8578 = scmp.lt.s32.totalorder %s8577, 63
        %s8579 = scalar_select %p8578, %s8577, 63
        %s8580 = smul.addr %s8579, 2
        %s8581 = smul.addr %s8580, 8
        %s8582 = scalar_lea.vmem %s8, %s8581
        %s8583 = sand.u32 %s248, 1
        %s8584 = scalar_lea.sflag [#allocation4], %s8583
        %s8585 = sand.u32 %s248, 1
        %s8586 = smul.addr %s8585, 256
        %s8587 = scalar_lea.vmem [#allocation5], %s8586
        %s8588 = sand.u32 %s274, 1
        %s8589 = scalar_lea.sflag [#allocation7], %s8588
        %s8590 = sand.u32 %s274, 1
        %s8591 = smul.addr %s8590, 256
        %s8592 = scalar_lea.vmem [#allocation6], %s8591
        // Predicated region
        $region57: #{complex_projection_forward.1} parent=51 // pred_check
          %p8593 = pneg %p232
        $region58: #{complex_projection_forward.1} parent=51 // pred_check_branch
          %8595 = sbr.rel (%p8593) target = $region60
        $region59: #{complex_projection_forward.1} parent=51 // pred_region
          %s8596 = smul.u32 32, %s31
        $region60: #{complex_projection_forward.1} parent=51 // pred_fallthru
          _
        // Predicated region
        $region61: #{complex_projection_forward.1} parent=51 // pred_check
          %p8597 = pneg %p258
        $region62: #{complex_projection_forward.1} parent=51 // pred_check_branch
          %8599 = sbr.rel (%p8597) target = $region64
        $region63: #{complex_projection_forward.1} parent=51 // pred_region
          %s8600 = smul.u32 32, %s31
          %s8602 = ssub.s32 4096, 4096
          %8603 = vsyncadd %s8584, %s8602
          %s8604 = smul.addr %s8600, 128
          %s8605 = scalar_lea.hbm %s9, %s8604
          %s8606 = sshll.u32 %s8587, 4
          %s8607 = int_to_ptr.vmem [resolvable:$true] %s8606
          %8612 = dma.vmem_to_hbm [thread:$0]  %s8607, 4096, %s8605, %s8584, 128, 128, 8
        $region64: #{complex_projection_forward.1} parent=51 // pred_fallthru
          _
        // Predicated region
        $region65: #{complex_projection_forward.1} parent=51 // pred_check
          %p8613 = pneg %p284
        $region66: #{complex_projection_forward.1} parent=51 // pred_check_branch
          %8615 = sbr.rel (%p8613) target = $region68
        $region67: #{complex_projection_forward.1} parent=51 // pred_region
          %s8616 = smul.u32 32, %s31
          %s8618 = ssub.s32 4096, 4096
          %8619 = vsyncadd %s8589, %s8618
          %s8620 = smul.addr %s8616, 128
          %s8621 = scalar_lea.hbm %s10, %s8620
          %s8622 = sshll.u32 %s8592, 4
          %s8623 = int_to_ptr.vmem [resolvable:$true] %s8622
          %8628 = dma.vmem_to_hbm [thread:$0]  %s8623, 4096, %s8621, %s8589, 128, 128, 8
        $region68: #{complex_projection_forward.1} parent=51 // pred_fallthru
          _
      $region52: #{complex_projection_forward.1} parent=5 // pred_fallthru
        _
      %p8629 = scmp.le.s32.totalorder 2, %s26
      // Predicated region
      $region69: #{complex_projection_forward.1} parent=5 // pred_check
        %p8630 = pneg %p8629
      $region70: #{complex_projection_forward.1} parent=5 // pred_check_branch
        %8632 = sbr.rel (%p8630) target = $region72
      $region71: #{complex_projection_forward.1} parent=5 // pred_region
        %s8633 = ssub.s32 %s26, 2
        // Predicated region
        $region73: #{complex_projection_forward.1} parent=71 // pred_check
          %p8634 = pneg %p238
        $region74: #{complex_projection_forward.1} parent=71 // pred_check_branch
          %8636 = sbr.rel (%p8634) target = $region76
        $region75: #{complex_projection_forward.1} parent=71 // pred_region
          %s8637 = smul.u32 32, %s32
          %p8638 = scmp.lt.s32.totalorder %s8637, 63
          %s8639 = scalar_select %p8638, %s8637, 63
          %s8640 = smul.addr %s8639, 2
          %s8641 = smul.addr %s8640, 8
          %s8642 = scalar_lea.vmem %s8, %s8641
        $region76: #{complex_projection_forward.1} parent=71 // pred_fallthru
          _
        // Predicated region
        $region77: #{complex_projection_forward.1} parent=71 // pred_check
          %p8643 = pneg %p264
        $region78: #{complex_projection_forward.1} parent=71 // pred_check_branch
          %8645 = sbr.rel (%p8643) target = $region80
        $region79: #{complex_projection_forward.1} parent=71 // pred_region
          %s8646 = sand.u32 %s249, 1
          %s8647 = scalar_lea.sflag [#allocation4], %s8646
          %s8648 = sand.u32 %s249, 1
          %s8649 = smul.addr %s8648, 256
          %s8650 = scalar_lea.vmem [#allocation5], %s8649
          %8651 = dma.done %s8647, 4096
        $region80: #{complex_projection_forward.1} parent=71 // pred_fallthru
          _
        // Predicated region
        $region81: #{complex_projection_forward.1} parent=71 // pred_check
          %p8652 = pneg %p290
        $region82: #{complex_projection_forward.1} parent=71 // pred_check_branch
          %8654 = sbr.rel (%p8652) target = $region84
        $region83: #{complex_projection_forward.1} parent=71 // pred_region
          %s8655 = sand.u32 %s275, 1
          %s8656 = scalar_lea.sflag [#allocation7], %s8655
          %s8657 = sand.u32 %s275, 1
          %s8658 = smul.addr %s8657, 256
          %s8659 = scalar_lea.vmem [#allocation6], %s8658
          %8660 = dma.done %s8656, 4096
        $region84: #{complex_projection_forward.1} parent=71 // pred_fallthru
          _
      $region72: #{complex_projection_forward.1} parent=5 // pred_fallthru
        _
    $region6: #{complex_projection_forward.1} parent=1 // loop_footer
      %s30 = sadd.s32 1, %s26
    $region7: #{complex_projection_forward.1} parent=1 // loop_footer_branch
      %25 = sbr.rel target = $region3
    $region8: #{complex_projection_forward.1} parent=1 // loop_exit
      _
    %8661 = vsyncpa [#allocation3], 1
    %s8662 = scalar_lea.sflag [#allocation3], 1
    %8663 = vsyncpa %s8662, 1
    %8664 = vsyncpa [#allocation4], 1
    %s8665 = scalar_lea.sflag [#allocation4], 1
    %8666 = vsyncpa %s8665, 1
    %8667 = vsyncpa [#allocation7], 1
    %s8668 = scalar_lea.sflag [#allocation7], 1
    %8669 = vsyncpa %s8668, 1

</llo_original>
